<compile_context>
chip_gen: v7x
topology: tpu7x:2x2x1
jax: 0.10.0
libtpu: 0.0.40
codegen_flags: <defaults>
</compile_context>

<pallas_src>
import functools

import jax
import jax.numpy as jnp
from jax import lax
from jax.experimental import pallas as pl
from jax.experimental.pallas import tpu as pltpu


# ------------------------------- Pallas kernel -------------------------------


def _basic_block_kernel(x_ref, w1_ref, b1_ref, w2_ref, b2_ref, out_ref, mid_ref,
                        *, H, W, WP):
    """Fused BasicBlock forward for one batch element.

    x_ref:   (1, (H+3)*WP, Cp) bf16  zero-padded input slab (1px halo + 1 extra
                                     bottom row so all tap windows stay in bounds)
    w*_ref:  (9, Cp, Cp)       bf16  BN-scale-folded conv weights, tap = kh*3+kw
    b*_ref:  (1, Cp)           f32   folded BN bias
    out_ref: (1, H*WP, Cp)     f32   output on the padded-width grid
    mid_ref: ((H+3)*WP, Cp)    bf16  VMEM scratch: padded intermediate activation
    """
    HWp = H * WP
    Cp = x_ref.shape[-1]

    # Mask for the wrap/garbage columns of the padded-width output grid (cols >= W).
    col = lax.broadcasted_iota(jnp.int32, (HWp, 1), 0) % WP
    valid = col < W

    # ---- Conv1 (BN scale folded into weights) + bias + ReLU -> VMEM scratch ----
    acc1 = jnp.zeros((HWp, Cp), jnp.float32)
    for kh in range(3):
        for kw in range(3):
            off = kh * WP + kw
            acc1 = acc1 + jnp.dot(x_ref[0, pl.ds(off, HWp), :],
                                  w1_ref[kh * 3 + kw],
                                  preferred_element_type=jnp.float32)
    o1 = jnp.maximum(acc1 + b1_ref[...], 0.0)
    o1 = jnp.where(valid, o1, 0.0).astype(mid_ref.dtype)

    # Scatter into the padded intermediate slab: halo rows stay zero; the masked
    # garbage columns land exactly on the left/right halo positions -> correct
    # zero padding for conv2 without any per-row copies.
    mid_ref[...] = jnp.zeros(mid_ref.shape, mid_ref.dtype)
    mid_ref[pl.ds(WP + 1, HWp), :] = o1

    # ---- Conv2 + bias + residual add + ReLU ----
    acc2 = jnp.zeros((HWp, Cp), jnp.float32)
    for kh in range(3):
        for kw in range(3):
            off = kh * WP + kw
            acc2 = acc2 + jnp.dot(mid_ref[pl.ds(off, HWp), :],
                                  w2_ref[kh * 3 + kw],
                                  preferred_element_type=jnp.float32)
    res = x_ref[0, pl.ds(WP + 1, HWp), :].astype(jnp.float32)   # identity (= x)
    o2 = jnp.maximum(acc2 + b2_ref[...] + res, 0.0)
    out_ref[0] = o2.astype(out_ref.dtype)


# --------------------------------- Wrapper -----------------------------------


@jax.jit
def basic_block_forward(x_nchw, params):
    """BasicBlock.forward with Downsample=None, Stride=1 (InPlanes == Planes)."""
    N, C, H, W = x_nchw.shape
    Cp = params["w1"].shape[-1]
    WP = W + 2
    HPAD = H + 3                       # 1px halo top, 2 rows bottom (window in-bounds)

    # Single fused layout transform for the whole block: NCHW -> NHWC, bf16 cast,
    # channel pad to the 128-lane boundary, spatial halo, flatten to a 2-D slab.
    x = jnp.transpose(x_nchw, (0, 2, 3, 1)).astype(jnp.bfloat16)
    x = jnp.pad(x, ((0, 0), (1, 2), (1, 1), (0, Cp - C)))
    x_slab = x.reshape(N, HPAD * WP, Cp)

    kernel = functools.partial(_basic_block_kernel, H=H, W=W, WP=WP)
    out_slab = pl.pallas_call(
        kernel,
        out_shape=jax.ShapeDtypeStruct((N, H * WP, Cp), jnp.float32),
        grid=(N,),
        in_specs=[
            pl.BlockSpec((1, HPAD * WP, Cp), lambda n: (n, 0, 0)),
            pl.BlockSpec((9, Cp, Cp), lambda n: (0, 0, 0)),
            pl.BlockSpec((1, Cp), lambda n: (0, 0)),
            pl.BlockSpec((9, Cp, Cp), lambda n: (0, 0, 0)),
            pl.BlockSpec((1, Cp), lambda n: (0, 0)),
        ],
        out_specs=pl.BlockSpec((1, H * WP, Cp), lambda n: (n, 0, 0)),
        scratch_shapes=[pltpu.VMEM((HPAD * WP, Cp), jnp.bfloat16)],
        compiler_params=pltpu.CompilerParams(
            dimension_semantics=("parallel",),
            vmem_limit_bytes=48 * 1024 * 1024),
    )(x_slab, params["w1"], params["b1"], params["w2"], params["b2"])

    # (N, H*(W+2), Cp) -> drop wrap columns + channel padding -> NCHW f32.
    out = out_slab.reshape(N, H, WP, Cp)[:, :, :W, :C]
    return jnp.transpose(out, (0, 3, 1, 2))


# --------------------------- Parameter construction ---------------------------


def _round_up(x, m):
    return (x + m - 1) // m * m


def make_params(key, in_planes, planes, eps=1e-5):
    assert in_planes == planes          # Downsample=None, Stride=1 path
    k = jax.random.split(key, 10)
    # PyTorch conv weights are (Cout, Cin, 3, 3), bias=False.
    w1_pt = 0.1 * jax.random.normal(k[0], (planes, in_planes, 3, 3), jnp.float32)
    w2_pt = 0.1 * jax.random.normal(k[1], (planes, planes, 3, 3), jnp.float32)
    g1 = 1.0 + 0.1 * jax.random.normal(k[2], (planes,), jnp.float32)
    b1 = 0.1 * jax.random.normal(k[3], (planes,), jnp.float32)
    m1 = 0.05 * jax.random.normal(k[4], (planes,), jnp.float32)
    v1 = 1.0 + 0.1 * jax.random.uniform(k[5], (planes,), jnp.float32)
    g2 = 1.0 + 0.1 * jax.random.normal(k[6], (planes,), jnp.float32)
    b2 = 0.1 * jax.random.normal(k[7], (planes,), jnp.float32)
    m2 = 0.05 * jax.random.normal(k[8], (planes,), jnp.float32)
    v2 = 1.0 + 0.1 * jax.random.uniform(k[9], (planes,), jnp.float32)

    def fold_and_pack(w_pt, gamma, beta, mean, var):
        scale = gamma / jnp.sqrt(var + eps)            # (Cout,)
        bias = beta - mean * scale                     # (Cout,)
        w = jnp.transpose(w_pt, (2, 3, 1, 0))          # OIHW -> HWIO
        w = w * scale[None, None, None, :]             # fold BN scale into conv weight
        cin, cout = w.shape[2], w.shape[3]
        cp = _round_up(max(cin, cout, 128), 128)       # lane-dense channel padding
        w = jnp.pad(w, ((0, 0), (0, 0), (0, cp - cin), (0, cp - cout)))
        w = w.reshape(9, cp, cp).astype(jnp.bfloat16)  # tap index = kh*3 + kw
        b = jnp.pad(bias, (0, cp - cout)).reshape(1, cp).astype(jnp.float32)
        return w, b

    w1, bb1 = fold_and_pack(w1_pt, g1, b1, m1, v1)
    w2, bb2 = fold_and_pack(w2_pt, g2, b2, m2, v2)
    return {"w1": w1, "b1": bb1, "w2": w2, "b2": bb2}


# ----------------------------- Pure-JAX reference -----------------------------


@functools.partial(jax.jit, static_argnums=(2,))
def _ref_forward(x_nchw, params, C):
    """Same numerics as the kernel (bf16 inputs/weights, f32 accumulation)."""
    Cp = params["w1"].shape[-1]
    w1 = params["w1"].reshape(3, 3, Cp, Cp)[:, :, :C, :C]
    w2 = params["w2"].reshape(3, 3, Cp, Cp)[:, :, :C, :C]
    b1 = params["b1"][0, :C]
    b2 = params["b2"][0, :C]
    x = jnp.transpose(x_nchw, (0, 2, 3, 1)).astype(jnp.bfloat16)
    dn = ("NHWC", "HWIO", "NHWC")
    o = lax.conv_general_dilated(x, w1, (1, 1), "SAME", dimension_numbers=dn,
                                 preferred_element_type=jnp.float32)
    o = jnp.maximum(o + b1, 0.0).astype(jnp.bfloat16)
    o = lax.conv_general_dilated(o, w2, (1, 1), "SAME", dimension_numbers=dn,
                                 preferred_element_type=jnp.float32)
    o = jnp.maximum(o + b2 + x.astype(jnp.float32), 0.0)
    return jnp.transpose(o, (0, 3, 1, 2))


# ------------------------------------ Main ------------------------------------

if __name__ == "__main__":
    key = jax.random.PRNGKey(0)
    kx, kp = jax.random.split(key)

    N, C, H, W = 2, 8, 16, 16           # InPlanes = Planes = 8, Stride = 1
    x = jax.random.normal(kx, (N, C, H, W), jnp.float32)
    params = make_params(kp, C, C)

    out = jax.block_until_ready(basic_block_forward(x, params))
    ref = jax.block_until_ready(_ref_forward(x, params, C))

    assert out.shape == (N, C, H, W)
    max_err = float(jnp.max(jnp.abs(out - ref)))
    assert jnp.allclose(out, ref, atol=1e-2, rtol=1e-2), f"mismatch vs reference: {max_err}"

    print("KERNEL_OK")
</pallas_src>

<mosaic_0001>
module attributes {stable_mosaic.version = 11 : i64} {
  func.func @_basic_block_kernel(%arg0: i32, %arg1: memref<1x342x128xbf16, #tpu.memory_space<vmem>>, %arg2: memref<9x128x128xbf16, #tpu.memory_space<vmem>>, %arg3: memref<1x128xf32, #tpu.memory_space<vmem>>, %arg4: memref<9x128x128xbf16, #tpu.memory_space<vmem>>, %arg5: memref<1x128xf32, #tpu.memory_space<vmem>>, %arg6: memref<1x288x128xf32, #tpu.memory_space<vmem>>, %arg7: memref<342x128xbf16, #tpu.memory_space<vmem>>) attributes {dimension_semantics = [#tpu.dimension_semantics<parallel>], iteration_bounds = array<i64: 2>, scalar_prefetch = 0 : i64, scratch_operands = 1 : i64, tpu.core_type = #tpu.core_type<tc>, window_params = [{transform_indices = @transform_0, window_bounds = array<i64: 1, 342, 128>}, {pipeline_mode = #tpu.pipeline_mode<synchronous>, transform_indices = @transform_1, window_bounds = array<i64: 9, 128, 128>}, {pipeline_mode = #tpu.pipeline_mode<synchronous>, transform_indices = @transform_2, window_bounds = array<i64: 1, 128>}, {pipeline_mode = #tpu.pipeline_mode<synchronous>, transform_indices = @transform_3, window_bounds = array<i64: 9, 128, 128>}, {pipeline_mode = #tpu.pipeline_mode<synchronous>, transform_indices = @transform_4, window_bounds = array<i64: 1, 128>}, {transform_indices = @transform_5, window_bounds = array<i64: 1, 288, 128>}]} {
    %0 = tpu.iota {dimensions = array<i32: 0>} : vector<288x1xi32>
    %c18_i32 = arith.constant 18 : i32
    %c0_i32 = arith.constant 0 : i32
    %1 = arith.cmpi eq, %c18_i32, %c0_i32 : i32
    %c1_i32 = arith.constant 1 : i32
    %2 = arith.select %1, %c1_i32, %c18_i32 : i32
    %3 = vector.broadcast %2 : i32 to vector<288x1xi32>
    %4 = arith.remsi %0, %3 : vector<288x1xi32>
    %c0_i32_0 = arith.constant 0 : i32
    %5 = vector.broadcast %c0_i32_0 : i32 to vector<288x1xi32>
    %6 = arith.cmpi ne, %4, %5 : vector<288x1xi32>
    %c0_i32_1 = arith.constant 0 : i32
    %7 = vector.broadcast %c0_i32_1 : i32 to vector<288x1xi32>
    %8 = arith.cmpi slt, %4, %7 : vector<288x1xi32>
    %c0_i32_2 = arith.constant 0 : i32
    %9 = arith.cmpi slt, %2, %c0_i32_2 : i32
    %10 = vector.broadcast %9 : i1 to vector<288x1xi1>
    %11 = vector.broadcast %10 : vector<288x1xi1> to vector<288x1xi1>
    %12 = arith.xori %8, %11 : vector<288x1xi1>
    %13 = arith.andi %12, %6 : vector<288x1xi1>
    %14 = vector.broadcast %2 : i32 to vector<288x1xi32>
    %15 = arith.addi %4, %14 : vector<288x1xi32>
    %16 = arith.select %13, %15, %4 : vector<288x1xi1>, vector<288x1xi32>
    %c16_i32 = arith.constant 16 : i32
    %17 = vector.broadcast %c16_i32 : i32 to vector<288x1xi32>
    %18 = arith.cmpi slt, %16, %17 : vector<288x1xi32>
    %cst = arith.constant 0.000000e+00 : f32
    %19 = vector.broadcast %cst : f32 to vector<288x128xf32>
    %c0 = arith.constant 0 : index
    %c0_3 = arith.constant 0 : index
    %c0_4 = arith.constant 0 : index
    %20 = vector.load %arg1[%c0, %c0_3, %c0_4] : memref<1x342x128xbf16, #tpu.memory_space<vmem>>, vector<1x288x128xbf16>
    %21 = vector.shape_cast %20 : vector<1x288x128xbf16> to vector<288x128xbf16>
    %c0_5 = arith.constant 0 : index
    %c0_6 = arith.constant 0 : index
    %c0_7 = arith.constant 0 : index
    %22 = vector.load %arg2[%c0_5, %c0_6, %c0_7] : memref<9x128x128xbf16, #tpu.memory_space<vmem>>, vector<1x128x128xbf16>
    %23 = vector.shape_cast %22 : vector<1x128x128xbf16> to vector<128x128xbf16>
    %cst_8 = arith.constant dense<0.000000e+00> : vector<288x128xf32>
    %24 = tpu.matmul %21, %23, %cst_8 {dimension_numbers = #tpu.dot_dimension_numbers<[1], [0], [0], [1], [0, 0, 1, 1], [], []>} : vector<288x128xbf16>, vector<128x128xbf16>, vector<288x128xf32> -> vector<288x128xf32>
    %25 = arith.addf %19, %24 : vector<288x128xf32>
    %c0_9 = arith.constant 0 : index
    %c1 = arith.constant 1 : index
    %c0_10 = arith.constant 0 : index
    %26 = vector.load %arg1[%c0_9, %c1, %c0_10] : memref<1x342x128xbf16, #tpu.memory_space<vmem>>, vector<1x288x128xbf16>
    %27 = vector.shape_cast %26 : vector<1x288x128xbf16> to vector<288x128xbf16>
    %c1_11 = arith.constant 1 : index
    %c0_12 = arith.constant 0 : index
    %c0_13 = arith.constant 0 : index
    %28 = vector.load %arg2[%c1_11, %c0_12, %c0_13] : memref<9x128x128xbf16, #tpu.memory_space<vmem>>, vector<1x128x128xbf16>
    %29 = vector.shape_cast %28 : vector<1x128x128xbf16> to vector<128x128xbf16>
    %cst_14 = arith.constant dense<0.000000e+00> : vector<288x128xf32>
    %30 = tpu.matmul %27, %29, %cst_14 {dimension_numbers = #tpu.dot_dimension_numbers<[1], [0], [0], [1], [0, 0, 1, 1], [], []>} : vector<288x128xbf16>, vector<128x128xbf16>, vector<288x128xf32> -> vector<288x128xf32>
    %31 = arith.addf %25, %30 : vector<288x128xf32>
    %c0_15 = arith.constant 0 : index
    %c2 = arith.constant 2 : index
    %c0_16 = arith.constant 0 : index
    %32 = vector.load %arg1[%c0_15, %c2, %c0_16] : memref<1x342x128xbf16, #tpu.memory_space<vmem>>, vector<1x288x128xbf16>
    %33 = vector.shape_cast %32 : vector<1x288x128xbf16> to vector<288x128xbf16>
    %c2_17 = arith.constant 2 : index
    %c0_18 = arith.constant 0 : index
    %c0_19 = arith.constant 0 : index
    %34 = vector.load %arg2[%c2_17, %c0_18, %c0_19] : memref<9x128x128xbf16, #tpu.memory_space<vmem>>, vector<1x128x128xbf16>
    %35 = vector.shape_cast %34 : vector<1x128x128xbf16> to vector<128x128xbf16>
    %cst_20 = arith.constant dense<0.000000e+00> : vector<288x128xf32>
    %36 = tpu.matmul %33, %35, %cst_20 {dimension_numbers = #tpu.dot_dimension_numbers<[1], [0], [0], [1], [0, 0, 1, 1], [], []>} : vector<288x128xbf16>, vector<128x128xbf16>, vector<288x128xf32> -> vector<288x128xf32>
    %37 = arith.addf %31, %36 : vector<288x128xf32>
    %c0_21 = arith.constant 0 : index
    %c18 = arith.constant 18 : index
    %c0_22 = arith.constant 0 : index
    %38 = vector.load %arg1[%c0_21, %c18, %c0_22] : memref<1x342x128xbf16, #tpu.memory_space<vmem>>, vector<1x288x128xbf16>
    %39 = vector.shape_cast %38 : vector<1x288x128xbf16> to vector<288x128xbf16>
    %c3 = arith.constant 3 : index
    %c0_23 = arith.constant 0 : index
    %c0_24 = arith.constant 0 : index
    %40 = vector.load %arg2[%c3, %c0_23, %c0_24] : memref<9x128x128xbf16, #tpu.memory_space<vmem>>, vector<1x128x128xbf16>
    %41 = vector.shape_cast %40 : vector<1x128x128xbf16> to vector<128x128xbf16>
    %cst_25 = arith.constant dense<0.000000e+00> : vector<288x128xf32>
    %42 = tpu.matmul %39, %41, %cst_25 {dimension_numbers = #tpu.dot_dimension_numbers<[1], [0], [0], [1], [0, 0, 1, 1], [], []>} : vector<288x128xbf16>, vector<128x128xbf16>, vector<288x128xf32> -> vector<288x128xf32>
    %43 = arith.addf %37, %42 : vector<288x128xf32>
    %c0_26 = arith.constant 0 : index
    %c19 = arith.constant 19 : index
    %c0_27 = arith.constant 0 : index
    %44 = vector.load %arg1[%c0_26, %c19, %c0_27] : memref<1x342x128xbf16, #tpu.memory_space<vmem>>, vector<1x288x128xbf16>
    %45 = vector.shape_cast %44 : vector<1x288x128xbf16> to vector<288x128xbf16>
    %c4 = arith.constant 4 : index
    %c0_28 = arith.constant 0 : index
    %c0_29 = arith.constant 0 : index
    %46 = vector.load %arg2[%c4, %c0_28, %c0_29] : memref<9x128x128xbf16, #tpu.memory_space<vmem>>, vector<1x128x128xbf16>
    %47 = vector.shape_cast %46 : vector<1x128x128xbf16> to vector<128x128xbf16>
    %cst_30 = arith.constant dense<0.000000e+00> : vector<288x128xf32>
    %48 = tpu.matmul %45, %47, %cst_30 {dimension_numbers = #tpu.dot_dimension_numbers<[1], [0], [0], [1], [0, 0, 1, 1], [], []>} : vector<288x128xbf16>, vector<128x128xbf16>, vector<288x128xf32> -> vector<288x128xf32>
    %49 = arith.addf %43, %48 : vector<288x128xf32>
    %c0_31 = arith.constant 0 : index
    %c20 = arith.constant 20 : index
    %c0_32 = arith.constant 0 : index
    %50 = vector.load %arg1[%c0_31, %c20, %c0_32] : memref<1x342x128xbf16, #tpu.memory_space<vmem>>, vector<1x288x128xbf16>
    %51 = vector.shape_cast %50 : vector<1x288x128xbf16> to vector<288x128xbf16>
    %c5 = arith.constant 5 : index
    %c0_33 = arith.constant 0 : index
    %c0_34 = arith.constant 0 : index
    %52 = vector.load %arg2[%c5, %c0_33, %c0_34] : memref<9x128x128xbf16, #tpu.memory_space<vmem>>, vector<1x128x128xbf16>
    %53 = vector.shape_cast %52 : vector<1x128x128xbf16> to vector<128x128xbf16>
    %cst_35 = arith.constant dense<0.000000e+00> : vector<288x128xf32>
    %54 = tpu.matmul %51, %53, %cst_35 {dimension_numbers = #tpu.dot_dimension_numbers<[1], [0], [0], [1], [0, 0, 1, 1], [], []>} : vector<288x128xbf16>, vector<128x128xbf16>, vector<288x128xf32> -> vector<288x128xf32>
    %55 = arith.addf %49, %54 : vector<288x128xf32>
    %c0_36 = arith.constant 0 : index
    %c36 = arith.constant 36 : index
    %c0_37 = arith.constant 0 : index
    %56 = vector.load %arg1[%c0_36, %c36, %c0_37] : memref<1x342x128xbf16, #tpu.memory_space<vmem>>, vector<1x288x128xbf16>
    %57 = vector.shape_cast %56 : vector<1x288x128xbf16> to vector<288x128xbf16>
    %c6 = arith.constant 6 : index
    %c0_38 = arith.constant 0 : index
    %c0_39 = arith.constant 0 : index
    %58 = vector.load %arg2[%c6, %c0_38, %c0_39] : memref<9x128x128xbf16, #tpu.memory_space<vmem>>, vector<1x128x128xbf16>
    %59 = vector.shape_cast %58 : vector<1x128x128xbf16> to vector<128x128xbf16>
    %cst_40 = arith.constant dense<0.000000e+00> : vector<288x128xf32>
    %60 = tpu.matmul %57, %59, %cst_40 {dimension_numbers = #tpu.dot_dimension_numbers<[1], [0], [0], [1], [0, 0, 1, 1], [], []>} : vector<288x128xbf16>, vector<128x128xbf16>, vector<288x128xf32> -> vector<288x128xf32>
    %61 = arith.addf %55, %60 : vector<288x128xf32>
    %c0_41 = arith.constant 0 : index
    %c37 = arith.constant 37 : index
    %c0_42 = arith.constant 0 : index
    %62 = vector.load %arg1[%c0_41, %c37, %c0_42] : memref<1x342x128xbf16, #tpu.memory_space<vmem>>, vector<1x288x128xbf16>
    %63 = vector.shape_cast %62 : vector<1x288x128xbf16> to vector<288x128xbf16>
    %c7 = arith.constant 7 : index
    %c0_43 = arith.constant 0 : index
    %c0_44 = arith.constant 0 : index
    %64 = vector.load %arg2[%c7, %c0_43, %c0_44] : memref<9x128x128xbf16, #tpu.memory_space<vmem>>, vector<1x128x128xbf16>
    %65 = vector.shape_cast %64 : vector<1x128x128xbf16> to vector<128x128xbf16>
    %cst_45 = arith.constant dense<0.000000e+00> : vector<288x128xf32>
    %66 = tpu.matmul %63, %65, %cst_45 {dimension_numbers = #tpu.dot_dimension_numbers<[1], [0], [0], [1], [0, 0, 1, 1], [], []>} : vector<288x128xbf16>, vector<128x128xbf16>, vector<288x128xf32> -> vector<288x128xf32>
    %67 = arith.addf %61, %66 : vector<288x128xf32>
    %c0_46 = arith.constant 0 : index
    %c38 = arith.constant 38 : index
    %c0_47 = arith.constant 0 : index
    %68 = vector.load %arg1[%c0_46, %c38, %c0_47] : memref<1x342x128xbf16, #tpu.memory_space<vmem>>, vector<1x288x128xbf16>
    %69 = vector.shape_cast %68 : vector<1x288x128xbf16> to vector<288x128xbf16>
    %c8 = arith.constant 8 : index
    %c0_48 = arith.constant 0 : index
    %c0_49 = arith.constant 0 : index
    %70 = vector.load %arg2[%c8, %c0_48, %c0_49] : memref<9x128x128xbf16, #tpu.memory_space<vmem>>, vector<1x128x128xbf16>
    %71 = vector.shape_cast %70 : vector<1x128x128xbf16> to vector<128x128xbf16>
    %cst_50 = arith.constant dense<0.000000e+00> : vector<288x128xf32>
    %72 = tpu.matmul %69, %71, %cst_50 {dimension_numbers = #tpu.dot_dimension_numbers<[1], [0], [0], [1], [0, 0, 1, 1], [], []>} : vector<288x128xbf16>, vector<128x128xbf16>, vector<288x128xf32> -> vector<288x128xf32>
    %73 = arith.addf %67, %72 : vector<288x128xf32>
    %c0_51 = arith.constant 0 : index
    %c0_52 = arith.constant 0 : index
    %74 = vector.load %arg3[%c0_51, %c0_52] : memref<1x128xf32, #tpu.memory_space<vmem>>, vector<1x128xf32>
    %75 = vector.broadcast %74 : vector<1x128xf32> to vector<288x128xf32>
    %76 = arith.addf %73, %75 : vector<288x128xf32>
    %cst_53 = arith.constant 0.000000e+00 : f32
    %77 = vector.broadcast %cst_53 : f32 to vector<288x128xf32>
    %78 = arith.maximumf %76, %77 : vector<288x128xf32>
    %cst_54 = arith.constant 0.000000e+00 : f32
    %79 = vector.shape_cast %18 : vector<288x1xi1> to vector<288x1xi1>
    %80 = vector.broadcast %79 : vector<288x1xi1> to vector<288x128xi1>
    %81 = vector.broadcast %cst_54 : f32 to vector<288x128xf32>
    %82 = arith.select %80, %78, %81 : vector<288x128xi1>, vector<288x128xf32>
    %83 = arith.truncf %82 : vector<288x128xf32> to vector<288x128xbf16>
    %cst_55 = arith.constant 0.000000e+00 : bf16
    %84 = vector.broadcast %cst_55 : bf16 to vector<342x128xbf16>
    %c0_56 = arith.constant 0 : index
    %c0_57 = arith.constant 0 : index
    %85 = vector.load %arg7[%c0_56, %c0_57] : memref<342x128xbf16, #tpu.memory_space<vmem>>, vector<342x128xbf16>
    tpu.vector_store %arg7[%c0_56, %c0_57], %84 {strides = array<i32>} : memref<342x128xbf16, #tpu.memory_space<vmem>>, vector<342x128xbf16>,
    %c19_58 = arith.constant 19 : index
    %c0_59 = arith.constant 0 : index
    %86 = vector.load %arg7[%c19_58, %c0_59] : memref<342x128xbf16, #tpu.memory_space<vmem>>, vector<288x128xbf16>
    tpu.vector_store %arg7[%c19_58, %c0_59], %83 {strides = array<i32>} : memref<342x128xbf16, #tpu.memory_space<vmem>>, vector<288x128xbf16>,
    %cst_60 = arith.constant 0.000000e+00 : f32
    %87 = vector.broadcast %cst_60 : f32 to vector<288x128xf32>
    %c0_61 = arith.constant 0 : index
    %c0_62 = arith.constant 0 : index
    %88 = vector.load %arg7[%c0_61, %c0_62] : memref<342x128xbf16, #tpu.memory_space<vmem>>, vector<288x128xbf16>
    %c0_63 = arith.constant 0 : index
    %c0_64 = arith.constant 0 : index
    %c0_65 = arith.constant 0 : index
    %89 = vector.load %arg4[%c0_63, %c0_64, %c0_65] : memref<9x128x128xbf16, #tpu.memory_space<vmem>>, vector<1x128x128xbf16>
    %90 = vector.shape_cast %89 : vector<1x128x128xbf16> to vector<128x128xbf16>
    %cst_66 = arith.constant dense<0.000000e+00> : vector<288x128xf32>
    %91 = tpu.matmul %88, %90, %cst_66 {dimension_numbers = #tpu.dot_dimension_numbers<[1], [0], [0], [1], [0, 0, 1, 1], [], []>} : vector<288x128xbf16>, vector<128x128xbf16>, vector<288x128xf32> -> vector<288x128xf32>
    %92 = arith.addf %87, %91 : vector<288x128xf32>
    %c1_67 = arith.constant 1 : index
    %c0_68 = arith.constant 0 : index
    %93 = vector.load %arg7[%c1_67, %c0_68] : memref<342x128xbf16, #tpu.memory_space<vmem>>, vector<288x128xbf16>
    %c1_69 = arith.constant 1 : index
    %c0_70 = arith.constant 0 : index
    %c0_71 = arith.constant 0 : index
    %94 = vector.load %arg4[%c1_69, %c0_70, %c0_71] : memref<9x128x128xbf16, #tpu.memory_space<vmem>>, vector<1x128x128xbf16>
    %95 = vector.shape_cast %94 : vector<1x128x128xbf16> to vector<128x128xbf16>
    %cst_72 = arith.constant dense<0.000000e+00> : vector<288x128xf32>
    %96 = tpu.matmul %93, %95, %cst_72 {dimension_numbers = #tpu.dot_dimension_numbers<[1], [0], [0], [1], [0, 0, 1, 1], [], []>} : vector<288x128xbf16>, vector<128x128xbf16>, vector<288x128xf32> -> vector<288x128xf32>
    %97 = arith.addf %92, %96 : vector<288x128xf32>
    %c2_73 = arith.constant 2 : index
    %c0_74 = arith.constant 0 : index
    %98 = vector.load %arg7[%c2_73, %c0_74] : memref<342x128xbf16, #tpu.memory_space<vmem>>, vector<288x128xbf16>
    %c2_75 = arith.constant 2 : index
    %c0_76 = arith.constant 0 : index
    %c0_77 = arith.constant 0 : index
    %99 = vector.load %arg4[%c2_75, %c0_76, %c0_77] : memref<9x128x128xbf16, #tpu.memory_space<vmem>>, vector<1x128x128xbf16>
    %100 = vector.shape_cast %99 : vector<1x128x128xbf16> to vector<128x128xbf16>
    %cst_78 = arith.constant dense<0.000000e+00> : vector<288x128xf32>
    %101 = tpu.matmul %98, %100, %cst_78 {dimension_numbers = #tpu.dot_dimension_numbers<[1], [0], [0], [1], [0, 0, 1, 1], [], []>} : vector<288x128xbf16>, vector<128x128xbf16>, vector<288x128xf32> -> vector<288x128xf32>
    %102 = arith.addf %97, %101 : vector<288x128xf32>
    %c18_79 = arith.constant 18 : index
    %c0_80 = arith.constant 0 : index
    %103 = vector.load %arg7[%c18_79, %c0_80] : memref<342x128xbf16, #tpu.memory_space<vmem>>, vector<288x128xbf16>
    %c3_81 = arith.constant 3 : index
    %c0_82 = arith.constant 0 : index
    %c0_83 = arith.constant 0 : index
    %104 = vector.load %arg4[%c3_81, %c0_82, %c0_83] : memref<9x128x128xbf16, #tpu.memory_space<vmem>>, vector<1x128x128xbf16>
    %105 = vector.shape_cast %104 : vector<1x128x128xbf16> to vector<128x128xbf16>
    %cst_84 = arith.constant dense<0.000000e+00> : vector<288x128xf32>
    %106 = tpu.matmul %103, %105, %cst_84 {dimension_numbers = #tpu.dot_dimension_numbers<[1], [0], [0], [1], [0, 0, 1, 1], [], []>} : vector<288x128xbf16>, vector<128x128xbf16>, vector<288x128xf32> -> vector<288x128xf32>
    %107 = arith.addf %102, %106 : vector<288x128xf32>
    %c19_85 = arith.constant 19 : index
    %c0_86 = arith.constant 0 : index
    %108 = vector.load %arg7[%c19_85, %c0_86] : memref<342x128xbf16, #tpu.memory_space<vmem>>, vector<288x128xbf16>
    %c4_87 = arith.constant 4 : index
    %c0_88 = arith.constant 0 : index
    %c0_89 = arith.constant 0 : index
    %109 = vector.load %arg4[%c4_87, %c0_88, %c0_89] : memref<9x128x128xbf16, #tpu.memory_space<vmem>>, vector<1x128x128xbf16>
    %110 = vector.shape_cast %109 : vector<1x128x128xbf16> to vector<128x128xbf16>
    %cst_90 = arith.constant dense<0.000000e+00> : vector<288x128xf32>
    %111 = tpu.matmul %108, %110, %cst_90 {dimension_numbers = #tpu.dot_dimension_numbers<[1], [0], [0], [1], [0, 0, 1, 1], [], []>} : vector<288x128xbf16>, vector<128x128xbf16>, vector<288x128xf32> -> vector<288x128xf32>
    %112 = arith.addf %107, %111 : vector<288x128xf32>
    %c20_91 = arith.constant 20 : index
    %c0_92 = arith.constant 0 : index
    %113 = vector.load %arg7[%c20_91, %c0_92] : memref<342x128xbf16, #tpu.memory_space<vmem>>, vector<288x128xbf16>
    %c5_93 = arith.constant 5 : index
    %c0_94 = arith.constant 0 : index
    %c0_95 = arith.constant 0 : index
    %114 = vector.load %arg4[%c5_93, %c0_94, %c0_95] : memref<9x128x128xbf16, #tpu.memory_space<vmem>>, vector<1x128x128xbf16>
    %115 = vector.shape_cast %114 : vector<1x128x128xbf16> to vector<128x128xbf16>
    %cst_96 = arith.constant dense<0.000000e+00> : vector<288x128xf32>
    %116 = tpu.matmul %113, %115, %cst_96 {dimension_numbers = #tpu.dot_dimension_numbers<[1], [0], [0], [1], [0, 0, 1, 1], [], []>} : vector<288x128xbf16>, vector<128x128xbf16>, vector<288x128xf32> -> vector<288x128xf32>
    %117 = arith.addf %112, %116 : vector<288x128xf32>
    %c36_97 = arith.constant 36 : index
    %c0_98 = arith.constant 0 : index
    %118 = vector.load %arg7[%c36_97, %c0_98] : memref<342x128xbf16, #tpu.memory_space<vmem>>, vector<288x128xbf16>
    %c6_99 = arith.constant 6 : index
    %c0_100 = arith.constant 0 : index
    %c0_101 = arith.constant 0 : index
    %119 = vector.load %arg4[%c6_99, %c0_100, %c0_101] : memref<9x128x128xbf16, #tpu.memory_space<vmem>>, vector<1x128x128xbf16>
    %120 = vector.shape_cast %119 : vector<1x128x128xbf16> to vector<128x128xbf16>
    %cst_102 = arith.constant dense<0.000000e+00> : vector<288x128xf32>
    %121 = tpu.matmul %118, %120, %cst_102 {dimension_numbers = #tpu.dot_dimension_numbers<[1], [0], [0], [1], [0, 0, 1, 1], [], []>} : vector<288x128xbf16>, vector<128x128xbf16>, vector<288x128xf32> -> vector<288x128xf32>
    %122 = arith.addf %117, %121 : vector<288x128xf32>
    %c37_103 = arith.constant 37 : index
    %c0_104 = arith.constant 0 : index
    %123 = vector.load %arg7[%c37_103, %c0_104] : memref<342x128xbf16, #tpu.memory_space<vmem>>, vector<288x128xbf16>
    %c7_105 = arith.constant 7 : index
    %c0_106 = arith.constant 0 : index
    %c0_107 = arith.constant 0 : index
    %124 = vector.load %arg4[%c7_105, %c0_106, %c0_107] : memref<9x128x128xbf16, #tpu.memory_space<vmem>>, vector<1x128x128xbf16>
    %125 = vector.shape_cast %124 : vector<1x128x128xbf16> to vector<128x128xbf16>
    %cst_108 = arith.constant dense<0.000000e+00> : vector<288x128xf32>
    %126 = tpu.matmul %123, %125, %cst_108 {dimension_numbers = #tpu.dot_dimension_numbers<[1], [0], [0], [1], [0, 0, 1, 1], [], []>} : vector<288x128xbf16>, vector<128x128xbf16>, vector<288x128xf32> -> vector<288x128xf32>
    %127 = arith.addf %122, %126 : vector<288x128xf32>
    %c38_109 = arith.constant 38 : index
    %c0_110 = arith.constant 0 : index
    %128 = vector.load %arg7[%c38_109, %c0_110] : memref<342x128xbf16, #tpu.memory_space<vmem>>, vector<288x128xbf16>
    %c8_111 = arith.constant 8 : index
    %c0_112 = arith.constant 0 : index
    %c0_113 = arith.constant 0 : index
    %129 = vector.load %arg4[%c8_111, %c0_112, %c0_113] : memref<9x128x128xbf16, #tpu.memory_space<vmem>>, vector<1x128x128xbf16>
    %130 = vector.shape_cast %129 : vector<1x128x128xbf16> to vector<128x128xbf16>
    %cst_114 = arith.constant dense<0.000000e+00> : vector<288x128xf32>
    %131 = tpu.matmul %128, %130, %cst_114 {dimension_numbers = #tpu.dot_dimension_numbers<[1], [0], [0], [1], [0, 0, 1, 1], [], []>} : vector<288x128xbf16>, vector<128x128xbf16>, vector<288x128xf32> -> vector<288x128xf32>
    %132 = arith.addf %127, %131 : vector<288x128xf32>
    %c0_115 = arith.constant 0 : index
    %c19_116 = arith.constant 19 : index
    %c0_117 = arith.constant 0 : index
    %133 = vector.load %arg1[%c0_115, %c19_116, %c0_117] : memref<1x342x128xbf16, #tpu.memory_space<vmem>>, vector<1x288x128xbf16>
    %134 = vector.shape_cast %133 : vector<1x288x128xbf16> to vector<288x128xbf16>
    %135 = arith.extf %134 : vector<288x128xbf16> to vector<288x128xf32>
    %c0_118 = arith.constant 0 : index
    %c0_119 = arith.constant 0 : index
    %136 = vector.load %arg5[%c0_118, %c0_119] : memref<1x128xf32, #tpu.memory_space<vmem>>, vector<1x128xf32>
    %137 = vector.broadcast %136 : vector<1x128xf32> to vector<288x128xf32>
    %138 = arith.addf %132, %137 : vector<288x128xf32>
    %139 = arith.addf %138, %135 : vector<288x128xf32>
    %cst_120 = arith.constant 0.000000e+00 : f32
    %140 = vector.broadcast %cst_120 : f32 to vector<288x128xf32>
    %141 = arith.maximumf %139, %140 : vector<288x128xf32>
    %c0_121 = arith.constant 0 : index
    %c0_122 = arith.constant 0 : index
    %c0_123 = arith.constant 0 : index
    %142 = vector.load %arg6[%c0_121, %c0_122, %c0_123] : memref<1x288x128xf32, #tpu.memory_space<vmem>>, vector<1x288x128xf32>
    %143 = vector.shape_cast %142 : vector<1x288x128xf32> to vector<288x128xf32>
    %144 = vector.shape_cast %141 : vector<288x128xf32> to vector<1x288x128xf32>
    tpu.vector_store %arg6[%c0_121, %c0_122, %c0_123], %144 {strides = array<i32>} : memref<1x288x128xf32, #tpu.memory_space<vmem>>, vector<1x288x128xf32>,
    return
  }
  func.func @transform_0(%arg0: i32) -> (i32, i32, i32) {
    %c0_i32 = arith.constant 0 : i32
    %c0_i32_0 = arith.constant 0 : i32
    %c0_i32_1 = arith.constant 0 : i32
    return %arg0, %c0_i32, %c0_i32_0 : i32, i32, i32
  }
  func.func @transform_1(%arg0: i32) -> (i32, i32, i32) {
    %c0_i32 = arith.constant 0 : i32
    %c0_i32_0 = arith.constant 0 : i32
    %c0_i32_1 = arith.constant 0 : i32
    %c0_i32_2 = arith.constant 0 : i32
    return %c0_i32, %c0_i32_0, %c0_i32_1 : i32, i32, i32
  }
  func.func @transform_2(%arg0: i32) -> (i32, i32) {
    %c0_i32 = arith.constant 0 : i32
    %c0_i32_0 = arith.constant 0 : i32
    %c0_i32_1 = arith.constant 0 : i32
    return %c0_i32, %c0_i32_0 : i32, i32
  }
  func.func @transform_3(%arg0: i32) -> (i32, i32, i32) {
    %c0_i32 = arith.constant 0 : i32
    %c0_i32_0 = arith.constant 0 : i32
    %c0_i32_1 = arith.constant 0 : i32
    %c0_i32_2 = arith.constant 0 : i32
    return %c0_i32, %c0_i32_0, %c0_i32_1 : i32, i32, i32
  }
  func.func @transform_4(%arg0: i32) -> (i32, i32) {
    %c0_i32 = arith.constant 0 : i32
    %c0_i32_0 = arith.constant 0 : i32
    %c0_i32_1 = arith.constant 0 : i32
    return %c0_i32, %c0_i32_0 : i32, i32
  }
  func.func @transform_5(%arg0: i32) -> (i32, i32, i32) {
    %c0_i32 = arith.constant 0 : i32
    %c0_i32_0 = arith.constant 0 : i32
    %c0_i32_1 = arith.constant 0 : i32
    return %arg0, %c0_i32, %c0_i32_0 : i32, i32, i32
  }
}

</mosaic_0001>

<llo_original>
// kernel: basic_block_forward.1
$region0: #{basic_block_forward.1}
  #allocation0 [shape = 'u32[]', space=smem, size = 0x4, offset = 0x4, fixed_abs, tag = 'smem constant byte address 0x4 - core index']
  #allocation1 [shape = 'u32[144,128]{1,0:T(1,128)}', space=vmem, size = 0x12000, scoped, tag = 'internal scratch']
  #allocation2 [shape = 'bf16[342,128]{1,0:T(8,128)(2,1)}', space=vmem, size = 0x15800, scoped, tag = 'scratch operand']
  %s0 = inlined_call_operand.vmem [shape: bf16[2,342,128], index: 0, kind: input, shape index: {}]
  %s1 = inlined_call_operand.vmem [shape: bf16[9,128,128], index: 1, kind: input, shape index: {}]
  %s2 = inlined_call_operand.vmem [shape: f32[1,128], index: 2, kind: input, shape index: {}]
  %s3 = inlined_call_operand.vmem [shape: bf16[9,128,128], index: 3, kind: input, shape index: {}]
  %s4 = inlined_call_operand.vmem [shape: f32[1,128], index: 4, kind: input, shape index: {}]
  %s5 = inlined_call_operand.vmem [shape: f32[2,288,128], index: 5, kind: output, shape index: {}]
  %s6 = sld [smem:[#allocation0]]
  $region53: #{basic_block_forward.1} parent=0
    _
  %s8 = ssub.s32 1, %s6
  %s9 = scalar_select 0, %s8, %s6
  loop: start=0, step=1, limit=4
  $region2: #{basic_block_forward.1} parent=0 // loop_pre_header
    _
  $region3: #{basic_block_forward.1} parent=0 // loop_header
    %s11 = sphi 0, %s15
    %p12 = scmp.ge.s32.totalorder %s11, 4
    %s21 = sphi 0, %s23
    %s24 = sphi 0, %s21
    %s25 = sphi 0, %s24
    %s41 = sphi 0, %s25
    %s45 = sphi 0, %s45
    %s47 = sphi 0, %s45
    %s48 = sphi 0, %s47
    %s62 = sphi 0, %s48
    %s66 = sphi 0, %s66
    %s68 = sphi 0, %s66
    %s69 = sphi 0, %s68
    %s83 = sphi 0, %s69
    %s87 = sphi 0, %s87
    %s89 = sphi 0, %s87
    %s90 = sphi 0, %s89
    %s104 = sphi 0, %s90
    %s108 = sphi 0, %s108
    %s110 = sphi 0, %s108
    %s111 = sphi 0, %s110
    %s125 = sphi 0, %s111
    %s131 = sphi 0, %s133
    %s134 = sphi 0, %s131
    %s135 = sphi 0, %s134
    %s151 = sphi 0, %s135
  $region4: #{basic_block_forward.1} parent=0 // loop_header_branch
    %14 = sbr.rel (%p12) target = $region8
  $region5: #{basic_block_forward.1} parent=0 // loop_body
    %s16 = ssub.s32 %s11, 1
    %s17 = ssub.s32 %s11, 2
    %s18 = sadd.s32 %s11, 1
    %s19 = ssub.s32 %s11, %s18
    %p20 = scmp.eq.s32.totalorder %s19, 0
    %s22 = sadd.s32 %s21, 1
    %s23 = scalar_select %p20, %s21, %s22
    %p26 = pneg %p20
    %p27 = scmp.eq.s32.totalorder %s11, 1
    %p28 = por %p26, %p27
    %p29 = scmp.ne.s32.totalorder %s21, %s24
    %p30 = scmp.eq.s32.totalorder %s11, 0
    %p31 = por %p29, %p30
    %p32 = scmp.ne.s32.totalorder %s21, %s24
    %p33 = scmp.eq.s32.totalorder %s16, 1
    %p34 = por %p32, %p33
    %p35 = scmp.ne.s32.totalorder %s24, %s25
    %p36 = scmp.eq.s32.totalorder %s16, 0
    %p37 = por %p35, %p36
    %p38 = scmp.ne.s32.totalorder %s24, %s25
    %p39 = scmp.eq.s32.totalorder %s17, 1
    %p40 = por %p38, %p39
    %p42 = scmp.ne.s32.totalorder %s25, %s41
    %p43 = scmp.eq.s32.totalorder %s17, 0
    %p44 = por %p42, %p43
    %s46 = sadd.s32 %s45, 1
    %p49 = scmp.eq.s32.totalorder %s11, 1
    %p50 = scmp.ne.s32.totalorder %s45, %s47
    %p51 = scmp.eq.s32.totalorder %s11, 0
    %p52 = por %p50, %p51
    %p53 = scmp.ne.s32.totalorder %s45, %s47
    %p54 = scmp.eq.s32.totalorder %s16, 1
    %p55 = por %p53, %p54
    %p56 = scmp.ne.s32.totalorder %s47, %s48
    %p57 = scmp.eq.s32.totalorder %s16, 0
    %p58 = por %p56, %p57
    %p59 = scmp.ne.s32.totalorder %s47, %s48
    %p60 = scmp.eq.s32.totalorder %s17, 1
    %p61 = por %p59, %p60
    %p63 = scmp.ne.s32.totalorder %s48, %s62
    %p64 = scmp.eq.s32.totalorder %s17, 0
    %p65 = por %p63, %p64
    %s67 = sadd.s32 %s66, 1
    %p70 = scmp.eq.s32.totalorder %s11, 1
    %p71 = scmp.ne.s32.totalorder %s66, %s68
    %p72 = scmp.eq.s32.totalorder %s11, 0
    %p73 = por %p71, %p72
    %p74 = scmp.ne.s32.totalorder %s66, %s68
    %p75 = scmp.eq.s32.totalorder %s16, 1
    %p76 = por %p74, %p75
    %p77 = scmp.ne.s32.totalorder %s68, %s69
    %p78 = scmp.eq.s32.totalorder %s16, 0
    %p79 = por %p77, %p78
    %p80 = scmp.ne.s32.totalorder %s68, %s69
    %p81 = scmp.eq.s32.totalorder %s17, 1
    %p82 = por %p80, %p81
    %p84 = scmp.ne.s32.totalorder %s69, %s83
    %p85 = scmp.eq.s32.totalorder %s17, 0
    %p86 = por %p84, %p85
    %s88 = sadd.s32 %s87, 1
    %p91 = scmp.eq.s32.totalorder %s11, 1
    %p92 = scmp.ne.s32.totalorder %s87, %s89
    %p93 = scmp.eq.s32.totalorder %s11, 0
    %p94 = por %p92, %p93
    %p95 = scmp.ne.s32.totalorder %s87, %s89
    %p96 = scmp.eq.s32.totalorder %s16, 1
    %p97 = por %p95, %p96
    %p98 = scmp.ne.s32.totalorder %s89, %s90
    %p99 = scmp.eq.s32.totalorder %s16, 0
    %p100 = por %p98, %p99
    %p101 = scmp.ne.s32.totalorder %s89, %s90
    %p102 = scmp.eq.s32.totalorder %s17, 1
    %p103 = por %p101, %p102
    %p105 = scmp.ne.s32.totalorder %s90, %s104
    %p106 = scmp.eq.s32.totalorder %s17, 0
    %p107 = por %p105, %p106
    %s109 = sadd.s32 %s108, 1
    %p112 = scmp.eq.s32.totalorder %s11, 1
    %p113 = scmp.ne.s32.totalorder %s108, %s110
    %p114 = scmp.eq.s32.totalorder %s11, 0
    %p115 = por %p113, %p114
    %p116 = scmp.ne.s32.totalorder %s108, %s110
    %p117 = scmp.eq.s32.totalorder %s16, 1
    %p118 = por %p116, %p117
    %p119 = scmp.ne.s32.totalorder %s110, %s111
    %p120 = scmp.eq.s32.totalorder %s16, 0
    %p121 = por %p119, %p120
    %p122 = scmp.ne.s32.totalorder %s110, %s111
    %p123 = scmp.eq.s32.totalorder %s17, 1
    %p124 = por %p122, %p123
    %p126 = scmp.ne.s32.totalorder %s111, %s125
    %p127 = scmp.eq.s32.totalorder %s17, 0
    %p128 = por %p126, %p127
    %s129 = ssub.s32 %s11, %s18
    %p130 = scmp.eq.s32.totalorder %s129, 0
    %s132 = sadd.s32 %s131, 1
    %s133 = scalar_select %p130, %s131, %s132
    %p136 = pneg %p130
    %p137 = scmp.eq.s32.totalorder %s11, 1
    %p138 = por %p136, %p137
    %p139 = scmp.ne.s32.totalorder %s131, %s134
    %p140 = scmp.eq.s32.totalorder %s11, 0
    %p141 = por %p139, %p140
    %p142 = scmp.ne.s32.totalorder %s131, %s134
    %p143 = scmp.eq.s32.totalorder %s16, 1
    %p144 = por %p142, %p143
    %p145 = scmp.ne.s32.totalorder %s134, %s135
    %p146 = scmp.eq.s32.totalorder %s16, 0
    %p147 = por %p145, %p146
    %p148 = scmp.ne.s32.totalorder %s134, %s135
    %p149 = scmp.eq.s32.totalorder %s17, 1
    %p150 = por %p148, %p149
    %p152 = scmp.ne.s32.totalorder %s135, %s151
    %p153 = scmp.eq.s32.totalorder %s17, 0
    %p154 = por %p152, %p153
    %p155 = scmp.le.s32.totalorder 1, %s11
    %p156 = scmp.lt.s32.totalorder %s11, 3
    %p157 = pnand %p155, %p156
    %p158 = pneg %p157
    // Predicated region
    $region9: #{basic_block_forward.1} parent=5 // pred_check
      _
    $region10: #{basic_block_forward.1} parent=5 // pred_check_branch
      %160 = sbr.rel (%p157) target = $region12
    $region11: #{basic_block_forward.1} parent=5 // pred_region
      %s161 = ssub.s32 %s11, 1
      // Predicated region
      $region13: #{basic_block_forward.1} parent=11 // pred_check
        %p162 = pneg %p58
      $region14: #{basic_block_forward.1} parent=11 // pred_check_branch
        %164 = sbr.rel (%p162) target = $region16
      $region15: #{basic_block_forward.1} parent=11 // pred_region
        _
      $region16: #{basic_block_forward.1} parent=11 // pred_fallthru
        _
      // Predicated region
      $region17: #{basic_block_forward.1} parent=11 // pred_check
        %p165 = pneg %p79
      $region18: #{basic_block_forward.1} parent=11 // pred_check_branch
        %167 = sbr.rel (%p165) target = $region20
      $region19: #{basic_block_forward.1} parent=11 // pred_region
        _
      $region20: #{basic_block_forward.1} parent=11 // pred_fallthru
        _
      // Predicated region
      $region21: #{basic_block_forward.1} parent=11 // pred_check
        %p168 = pneg %p100
      $region22: #{basic_block_forward.1} parent=11 // pred_check_branch
        %170 = sbr.rel (%p168) target = $region24
      $region23: #{basic_block_forward.1} parent=11 // pred_region
        _
      $region24: #{basic_block_forward.1} parent=11 // pred_fallthru
        _
      // Predicated region
      $region25: #{basic_block_forward.1} parent=11 // pred_check
        %p171 = pneg %p121
      $region26: #{basic_block_forward.1} parent=11 // pred_check_branch
        %173 = sbr.rel (%p171) target = $region28
      $region27: #{basic_block_forward.1} parent=11 // pred_region
        _
      $region28: #{basic_block_forward.1} parent=11 // pred_fallthru
        _
    $region12: #{basic_block_forward.1} parent=5 // pred_fallthru
      _
    %p174 = scmp.lt.s32.totalorder %s11, 2
    // Predicated region
    $region29: #{basic_block_forward.1} parent=5 // pred_check
      %p175 = pneg %p174
    $region30: #{basic_block_forward.1} parent=5 // pred_check_branch
      %177 = sbr.rel (%p175) target = $region32
    $region31: #{basic_block_forward.1} parent=5 // pred_region
      // Predicated region
      $region33: #{basic_block_forward.1} parent=31 // pred_check
        %p178 = pneg %p31
      $region34: #{basic_block_forward.1} parent=31 // pred_check_branch
        %180 = sbr.rel (%p178) target = $region36
      $region35: #{basic_block_forward.1} parent=31 // pred_region
        %p181 = scmp.lt.s32.totalorder %s11, 1
        %s182 = scalar_select %p181, %s11, 1
        %s183 = smul.addr %s182, 43
        %s184 = smul.addr %s183, 4
        %s185 = scalar_lea.vmem %s0, %s184
      $region36: #{basic_block_forward.1} parent=31 // pred_fallthru
        _
    $region32: #{basic_block_forward.1} parent=5 // pred_fallthru
      _
    %p186 = scmp.le.s32.totalorder 1, %s11
    %p187 = scmp.lt.s32.totalorder %s11, 3
    %p188 = pnand %p186, %p187
    %p189 = pneg %p188
    // Predicated region
    $region37: #{basic_block_forward.1} parent=5 // pred_check
      _
    $region38: #{basic_block_forward.1} parent=5 // pred_check_branch
      %191 = sbr.rel (%p188) target = $region40
    $region39: #{basic_block_forward.1} parent=5 // pred_region
      %s192 = ssub.s32 %s11, 1
      %p193 = scmp.lt.s32.totalorder %s16, 1
      %s194 = scalar_select %p193, %s16, 1
      %s195 = smul.addr %s194, 43
      %s196 = smul.addr %s195, 4
      %s197 = scalar_lea.vmem %s0, %s196
      %p198 = pneg %p37
      %p199 = pneg %p34
      %p200 = pneg %p58
      %p201 = pneg %p55
      %p202 = pneg %p79
      %p203 = pneg %p76
      %p204 = pneg %p100
      %p205 = pneg %p97
      %p206 = pneg %p121
      %p207 = pneg %p118
      %p208 = pneg %p147
      %p209 = pneg %p144
      %p210 = scmp.lt.s32.totalorder %s16, 1
      %s211 = scalar_select %p210, %s16, 1
      %s212 = smul.addr %s211, 36
      %s213 = smul.addr %s212, 8
      %s214 = scalar_lea.vmem %s5, %s213
      %p215 = scmp.lt.s32.totalorder %s16, 1
      %s216 = scalar_select %p215, %s16, 1
      %s217 = smul.addr %s216, 43
      %s218 = smul.addr %s217, 4
      %s219 = scalar_lea.vmem %s0, %s218
      %p220 = scmp.lt.s32.totalorder %s16, 1
      %s221 = scalar_select %p220, %s16, 1
      %s222 = smul.addr %s221, 36
      %s223 = smul.addr %s222, 8
      %s224 = scalar_lea.vmem %s5, %s223
      %v226 = vlaneseq
      %v227 = vshrl.u32 %v226, 7
      %v228 = vadd.s32 %v227, 8
      %v229 = vadd.s32 %v227, 16
      %v230 = vadd.s32 %v227, 24
      %v231 = vadd.s32 %v227, 32
      %v232 = vadd.s32 %v227, 40
      %v233 = vadd.s32 %v227, 48
      %v234 = vadd.s32 %v227, 56
      %v235 = vadd.s32 %v227, 64
      %v236 = vadd.s32 %v227, 72
      %v237 = vadd.s32 %v227, 80
      %v238 = vadd.s32 %v227, 88
      %v239 = vadd.s32 %v227, 96
      %v240 = vadd.s32 %v227, 104
      %v241 = vadd.s32 %v227, 112
      %v242 = vadd.s32 %v227, 120
      %v243 = vadd.s32 %v227, 128
      %v244 = vadd.s32 %v227, 136
      %v245 = vadd.s32 %v227, 144
      %v246 = vadd.s32 %v227, 152
      %v247 = vadd.s32 %v227, 160
      %v248 = vadd.s32 %v227, 168
      %v249 = vadd.s32 %v227, 176
      %v250 = vadd.s32 %v227, 184
      %v251 = vadd.s32 %v227, 192
      %v252 = vadd.s32 %v227, 200
      %v253 = vadd.s32 %v227, 208
      %v254 = vadd.s32 %v227, 216
      %v255 = vadd.s32 %v227, 224
      %v256 = vadd.s32 %v227, 232
      %v257 = vadd.s32 %v227, 240
      %v258 = vadd.s32 %v227, 248
      %v259 = vadd.s32 %v227, 256
      %v260 = vadd.s32 %v227, 264
      %v261 = vadd.s32 %v227, 272
      %v262 = vadd.s32 %v227, 280
      %vm263 = vcmp.lt.s32.totalorder %v227, 0
      %v264 = vsub.s32 0, %v227
      %v265 = vsel %vm263, %v264, %v227
      %v266 = vmul.u32.u64.compose %v265, 3817748708
      %v267 = vextract.low.u32 %v266
      %v268 = vextract.high.u32 %v266
      %v269 = vshrl.u32 %v268, 4
      %v270 = vmul.u32 %v269, 18
      %v271 = vsub.s32 %v265, %v270
      %v272 = vsub.s32 0, %v271
      %v273 = vsel %vm263, %v272, %v271
      %vm274 = vcmp.lt.s32.totalorder %v228, 0
      %v275 = vsub.s32 0, %v228
      %v276 = vsel %vm274, %v275, %v228
      %v277 = vmul.u32.u64.compose %v276, 3817748708
      %v278 = vextract.low.u32 %v277
      %v279 = vextract.high.u32 %v277
      %v280 = vshrl.u32 %v279, 4
      %v281 = vmul.u32 %v280, 18
      %v282 = vsub.s32 %v276, %v281
      %v283 = vsub.s32 0, %v282
      %v284 = vsel %vm274, %v283, %v282
      %vm285 = vcmp.lt.s32.totalorder %v229, 0
      %v286 = vsub.s32 0, %v229
      %v287 = vsel %vm285, %v286, %v229
      %v288 = vmul.u32.u64.compose %v287, 3817748708
      %v289 = vextract.low.u32 %v288
      %v290 = vextract.high.u32 %v288
      %v291 = vshrl.u32 %v290, 4
      %v292 = vmul.u32 %v291, 18
      %v293 = vsub.s32 %v287, %v292
      %v294 = vsub.s32 0, %v293
      %v295 = vsel %vm285, %v294, %v293
      %vm296 = vcmp.lt.s32.totalorder %v230, 0
      %v297 = vsub.s32 0, %v230
      %v298 = vsel %vm296, %v297, %v230
      %v299 = vmul.u32.u64.compose %v298, 3817748708
      %v300 = vextract.low.u32 %v299
      %v301 = vextract.high.u32 %v299
      %v302 = vshrl.u32 %v301, 4
      %v303 = vmul.u32 %v302, 18
      %v304 = vsub.s32 %v298, %v303
      %v305 = vsub.s32 0, %v304
      %v306 = vsel %vm296, %v305, %v304
      %vm307 = vcmp.lt.s32.totalorder %v231, 0
      %v308 = vsub.s32 0, %v231
      %v309 = vsel %vm307, %v308, %v231
      %v310 = vmul.u32.u64.compose %v309, 3817748708
      %v311 = vextract.low.u32 %v310
      %v312 = vextract.high.u32 %v310
      %v313 = vshrl.u32 %v312, 4
      %v314 = vmul.u32 %v313, 18
      %v315 = vsub.s32 %v309, %v314
      %v316 = vsub.s32 0, %v315
      %v317 = vsel %vm307, %v316, %v315
      %vm318 = vcmp.lt.s32.totalorder %v232, 0
      %v319 = vsub.s32 0, %v232
      %v320 = vsel %vm318, %v319, %v232
      %v321 = vmul.u32.u64.compose %v320, 3817748708
      %v322 = vextract.low.u32 %v321
      %v323 = vextract.high.u32 %v321
      %v324 = vshrl.u32 %v323, 4
      %v325 = vmul.u32 %v324, 18
      %v326 = vsub.s32 %v320, %v325
      %v327 = vsub.s32 0, %v326
      %v328 = vsel %vm318, %v327, %v326
      %vm329 = vcmp.lt.s32.totalorder %v233, 0
      %v330 = vsub.s32 0, %v233
      %v331 = vsel %vm329, %v330, %v233
      %v332 = vmul.u32.u64.compose %v331, 3817748708
      %v333 = vextract.low.u32 %v332
      %v334 = vextract.high.u32 %v332
      %v335 = vshrl.u32 %v334, 4
      %v336 = vmul.u32 %v335, 18
      %v337 = vsub.s32 %v331, %v336
      %v338 = vsub.s32 0, %v337
      %v339 = vsel %vm329, %v338, %v337
      %vm340 = vcmp.lt.s32.totalorder %v234, 0
      %v341 = vsub.s32 0, %v234
      %v342 = vsel %vm340, %v341, %v234
      %v343 = vmul.u32.u64.compose %v342, 3817748708
      %v344 = vextract.low.u32 %v343
      %v345 = vextract.high.u32 %v343
      %v346 = vshrl.u32 %v345, 4
      %v347 = vmul.u32 %v346, 18
      %v348 = vsub.s32 %v342, %v347
      %v349 = vsub.s32 0, %v348
      %v350 = vsel %vm340, %v349, %v348
      %vm351 = vcmp.lt.s32.totalorder %v235, 0
      %v352 = vsub.s32 0, %v235
      %v353 = vsel %vm351, %v352, %v235
      %v354 = vmul.u32.u64.compose %v353, 3817748708
      %v355 = vextract.low.u32 %v354
      %v356 = vextract.high.u32 %v354
      %v357 = vshrl.u32 %v356, 4
      %v358 = vmul.u32 %v357, 18
      %v359 = vsub.s32 %v353, %v358
      %v360 = vsub.s32 0, %v359
      %v361 = vsel %vm351, %v360, %v359
      %vm362 = vcmp.lt.s32.totalorder %v236, 0
      %v363 = vsub.s32 0, %v236
      %v364 = vsel %vm362, %v363, %v236
      %v365 = vmul.u32.u64.compose %v364, 3817748708
      %v366 = vextract.low.u32 %v365
      %v367 = vextract.high.u32 %v365
      %v368 = vshrl.u32 %v367, 4
      %v369 = vmul.u32 %v368, 18
      %v370 = vsub.s32 %v364, %v369
      %v371 = vsub.s32 0, %v370
      %v372 = vsel %vm362, %v371, %v370
      %vm373 = vcmp.lt.s32.totalorder %v237, 0
      %v374 = vsub.s32 0, %v237
      %v375 = vsel %vm373, %v374, %v237
      %v376 = vmul.u32.u64.compose %v375, 3817748708
      %v377 = vextract.low.u32 %v376
      %v378 = vextract.high.u32 %v376
      %v379 = vshrl.u32 %v378, 4
      %v380 = vmul.u32 %v379, 18
      %v381 = vsub.s32 %v375, %v380
      %v382 = vsub.s32 0, %v381
      %v383 = vsel %vm373, %v382, %v381
      %vm384 = vcmp.lt.s32.totalorder %v238, 0
      %v385 = vsub.s32 0, %v238
      %v386 = vsel %vm384, %v385, %v238
      %v387 = vmul.u32.u64.compose %v386, 3817748708
      %v388 = vextract.low.u32 %v387
      %v389 = vextract.high.u32 %v387
      %v390 = vshrl.u32 %v389, 4
      %v391 = vmul.u32 %v390, 18
      %v392 = vsub.s32 %v386, %v391
      %v393 = vsub.s32 0, %v392
      %v394 = vsel %vm384, %v393, %v392
      %vm395 = vcmp.lt.s32.totalorder %v239, 0
      %v396 = vsub.s32 0, %v239
      %v397 = vsel %vm395, %v396, %v239
      %v398 = vmul.u32.u64.compose %v397, 3817748708
      %v399 = vextract.low.u32 %v398
      %v400 = vextract.high.u32 %v398
      %v401 = vshrl.u32 %v400, 4
      %v402 = vmul.u32 %v401, 18
      %v403 = vsub.s32 %v397, %v402
      %v404 = vsub.s32 0, %v403
      %v405 = vsel %vm395, %v404, %v403
      %vm406 = vcmp.lt.s32.totalorder %v240, 0
      %v407 = vsub.s32 0, %v240
      %v408 = vsel %vm406, %v407, %v240
      %v409 = vmul.u32.u64.compose %v408, 3817748708
      %v410 = vextract.low.u32 %v409
      %v411 = vextract.high.u32 %v409
      %v412 = vshrl.u32 %v411, 4
      %v413 = vmul.u32 %v412, 18
      %v414 = vsub.s32 %v408, %v413
      %v415 = vsub.s32 0, %v414
      %v416 = vsel %vm406, %v415, %v414
      %vm417 = vcmp.lt.s32.totalorder %v241, 0
      %v418 = vsub.s32 0, %v241
      %v419 = vsel %vm417, %v418, %v241
      %v420 = vmul.u32.u64.compose %v419, 3817748708
      %v421 = vextract.low.u32 %v420
      %v422 = vextract.high.u32 %v420
      %v423 = vshrl.u32 %v422, 4
      %v424 = vmul.u32 %v423, 18
      %v425 = vsub.s32 %v419, %v424
      %v426 = vsub.s32 0, %v425
      %v427 = vsel %vm417, %v426, %v425
      %vm428 = vcmp.lt.s32.totalorder %v242, 0
      %v429 = vsub.s32 0, %v242
      %v430 = vsel %vm428, %v429, %v242
      %v431 = vmul.u32.u64.compose %v430, 3817748708
      %v432 = vextract.low.u32 %v431
      %v433 = vextract.high.u32 %v431
      %v434 = vshrl.u32 %v433, 4
      %v435 = vmul.u32 %v434, 18
      %v436 = vsub.s32 %v430, %v435
      %v437 = vsub.s32 0, %v436
      %v438 = vsel %vm428, %v437, %v436
      %vm439 = vcmp.lt.s32.totalorder %v243, 0
      %v440 = vsub.s32 0, %v243
      %v441 = vsel %vm439, %v440, %v243
      %v442 = vmul.u32.u64.compose %v441, 3817748708
      %v443 = vextract.low.u32 %v442
      %v444 = vextract.high.u32 %v442
      %v445 = vshrl.u32 %v444, 4
      %v446 = vmul.u32 %v445, 18
      %v447 = vsub.s32 %v441, %v446
      %v448 = vsub.s32 0, %v447
      %v449 = vsel %vm439, %v448, %v447
      %vm450 = vcmp.lt.s32.totalorder %v244, 0
      %v451 = vsub.s32 0, %v244
      %v452 = vsel %vm450, %v451, %v244
      %v453 = vmul.u32.u64.compose %v452, 3817748708
      %v454 = vextract.low.u32 %v453
      %v455 = vextract.high.u32 %v453
      %v456 = vshrl.u32 %v455, 4
      %v457 = vmul.u32 %v456, 18
      %v458 = vsub.s32 %v452, %v457
      %v459 = vsub.s32 0, %v458
      %v460 = vsel %vm450, %v459, %v458
      %vm461 = vcmp.lt.s32.totalorder %v245, 0
      %v462 = vsub.s32 0, %v245
      %v463 = vsel %vm461, %v462, %v245
      %v464 = vmul.u32.u64.compose %v463, 3817748708
      %v465 = vextract.low.u32 %v464
      %v466 = vextract.high.u32 %v464
      %v467 = vshrl.u32 %v466, 4
      %v468 = vmul.u32 %v467, 18
      %v469 = vsub.s32 %v463, %v468
      %v470 = vsub.s32 0, %v469
      %v471 = vsel %vm461, %v470, %v469
      %vm472 = vcmp.lt.s32.totalorder %v246, 0
      %v473 = vsub.s32 0, %v246
      %v474 = vsel %vm472, %v473, %v246
      %v475 = vmul.u32.u64.compose %v474, 3817748708
      %v476 = vextract.low.u32 %v475
      %v477 = vextract.high.u32 %v475
      %v478 = vshrl.u32 %v477, 4
      %v479 = vmul.u32 %v478, 18
      %v480 = vsub.s32 %v474, %v479
      %v481 = vsub.s32 0, %v480
      %v482 = vsel %vm472, %v481, %v480
      %vm483 = vcmp.lt.s32.totalorder %v247, 0
      %v484 = vsub.s32 0, %v247
      %v485 = vsel %vm483, %v484, %v247
      %v486 = vmul.u32.u64.compose %v485, 3817748708
      %v487 = vextract.low.u32 %v486
      %v488 = vextract.high.u32 %v486
      %v489 = vshrl.u32 %v488, 4
      %v490 = vmul.u32 %v489, 18
      %v491 = vsub.s32 %v485, %v490
      %v492 = vsub.s32 0, %v491
      %v493 = vsel %vm483, %v492, %v491
      %vm494 = vcmp.lt.s32.totalorder %v248, 0
      %v495 = vsub.s32 0, %v248
      %v496 = vsel %vm494, %v495, %v248
      %v497 = vmul.u32.u64.compose %v496, 3817748708
      %v498 = vextract.low.u32 %v497
      %v499 = vextract.high.u32 %v497
      %v500 = vshrl.u32 %v499, 4
      %v501 = vmul.u32 %v500, 18
      %v502 = vsub.s32 %v496, %v501
      %v503 = vsub.s32 0, %v502
      %v504 = vsel %vm494, %v503, %v502
      %vm505 = vcmp.lt.s32.totalorder %v249, 0
      %v506 = vsub.s32 0, %v249
      %v507 = vsel %vm505, %v506, %v249
      %v508 = vmul.u32.u64.compose %v507, 3817748708
      %v509 = vextract.low.u32 %v508
      %v510 = vextract.high.u32 %v508
      %v511 = vshrl.u32 %v510, 4
      %v512 = vmul.u32 %v511, 18
      %v513 = vsub.s32 %v507, %v512
      %v514 = vsub.s32 0, %v513
      %v515 = vsel %vm505, %v514, %v513
      %vm516 = vcmp.lt.s32.totalorder %v250, 0
      %v517 = vsub.s32 0, %v250
      %v518 = vsel %vm516, %v517, %v250
      %v519 = vmul.u32.u64.compose %v518, 3817748708
      %v520 = vextract.low.u32 %v519
      %v521 = vextract.high.u32 %v519
      %v522 = vshrl.u32 %v521, 4
      %v523 = vmul.u32 %v522, 18
      %v524 = vsub.s32 %v518, %v523
      %v525 = vsub.s32 0, %v524
      %v526 = vsel %vm516, %v525, %v524
      %vm527 = vcmp.lt.s32.totalorder %v251, 0
      %v528 = vsub.s32 0, %v251
      %v529 = vsel %vm527, %v528, %v251
      %v530 = vmul.u32.u64.compose %v529, 3817748708
      %v531 = vextract.low.u32 %v530
      %v532 = vextract.high.u32 %v530
      %v533 = vshrl.u32 %v532, 4
      %v534 = vmul.u32 %v533, 18
      %v535 = vsub.s32 %v529, %v534
      %v536 = vsub.s32 0, %v535
      %v537 = vsel %vm527, %v536, %v535
      %vm538 = vcmp.lt.s32.totalorder %v252, 0
      %v539 = vsub.s32 0, %v252
      %v540 = vsel %vm538, %v539, %v252
      %v541 = vmul.u32.u64.compose %v540, 3817748708
      %v542 = vextract.low.u32 %v541
      %v543 = vextract.high.u32 %v541
      %v544 = vshrl.u32 %v543, 4
      %v545 = vmul.u32 %v544, 18
      %v546 = vsub.s32 %v540, %v545
      %v547 = vsub.s32 0, %v546
      %v548 = vsel %vm538, %v547, %v546
      %vm549 = vcmp.lt.s32.totalorder %v253, 0
      %v550 = vsub.s32 0, %v253
      %v551 = vsel %vm549, %v550, %v253
      %v552 = vmul.u32.u64.compose %v551, 3817748708
      %v553 = vextract.low.u32 %v552
      %v554 = vextract.high.u32 %v552
      %v555 = vshrl.u32 %v554, 4
      %v556 = vmul.u32 %v555, 18
      %v557 = vsub.s32 %v551, %v556
      %v558 = vsub.s32 0, %v557
      %v559 = vsel %vm549, %v558, %v557
      %vm560 = vcmp.lt.s32.totalorder %v254, 0
      %v561 = vsub.s32 0, %v254
      %v562 = vsel %vm560, %v561, %v254
      %v563 = vmul.u32.u64.compose %v562, 3817748708
      %v564 = vextract.low.u32 %v563
      %v565 = vextract.high.u32 %v563
      %v566 = vshrl.u32 %v565, 4
      %v567 = vmul.u32 %v566, 18
      %v568 = vsub.s32 %v562, %v567
      %v569 = vsub.s32 0, %v568
      %v570 = vsel %vm560, %v569, %v568
      %vm571 = vcmp.lt.s32.totalorder %v255, 0
      %v572 = vsub.s32 0, %v255
      %v573 = vsel %vm571, %v572, %v255
      %v574 = vmul.u32.u64.compose %v573, 3817748708
      %v575 = vextract.low.u32 %v574
      %v576 = vextract.high.u32 %v574
      %v577 = vshrl.u32 %v576, 4
      %v578 = vmul.u32 %v577, 18
      %v579 = vsub.s32 %v573, %v578
      %v580 = vsub.s32 0, %v579
      %v581 = vsel %vm571, %v580, %v579
      %vm582 = vcmp.lt.s32.totalorder %v256, 0
      %v583 = vsub.s32 0, %v256
      %v584 = vsel %vm582, %v583, %v256
      %v585 = vmul.u32.u64.compose %v584, 3817748708
      %v586 = vextract.low.u32 %v585
      %v587 = vextract.high.u32 %v585
      %v588 = vshrl.u32 %v587, 4
      %v589 = vmul.u32 %v588, 18
      %v590 = vsub.s32 %v584, %v589
      %v591 = vsub.s32 0, %v590
      %v592 = vsel %vm582, %v591, %v590
      %vm593 = vcmp.lt.s32.totalorder %v257, 0
      %v594 = vsub.s32 0, %v257
      %v595 = vsel %vm593, %v594, %v257
      %v596 = vmul.u32.u64.compose %v595, 3817748708
      %v597 = vextract.low.u32 %v596
      %v598 = vextract.high.u32 %v596
      %v599 = vshrl.u32 %v598, 4
      %v600 = vmul.u32 %v599, 18
      %v601 = vsub.s32 %v595, %v600
      %v602 = vsub.s32 0, %v601
      %v603 = vsel %vm593, %v602, %v601
      %vm604 = vcmp.lt.s32.totalorder %v258, 0
      %v605 = vsub.s32 0, %v258
      %v606 = vsel %vm604, %v605, %v258
      %v607 = vmul.u32.u64.compose %v606, 3817748708
      %v608 = vextract.low.u32 %v607
      %v609 = vextract.high.u32 %v607
      %v610 = vshrl.u32 %v609, 4
      %v611 = vmul.u32 %v610, 18
      %v612 = vsub.s32 %v606, %v611
      %v613 = vsub.s32 0, %v612
      %v614 = vsel %vm604, %v613, %v612
      %vm615 = vcmp.lt.s32.totalorder %v259, 0
      %v616 = vsub.s32 0, %v259
      %v617 = vsel %vm615, %v616, %v259
      %v618 = vmul.u32.u64.compose %v617, 3817748708
      %v619 = vextract.low.u32 %v618
      %v620 = vextract.high.u32 %v618
      %v621 = vshrl.u32 %v620, 4
      %v622 = vmul.u32 %v621, 18
      %v623 = vsub.s32 %v617, %v622
      %v624 = vsub.s32 0, %v623
      %v625 = vsel %vm615, %v624, %v623
      %vm626 = vcmp.lt.s32.totalorder %v260, 0
      %v627 = vsub.s32 0, %v260
      %v628 = vsel %vm626, %v627, %v260
      %v629 = vmul.u32.u64.compose %v628, 3817748708
      %v630 = vextract.low.u32 %v629
      %v631 = vextract.high.u32 %v629
      %v632 = vshrl.u32 %v631, 4
      %v633 = vmul.u32 %v632, 18
      %v634 = vsub.s32 %v628, %v633
      %v635 = vsub.s32 0, %v634
      %v636 = vsel %vm626, %v635, %v634
      %vm637 = vcmp.lt.s32.totalorder %v261, 0
      %v638 = vsub.s32 0, %v261
      %v639 = vsel %vm637, %v638, %v261
      %v640 = vmul.u32.u64.compose %v639, 3817748708
      %v641 = vextract.low.u32 %v640
      %v642 = vextract.high.u32 %v640
      %v643 = vshrl.u32 %v642, 4
      %v644 = vmul.u32 %v643, 18
      %v645 = vsub.s32 %v639, %v644
      %v646 = vsub.s32 0, %v645
      %v647 = vsel %vm637, %v646, %v645
      %vm648 = vcmp.lt.s32.totalorder %v262, 0
      %v649 = vsub.s32 0, %v262
      %v650 = vsel %vm648, %v649, %v262
      %v651 = vmul.u32.u64.compose %v650, 3817748708
      %v652 = vextract.low.u32 %v651
      %v653 = vextract.high.u32 %v651
      %v654 = vshrl.u32 %v653, 4
      %v655 = vmul.u32 %v654, 18
      %v656 = vsub.s32 %v650, %v655
      %v657 = vsub.s32 0, %v656
      %v658 = vsel %vm648, %v657, %v656
      %vm659 = vcmp.ne.s32.totalorder %v273, 0
      %vm660 = vcmp.ne.s32.totalorder %v284, 0
      %vm661 = vcmp.ne.s32.totalorder %v295, 0
      %vm662 = vcmp.ne.s32.totalorder %v306, 0
      %vm663 = vcmp.ne.s32.totalorder %v317, 0
      %vm664 = vcmp.ne.s32.totalorder %v328, 0
      %vm665 = vcmp.ne.s32.totalorder %v339, 0
      %vm666 = vcmp.ne.s32.totalorder %v350, 0
      %vm667 = vcmp.ne.s32.totalorder %v361, 0
      %vm668 = vcmp.ne.s32.totalorder %v372, 0
      %vm669 = vcmp.ne.s32.totalorder %v383, 0
      %vm670 = vcmp.ne.s32.totalorder %v394, 0
      %vm671 = vcmp.ne.s32.totalorder %v405, 0
      %vm672 = vcmp.ne.s32.totalorder %v416, 0
      %vm673 = vcmp.ne.s32.totalorder %v427, 0
      %vm674 = vcmp.ne.s32.totalorder %v438, 0
      %vm675 = vcmp.ne.s32.totalorder %v449, 0
      %vm676 = vcmp.ne.s32.totalorder %v460, 0
      %vm677 = vcmp.ne.s32.totalorder %v471, 0
      %vm678 = vcmp.ne.s32.totalorder %v482, 0
      %vm679 = vcmp.ne.s32.totalorder %v493, 0
      %vm680 = vcmp.ne.s32.totalorder %v504, 0
      %vm681 = vcmp.ne.s32.totalorder %v515, 0
      %vm682 = vcmp.ne.s32.totalorder %v526, 0
      %vm683 = vcmp.ne.s32.totalorder %v537, 0
      %vm684 = vcmp.ne.s32.totalorder %v548, 0
      %vm685 = vcmp.ne.s32.totalorder %v559, 0
      %vm686 = vcmp.ne.s32.totalorder %v570, 0
      %vm687 = vcmp.ne.s32.totalorder %v581, 0
      %vm688 = vcmp.ne.s32.totalorder %v592, 0
      %vm689 = vcmp.ne.s32.totalorder %v603, 0
      %vm690 = vcmp.ne.s32.totalorder %v614, 0
      %vm691 = vcmp.ne.s32.totalorder %v625, 0
      %vm692 = vcmp.ne.s32.totalorder %v636, 0
      %vm693 = vcmp.ne.s32.totalorder %v647, 0
      %vm694 = vcmp.ne.s32.totalorder %v658, 0
      %vm695 = vcmp.lt.s32.totalorder %v273, 0
      %vm696 = vcmp.lt.s32.totalorder %v284, 0
      %vm697 = vcmp.lt.s32.totalorder %v295, 0
      %vm698 = vcmp.lt.s32.totalorder %v306, 0
      %vm699 = vcmp.lt.s32.totalorder %v317, 0
      %vm700 = vcmp.lt.s32.totalorder %v328, 0
      %vm701 = vcmp.lt.s32.totalorder %v339, 0
      %vm702 = vcmp.lt.s32.totalorder %v350, 0
      %vm703 = vcmp.lt.s32.totalorder %v361, 0
      %vm704 = vcmp.lt.s32.totalorder %v372, 0
      %vm705 = vcmp.lt.s32.totalorder %v383, 0
      %vm706 = vcmp.lt.s32.totalorder %v394, 0
      %vm707 = vcmp.lt.s32.totalorder %v405, 0
      %vm708 = vcmp.lt.s32.totalorder %v416, 0
      %vm709 = vcmp.lt.s32.totalorder %v427, 0
      %vm710 = vcmp.lt.s32.totalorder %v438, 0
      %vm711 = vcmp.lt.s32.totalorder %v449, 0
      %vm712 = vcmp.lt.s32.totalorder %v460, 0
      %vm713 = vcmp.lt.s32.totalorder %v471, 0
      %vm714 = vcmp.lt.s32.totalorder %v482, 0
      %vm715 = vcmp.lt.s32.totalorder %v493, 0
      %vm716 = vcmp.lt.s32.totalorder %v504, 0
      %vm717 = vcmp.lt.s32.totalorder %v515, 0
      %vm718 = vcmp.lt.s32.totalorder %v526, 0
      %vm719 = vcmp.lt.s32.totalorder %v537, 0
      %vm720 = vcmp.lt.s32.totalorder %v548, 0
      %vm721 = vcmp.lt.s32.totalorder %v559, 0
      %vm722 = vcmp.lt.s32.totalorder %v570, 0
      %vm723 = vcmp.lt.s32.totalorder %v581, 0
      %vm724 = vcmp.lt.s32.totalorder %v592, 0
      %vm725 = vcmp.lt.s32.totalorder %v603, 0
      %vm726 = vcmp.lt.s32.totalorder %v614, 0
      %vm727 = vcmp.lt.s32.totalorder %v625, 0
      %vm728 = vcmp.lt.s32.totalorder %v636, 0
      %vm729 = vcmp.lt.s32.totalorder %v647, 0
      %vm730 = vcmp.lt.s32.totalorder %v658, 0
      %vm731 = vmand %vm695, %vm659
      %vm732 = vmand %vm696, %vm660
      %vm733 = vmand %vm697, %vm661
      %vm734 = vmand %vm698, %vm662
      %vm735 = vmand %vm699, %vm663
      %vm736 = vmand %vm700, %vm664
      %vm737 = vmand %vm701, %vm665
      %vm738 = vmand %vm702, %vm666
      %vm739 = vmand %vm703, %vm667
      %vm740 = vmand %vm704, %vm668
      %vm741 = vmand %vm705, %vm669
      %vm742 = vmand %vm706, %vm670
      %vm743 = vmand %vm707, %vm671
      %vm744 = vmand %vm708, %vm672
      %vm745 = vmand %vm709, %vm673
      %vm746 = vmand %vm710, %vm674
      %vm747 = vmand %vm711, %vm675
      %vm748 = vmand %vm712, %vm676
      %vm749 = vmand %vm713, %vm677
      %vm750 = vmand %vm714, %vm678
      %vm751 = vmand %vm715, %vm679
      %vm752 = vmand %vm716, %vm680
      %vm753 = vmand %vm717, %vm681
      %vm754 = vmand %vm718, %vm682
      %vm755 = vmand %vm719, %vm683
      %vm756 = vmand %vm720, %vm684
      %vm757 = vmand %vm721, %vm685
      %vm758 = vmand %vm722, %vm686
      %vm759 = vmand %vm723, %vm687
      %vm760 = vmand %vm724, %vm688
      %vm761 = vmand %vm725, %vm689
      %vm762 = vmand %vm726, %vm690
      %vm763 = vmand %vm727, %vm691
      %vm764 = vmand %vm728, %vm692
      %vm765 = vmand %vm729, %vm693
      %vm766 = vmand %vm730, %vm694
      %v767 = vadd.s32 %v273, 18
      %v768 = vadd.s32 %v284, 18
      %v769 = vadd.s32 %v295, 18
      %v770 = vadd.s32 %v306, 18
      %v771 = vadd.s32 %v317, 18
      %v772 = vadd.s32 %v328, 18
      %v773 = vadd.s32 %v339, 18
      %v774 = vadd.s32 %v350, 18
      %v775 = vadd.s32 %v361, 18
      %v776 = vadd.s32 %v372, 18
      %v777 = vadd.s32 %v383, 18
      %v778 = vadd.s32 %v394, 18
      %v779 = vadd.s32 %v405, 18
      %v780 = vadd.s32 %v416, 18
      %v781 = vadd.s32 %v427, 18
      %v782 = vadd.s32 %v438, 18
      %v783 = vadd.s32 %v449, 18
      %v784 = vadd.s32 %v460, 18
      %v785 = vadd.s32 %v471, 18
      %v786 = vadd.s32 %v482, 18
      %v787 = vadd.s32 %v493, 18
      %v788 = vadd.s32 %v504, 18
      %v789 = vadd.s32 %v515, 18
      %v790 = vadd.s32 %v526, 18
      %v791 = vadd.s32 %v537, 18
      %v792 = vadd.s32 %v548, 18
      %v793 = vadd.s32 %v559, 18
      %v794 = vadd.s32 %v570, 18
      %v795 = vadd.s32 %v581, 18
      %v796 = vadd.s32 %v592, 18
      %v797 = vadd.s32 %v603, 18
      %v798 = vadd.s32 %v614, 18
      %v799 = vadd.s32 %v625, 18
      %v800 = vadd.s32 %v636, 18
      %v801 = vadd.s32 %v647, 18
      %v802 = vadd.s32 %v658, 18
      %v803 = vsel %vm731, %v767, %v273
      %v804 = vsel %vm732, %v768, %v284
      %v805 = vsel %vm733, %v769, %v295
      %v806 = vsel %vm734, %v770, %v306
      %v807 = vsel %vm735, %v771, %v317
      %v808 = vsel %vm736, %v772, %v328
      %v809 = vsel %vm737, %v773, %v339
      %v810 = vsel %vm738, %v774, %v350
      %v811 = vsel %vm739, %v775, %v361
      %v812 = vsel %vm740, %v776, %v372
      %v813 = vsel %vm741, %v777, %v383
      %v814 = vsel %vm742, %v778, %v394
      %v815 = vsel %vm743, %v779, %v405
      %v816 = vsel %vm744, %v780, %v416
      %v817 = vsel %vm745, %v781, %v427
      %v818 = vsel %vm746, %v782, %v438
      %v819 = vsel %vm747, %v783, %v449
      %v820 = vsel %vm748, %v784, %v460
      %v821 = vsel %vm749, %v785, %v471
      %v822 = vsel %vm750, %v786, %v482
      %v823 = vsel %vm751, %v787, %v493
      %v824 = vsel %vm752, %v788, %v504
      %v825 = vsel %vm753, %v789, %v515
      %v826 = vsel %vm754, %v790, %v526
      %v827 = vsel %vm755, %v791, %v537
      %v828 = vsel %vm756, %v792, %v548
      %v829 = vsel %vm757, %v793, %v559
      %v830 = vsel %vm758, %v794, %v570
      %v831 = vsel %vm759, %v795, %v581
      %v832 = vsel %vm760, %v796, %v592
      %v833 = vsel %vm761, %v797, %v603
      %v834 = vsel %vm762, %v798, %v614
      %v835 = vsel %vm763, %v799, %v625
      %v836 = vsel %vm764, %v800, %v636
      %v837 = vsel %vm765, %v801, %v647
      %v838 = vsel %vm766, %v802, %v658
      %vm839 = vcmp.lt.s32.totalorder %v803, 16
      %vm840 = vcmp.lt.s32.totalorder %v804, 16
      %vm841 = vcmp.lt.s32.totalorder %v805, 16
      %vm842 = vcmp.lt.s32.totalorder %v806, 16
      %vm843 = vcmp.lt.s32.totalorder %v807, 16
      %vm844 = vcmp.lt.s32.totalorder %v808, 16
      %vm845 = vcmp.lt.s32.totalorder %v809, 16
      %vm846 = vcmp.lt.s32.totalorder %v810, 16
      %vm847 = vcmp.lt.s32.totalorder %v811, 16
      %vm848 = vcmp.lt.s32.totalorder %v812, 16
      %vm849 = vcmp.lt.s32.totalorder %v813, 16
      %vm850 = vcmp.lt.s32.totalorder %v814, 16
      %vm851 = vcmp.lt.s32.totalorder %v815, 16
      %vm852 = vcmp.lt.s32.totalorder %v816, 16
      %vm853 = vcmp.lt.s32.totalorder %v817, 16
      %vm854 = vcmp.lt.s32.totalorder %v818, 16
      %vm855 = vcmp.lt.s32.totalorder %v819, 16
      %vm856 = vcmp.lt.s32.totalorder %v820, 16
      %vm857 = vcmp.lt.s32.totalorder %v821, 16
      %vm858 = vcmp.lt.s32.totalorder %v822, 16
      %vm859 = vcmp.lt.s32.totalorder %v823, 16
      %vm860 = vcmp.lt.s32.totalorder %v824, 16
      %vm861 = vcmp.lt.s32.totalorder %v825, 16
      %vm862 = vcmp.lt.s32.totalorder %v826, 16
      %vm863 = vcmp.lt.s32.totalorder %v827, 16
      %vm864 = vcmp.lt.s32.totalorder %v828, 16
      %vm865 = vcmp.lt.s32.totalorder %v829, 16
      %vm866 = vcmp.lt.s32.totalorder %v830, 16
      %vm867 = vcmp.lt.s32.totalorder %v831, 16
      %vm868 = vcmp.lt.s32.totalorder %v832, 16
      %vm869 = vcmp.lt.s32.totalorder %v833, 16
      %vm870 = vcmp.lt.s32.totalorder %v834, 16
      %vm871 = vcmp.lt.s32.totalorder %v835, 16
      %vm872 = vcmp.lt.s32.totalorder %v836, 16
      %vm873 = vcmp.lt.s32.totalorder %v837, 16
      %vm874 = vcmp.lt.s32.totalorder %v838, 16
      %v875 = vld [vmem:[%s219] sm:$0xf]
      %v876 = vld [vmem:[%s219 + $0x4] sm:$0xf]
      %v877 = vld [vmem:[%s219 + $0x8] sm:$0xf]
      %v878 = vld [vmem:[%s219 + $0xc] sm:$0xf]
      %v879 = vld [vmem:[%s219 + $0x10] sm:$0xf]
      %v880 = vld [vmem:[%s219 + $0x14] sm:$0xf]
      %v881 = vld [vmem:[%s219 + $0x18] sm:$0xf]
      %v882 = vld [vmem:[%s219 + $0x1c] sm:$0xf]
      %v883 = vld [vmem:[%s219 + $0x20] sm:$0xf]
      %v884 = vld [vmem:[%s219 + $0x24] sm:$0xf]
      %v885 = vld [vmem:[%s219 + $0x28] sm:$0xf]
      %v886 = vld [vmem:[%s219 + $0x2c] sm:$0xf]
      %v887 = vld [vmem:[%s219 + $0x30] sm:$0xf]
      %v888 = vld [vmem:[%s219 + $0x34] sm:$0xf]
      %v889 = vld [vmem:[%s219 + $0x38] sm:$0xf]
      %v890 = vld [vmem:[%s219 + $0x3c] sm:$0xf]
      %v891 = vld [vmem:[%s219 + $0x40] sm:$0xf]
      %v892 = vld [vmem:[%s219 + $0x44] sm:$0xf]
      %v893 = vld [vmem:[%s219 + $0x48] sm:$0xf]
      %v894 = vld [vmem:[%s219 + $0x4c] sm:$0xf]
      %v895 = vld [vmem:[%s219 + $0x50] sm:$0xf]
      %v896 = vld [vmem:[%s219 + $0x54] sm:$0xf]
      %v897 = vld [vmem:[%s219 + $0x58] sm:$0xf]
      %v898 = vld [vmem:[%s219 + $0x5c] sm:$0xf]
      %v899 = vld [vmem:[%s219 + $0x60] sm:$0xf]
      %v900 = vld [vmem:[%s219 + $0x64] sm:$0xf]
      %v901 = vld [vmem:[%s219 + $0x68] sm:$0xf]
      %v902 = vld [vmem:[%s219 + $0x6c] sm:$0xf]
      %v903 = vld [vmem:[%s219 + $0x70] sm:$0xf]
      %v904 = vld [vmem:[%s219 + $0x74] sm:$0xf]
      %v905 = vld [vmem:[%s219 + $0x78] sm:$0xf]
      %v906 = vld [vmem:[%s219 + $0x7c] sm:$0xf]
      %v907 = vld [vmem:[%s219 + $0x80] sm:$0xf]
      %v908 = vld [vmem:[%s219 + $0x84] sm:$0xf]
      %v909 = vld [vmem:[%s219 + $0x88] sm:$0xf]
      %v910 = vld [vmem:[%s219 + $0x8c] sm:$0xf]
      %v911 = vld [vmem:[%s1] sm:$0xf]
      %v912 = vld [vmem:[%s1 + $0x4] sm:$0xf]
      %v913 = vld [vmem:[%s1 + $0x8] sm:$0xf]
      %v914 = vld [vmem:[%s1 + $0xc] sm:$0xf]
      %v915 = vld [vmem:[%s1 + $0x10] sm:$0xf]
      %v916 = vld [vmem:[%s1 + $0x14] sm:$0xf]
      %v917 = vld [vmem:[%s1 + $0x18] sm:$0xf]
      %v918 = vld [vmem:[%s1 + $0x1c] sm:$0xf]
      %v919 = vld [vmem:[%s1 + $0x20] sm:$0xf]
      %v920 = vld [vmem:[%s1 + $0x24] sm:$0xf]
      %v921 = vld [vmem:[%s1 + $0x28] sm:$0xf]
      %v922 = vld [vmem:[%s1 + $0x2c] sm:$0xf]
      %v923 = vld [vmem:[%s1 + $0x30] sm:$0xf]
      %v924 = vld [vmem:[%s1 + $0x34] sm:$0xf]
      %v925 = vld [vmem:[%s1 + $0x38] sm:$0xf]
      %v926 = vld [vmem:[%s1 + $0x3c] sm:$0xf]
      %v927 = vld [vmem:[%s219 + $0x90] sm:$0x1]
      %s928 = scalar_lea.vmem %s1, 64
      %v929 = vld [vmem:[%s928] sm:$0xf]
      %v930 = vld [vmem:[%s928 + $0x4] sm:$0xf]
      %v931 = vld [vmem:[%s928 + $0x8] sm:$0xf]
      %v932 = vld [vmem:[%s928 + $0xc] sm:$0xf]
      %v933 = vld [vmem:[%s928 + $0x10] sm:$0xf]
      %v934 = vld [vmem:[%s928 + $0x14] sm:$0xf]
      %v935 = vld [vmem:[%s928 + $0x18] sm:$0xf]
      %v936 = vld [vmem:[%s928 + $0x1c] sm:$0xf]
      %v937 = vld [vmem:[%s928 + $0x20] sm:$0xf]
      %v938 = vld [vmem:[%s928 + $0x24] sm:$0xf]
      %v939 = vld [vmem:[%s928 + $0x28] sm:$0xf]
      %v940 = vld [vmem:[%s928 + $0x2c] sm:$0xf]
      %v941 = vld [vmem:[%s928 + $0x30] sm:$0xf]
      %v942 = vld [vmem:[%s928 + $0x34] sm:$0xf]
      %v943 = vld [vmem:[%s928 + $0x38] sm:$0xf]
      %v944 = vld [vmem:[%s928 + $0x3c] sm:$0xf]
      %v982 = vunpack.c.l.b16 %v875
      %v983 = vunpack.c.l.b16 %v876
      %v984 = vunpack.c.l.b16 %v877
      %v985 = vunpack.c.l.b16 %v878
      %v986 = vunpack.c.l.b16 %v879
      %v987 = vunpack.c.l.b16 %v880
      %v988 = vunpack.c.l.b16 %v881
      %v989 = vunpack.c.l.b16 %v882
      %v990 = vunpack.c.l.b16 %v883
      %v991 = vunpack.c.l.b16 %v884
      %v992 = vunpack.c.l.b16 %v885
      %v993 = vunpack.c.l.b16 %v886
      %v994 = vunpack.c.l.b16 %v887
      %v995 = vunpack.c.l.b16 %v888
      %v996 = vunpack.c.l.b16 %v889
      %v997 = vunpack.c.l.b16 %v890
      %v998 = vunpack.c.l.b16 %v891
      %v999 = vunpack.c.l.b16 %v892
      %v1000 = vunpack.c.l.b16 %v893
      %v1001 = vunpack.c.l.b16 %v894
      %v1002 = vunpack.c.l.b16 %v895
      %v1003 = vunpack.c.l.b16 %v896
      %v1004 = vunpack.c.l.b16 %v897
      %v1005 = vunpack.c.l.b16 %v898
      %v1006 = vunpack.c.l.b16 %v899
      %v1007 = vunpack.c.l.b16 %v900
      %v1008 = vunpack.c.l.b16 %v901
      %v1009 = vunpack.c.l.b16 %v902
      %v1010 = vunpack.c.l.b16 %v903
      %v1011 = vunpack.c.l.b16 %v904
      %v1012 = vunpack.c.l.b16 %v905
      %v1013 = vunpack.c.l.b16 %v906
      %v1014 = vunpack.c.l.b16 %v907
      %v1015 = vunpack.c.l.b16 %v908
      %v1016 = vunpack.c.l.b16 %v909
      %v1017 = vunpack.c.l.b16 %v910
      %v1018 = vunpack.c.l.b16 %v927
      %v1019 = vpack.c.b16 %v983, %v982
      %v1020 = vpack.c.b16 %v985, %v984
      %v1021 = vpack.c.b16 %v987, %v986
      %v1022 = vpack.c.b16 %v989, %v988
      %v1023 = vpack.c.b16 %v991, %v990
      %v1024 = vpack.c.b16 %v993, %v992
      %v1025 = vpack.c.b16 %v995, %v994
      %v1026 = vpack.c.b16 %v997, %v996
      %v1027 = vpack.c.b16 %v999, %v998
      %v1028 = vpack.c.b16 %v1001, %v1000
      %v1029 = vpack.c.b16 %v1003, %v1002
      %v1030 = vpack.c.b16 %v1005, %v1004
      %v1031 = vpack.c.b16 %v1007, %v1006
      %v1032 = vpack.c.b16 %v1009, %v1008
      %v1033 = vpack.c.b16 %v1011, %v1010
      %v1034 = vpack.c.b16 %v1013, %v1012
      %v1035 = vpack.c.b16 %v1015, %v1014
      %v1036 = vpack.c.b16 %v1017, %v1016
      %v1037 = vpack.c.b16 %v1018, %v1018
      %vm1038 = vsmask.f32 7424
      %v1040 = vshrl.u32 %v1019, 16
      %v1042 = vshll.u32 %v1019, 16
      %v1044 = vrot.slane %v1042, 1
      %v1045 = vor.u32 %v1040, %v1044
      %v1047 = vshll.u32 %v1020, 16
      %v1049 = vrot.slane %v1047, 1
      %v1050 = vsel %vm1038, %v1045, %v1049
      %v1051 = vshrl.u32 %v1020, 16
      %v1053 = vor.u32 %v1051, %v1049
      %v1055 = vshll.u32 %v1021, 16
      %v1057 = vrot.slane %v1055, 1
      %v1058 = vsel %vm1038, %v1053, %v1057
      %v1059 = vshrl.u32 %v1021, 16
      %v1061 = vor.u32 %v1059, %v1057
      %v1063 = vshll.u32 %v1022, 16
      %v1065 = vrot.slane %v1063, 1
      %v1066 = vsel %vm1038, %v1061, %v1065
      %v1067 = vshrl.u32 %v1022, 16
      %v1069 = vor.u32 %v1067, %v1065
      %v1071 = vshll.u32 %v1023, 16
      %v1073 = vrot.slane %v1071, 1
      %v1074 = vsel %vm1038, %v1069, %v1073
      %v1075 = vshrl.u32 %v1023, 16
      %v1077 = vor.u32 %v1075, %v1073
      %v1079 = vshll.u32 %v1024, 16
      %v1081 = vrot.slane %v1079, 1
      %v1082 = vsel %vm1038, %v1077, %v1081
      %v1083 = vshrl.u32 %v1024, 16
      %v1085 = vor.u32 %v1083, %v1081
      %v1087 = vshll.u32 %v1025, 16
      %v1089 = vrot.slane %v1087, 1
      %v1090 = vsel %vm1038, %v1085, %v1089
      %v1091 = vshrl.u32 %v1025, 16
      %v1093 = vor.u32 %v1091, %v1089
      %v1095 = vshll.u32 %v1026, 16
      %v1097 = vrot.slane %v1095, 1
      %v1098 = vsel %vm1038, %v1093, %v1097
      %v1099 = vshrl.u32 %v1026, 16
      %v1101 = vor.u32 %v1099, %v1097
      %v1103 = vshll.u32 %v1027, 16
      %v1105 = vrot.slane %v1103, 1
      %v1106 = vsel %vm1038, %v1101, %v1105
      %v1107 = vshrl.u32 %v1027, 16
      %v1109 = vor.u32 %v1107, %v1105
      %v1111 = vshll.u32 %v1028, 16
      %v1113 = vrot.slane %v1111, 1
      %v1114 = vsel %vm1038, %v1109, %v1113
      %v1115 = vshrl.u32 %v1028, 16
      %v1117 = vor.u32 %v1115, %v1113
      %v1119 = vshll.u32 %v1029, 16
      %v1121 = vrot.slane %v1119, 1
      %v1122 = vsel %vm1038, %v1117, %v1121
      %v1123 = vshrl.u32 %v1029, 16
      %v1125 = vor.u32 %v1123, %v1121
      %v1127 = vshll.u32 %v1030, 16
      %v1129 = vrot.slane %v1127, 1
      %v1130 = vsel %vm1038, %v1125, %v1129
      %v1131 = vshrl.u32 %v1030, 16
      %v1133 = vor.u32 %v1131, %v1129
      %v1135 = vshll.u32 %v1031, 16
      %v1137 = vrot.slane %v1135, 1
      %v1138 = vsel %vm1038, %v1133, %v1137
      %v1139 = vshrl.u32 %v1031, 16
      %v1141 = vor.u32 %v1139, %v1137
      %v1143 = vshll.u32 %v1032, 16
      %v1145 = vrot.slane %v1143, 1
      %v1146 = vsel %vm1038, %v1141, %v1145
      %v1147 = vshrl.u32 %v1032, 16
      %v1149 = vor.u32 %v1147, %v1145
      %v1151 = vshll.u32 %v1033, 16
      %v1153 = vrot.slane %v1151, 1
      %v1154 = vsel %vm1038, %v1149, %v1153
      %v1155 = vshrl.u32 %v1033, 16
      %v1157 = vor.u32 %v1155, %v1153
      %v1159 = vshll.u32 %v1034, 16
      %v1161 = vrot.slane %v1159, 1
      %v1162 = vsel %vm1038, %v1157, %v1161
      %v1163 = vshrl.u32 %v1034, 16
      %v1165 = vor.u32 %v1163, %v1161
      %v1167 = vshll.u32 %v1035, 16
      %v1169 = vrot.slane %v1167, 1
      %v1170 = vsel %vm1038, %v1165, %v1169
      %v1171 = vshrl.u32 %v1035, 16
      %v1173 = vor.u32 %v1171, %v1169
      %v1175 = vshll.u32 %v1036, 16
      %v1177 = vrot.slane %v1175, 1
      %v1178 = vsel %vm1038, %v1173, %v1177
      %v1179 = vshrl.u32 %v1036, 16
      %v1181 = vor.u32 %v1179, %v1177
      %v1183 = vshll.u32 %v1037, 16
      %v1185 = vrot.slane %v1183, 1
      %v1186 = vsel %vm1038, %v1181, %v1185
      %v1221 = vunpack.c.l.b16 %v929
      %v1222 = vunpack.c.l.b16 %v930
      %v1223 = vunpack.c.l.b16 %v931
      %v1224 = vunpack.c.l.b16 %v932
      %v1225 = vunpack.c.l.b16 %v933
      %v1226 = vunpack.c.l.b16 %v934
      %v1227 = vunpack.c.l.b16 %v935
      %v1228 = vunpack.c.l.b16 %v936
      %v1229 = vunpack.c.l.b16 %v937
      %v1230 = vunpack.c.l.b16 %v938
      %v1231 = vunpack.c.l.b16 %v939
      %v1232 = vunpack.c.l.b16 %v940
      %v1233 = vunpack.c.l.b16 %v941
      %v1234 = vunpack.c.l.b16 %v942
      %v1235 = vunpack.c.l.b16 %v943
      %v1236 = vunpack.c.l.b16 %v944
      %v1237 = vpack.c.b16 %v1222, %v1221
      %v1238 = vpack.c.b16 %v1224, %v1223
      %v1239 = vpack.c.b16 %v1226, %v1225
      %v1240 = vpack.c.b16 %v1228, %v1227
      %v1241 = vpack.c.b16 %v1230, %v1229
      %v1242 = vpack.c.b16 %v1232, %v1231
      %v1243 = vpack.c.b16 %v1234, %v1233
      %v1244 = vpack.c.b16 %v1236, %v1235
      %1253 = vmatprep.subr.bf16.mxu0 0
      %1254 = vmatpush1.bf16.msra.mxu0 %v1237
      %1255 = vmatprep.subr.bf16.mxu0 0
      %1256 = vmatpush1.bf16.msra.mxu0 %v1238
      %1257 = vmatprep.subr.bf16.mxu0 0
      %1258 = vmatpush1.bf16.msra.mxu0 %v1239
      %1259 = vmatprep.subr.bf16.mxu0 0
      %1260 = vmatpush1.bf16.msra.mxu0 %v1240
      %1261 = vmatprep.subr.bf16.mxu0 0
      %1262 = vmatpush1.bf16.msra.mxu0 %v1241
      %1263 = vmatprep.subr.bf16.mxu0 0
      %1264 = vmatpush1.bf16.msra.mxu0 %v1242
      %1265 = vmatprep.subr.bf16.mxu0 0
      %1266 = vmatpush1.bf16.msra.mxu0 %v1243
      %1267 = vmatprep.subr.bf16.mxu0 0
      %1268 = vmatpush1.bf16.msra.mxu0 %v1244
      %1269 = vmatprep.subr.bf16.mxu0 0
      %1270 = vmatpush1.bf16.msra.mxu0 0
      %1271 = vmatprep.subr.bf16.mxu0 0
      %1272 = vmatpush1.bf16.msra.mxu0 0
      %1273 = vmatprep.subr.bf16.mxu0 0
      %1274 = vmatpush1.bf16.msra.mxu0 0
      %1275 = vmatprep.subr.bf16.mxu0 0
      %1276 = vmatpush1.bf16.msra.mxu0 0
      %1277 = vmatprep.subr.bf16.mxu0 0
      %1278 = vmatpush1.bf16.msra.mxu0 0
      %1279 = vmatprep.subr.bf16.mxu0 0
      %1280 = vmatpush1.bf16.msra.mxu0 0
      %1281 = vmatprep.subr.bf16.mxu0 0
      %1282 = vmatpush1.bf16.msra.mxu0 0
      %1283 = vmatprep.subr.bf16.mxu0 0
      %1284 = vmatpush1.bf16.msra.mxu0 0
      %1285 = vmatprep.mubr.bf16.mxu0 0
      %1286 = vmatmul.mubr.bf16.gmra.mrb[0].mxu0 %v1050
      %v1287 = vpop.f32.mrb[0].mxu0
      %v1288 = vadd.f32 0.0, %v1287
      %v1289 = vpop.f32.mrb[0].mxu0
      %v1290 = vpop.f32.mrb[0].mxu0
      %v1291 = vadd.f32 0.0, %v1290
      %v1292 = vpop.f32.mrb[0].mxu0
      %1293 = vmatprep.mubr.bf16.mxu0 0
      %1294 = vmatmul.mubr.bf16.gmra.mrb[0].mxu0 %v1058
      %v1295 = vpop.f32.mrb[0].mxu0
      %v1296 = vadd.f32 0.0, %v1295
      %v1297 = vpop.f32.mrb[0].mxu0
      %v1298 = vpop.f32.mrb[0].mxu0
      %v1299 = vadd.f32 0.0, %v1298
      %v1300 = vpop.f32.mrb[0].mxu0
      %1301 = vmatprep.mubr.bf16.mxu0 0
      %1302 = vmatmul.mubr.bf16.gmra.mrb[0].mxu0 %v1066
      %v1303 = vpop.f32.mrb[0].mxu0
      %v1304 = vadd.f32 0.0, %v1303
      %v1305 = vpop.f32.mrb[0].mxu0
      %v1306 = vpop.f32.mrb[0].mxu0
      %v1307 = vadd.f32 0.0, %v1306
      %v1308 = vpop.f32.mrb[0].mxu0
      %1309 = vmatprep.mubr.bf16.mxu0 0
      %1310 = vmatmul.mubr.bf16.gmra.mrb[0].mxu0 %v1074
      %v1311 = vpop.f32.mrb[0].mxu0
      %v1312 = vadd.f32 0.0, %v1311
      %v1313 = vpop.f32.mrb[0].mxu0
      %v1314 = vpop.f32.mrb[0].mxu0
      %v1315 = vadd.f32 0.0, %v1314
      %v1316 = vpop.f32.mrb[0].mxu0
      %1317 = vmatprep.mubr.bf16.mxu0 0
      %1318 = vmatmul.mubr.bf16.gmra.mrb[0].mxu0 %v1082
      %v1319 = vpop.f32.mrb[0].mxu0
      %v1320 = vadd.f32 0.0, %v1319
      %v1321 = vpop.f32.mrb[0].mxu0
      %v1322 = vpop.f32.mrb[0].mxu0
      %v1323 = vadd.f32 0.0, %v1322
      %v1324 = vpop.f32.mrb[0].mxu0
      %1325 = vmatprep.mubr.bf16.mxu0 0
      %1326 = vmatmul.mubr.bf16.gmra.mrb[0].mxu0 %v1090
      %v1327 = vpop.f32.mrb[0].mxu0
      %v1328 = vadd.f32 0.0, %v1327
      %v1329 = vpop.f32.mrb[0].mxu0
      %v1330 = vpop.f32.mrb[0].mxu0
      %v1331 = vadd.f32 0.0, %v1330
      %v1332 = vpop.f32.mrb[0].mxu0
      %1333 = vmatprep.mubr.bf16.mxu0 0
      %1334 = vmatmul.mubr.bf16.gmra.mrb[0].mxu0 %v1098
      %v1335 = vpop.f32.mrb[0].mxu0
      %v1336 = vadd.f32 0.0, %v1335
      %v1337 = vpop.f32.mrb[0].mxu0
      %v1338 = vpop.f32.mrb[0].mxu0
      %v1339 = vadd.f32 0.0, %v1338
      %v1340 = vpop.f32.mrb[0].mxu0
      %1341 = vmatprep.mubr.bf16.mxu0 0
      %1342 = vmatmul.mubr.bf16.gmra.mrb[0].mxu0 %v1106
      %v1343 = vpop.f32.mrb[0].mxu0
      %v1344 = vadd.f32 0.0, %v1343
      %v1345 = vpop.f32.mrb[0].mxu0
      %v1346 = vpop.f32.mrb[0].mxu0
      %v1347 = vadd.f32 0.0, %v1346
      %v1348 = vpop.f32.mrb[0].mxu0
      %1349 = vmatprep.mubr.bf16.mxu0 0
      %1350 = vmatmul.mubr.bf16.gmra.mrb[0].mxu0 %v1114
      %v1351 = vpop.f32.mrb[0].mxu0
      %v1352 = vadd.f32 0.0, %v1351
      %v1353 = vpop.f32.mrb[0].mxu0
      %v1354 = vpop.f32.mrb[0].mxu0
      %v1355 = vadd.f32 0.0, %v1354
      %v1356 = vpop.f32.mrb[0].mxu0
      %1357 = vmatprep.mubr.bf16.mxu0 0
      %1358 = vmatmul.mubr.bf16.gmra.mrb[0].mxu0 %v1122
      %v1359 = vpop.f32.mrb[0].mxu0
      %v1360 = vadd.f32 0.0, %v1359
      %v1361 = vpop.f32.mrb[0].mxu0
      %v1362 = vpop.f32.mrb[0].mxu0
      %v1363 = vadd.f32 0.0, %v1362
      %v1364 = vpop.f32.mrb[0].mxu0
      %1365 = vmatprep.mubr.bf16.mxu0 0
      %1366 = vmatmul.mubr.bf16.gmra.mrb[0].mxu0 %v1130
      %v1367 = vpop.f32.mrb[0].mxu0
      %v1368 = vadd.f32 0.0, %v1367
      %v1369 = vpop.f32.mrb[0].mxu0
      %v1370 = vpop.f32.mrb[0].mxu0
      %v1371 = vadd.f32 0.0, %v1370
      %v1372 = vpop.f32.mrb[0].mxu0
      %1373 = vmatprep.mubr.bf16.mxu0 0
      %1374 = vmatmul.mubr.bf16.gmra.mrb[0].mxu0 %v1138
      %v1375 = vpop.f32.mrb[0].mxu0
      %v1376 = vadd.f32 0.0, %v1375
      %v1377 = vpop.f32.mrb[0].mxu0
      %v1378 = vpop.f32.mrb[0].mxu0
      %v1379 = vadd.f32 0.0, %v1378
      %v1380 = vpop.f32.mrb[0].mxu0
      %1381 = vmatprep.mubr.bf16.mxu0 0
      %1382 = vmatmul.mubr.bf16.gmra.mrb[0].mxu0 %v1146
      %v1383 = vpop.f32.mrb[0].mxu0
      %v1384 = vadd.f32 0.0, %v1383
      %v1385 = vpop.f32.mrb[0].mxu0
      %v1386 = vpop.f32.mrb[0].mxu0
      %v1387 = vadd.f32 0.0, %v1386
      %v1388 = vpop.f32.mrb[0].mxu0
      %1389 = vmatprep.mubr.bf16.mxu0 0
      %1390 = vmatmul.mubr.bf16.gmra.mrb[0].mxu0 %v1154
      %v1391 = vpop.f32.mrb[0].mxu0
      %v1392 = vadd.f32 0.0, %v1391
      %v1393 = vpop.f32.mrb[0].mxu0
      %v1394 = vpop.f32.mrb[0].mxu0
      %v1395 = vadd.f32 0.0, %v1394
      %v1396 = vpop.f32.mrb[0].mxu0
      %1397 = vmatprep.mubr.bf16.mxu0 0
      %1398 = vmatmul.mubr.bf16.gmra.mrb[0].mxu0 %v1162
      %v1399 = vpop.f32.mrb[0].mxu0
      %v1400 = vadd.f32 0.0, %v1399
      %v1401 = vpop.f32.mrb[0].mxu0
      %v1402 = vpop.f32.mrb[0].mxu0
      %v1403 = vadd.f32 0.0, %v1402
      %v1404 = vpop.f32.mrb[0].mxu0
      %1405 = vmatprep.mubr.bf16.mxu0 0
      %1406 = vmatmul.mubr.bf16.gmra.mrb[0].mxu0 %v1170
      %v1407 = vpop.f32.mrb[0].mxu0
      %v1408 = vadd.f32 0.0, %v1407
      %v1409 = vpop.f32.mrb[0].mxu0
      %v1410 = vpop.f32.mrb[0].mxu0
      %v1411 = vadd.f32 0.0, %v1410
      %v1412 = vpop.f32.mrb[0].mxu0
      %1413 = vmatprep.mubr.bf16.mxu0 0
      %1414 = vmatmul.mubr.bf16.gmra.mrb[0].mxu0 %v1178
      %v1415 = vpop.f32.mrb[0].mxu0
      %v1416 = vadd.f32 0.0, %v1415
      %v1417 = vpop.f32.mrb[0].mxu0
      %v1418 = vpop.f32.mrb[0].mxu0
      %v1419 = vadd.f32 0.0, %v1418
      %v1420 = vpop.f32.mrb[0].mxu0
      %1421 = vmatprep.mubr.bf16.mxu0 0
      %1422 = vmatmul.mubr.bf16.gmra.mrb[0].mxu0 %v1186
      %v1423 = vpop.f32.mrb[0].mxu0
      %v1424 = vadd.f32 0.0, %v1423
      %v1425 = vpop.f32.mrb[0].mxu0
      %v1426 = vpop.f32.mrb[0].mxu0
      %v1427 = vadd.f32 0.0, %v1426
      %v1428 = vpop.f32.mrb[0].mxu0
      %1429 = vdwg.mxu0
      %v1464 = vunpack.c.l.b16 %v911
      %v1465 = vunpack.c.l.b16 %v912
      %v1466 = vunpack.c.l.b16 %v913
      %v1467 = vunpack.c.l.b16 %v914
      %v1468 = vunpack.c.l.b16 %v915
      %v1469 = vunpack.c.l.b16 %v916
      %v1470 = vunpack.c.l.b16 %v917
      %v1471 = vunpack.c.l.b16 %v918
      %v1472 = vunpack.c.l.b16 %v919
      %v1473 = vunpack.c.l.b16 %v920
      %v1474 = vunpack.c.l.b16 %v921
      %v1475 = vunpack.c.l.b16 %v922
      %v1476 = vunpack.c.l.b16 %v923
      %v1477 = vunpack.c.l.b16 %v924
      %v1478 = vunpack.c.l.b16 %v925
      %v1479 = vunpack.c.l.b16 %v926
      %v1480 = vpack.c.b16 %v1465, %v1464
      %v1481 = vpack.c.b16 %v1467, %v1466
      %v1482 = vpack.c.b16 %v1469, %v1468
      %v1483 = vpack.c.b16 %v1471, %v1470
      %v1484 = vpack.c.b16 %v1473, %v1472
      %v1485 = vpack.c.b16 %v1475, %v1474
      %v1486 = vpack.c.b16 %v1477, %v1476
      %v1487 = vpack.c.b16 %v1479, %v1478
      %1496 = vmatprep.subr.bf16.mxu0 0
      %1497 = vmatpush1.bf16.msra.mxu0 %v1480
      %1498 = vmatprep.subr.bf16.mxu0 0
      %1499 = vmatpush1.bf16.msra.mxu0 %v1481
      %1500 = vmatprep.subr.bf16.mxu0 0
      %1501 = vmatpush1.bf16.msra.mxu0 %v1482
      %1502 = vmatprep.subr.bf16.mxu0 0
      %1503 = vmatpush1.bf16.msra.mxu0 %v1483
      %1504 = vmatprep.subr.bf16.mxu0 0
      %1505 = vmatpush1.bf16.msra.mxu0 %v1484
      %1506 = vmatprep.subr.bf16.mxu0 0
      %1507 = vmatpush1.bf16.msra.mxu0 %v1485
      %1508 = vmatprep.subr.bf16.mxu0 0
      %1509 = vmatpush1.bf16.msra.mxu0 %v1486
      %1510 = vmatprep.subr.bf16.mxu0 0
      %1511 = vmatpush1.bf16.msra.mxu0 %v1487
      %1512 = vmatprep.subr.bf16.mxu0 0
      %1513 = vmatpush1.bf16.msra.mxu0 0
      %1514 = vmatprep.subr.bf16.mxu0 0
      %1515 = vmatpush1.bf16.msra.mxu0 0
      %1516 = vmatprep.subr.bf16.mxu0 0
      %1517 = vmatpush1.bf16.msra.mxu0 0
      %1518 = vmatprep.subr.bf16.mxu0 0
      %1519 = vmatpush1.bf16.msra.mxu0 0
      %1520 = vmatprep.subr.bf16.mxu0 0
      %1521 = vmatpush1.bf16.msra.mxu0 0
      %1522 = vmatprep.subr.bf16.mxu0 0
      %1523 = vmatpush1.bf16.msra.mxu0 0
      %1524 = vmatprep.subr.bf16.mxu0 0
      %1525 = vmatpush1.bf16.msra.mxu0 0
      %1526 = vmatprep.subr.bf16.mxu0 0
      %1527 = vmatpush1.bf16.msra.mxu0 0
      %1528 = vmatprep.mubr.bf16.mxu0 0
      %1529 = vmatmul.mubr.bf16.gmra.mrb[0].mxu0 %v1019
      %v1530 = vpop.f32.mrb[0].mxu0
      %v1531 = vadd.f32 %v1288, %v1530
      %v1532 = vpop.f32.mrb[0].mxu0
      %v1533 = vpop.f32.mrb[0].mxu0
      %v1534 = vadd.f32 %v1291, %v1533
      %v1535 = vpop.f32.mrb[0].mxu0
      %1536 = vmatprep.mubr.bf16.mxu0 0
      %1537 = vmatmul.mubr.bf16.gmra.mrb[0].mxu0 %v1020
      %v1538 = vpop.f32.mrb[0].mxu0
      %v1539 = vadd.f32 %v1296, %v1538
      %v1540 = vpop.f32.mrb[0].mxu0
      %v1541 = vpop.f32.mrb[0].mxu0
      %v1542 = vadd.f32 %v1299, %v1541
      %v1543 = vpop.f32.mrb[0].mxu0
      %1544 = vmatprep.mubr.bf16.mxu0 0
      %1545 = vmatmul.mubr.bf16.gmra.mrb[0].mxu0 %v1021
      %v1546 = vpop.f32.mrb[0].mxu0
      %v1547 = vadd.f32 %v1304, %v1546
      %v1548 = vpop.f32.mrb[0].mxu0
      %v1549 = vpop.f32.mrb[0].mxu0
      %v1550 = vadd.f32 %v1307, %v1549
      %v1551 = vpop.f32.mrb[0].mxu0
      %1552 = vmatprep.mubr.bf16.mxu0 0
      %1553 = vmatmul.mubr.bf16.gmra.mrb[0].mxu0 %v1022
      %v1554 = vpop.f32.mrb[0].mxu0
      %v1555 = vadd.f32 %v1312, %v1554
      %v1556 = vpop.f32.mrb[0].mxu0
      %v1557 = vpop.f32.mrb[0].mxu0
      %v1558 = vadd.f32 %v1315, %v1557
      %v1559 = vpop.f32.mrb[0].mxu0
      %1560 = vmatprep.mubr.bf16.mxu0 0
      %1561 = vmatmul.mubr.bf16.gmra.mrb[0].mxu0 %v1023
      %v1562 = vpop.f32.mrb[0].mxu0
      %v1563 = vadd.f32 %v1320, %v1562
      %v1564 = vpop.f32.mrb[0].mxu0
      %v1565 = vpop.f32.mrb[0].mxu0
      %v1566 = vadd.f32 %v1323, %v1565
      %v1567 = vpop.f32.mrb[0].mxu0
      %1568 = vmatprep.mubr.bf16.mxu0 0
      %1569 = vmatmul.mubr.bf16.gmra.mrb[0].mxu0 %v1024
      %v1570 = vpop.f32.mrb[0].mxu0
      %v1571 = vadd.f32 %v1328, %v1570
      %v1572 = vpop.f32.mrb[0].mxu0
      %v1573 = vpop.f32.mrb[0].mxu0
      %v1574 = vadd.f32 %v1331, %v1573
      %v1575 = vpop.f32.mrb[0].mxu0
      %1576 = vmatprep.mubr.bf16.mxu0 0
      %1577 = vmatmul.mubr.bf16.gmra.mrb[0].mxu0 %v1025
      %v1578 = vpop.f32.mrb[0].mxu0
      %v1579 = vadd.f32 %v1336, %v1578
      %v1580 = vpop.f32.mrb[0].mxu0
      %v1581 = vpop.f32.mrb[0].mxu0
      %v1582 = vadd.f32 %v1339, %v1581
      %v1583 = vpop.f32.mrb[0].mxu0
      %1584 = vmatprep.mubr.bf16.mxu0 0
      %1585 = vmatmul.mubr.bf16.gmra.mrb[0].mxu0 %v1026
      %v1586 = vpop.f32.mrb[0].mxu0
      %v1587 = vadd.f32 %v1344, %v1586
      %v1588 = vpop.f32.mrb[0].mxu0
      %v1589 = vpop.f32.mrb[0].mxu0
      %v1590 = vadd.f32 %v1347, %v1589
      %v1591 = vpop.f32.mrb[0].mxu0
      %1592 = vmatprep.mubr.bf16.mxu0 0
      %1593 = vmatmul.mubr.bf16.gmra.mrb[0].mxu0 %v1027
      %v1594 = vpop.f32.mrb[0].mxu0
      %v1595 = vadd.f32 %v1352, %v1594
      %v1596 = vpop.f32.mrb[0].mxu0
      %v1597 = vpop.f32.mrb[0].mxu0
      %v1598 = vadd.f32 %v1355, %v1597
      %v1599 = vpop.f32.mrb[0].mxu0
      %1600 = vmatprep.mubr.bf16.mxu0 0
      %1601 = vmatmul.mubr.bf16.gmra.mrb[0].mxu0 %v1028
      %v1602 = vpop.f32.mrb[0].mxu0
      %v1603 = vadd.f32 %v1360, %v1602
      %v1604 = vpop.f32.mrb[0].mxu0
      %v1605 = vpop.f32.mrb[0].mxu0
      %v1606 = vadd.f32 %v1363, %v1605
      %v1607 = vpop.f32.mrb[0].mxu0
      %1608 = vmatprep.mubr.bf16.mxu0 0
      %1609 = vmatmul.mubr.bf16.gmra.mrb[0].mxu0 %v1029
      %v1610 = vpop.f32.mrb[0].mxu0
      %v1611 = vadd.f32 %v1368, %v1610
      %v1612 = vpop.f32.mrb[0].mxu0
      %v1613 = vpop.f32.mrb[0].mxu0
      %v1614 = vadd.f32 %v1371, %v1613
      %v1615 = vpop.f32.mrb[0].mxu0
      %1616 = vmatprep.mubr.bf16.mxu0 0
      %1617 = vmatmul.mubr.bf16.gmra.mrb[0].mxu0 %v1030
      %v1618 = vpop.f32.mrb[0].mxu0
      %v1619 = vadd.f32 %v1376, %v1618
      %v1620 = vpop.f32.mrb[0].mxu0
      %v1621 = vpop.f32.mrb[0].mxu0
      %v1622 = vadd.f32 %v1379, %v1621
      %v1623 = vpop.f32.mrb[0].mxu0
      %1624 = vmatprep.mubr.bf16.mxu0 0
      %1625 = vmatmul.mubr.bf16.gmra.mrb[0].mxu0 %v1031
      %v1626 = vpop.f32.mrb[0].mxu0
      %v1627 = vadd.f32 %v1384, %v1626
      %v1628 = vpop.f32.mrb[0].mxu0
      %v1629 = vpop.f32.mrb[0].mxu0
      %v1630 = vadd.f32 %v1387, %v1629
      %v1631 = vpop.f32.mrb[0].mxu0
      %1632 = vmatprep.mubr.bf16.mxu0 0
      %1633 = vmatmul.mubr.bf16.gmra.mrb[0].mxu0 %v1032
      %v1634 = vpop.f32.mrb[0].mxu0
      %v1635 = vadd.f32 %v1392, %v1634
      %v1636 = vpop.f32.mrb[0].mxu0
      %v1637 = vpop.f32.mrb[0].mxu0
      %v1638 = vadd.f32 %v1395, %v1637
      %v1639 = vpop.f32.mrb[0].mxu0
      %1640 = vmatprep.mubr.bf16.mxu0 0
      %1641 = vmatmul.mubr.bf16.gmra.mrb[0].mxu0 %v1033
      %v1642 = vpop.f32.mrb[0].mxu0
      %v1643 = vadd.f32 %v1400, %v1642
      %v1644 = vpop.f32.mrb[0].mxu0
      %v1645 = vpop.f32.mrb[0].mxu0
      %v1646 = vadd.f32 %v1403, %v1645
      %v1647 = vpop.f32.mrb[0].mxu0
      %1648 = vmatprep.mubr.bf16.mxu0 0
      %1649 = vmatmul.mubr.bf16.gmra.mrb[0].mxu0 %v1034
      %v1650 = vpop.f32.mrb[0].mxu0
      %v1651 = vadd.f32 %v1408, %v1650
      %v1652 = vpop.f32.mrb[0].mxu0
      %v1653 = vpop.f32.mrb[0].mxu0
      %v1654 = vadd.f32 %v1411, %v1653
      %v1655 = vpop.f32.mrb[0].mxu0
      %1656 = vmatprep.mubr.bf16.mxu0 0
      %1657 = vmatmul.mubr.bf16.gmra.mrb[0].mxu0 %v1035
      %v1658 = vpop.f32.mrb[0].mxu0
      %v1659 = vadd.f32 %v1416, %v1658
      %v1660 = vpop.f32.mrb[0].mxu0
      %v1661 = vpop.f32.mrb[0].mxu0
      %v1662 = vadd.f32 %v1419, %v1661
      %v1663 = vpop.f32.mrb[0].mxu0
      %1664 = vmatprep.mubr.bf16.mxu0 0
      %1665 = vmatmul.mubr.bf16.gmra.mrb[0].mxu0 %v1036
      %v1666 = vpop.f32.mrb[0].mxu0
      %v1667 = vadd.f32 %v1424, %v1666
      %v1668 = vpop.f32.mrb[0].mxu0
      %v1669 = vpop.f32.mrb[0].mxu0
      %v1670 = vadd.f32 %v1427, %v1669
      %v1671 = vpop.f32.mrb[0].mxu0
      %1672 = vdwg.mxu0
      %v1673 = vld [vmem:[%s219] sm:$0xe]
      %s1674 = scalar_lea.vmem %s1, 128
      %v1675 = vld [vmem:[%s1674] sm:$0xf]
      %v1676 = vld [vmem:[%s1674 + $0x4] sm:$0xf]
      %v1677 = vld [vmem:[%s1674 + $0x8] sm:$0xf]
      %v1678 = vld [vmem:[%s1674 + $0xc] sm:$0xf]
      %v1679 = vld [vmem:[%s1674 + $0x10] sm:$0xf]
      %v1680 = vld [vmem:[%s1674 + $0x14] sm:$0xf]
      %v1681 = vld [vmem:[%s1674 + $0x18] sm:$0xf]
      %v1682 = vld [vmem:[%s1674 + $0x1c] sm:$0xf]
      %v1683 = vld [vmem:[%s1674 + $0x20] sm:$0xf]
      %v1684 = vld [vmem:[%s1674 + $0x24] sm:$0xf]
      %v1685 = vld [vmem:[%s1674 + $0x28] sm:$0xf]
      %v1686 = vld [vmem:[%s1674 + $0x2c] sm:$0xf]
      %v1687 = vld [vmem:[%s1674 + $0x30] sm:$0xf]
      %v1688 = vld [vmem:[%s1674 + $0x34] sm:$0xf]
      %v1689 = vld [vmem:[%s1674 + $0x38] sm:$0xf]
      %v1690 = vld [vmem:[%s1674 + $0x3c] sm:$0xf]
      %v1692 = vunpack.c.l.b16 %v1673
      %v1693 = vpack.c.b16 %v983, %v1692
      %vm1694 = vcmask 1046528
      %v1695 = vrot.slane %v1693, 1
      %v1696 = vrot.slane %v1020, 1
      %v1697 = vsel %vm1694, %v1695, %v1696
      %v1698 = vrot.slane %v1021, 1
      %v1699 = vsel %vm1694, %v1696, %v1698
      %v1700 = vrot.slane %v1022, 1
      %v1701 = vsel %vm1694, %v1698, %v1700
      %v1702 = vrot.slane %v1023, 1
      %v1703 = vsel %vm1694, %v1700, %v1702
      %v1704 = vrot.slane %v1024, 1
      %v1705 = vsel %vm1694, %v1702, %v1704
      %v1706 = vrot.slane %v1025, 1
      %v1707 = vsel %vm1694, %v1704, %v1706
      %v1708 = vrot.slane %v1026, 1
      %v1709 = vsel %vm1694, %v1706, %v1708
      %v1710 = vrot.slane %v1027, 1
      %v1711 = vsel %vm1694, %v1708, %v1710
      %v1712 = vrot.slane %v1028, 1
      %v1713 = vsel %vm1694, %v1710, %v1712
      %v1714 = vrot.slane %v1029, 1
      %v1715 = vsel %vm1694, %v1712, %v1714
      %v1716 = vrot.slane %v1030, 1
      %v1717 = vsel %vm1694, %v1714, %v1716
      %v1718 = vrot.slane %v1031, 1
      %v1719 = vsel %vm1694, %v1716, %v1718
      %v1720 = vrot.slane %v1032, 1
      %v1721 = vsel %vm1694, %v1718, %v1720
      %v1722 = vrot.slane %v1033, 1
      %v1723 = vsel %vm1694, %v1720, %v1722
      %v1724 = vrot.slane %v1034, 1
      %v1725 = vsel %vm1694, %v1722, %v1724
      %v1726 = vrot.slane %v1035, 1
      %v1727 = vsel %vm1694, %v1724, %v1726
      %v1728 = vrot.slane %v1036, 1
      %v1729 = vsel %vm1694, %v1726, %v1728
      %v1730 = vrot.slane %v1037, 1
      %v1731 = vsel %vm1694, %v1728, %v1730
      %v1766 = vunpack.c.l.b16 %v1675
      %v1767 = vunpack.c.l.b16 %v1676
      %v1768 = vunpack.c.l.b16 %v1677
      %v1769 = vunpack.c.l.b16 %v1678
      %v1770 = vunpack.c.l.b16 %v1679
      %v1771 = vunpack.c.l.b16 %v1680
      %v1772 = vunpack.c.l.b16 %v1681
      %v1773 = vunpack.c.l.b16 %v1682
      %v1774 = vunpack.c.l.b16 %v1683
      %v1775 = vunpack.c.l.b16 %v1684
      %v1776 = vunpack.c.l.b16 %v1685
      %v1777 = vunpack.c.l.b16 %v1686
      %v1778 = vunpack.c.l.b16 %v1687
      %v1779 = vunpack.c.l.b16 %v1688
      %v1780 = vunpack.c.l.b16 %v1689
      %v1781 = vunpack.c.l.b16 %v1690
      %v1782 = vpack.c.b16 %v1767, %v1766
      %v1783 = vpack.c.b16 %v1769, %v1768
      %v1784 = vpack.c.b16 %v1771, %v1770
      %v1785 = vpack.c.b16 %v1773, %v1772
      %v1786 = vpack.c.b16 %v1775, %v1774
      %v1787 = vpack.c.b16 %v1777, %v1776
      %v1788 = vpack.c.b16 %v1779, %v1778
      %v1789 = vpack.c.b16 %v1781, %v1780
      %1798 = vmatprep.subr.bf16.mxu0 0
      %1799 = vmatpush1.bf16.msra.mxu0 %v1782
      %1800 = vmatprep.subr.bf16.mxu0 0
      %1801 = vmatpush1.bf16.msra.mxu0 %v1783
      %1802 = vmatprep.subr.bf16.mxu0 0
      %1803 = vmatpush1.bf16.msra.mxu0 %v1784
      %1804 = vmatprep.subr.bf16.mxu0 0
      %1805 = vmatpush1.bf16.msra.mxu0 %v1785
      %1806 = vmatprep.subr.bf16.mxu0 0
      %1807 = vmatpush1.bf16.msra.mxu0 %v1786
      %1808 = vmatprep.subr.bf16.mxu0 0
      %1809 = vmatpush1.bf16.msra.mxu0 %v1787
      %1810 = vmatprep.subr.bf16.mxu0 0
      %1811 = vmatpush1.bf16.msra.mxu0 %v1788
      %1812 = vmatprep.subr.bf16.mxu0 0
      %1813 = vmatpush1.bf16.msra.mxu0 %v1789
      %1814 = vmatprep.subr.bf16.mxu0 0
      %1815 = vmatpush1.bf16.msra.mxu0 0
      %1816 = vmatprep.subr.bf16.mxu0 0
      %1817 = vmatpush1.bf16.msra.mxu0 0
      %1818 = vmatprep.subr.bf16.mxu0 0
      %1819 = vmatpush1.bf16.msra.mxu0 0
      %1820 = vmatprep.subr.bf16.mxu0 0
      %1821 = vmatpush1.bf16.msra.mxu0 0
      %1822 = vmatprep.subr.bf16.mxu0 0
      %1823 = vmatpush1.bf16.msra.mxu0 0
      %1824 = vmatprep.subr.bf16.mxu0 0
      %1825 = vmatpush1.bf16.msra.mxu0 0
      %1826 = vmatprep.subr.bf16.mxu0 0
      %1827 = vmatpush1.bf16.msra.mxu0 0
      %1828 = vmatprep.subr.bf16.mxu0 0
      %1829 = vmatpush1.bf16.msra.mxu0 0
      %1830 = vmatprep.mubr.bf16.mxu0 0
      %1831 = vmatmul.mubr.bf16.gmra.mrb[0].mxu0 %v1697
      %v1832 = vpop.f32.mrb[0].mxu0
      %v1833 = vadd.f32 0.0, %v1832
      %v1834 = vpop.f32.mrb[0].mxu0
      %v1835 = vpop.f32.mrb[0].mxu0
      %v1836 = vadd.f32 0.0, %v1835
      %v1837 = vpop.f32.mrb[0].mxu0
      %1838 = vmatprep.mubr.bf16.mxu0 0
      %1839 = vmatmul.mubr.bf16.gmra.mrb[0].mxu0 %v1699
      %v1840 = vpop.f32.mrb[0].mxu0
      %v1841 = vadd.f32 0.0, %v1840
      %v1842 = vpop.f32.mrb[0].mxu0
      %v1843 = vpop.f32.mrb[0].mxu0
      %v1844 = vadd.f32 0.0, %v1843
      %v1845 = vpop.f32.mrb[0].mxu0
      %1846 = vmatprep.mubr.bf16.mxu0 0
      %1847 = vmatmul.mubr.bf16.gmra.mrb[0].mxu0 %v1701
      %v1848 = vpop.f32.mrb[0].mxu0
      %v1849 = vadd.f32 0.0, %v1848
      %v1850 = vpop.f32.mrb[0].mxu0
      %v1851 = vpop.f32.mrb[0].mxu0
      %v1852 = vadd.f32 0.0, %v1851
      %v1853 = vpop.f32.mrb[0].mxu0
      %1854 = vmatprep.mubr.bf16.mxu0 0
      %1855 = vmatmul.mubr.bf16.gmra.mrb[0].mxu0 %v1703
      %v1856 = vpop.f32.mrb[0].mxu0
      %v1857 = vadd.f32 0.0, %v1856
      %v1858 = vpop.f32.mrb[0].mxu0
      %v1859 = vpop.f32.mrb[0].mxu0
      %v1860 = vadd.f32 0.0, %v1859
      %v1861 = vpop.f32.mrb[0].mxu0
      %1862 = vmatprep.mubr.bf16.mxu0 0
      %1863 = vmatmul.mubr.bf16.gmra.mrb[0].mxu0 %v1705
      %v1864 = vpop.f32.mrb[0].mxu0
      %v1865 = vadd.f32 0.0, %v1864
      %v1866 = vpop.f32.mrb[0].mxu0
      %v1867 = vpop.f32.mrb[0].mxu0
      %v1868 = vadd.f32 0.0, %v1867
      %v1869 = vpop.f32.mrb[0].mxu0
      %1870 = vmatprep.mubr.bf16.mxu0 0
      %1871 = vmatmul.mubr.bf16.gmra.mrb[0].mxu0 %v1707
      %v1872 = vpop.f32.mrb[0].mxu0
      %v1873 = vadd.f32 0.0, %v1872
      %v1874 = vpop.f32.mrb[0].mxu0
      %v1875 = vpop.f32.mrb[0].mxu0
      %v1876 = vadd.f32 0.0, %v1875
      %v1877 = vpop.f32.mrb[0].mxu0
      %1878 = vmatprep.mubr.bf16.mxu0 0
      %1879 = vmatmul.mubr.bf16.gmra.mrb[0].mxu0 %v1709
      %v1880 = vpop.f32.mrb[0].mxu0
      %v1881 = vadd.f32 0.0, %v1880
      %v1882 = vpop.f32.mrb[0].mxu0
      %v1883 = vpop.f32.mrb[0].mxu0
      %v1884 = vadd.f32 0.0, %v1883
      %v1885 = vpop.f32.mrb[0].mxu0
      %1886 = vmatprep.mubr.bf16.mxu0 0
      %1887 = vmatmul.mubr.bf16.gmra.mrb[0].mxu0 %v1711
      %v1888 = vpop.f32.mrb[0].mxu0
      %v1889 = vadd.f32 0.0, %v1888
      %v1890 = vpop.f32.mrb[0].mxu0
      %v1891 = vpop.f32.mrb[0].mxu0
      %v1892 = vadd.f32 0.0, %v1891
      %v1893 = vpop.f32.mrb[0].mxu0
      %1894 = vmatprep.mubr.bf16.mxu0 0
      %1895 = vmatmul.mubr.bf16.gmra.mrb[0].mxu0 %v1713
      %v1896 = vpop.f32.mrb[0].mxu0
      %v1897 = vadd.f32 0.0, %v1896
      %v1898 = vpop.f32.mrb[0].mxu0
      %v1899 = vpop.f32.mrb[0].mxu0
      %v1900 = vadd.f32 0.0, %v1899
      %v1901 = vpop.f32.mrb[0].mxu0
      %1902 = vmatprep.mubr.bf16.mxu0 0
      %1903 = vmatmul.mubr.bf16.gmra.mrb[0].mxu0 %v1715
      %v1904 = vpop.f32.mrb[0].mxu0
      %v1905 = vadd.f32 0.0, %v1904
      %v1906 = vpop.f32.mrb[0].mxu0
      %v1907 = vpop.f32.mrb[0].mxu0
      %v1908 = vadd.f32 0.0, %v1907
      %v1909 = vpop.f32.mrb[0].mxu0
      %1910 = vmatprep.mubr.bf16.mxu0 0
      %1911 = vmatmul.mubr.bf16.gmra.mrb[0].mxu0 %v1717
      %v1912 = vpop.f32.mrb[0].mxu0
      %v1913 = vadd.f32 0.0, %v1912
      %v1914 = vpop.f32.mrb[0].mxu0
      %v1915 = vpop.f32.mrb[0].mxu0
      %v1916 = vadd.f32 0.0, %v1915
      %v1917 = vpop.f32.mrb[0].mxu0
      %1918 = vmatprep.mubr.bf16.mxu0 0
      %1919 = vmatmul.mubr.bf16.gmra.mrb[0].mxu0 %v1719
      %v1920 = vpop.f32.mrb[0].mxu0
      %v1921 = vadd.f32 0.0, %v1920
      %v1922 = vpop.f32.mrb[0].mxu0
      %v1923 = vpop.f32.mrb[0].mxu0
      %v1924 = vadd.f32 0.0, %v1923
      %v1925 = vpop.f32.mrb[0].mxu0
      %1926 = vmatprep.mubr.bf16.mxu0 0
      %1927 = vmatmul.mubr.bf16.gmra.mrb[0].mxu0 %v1721
      %v1928 = vpop.f32.mrb[0].mxu0
      %v1929 = vadd.f32 0.0, %v1928
      %v1930 = vpop.f32.mrb[0].mxu0
      %v1931 = vpop.f32.mrb[0].mxu0
      %v1932 = vadd.f32 0.0, %v1931
      %v1933 = vpop.f32.mrb[0].mxu0
      %1934 = vmatprep.mubr.bf16.mxu0 0
      %1935 = vmatmul.mubr.bf16.gmra.mrb[0].mxu0 %v1723
      %v1936 = vpop.f32.mrb[0].mxu0
      %v1937 = vadd.f32 0.0, %v1936
      %v1938 = vpop.f32.mrb[0].mxu0
      %v1939 = vpop.f32.mrb[0].mxu0
      %v1940 = vadd.f32 0.0, %v1939
      %v1941 = vpop.f32.mrb[0].mxu0
      %1942 = vmatprep.mubr.bf16.mxu0 0
      %1943 = vmatmul.mubr.bf16.gmra.mrb[0].mxu0 %v1725
      %v1944 = vpop.f32.mrb[0].mxu0
      %v1945 = vadd.f32 0.0, %v1944
      %v1946 = vpop.f32.mrb[0].mxu0
      %v1947 = vpop.f32.mrb[0].mxu0
      %v1948 = vadd.f32 0.0, %v1947
      %v1949 = vpop.f32.mrb[0].mxu0
      %1950 = vmatprep.mubr.bf16.mxu0 0
      %1951 = vmatmul.mubr.bf16.gmra.mrb[0].mxu0 %v1727
      %v1952 = vpop.f32.mrb[0].mxu0
      %v1953 = vadd.f32 0.0, %v1952
      %v1954 = vpop.f32.mrb[0].mxu0
      %v1955 = vpop.f32.mrb[0].mxu0
      %v1956 = vadd.f32 0.0, %v1955
      %v1957 = vpop.f32.mrb[0].mxu0
      %1958 = vmatprep.mubr.bf16.mxu0 0
      %1959 = vmatmul.mubr.bf16.gmra.mrb[0].mxu0 %v1729
      %v1960 = vpop.f32.mrb[0].mxu0
      %v1961 = vadd.f32 0.0, %v1960
      %v1962 = vpop.f32.mrb[0].mxu0
      %v1963 = vpop.f32.mrb[0].mxu0
      %v1964 = vadd.f32 0.0, %v1963
      %v1965 = vpop.f32.mrb[0].mxu0
      %1966 = vmatprep.mubr.bf16.mxu0 0
      %1967 = vmatmul.mubr.bf16.gmra.mrb[0].mxu0 %v1731
      %v1968 = vpop.f32.mrb[0].mxu0
      %v1969 = vadd.f32 0.0, %v1968
      %v1970 = vpop.f32.mrb[0].mxu0
      %v1971 = vpop.f32.mrb[0].mxu0
      %v1972 = vadd.f32 0.0, %v1971
      %v1973 = vpop.f32.mrb[0].mxu0
      %1974 = vdwg.mxu0
      %v1975 = vadd.f32 %v1531, %v1833
      %v1976 = vadd.f32 %v1534, %v1836
      %v1977 = vadd.f32 %v1539, %v1841
      %v1978 = vadd.f32 %v1542, %v1844
      %v1979 = vadd.f32 %v1547, %v1849
      %v1980 = vadd.f32 %v1550, %v1852
      %v1981 = vadd.f32 %v1555, %v1857
      %v1982 = vadd.f32 %v1558, %v1860
      %v1983 = vadd.f32 %v1563, %v1865
      %v1984 = vadd.f32 %v1566, %v1868
      %v1985 = vadd.f32 %v1571, %v1873
      %v1986 = vadd.f32 %v1574, %v1876
      %v1987 = vadd.f32 %v1579, %v1881
      %v1988 = vadd.f32 %v1582, %v1884
      %v1989 = vadd.f32 %v1587, %v1889
      %v1990 = vadd.f32 %v1590, %v1892
      %v1991 = vadd.f32 %v1595, %v1897
      %v1992 = vadd.f32 %v1598, %v1900
      %v1993 = vadd.f32 %v1603, %v1905
      %v1994 = vadd.f32 %v1606, %v1908
      %v1995 = vadd.f32 %v1611, %v1913
      %v1996 = vadd.f32 %v1614, %v1916
      %v1997 = vadd.f32 %v1619, %v1921
      %v1998 = vadd.f32 %v1622, %v1924
      %v1999 = vadd.f32 %v1627, %v1929
      %v2000 = vadd.f32 %v1630, %v1932
      %v2001 = vadd.f32 %v1635, %v1937
      %v2002 = vadd.f32 %v1638, %v1940
      %v2003 = vadd.f32 %v1643, %v1945
      %v2004 = vadd.f32 %v1646, %v1948
      %v2005 = vadd.f32 %v1651, %v1953
      %v2006 = vadd.f32 %v1654, %v1956
      %v2007 = vadd.f32 %v1659, %v1961
      %v2008 = vadd.f32 %v1662, %v1964
      %v2009 = vadd.f32 %v1667, %v1969
      %v2010 = vadd.f32 %v1670, %v1972
      %v2011 = vld [vmem:[%s219 + $0x8] sm:$0xe]
      %v2012 = vld [vmem:[%s219 + $0xc] sm:$0xf]
      %v2013 = vld [vmem:[%s219 + $0x10] sm:$0xf]
      %v2014 = vld [vmem:[%s219 + $0x14] sm:$0xf]
      %v2015 = vld [vmem:[%s219 + $0x18] sm:$0xf]
      %v2016 = vld [vmem:[%s219 + $0x1c] sm:$0xf]
      %v2017 = vld [vmem:[%s219 + $0x20] sm:$0xf]
      %v2018 = vld [vmem:[%s219 + $0x24] sm:$0xf]
      %v2019 = vld [vmem:[%s219 + $0x28] sm:$0xf]
      %v2020 = vld [vmem:[%s219 + $0x2c] sm:$0xf]
      %v2021 = vld [vmem:[%s219 + $0x30] sm:$0xf]
      %v2022 = vld [vmem:[%s219 + $0x34] sm:$0xf]
      %v2023 = vld [vmem:[%s219 + $0x38] sm:$0xf]
      %v2024 = vld [vmem:[%s219 + $0x3c] sm:$0xf]
      %v2025 = vld [vmem:[%s219 + $0x40] sm:$0xf]
      %v2026 = vld [vmem:[%s219 + $0x44] sm:$0xf]
      %v2027 = vld [vmem:[%s219 + $0x48] sm:$0xf]
      %v2028 = vld [vmem:[%s219 + $0x4c] sm:$0xf]
      %v2029 = vld [vmem:[%s219 + $0x50] sm:$0xf]
      %v2030 = vld [vmem:[%s219 + $0x54] sm:$0xf]
      %v2031 = vld [vmem:[%s219 + $0x58] sm:$0xf]
      %v2032 = vld [vmem:[%s219 + $0x5c] sm:$0xf]
      %v2033 = vld [vmem:[%s219 + $0x60] sm:$0xf]
      %v2034 = vld [vmem:[%s219 + $0x64] sm:$0xf]
      %v2035 = vld [vmem:[%s219 + $0x68] sm:$0xf]
      %v2036 = vld [vmem:[%s219 + $0x6c] sm:$0xf]
      %v2037 = vld [vmem:[%s219 + $0x70] sm:$0xf]
      %v2038 = vld [vmem:[%s219 + $0x74] sm:$0xf]
      %v2039 = vld [vmem:[%s219 + $0x78] sm:$0xf]
      %v2040 = vld [vmem:[%s219 + $0x7c] sm:$0xf]
      %v2041 = vld [vmem:[%s219 + $0x80] sm:$0xf]
      %v2042 = vld [vmem:[%s219 + $0x84] sm:$0xf]
      %v2043 = vld [vmem:[%s219 + $0x88] sm:$0xf]
      %v2044 = vld [vmem:[%s219 + $0x8c] sm:$0xf]
      %v2045 = vld [vmem:[%s219 + $0x90] sm:$0xf]
      %v2046 = vld [vmem:[%s219 + $0x94] sm:$0xf]
      %v2047 = vld [vmem:[%s219 + $0x98] sm:$0x1]
      %s2048 = scalar_lea.vmem %s1, 192
      %v2049 = vld [vmem:[%s2048] sm:$0xf]
      %v2050 = vld [vmem:[%s2048 + $0x4] sm:$0xf]
      %v2051 = vld [vmem:[%s2048 + $0x8] sm:$0xf]
      %v2052 = vld [vmem:[%s2048 + $0xc] sm:$0xf]
      %v2053 = vld [vmem:[%s2048 + $0x10] sm:$0xf]
      %v2054 = vld [vmem:[%s2048 + $0x14] sm:$0xf]
      %v2055 = vld [vmem:[%s2048 + $0x18] sm:$0xf]
      %v2056 = vld [vmem:[%s2048 + $0x1c] sm:$0xf]
      %v2057 = vld [vmem:[%s2048 + $0x20] sm:$0xf]
      %v2058 = vld [vmem:[%s2048 + $0x24] sm:$0xf]
      %v2059 = vld [vmem:[%s2048 + $0x28] sm:$0xf]
      %v2060 = vld [vmem:[%s2048 + $0x2c] sm:$0xf]
      %v2061 = vld [vmem:[%s2048 + $0x30] sm:$0xf]
      %v2062 = vld [vmem:[%s2048 + $0x34] sm:$0xf]
      %v2063 = vld [vmem:[%s2048 + $0x38] sm:$0xf]
      %v2064 = vld [vmem:[%s2048 + $0x3c] sm:$0xf]
      %v2102 = vunpack.c.l.b16 %v2011
      %v2103 = vunpack.c.l.b16 %v2012
      %v2104 = vunpack.c.l.b16 %v2013
      %v2105 = vunpack.c.l.b16 %v2014
      %v2106 = vunpack.c.l.b16 %v2015
      %v2107 = vunpack.c.l.b16 %v2016
      %v2108 = vunpack.c.l.b16 %v2017
      %v2109 = vunpack.c.l.b16 %v2018
      %v2110 = vunpack.c.l.b16 %v2019
      %v2111 = vunpack.c.l.b16 %v2020
      %v2112 = vunpack.c.l.b16 %v2021
      %v2113 = vunpack.c.l.b16 %v2022
      %v2114 = vunpack.c.l.b16 %v2023
      %v2115 = vunpack.c.l.b16 %v2024
      %v2116 = vunpack.c.l.b16 %v2025
      %v2117 = vunpack.c.l.b16 %v2026
      %v2118 = vunpack.c.l.b16 %v2027
      %v2119 = vunpack.c.l.b16 %v2028
      %v2120 = vunpack.c.l.b16 %v2029
      %v2121 = vunpack.c.l.b16 %v2030
      %v2122 = vunpack.c.l.b16 %v2031
      %v2123 = vunpack.c.l.b16 %v2032
      %v2124 = vunpack.c.l.b16 %v2033
      %v2125 = vunpack.c.l.b16 %v2034
      %v2126 = vunpack.c.l.b16 %v2035
      %v2127 = vunpack.c.l.b16 %v2036
      %v2128 = vunpack.c.l.b16 %v2037
      %v2129 = vunpack.c.l.b16 %v2038
      %v2130 = vunpack.c.l.b16 %v2039
      %v2131 = vunpack.c.l.b16 %v2040
      %v2132 = vunpack.c.l.b16 %v2041
      %v2133 = vunpack.c.l.b16 %v2042
      %v2134 = vunpack.c.l.b16 %v2043
      %v2135 = vunpack.c.l.b16 %v2044
      %v2136 = vunpack.c.l.b16 %v2045
      %v2137 = vunpack.c.l.b16 %v2046
      %v2138 = vunpack.c.l.b16 %v2047
      %v2139 = vpack.c.b16 %v2103, %v2102
      %v2140 = vpack.c.b16 %v2105, %v2104
      %v2141 = vpack.c.b16 %v2107, %v2106
      %v2142 = vpack.c.b16 %v2109, %v2108
      %v2143 = vpack.c.b16 %v2111, %v2110
      %v2144 = vpack.c.b16 %v2113, %v2112
      %v2145 = vpack.c.b16 %v2115, %v2114
      %v2146 = vpack.c.b16 %v2117, %v2116
      %v2147 = vpack.c.b16 %v2119, %v2118
      %v2148 = vpack.c.b16 %v2121, %v2120
      %v2149 = vpack.c.b16 %v2123, %v2122
      %v2150 = vpack.c.b16 %v2125, %v2124
      %v2151 = vpack.c.b16 %v2127, %v2126
      %v2152 = vpack.c.b16 %v2129, %v2128
      %v2153 = vpack.c.b16 %v2131, %v2130
      %v2154 = vpack.c.b16 %v2133, %v2132
      %v2155 = vpack.c.b16 %v2135, %v2134
      %v2156 = vpack.c.b16 %v2137, %v2136
      %v2157 = vpack.c.b16 %v2138, %v2138
      %v2158 = vrot.slane %v2139, 1
      %v2159 = vrot.slane %v2140, 1
      %v2160 = vsel %vm1694, %v2158, %v2159
      %v2161 = vrot.slane %v2141, 1
      %v2162 = vsel %vm1694, %v2159, %v2161
      %v2163 = vrot.slane %v2142, 1
      %v2164 = vsel %vm1694, %v2161, %v2163
      %v2165 = vrot.slane %v2143, 1
      %v2166 = vsel %vm1694, %v2163, %v2165
      %v2167 = vrot.slane %v2144, 1
      %v2168 = vsel %vm1694, %v2165, %v2167
      %v2169 = vrot.slane %v2145, 1
      %v2170 = vsel %vm1694, %v2167, %v2169
      %v2171 = vrot.slane %v2146, 1
      %v2172 = vsel %vm1694, %v2169, %v2171
      %v2173 = vrot.slane %v2147, 1
      %v2174 = vsel %vm1694, %v2171, %v2173
      %v2175 = vrot.slane %v2148, 1
      %v2176 = vsel %vm1694, %v2173, %v2175
      %v2177 = vrot.slane %v2149, 1
      %v2178 = vsel %vm1694, %v2175, %v2177
      %v2179 = vrot.slane %v2150, 1
      %v2180 = vsel %vm1694, %v2177, %v2179
      %v2181 = vrot.slane %v2151, 1
      %v2182 = vsel %vm1694, %v2179, %v2181
      %v2183 = vrot.slane %v2152, 1
      %v2184 = vsel %vm1694, %v2181, %v2183
      %v2185 = vrot.slane %v2153, 1
      %v2186 = vsel %vm1694, %v2183, %v2185
      %v2187 = vrot.slane %v2154, 1
      %v2188 = vsel %vm1694, %v2185, %v2187
      %v2189 = vrot.slane %v2155, 1
      %v2190 = vsel %vm1694, %v2187, %v2189
      %v2191 = vrot.slane %v2156, 1
      %v2192 = vsel %vm1694, %v2189, %v2191
      %v2193 = vrot.slane %v2157, 1
      %v2194 = vsel %vm1694, %v2191, %v2193
      %v2229 = vunpack.c.l.b16 %v2049
      %v2230 = vunpack.c.l.b16 %v2050
      %v2231 = vunpack.c.l.b16 %v2051
      %v2232 = vunpack.c.l.b16 %v2052
      %v2233 = vunpack.c.l.b16 %v2053
      %v2234 = vunpack.c.l.b16 %v2054
      %v2235 = vunpack.c.l.b16 %v2055
      %v2236 = vunpack.c.l.b16 %v2056
      %v2237 = vunpack.c.l.b16 %v2057
      %v2238 = vunpack.c.l.b16 %v2058
      %v2239 = vunpack.c.l.b16 %v2059
      %v2240 = vunpack.c.l.b16 %v2060
      %v2241 = vunpack.c.l.b16 %v2061
      %v2242 = vunpack.c.l.b16 %v2062
      %v2243 = vunpack.c.l.b16 %v2063
      %v2244 = vunpack.c.l.b16 %v2064
      %v2245 = vpack.c.b16 %v2230, %v2229
      %v2246 = vpack.c.b16 %v2232, %v2231
      %v2247 = vpack.c.b16 %v2234, %v2233
      %v2248 = vpack.c.b16 %v2236, %v2235
      %v2249 = vpack.c.b16 %v2238, %v2237
      %v2250 = vpack.c.b16 %v2240, %v2239
      %v2251 = vpack.c.b16 %v2242, %v2241
      %v2252 = vpack.c.b16 %v2244, %v2243
      %2261 = vmatprep.subr.bf16.mxu0 0
      %2262 = vmatpush1.bf16.msra.mxu0 %v2245
      %2263 = vmatprep.subr.bf16.mxu0 0
      %2264 = vmatpush1.bf16.msra.mxu0 %v2246
      %2265 = vmatprep.subr.bf16.mxu0 0
      %2266 = vmatpush1.bf16.msra.mxu0 %v2247
      %2267 = vmatprep.subr.bf16.mxu0 0
      %2268 = vmatpush1.bf16.msra.mxu0 %v2248
      %2269 = vmatprep.subr.bf16.mxu0 0
      %2270 = vmatpush1.bf16.msra.mxu0 %v2249
      %2271 = vmatprep.subr.bf16.mxu0 0
      %2272 = vmatpush1.bf16.msra.mxu0 %v2250
      %2273 = vmatprep.subr.bf16.mxu0 0
      %2274 = vmatpush1.bf16.msra.mxu0 %v2251
      %2275 = vmatprep.subr.bf16.mxu0 0
      %2276 = vmatpush1.bf16.msra.mxu0 %v2252
      %2277 = vmatprep.subr.bf16.mxu0 0
      %2278 = vmatpush1.bf16.msra.mxu0 0
      %2279 = vmatprep.subr.bf16.mxu0 0
      %2280 = vmatpush1.bf16.msra.mxu0 0
      %2281 = vmatprep.subr.bf16.mxu0 0
      %2282 = vmatpush1.bf16.msra.mxu0 0
      %2283 = vmatprep.subr.bf16.mxu0 0
      %2284 = vmatpush1.bf16.msra.mxu0 0
      %2285 = vmatprep.subr.bf16.mxu0 0
      %2286 = vmatpush1.bf16.msra.mxu0 0
      %2287 = vmatprep.subr.bf16.mxu0 0
      %2288 = vmatpush1.bf16.msra.mxu0 0
      %2289 = vmatprep.subr.bf16.mxu0 0
      %2290 = vmatpush1.bf16.msra.mxu0 0
      %2291 = vmatprep.subr.bf16.mxu0 0
      %2292 = vmatpush1.bf16.msra.mxu0 0
      %2293 = vmatprep.mubr.bf16.mxu0 0
      %2294 = vmatmul.mubr.bf16.gmra.mrb[0].mxu0 %v2160
      %v2295 = vpop.f32.mrb[0].mxu0
      %v2296 = vadd.f32 0.0, %v2295
      %v2297 = vpop.f32.mrb[0].mxu0
      %v2298 = vpop.f32.mrb[0].mxu0
      %v2299 = vadd.f32 0.0, %v2298
      %v2300 = vpop.f32.mrb[0].mxu0
      %2301 = vmatprep.mubr.bf16.mxu0 0
      %2302 = vmatmul.mubr.bf16.gmra.mrb[0].mxu0 %v2162
      %v2303 = vpop.f32.mrb[0].mxu0
      %v2304 = vadd.f32 0.0, %v2303
      %v2305 = vpop.f32.mrb[0].mxu0
      %v2306 = vpop.f32.mrb[0].mxu0
      %v2307 = vadd.f32 0.0, %v2306
      %v2308 = vpop.f32.mrb[0].mxu0
      %2309 = vmatprep.mubr.bf16.mxu0 0
      %2310 = vmatmul.mubr.bf16.gmra.mrb[0].mxu0 %v2164
      %v2311 = vpop.f32.mrb[0].mxu0
      %v2312 = vadd.f32 0.0, %v2311
      %v2313 = vpop.f32.mrb[0].mxu0
      %v2314 = vpop.f32.mrb[0].mxu0
      %v2315 = vadd.f32 0.0, %v2314
      %v2316 = vpop.f32.mrb[0].mxu0
      %2317 = vmatprep.mubr.bf16.mxu0 0
      %2318 = vmatmul.mubr.bf16.gmra.mrb[0].mxu0 %v2166
      %v2319 = vpop.f32.mrb[0].mxu0
      %v2320 = vadd.f32 0.0, %v2319
      %v2321 = vpop.f32.mrb[0].mxu0
      %v2322 = vpop.f32.mrb[0].mxu0
      %v2323 = vadd.f32 0.0, %v2322
      %v2324 = vpop.f32.mrb[0].mxu0
      %2325 = vmatprep.mubr.bf16.mxu0 0
      %2326 = vmatmul.mubr.bf16.gmra.mrb[0].mxu0 %v2168
      %v2327 = vpop.f32.mrb[0].mxu0
      %v2328 = vadd.f32 0.0, %v2327
      %v2329 = vpop.f32.mrb[0].mxu0
      %v2330 = vpop.f32.mrb[0].mxu0
      %v2331 = vadd.f32 0.0, %v2330
      %v2332 = vpop.f32.mrb[0].mxu0
      %2333 = vmatprep.mubr.bf16.mxu0 0
      %2334 = vmatmul.mubr.bf16.gmra.mrb[0].mxu0 %v2170
      %v2335 = vpop.f32.mrb[0].mxu0
      %v2336 = vadd.f32 0.0, %v2335
      %v2337 = vpop.f32.mrb[0].mxu0
      %v2338 = vpop.f32.mrb[0].mxu0
      %v2339 = vadd.f32 0.0, %v2338
      %v2340 = vpop.f32.mrb[0].mxu0
      %2341 = vmatprep.mubr.bf16.mxu0 0
      %2342 = vmatmul.mubr.bf16.gmra.mrb[0].mxu0 %v2172
      %v2343 = vpop.f32.mrb[0].mxu0
      %v2344 = vadd.f32 0.0, %v2343
      %v2345 = vpop.f32.mrb[0].mxu0
      %v2346 = vpop.f32.mrb[0].mxu0
      %v2347 = vadd.f32 0.0, %v2346
      %v2348 = vpop.f32.mrb[0].mxu0
      %2349 = vmatprep.mubr.bf16.mxu0 0
      %2350 = vmatmul.mubr.bf16.gmra.mrb[0].mxu0 %v2174
      %v2351 = vpop.f32.mrb[0].mxu0
      %v2352 = vadd.f32 0.0, %v2351
      %v2353 = vpop.f32.mrb[0].mxu0
      %v2354 = vpop.f32.mrb[0].mxu0
      %v2355 = vadd.f32 0.0, %v2354
      %v2356 = vpop.f32.mrb[0].mxu0
      %2357 = vmatprep.mubr.bf16.mxu0 0
      %2358 = vmatmul.mubr.bf16.gmra.mrb[0].mxu0 %v2176
      %v2359 = vpop.f32.mrb[0].mxu0
      %v2360 = vadd.f32 0.0, %v2359
      %v2361 = vpop.f32.mrb[0].mxu0
      %v2362 = vpop.f32.mrb[0].mxu0
      %v2363 = vadd.f32 0.0, %v2362
      %v2364 = vpop.f32.mrb[0].mxu0
      %2365 = vmatprep.mubr.bf16.mxu0 0
      %2366 = vmatmul.mubr.bf16.gmra.mrb[0].mxu0 %v2178
      %v2367 = vpop.f32.mrb[0].mxu0
      %v2368 = vadd.f32 0.0, %v2367
      %v2369 = vpop.f32.mrb[0].mxu0
      %v2370 = vpop.f32.mrb[0].mxu0
      %v2371 = vadd.f32 0.0, %v2370
      %v2372 = vpop.f32.mrb[0].mxu0
      %2373 = vmatprep.mubr.bf16.mxu0 0
      %2374 = vmatmul.mubr.bf16.gmra.mrb[0].mxu0 %v2180
      %v2375 = vpop.f32.mrb[0].mxu0
      %v2376 = vadd.f32 0.0, %v2375
      %v2377 = vpop.f32.mrb[0].mxu0
      %v2378 = vpop.f32.mrb[0].mxu0
      %v2379 = vadd.f32 0.0, %v2378
      %v2380 = vpop.f32.mrb[0].mxu0
      %2381 = vmatprep.mubr.bf16.mxu0 0
      %2382 = vmatmul.mubr.bf16.gmra.mrb[0].mxu0 %v2182
      %v2383 = vpop.f32.mrb[0].mxu0
      %v2384 = vadd.f32 0.0, %v2383
      %v2385 = vpop.f32.mrb[0].mxu0
      %v2386 = vpop.f32.mrb[0].mxu0
      %v2387 = vadd.f32 0.0, %v2386
      %v2388 = vpop.f32.mrb[0].mxu0
      %2389 = vmatprep.mubr.bf16.mxu0 0
      %2390 = vmatmul.mubr.bf16.gmra.mrb[0].mxu0 %v2184
      %v2391 = vpop.f32.mrb[0].mxu0
      %v2392 = vadd.f32 0.0, %v2391
      %v2393 = vpop.f32.mrb[0].mxu0
      %v2394 = vpop.f32.mrb[0].mxu0
      %v2395 = vadd.f32 0.0, %v2394
      %v2396 = vpop.f32.mrb[0].mxu0
      %2397 = vmatprep.mubr.bf16.mxu0 0
      %2398 = vmatmul.mubr.bf16.gmra.mrb[0].mxu0 %v2186
      %v2399 = vpop.f32.mrb[0].mxu0
      %v2400 = vadd.f32 0.0, %v2399
      %v2401 = vpop.f32.mrb[0].mxu0
      %v2402 = vpop.f32.mrb[0].mxu0
      %v2403 = vadd.f32 0.0, %v2402
      %v2404 = vpop.f32.mrb[0].mxu0
      %2405 = vmatprep.mubr.bf16.mxu0 0
      %2406 = vmatmul.mubr.bf16.gmra.mrb[0].mxu0 %v2188
      %v2407 = vpop.f32.mrb[0].mxu0
      %v2408 = vadd.f32 0.0, %v2407
      %v2409 = vpop.f32.mrb[0].mxu0
      %v2410 = vpop.f32.mrb[0].mxu0
      %v2411 = vadd.f32 0.0, %v2410
      %v2412 = vpop.f32.mrb[0].mxu0
      %2413 = vmatprep.mubr.bf16.mxu0 0
      %2414 = vmatmul.mubr.bf16.gmra.mrb[0].mxu0 %v2190
      %v2415 = vpop.f32.mrb[0].mxu0
      %v2416 = vadd.f32 0.0, %v2415
      %v2417 = vpop.f32.mrb[0].mxu0
      %v2418 = vpop.f32.mrb[0].mxu0
      %v2419 = vadd.f32 0.0, %v2418
      %v2420 = vpop.f32.mrb[0].mxu0
      %2421 = vmatprep.mubr.bf16.mxu0 0
      %2422 = vmatmul.mubr.bf16.gmra.mrb[0].mxu0 %v2192
      %v2423 = vpop.f32.mrb[0].mxu0
      %v2424 = vadd.f32 0.0, %v2423
      %v2425 = vpop.f32.mrb[0].mxu0
      %v2426 = vpop.f32.mrb[0].mxu0
      %v2427 = vadd.f32 0.0, %v2426
      %v2428 = vpop.f32.mrb[0].mxu0
      %2429 = vmatprep.mubr.bf16.mxu0 0
      %2430 = vmatmul.mubr.bf16.gmra.mrb[0].mxu0 %v2194
      %v2431 = vpop.f32.mrb[0].mxu0
      %v2432 = vadd.f32 0.0, %v2431
      %v2433 = vpop.f32.mrb[0].mxu0
      %v2434 = vpop.f32.mrb[0].mxu0
      %v2435 = vadd.f32 0.0, %v2434
      %v2436 = vpop.f32.mrb[0].mxu0
      %2437 = vdwg.mxu0
      %v2438 = vadd.f32 %v1975, %v2296
      %v2439 = vadd.f32 %v1976, %v2299
      %v2440 = vadd.f32 %v1977, %v2304
      %v2441 = vadd.f32 %v1978, %v2307
      %v2442 = vadd.f32 %v1979, %v2312
      %v2443 = vadd.f32 %v1980, %v2315
      %v2444 = vadd.f32 %v1981, %v2320
      %v2445 = vadd.f32 %v1982, %v2323
      %v2446 = vadd.f32 %v1983, %v2328
      %v2447 = vadd.f32 %v1984, %v2331
      %v2448 = vadd.f32 %v1985, %v2336
      %v2449 = vadd.f32 %v1986, %v2339
      %v2450 = vadd.f32 %v1987, %v2344
      %v2451 = vadd.f32 %v1988, %v2347
      %v2452 = vadd.f32 %v1989, %v2352
      %v2453 = vadd.f32 %v1990, %v2355
      %v2454 = vadd.f32 %v1991, %v2360
      %v2455 = vadd.f32 %v1992, %v2363
      %v2456 = vadd.f32 %v1993, %v2368
      %v2457 = vadd.f32 %v1994, %v2371
      %v2458 = vadd.f32 %v1995, %v2376
      %v2459 = vadd.f32 %v1996, %v2379
      %v2460 = vadd.f32 %v1997, %v2384
      %v2461 = vadd.f32 %v1998, %v2387
      %v2462 = vadd.f32 %v1999, %v2392
      %v2463 = vadd.f32 %v2000, %v2395
      %v2464 = vadd.f32 %v2001, %v2400
      %v2465 = vadd.f32 %v2002, %v2403
      %v2466 = vadd.f32 %v2003, %v2408
      %v2467 = vadd.f32 %v2004, %v2411
      %v2468 = vadd.f32 %v2005, %v2416
      %v2469 = vadd.f32 %v2006, %v2419
      %v2470 = vadd.f32 %v2007, %v2424
      %v2471 = vadd.f32 %v2008, %v2427
      %v2472 = vadd.f32 %v2009, %v2432
      %v2473 = vadd.f32 %v2010, %v2435
      %v2474 = vld [vmem:[%s219 + $0x98] sm:$0x3]
      %s2475 = scalar_lea.vmem %s1, 256
      %v2476 = vld [vmem:[%s2475] sm:$0xf]
      %v2477 = vld [vmem:[%s2475 + $0x4] sm:$0xf]
      %v2478 = vld [vmem:[%s2475 + $0x8] sm:$0xf]
      %v2479 = vld [vmem:[%s2475 + $0xc] sm:$0xf]
      %v2480 = vld [vmem:[%s2475 + $0x10] sm:$0xf]
      %v2481 = vld [vmem:[%s2475 + $0x14] sm:$0xf]
      %v2482 = vld [vmem:[%s2475 + $0x18] sm:$0xf]
      %v2483 = vld [vmem:[%s2475 + $0x1c] sm:$0xf]
      %v2484 = vld [vmem:[%s2475 + $0x20] sm:$0xf]
      %v2485 = vld [vmem:[%s2475 + $0x24] sm:$0xf]
      %v2486 = vld [vmem:[%s2475 + $0x28] sm:$0xf]
      %v2487 = vld [vmem:[%s2475 + $0x2c] sm:$0xf]
      %v2488 = vld [vmem:[%s2475 + $0x30] sm:$0xf]
      %v2489 = vld [vmem:[%s2475 + $0x34] sm:$0xf]
      %v2490 = vld [vmem:[%s2475 + $0x38] sm:$0xf]
      %v2491 = vld [vmem:[%s2475 + $0x3c] sm:$0xf]
      %v2493 = vunpack.c.l.b16 %v2474
      %v2494 = vpack.c.b16 %v2493, %v2493
      %vm2495 = vsmask.f32 6400
      %v2497 = vshrl.u32 %v2139, 16
      %v2499 = vrot.slane %v2497, 1
      %v2500 = vshll.u32 %v2139, 16
      %v2502 = vrot.slane %v2500, 2
      %v2503 = vor.u32 %v2499, %v2502
      %v2505 = vshrl.u32 %v2140, 16
      %v2507 = vrot.slane %v2505, 1
      %v2508 = vshll.u32 %v2140, 16
      %v2510 = vrot.slane %v2508, 2
      %v2511 = vor.u32 %v2507, %v2510
      %v2512 = vsel %vm2495, %v2503, %v2511
      %v2514 = vshrl.u32 %v2141, 16
      %v2516 = vrot.slane %v2514, 1
      %v2517 = vshll.u32 %v2141, 16
      %v2519 = vrot.slane %v2517, 2
      %v2520 = vor.u32 %v2516, %v2519
      %v2521 = vsel %vm2495, %v2511, %v2520
      %v2523 = vshrl.u32 %v2142, 16
      %v2525 = vrot.slane %v2523, 1
      %v2526 = vshll.u32 %v2142, 16
      %v2528 = vrot.slane %v2526, 2
      %v2529 = vor.u32 %v2525, %v2528
      %v2530 = vsel %vm2495, %v2520, %v2529
      %v2532 = vshrl.u32 %v2143, 16
      %v2534 = vrot.slane %v2532, 1
      %v2535 = vshll.u32 %v2143, 16
      %v2537 = vrot.slane %v2535, 2
      %v2538 = vor.u32 %v2534, %v2537
      %v2539 = vsel %vm2495, %v2529, %v2538
      %v2541 = vshrl.u32 %v2144, 16
      %v2543 = vrot.slane %v2541, 1
      %v2544 = vshll.u32 %v2144, 16
      %v2546 = vrot.slane %v2544, 2
      %v2547 = vor.u32 %v2543, %v2546
      %v2548 = vsel %vm2495, %v2538, %v2547
      %v2550 = vshrl.u32 %v2145, 16
      %v2552 = vrot.slane %v2550, 1
      %v2553 = vshll.u32 %v2145, 16
      %v2555 = vrot.slane %v2553, 2
      %v2556 = vor.u32 %v2552, %v2555
      %v2557 = vsel %vm2495, %v2547, %v2556
      %v2559 = vshrl.u32 %v2146, 16
      %v2561 = vrot.slane %v2559, 1
      %v2562 = vshll.u32 %v2146, 16
      %v2564 = vrot.slane %v2562, 2
      %v2565 = vor.u32 %v2561, %v2564
      %v2566 = vsel %vm2495, %v2556, %v2565
      %v2568 = vshrl.u32 %v2147, 16
      %v2570 = vrot.slane %v2568, 1
      %v2571 = vshll.u32 %v2147, 16
      %v2573 = vrot.slane %v2571, 2
      %v2574 = vor.u32 %v2570, %v2573
      %v2575 = vsel %vm2495, %v2565, %v2574
      %v2577 = vshrl.u32 %v2148, 16
      %v2579 = vrot.slane %v2577, 1
      %v2580 = vshll.u32 %v2148, 16
      %v2582 = vrot.slane %v2580, 2
      %v2583 = vor.u32 %v2579, %v2582
      %v2584 = vsel %vm2495, %v2574, %v2583
      %v2586 = vshrl.u32 %v2149, 16
      %v2588 = vrot.slane %v2586, 1
      %v2589 = vshll.u32 %v2149, 16
      %v2591 = vrot.slane %v2589, 2
      %v2592 = vor.u32 %v2588, %v2591
      %v2593 = vsel %vm2495, %v2583, %v2592
      %v2595 = vshrl.u32 %v2150, 16
      %v2597 = vrot.slane %v2595, 1
      %v2598 = vshll.u32 %v2150, 16
      %v2600 = vrot.slane %v2598, 2
      %v2601 = vor.u32 %v2597, %v2600
      %v2602 = vsel %vm2495, %v2592, %v2601
      %v2604 = vshrl.u32 %v2151, 16
      %v2606 = vrot.slane %v2604, 1
      %v2607 = vshll.u32 %v2151, 16
      %v2609 = vrot.slane %v2607, 2
      %v2610 = vor.u32 %v2606, %v2609
      %v2611 = vsel %vm2495, %v2601, %v2610
      %v2613 = vshrl.u32 %v2152, 16
      %v2615 = vrot.slane %v2613, 1
      %v2616 = vshll.u32 %v2152, 16
      %v2618 = vrot.slane %v2616, 2
      %v2619 = vor.u32 %v2615, %v2618
      %v2620 = vsel %vm2495, %v2610, %v2619
      %v2622 = vshrl.u32 %v2153, 16
      %v2624 = vrot.slane %v2622, 1
      %v2625 = vshll.u32 %v2153, 16
      %v2627 = vrot.slane %v2625, 2
      %v2628 = vor.u32 %v2624, %v2627
      %v2629 = vsel %vm2495, %v2619, %v2628
      %v2631 = vshrl.u32 %v2154, 16
      %v2633 = vrot.slane %v2631, 1
      %v2634 = vshll.u32 %v2154, 16
      %v2636 = vrot.slane %v2634, 2
      %v2637 = vor.u32 %v2633, %v2636
      %v2638 = vsel %vm2495, %v2628, %v2637
      %v2640 = vshrl.u32 %v2155, 16
      %v2642 = vrot.slane %v2640, 1
      %v2643 = vshll.u32 %v2155, 16
      %v2645 = vrot.slane %v2643, 2
      %v2646 = vor.u32 %v2642, %v2645
      %v2647 = vsel %vm2495, %v2637, %v2646
      %v2649 = vshrl.u32 %v2156, 16
      %v2651 = vrot.slane %v2649, 1
      %v2652 = vshll.u32 %v2156, 16
      %v2654 = vrot.slane %v2652, 2
      %v2655 = vor.u32 %v2651, %v2654
      %v2656 = vsel %vm2495, %v2646, %v2655
      %v2658 = vshrl.u32 %v2494, 16
      %v2660 = vrot.slane %v2658, 1
      %v2661 = vshll.u32 %v2494, 16
      %v2663 = vrot.slane %v2661, 2
      %v2664 = vor.u32 %v2660, %v2663
      %v2665 = vsel %vm2495, %v2655, %v2664
      %v2700 = vunpack.c.l.b16 %v2476
      %v2701 = vunpack.c.l.b16 %v2477
      %v2702 = vunpack.c.l.b16 %v2478
      %v2703 = vunpack.c.l.b16 %v2479
      %v2704 = vunpack.c.l.b16 %v2480
      %v2705 = vunpack.c.l.b16 %v2481
      %v2706 = vunpack.c.l.b16 %v2482
      %v2707 = vunpack.c.l.b16 %v2483
      %v2708 = vunpack.c.l.b16 %v2484
      %v2709 = vunpack.c.l.b16 %v2485
      %v2710 = vunpack.c.l.b16 %v2486
      %v2711 = vunpack.c.l.b16 %v2487
      %v2712 = vunpack.c.l.b16 %v2488
      %v2713 = vunpack.c.l.b16 %v2489
      %v2714 = vunpack.c.l.b16 %v2490
      %v2715 = vunpack.c.l.b16 %v2491
      %v2716 = vpack.c.b16 %v2701, %v2700
      %v2717 = vpack.c.b16 %v2703, %v2702
      %v2718 = vpack.c.b16 %v2705, %v2704
      %v2719 = vpack.c.b16 %v2707, %v2706
      %v2720 = vpack.c.b16 %v2709, %v2708
      %v2721 = vpack.c.b16 %v2711, %v2710
      %v2722 = vpack.c.b16 %v2713, %v2712
      %v2723 = vpack.c.b16 %v2715, %v2714
      %2732 = vmatprep.subr.bf16.mxu0 0
      %2733 = vmatpush1.bf16.msra.mxu0 %v2716
      %2734 = vmatprep.subr.bf16.mxu0 0
      %2735 = vmatpush1.bf16.msra.mxu0 %v2717
      %2736 = vmatprep.subr.bf16.mxu0 0
      %2737 = vmatpush1.bf16.msra.mxu0 %v2718
      %2738 = vmatprep.subr.bf16.mxu0 0
      %2739 = vmatpush1.bf16.msra.mxu0 %v2719
      %2740 = vmatprep.subr.bf16.mxu0 0
      %2741 = vmatpush1.bf16.msra.mxu0 %v2720
      %2742 = vmatprep.subr.bf16.mxu0 0
      %2743 = vmatpush1.bf16.msra.mxu0 %v2721
      %2744 = vmatprep.subr.bf16.mxu0 0
      %2745 = vmatpush1.bf16.msra.mxu0 %v2722
      %2746 = vmatprep.subr.bf16.mxu0 0
      %2747 = vmatpush1.bf16.msra.mxu0 %v2723
      %2748 = vmatprep.subr.bf16.mxu0 0
      %2749 = vmatpush1.bf16.msra.mxu0 0
      %2750 = vmatprep.subr.bf16.mxu0 0
      %2751 = vmatpush1.bf16.msra.mxu0 0
      %2752 = vmatprep.subr.bf16.mxu0 0
      %2753 = vmatpush1.bf16.msra.mxu0 0
      %2754 = vmatprep.subr.bf16.mxu0 0
      %2755 = vmatpush1.bf16.msra.mxu0 0
      %2756 = vmatprep.subr.bf16.mxu0 0
      %2757 = vmatpush1.bf16.msra.mxu0 0
      %2758 = vmatprep.subr.bf16.mxu0 0
      %2759 = vmatpush1.bf16.msra.mxu0 0
      %2760 = vmatprep.subr.bf16.mxu0 0
      %2761 = vmatpush1.bf16.msra.mxu0 0
      %2762 = vmatprep.subr.bf16.mxu0 0
      %2763 = vmatpush1.bf16.msra.mxu0 0
      %2764 = vmatprep.mubr.bf16.mxu0 0
      %2765 = vmatmul.mubr.bf16.gmra.mrb[0].mxu0 %v2512
      %v2766 = vpop.f32.mrb[0].mxu0
      %v2767 = vadd.f32 0.0, %v2766
      %v2768 = vpop.f32.mrb[0].mxu0
      %v2769 = vpop.f32.mrb[0].mxu0
      %v2770 = vadd.f32 0.0, %v2769
      %v2771 = vpop.f32.mrb[0].mxu0
      %2772 = vmatprep.mubr.bf16.mxu0 0
      %2773 = vmatmul.mubr.bf16.gmra.mrb[0].mxu0 %v2521
      %v2774 = vpop.f32.mrb[0].mxu0
      %v2775 = vadd.f32 0.0, %v2774
      %v2776 = vpop.f32.mrb[0].mxu0
      %v2777 = vpop.f32.mrb[0].mxu0
      %v2778 = vadd.f32 0.0, %v2777
      %v2779 = vpop.f32.mrb[0].mxu0
      %2780 = vmatprep.mubr.bf16.mxu0 0
      %2781 = vmatmul.mubr.bf16.gmra.mrb[0].mxu0 %v2530
      %v2782 = vpop.f32.mrb[0].mxu0
      %v2783 = vadd.f32 0.0, %v2782
      %v2784 = vpop.f32.mrb[0].mxu0
      %v2785 = vpop.f32.mrb[0].mxu0
      %v2786 = vadd.f32 0.0, %v2785
      %v2787 = vpop.f32.mrb[0].mxu0
      %2788 = vmatprep.mubr.bf16.mxu0 0
      %2789 = vmatmul.mubr.bf16.gmra.mrb[0].mxu0 %v2539
      %v2790 = vpop.f32.mrb[0].mxu0
      %v2791 = vadd.f32 0.0, %v2790
      %v2792 = vpop.f32.mrb[0].mxu0
      %v2793 = vpop.f32.mrb[0].mxu0
      %v2794 = vadd.f32 0.0, %v2793
      %v2795 = vpop.f32.mrb[0].mxu0
      %2796 = vmatprep.mubr.bf16.mxu0 0
      %2797 = vmatmul.mubr.bf16.gmra.mrb[0].mxu0 %v2548
      %v2798 = vpop.f32.mrb[0].mxu0
      %v2799 = vadd.f32 0.0, %v2798
      %v2800 = vpop.f32.mrb[0].mxu0
      %v2801 = vpop.f32.mrb[0].mxu0
      %v2802 = vadd.f32 0.0, %v2801
      %v2803 = vpop.f32.mrb[0].mxu0
      %2804 = vmatprep.mubr.bf16.mxu0 0
      %2805 = vmatmul.mubr.bf16.gmra.mrb[0].mxu0 %v2557
      %v2806 = vpop.f32.mrb[0].mxu0
      %v2807 = vadd.f32 0.0, %v2806
      %v2808 = vpop.f32.mrb[0].mxu0
      %v2809 = vpop.f32.mrb[0].mxu0
      %v2810 = vadd.f32 0.0, %v2809
      %v2811 = vpop.f32.mrb[0].mxu0
      %2812 = vmatprep.mubr.bf16.mxu0 0
      %2813 = vmatmul.mubr.bf16.gmra.mrb[0].mxu0 %v2566
      %v2814 = vpop.f32.mrb[0].mxu0
      %v2815 = vadd.f32 0.0, %v2814
      %v2816 = vpop.f32.mrb[0].mxu0
      %v2817 = vpop.f32.mrb[0].mxu0
      %v2818 = vadd.f32 0.0, %v2817
      %v2819 = vpop.f32.mrb[0].mxu0
      %2820 = vmatprep.mubr.bf16.mxu0 0
      %2821 = vmatmul.mubr.bf16.gmra.mrb[0].mxu0 %v2575
      %v2822 = vpop.f32.mrb[0].mxu0
      %v2823 = vadd.f32 0.0, %v2822
      %v2824 = vpop.f32.mrb[0].mxu0
      %v2825 = vpop.f32.mrb[0].mxu0
      %v2826 = vadd.f32 0.0, %v2825
      %v2827 = vpop.f32.mrb[0].mxu0
      %2828 = vmatprep.mubr.bf16.mxu0 0
      %2829 = vmatmul.mubr.bf16.gmra.mrb[0].mxu0 %v2584
      %v2830 = vpop.f32.mrb[0].mxu0
      %v2831 = vadd.f32 0.0, %v2830
      %v2832 = vpop.f32.mrb[0].mxu0
      %v2833 = vpop.f32.mrb[0].mxu0
      %v2834 = vadd.f32 0.0, %v2833
      %v2835 = vpop.f32.mrb[0].mxu0
      %2836 = vmatprep.mubr.bf16.mxu0 0
      %2837 = vmatmul.mubr.bf16.gmra.mrb[0].mxu0 %v2593
      %v2838 = vpop.f32.mrb[0].mxu0
      %v2839 = vadd.f32 0.0, %v2838
      %v2840 = vpop.f32.mrb[0].mxu0
      %v2841 = vpop.f32.mrb[0].mxu0
      %v2842 = vadd.f32 0.0, %v2841
      %v2843 = vpop.f32.mrb[0].mxu0
      %2844 = vmatprep.mubr.bf16.mxu0 0
      %2845 = vmatmul.mubr.bf16.gmra.mrb[0].mxu0 %v2602
      %v2846 = vpop.f32.mrb[0].mxu0
      %v2847 = vadd.f32 0.0, %v2846
      %v2848 = vpop.f32.mrb[0].mxu0
      %v2849 = vpop.f32.mrb[0].mxu0
      %v2850 = vadd.f32 0.0, %v2849
      %v2851 = vpop.f32.mrb[0].mxu0
      %2852 = vmatprep.mubr.bf16.mxu0 0
      %2853 = vmatmul.mubr.bf16.gmra.mrb[0].mxu0 %v2611
      %v2854 = vpop.f32.mrb[0].mxu0
      %v2855 = vadd.f32 0.0, %v2854
      %v2856 = vpop.f32.mrb[0].mxu0
      %v2857 = vpop.f32.mrb[0].mxu0
      %v2858 = vadd.f32 0.0, %v2857
      %v2859 = vpop.f32.mrb[0].mxu0
      %2860 = vmatprep.mubr.bf16.mxu0 0
      %2861 = vmatmul.mubr.bf16.gmra.mrb[0].mxu0 %v2620
      %v2862 = vpop.f32.mrb[0].mxu0
      %v2863 = vadd.f32 0.0, %v2862
      %v2864 = vpop.f32.mrb[0].mxu0
      %v2865 = vpop.f32.mrb[0].mxu0
      %v2866 = vadd.f32 0.0, %v2865
      %v2867 = vpop.f32.mrb[0].mxu0
      %2868 = vmatprep.mubr.bf16.mxu0 0
      %2869 = vmatmul.mubr.bf16.gmra.mrb[0].mxu0 %v2629
      %v2870 = vpop.f32.mrb[0].mxu0
      %v2871 = vadd.f32 0.0, %v2870
      %v2872 = vpop.f32.mrb[0].mxu0
      %v2873 = vpop.f32.mrb[0].mxu0
      %v2874 = vadd.f32 0.0, %v2873
      %v2875 = vpop.f32.mrb[0].mxu0
      %2876 = vmatprep.mubr.bf16.mxu0 0
      %2877 = vmatmul.mubr.bf16.gmra.mrb[0].mxu0 %v2638
      %v2878 = vpop.f32.mrb[0].mxu0
      %v2879 = vadd.f32 0.0, %v2878
      %v2880 = vpop.f32.mrb[0].mxu0
      %v2881 = vpop.f32.mrb[0].mxu0
      %v2882 = vadd.f32 0.0, %v2881
      %v2883 = vpop.f32.mrb[0].mxu0
      %2884 = vmatprep.mubr.bf16.mxu0 0
      %2885 = vmatmul.mubr.bf16.gmra.mrb[0].mxu0 %v2647
      %v2886 = vpop.f32.mrb[0].mxu0
      %v2887 = vadd.f32 0.0, %v2886
      %v2888 = vpop.f32.mrb[0].mxu0
      %v2889 = vpop.f32.mrb[0].mxu0
      %v2890 = vadd.f32 0.0, %v2889
      %v2891 = vpop.f32.mrb[0].mxu0
      %2892 = vmatprep.mubr.bf16.mxu0 0
      %2893 = vmatmul.mubr.bf16.gmra.mrb[0].mxu0 %v2656
      %v2894 = vpop.f32.mrb[0].mxu0
      %v2895 = vadd.f32 0.0, %v2894
      %v2896 = vpop.f32.mrb[0].mxu0
      %v2897 = vpop.f32.mrb[0].mxu0
      %v2898 = vadd.f32 0.0, %v2897
      %v2899 = vpop.f32.mrb[0].mxu0
      %2900 = vmatprep.mubr.bf16.mxu0 0
      %2901 = vmatmul.mubr.bf16.gmra.mrb[0].mxu0 %v2665
      %v2902 = vpop.f32.mrb[0].mxu0
      %v2903 = vadd.f32 0.0, %v2902
      %v2904 = vpop.f32.mrb[0].mxu0
      %v2905 = vpop.f32.mrb[0].mxu0
      %v2906 = vadd.f32 0.0, %v2905
      %v2907 = vpop.f32.mrb[0].mxu0
      %2908 = vdwg.mxu0
      %v2909 = vadd.f32 %v2438, %v2767
      %v2910 = vadd.f32 %v2439, %v2770
      %v2911 = vadd.f32 %v2440, %v2775
      %v2912 = vadd.f32 %v2441, %v2778
      %v2913 = vadd.f32 %v2442, %v2783
      %v2914 = vadd.f32 %v2443, %v2786
      %v2915 = vadd.f32 %v2444, %v2791
      %v2916 = vadd.f32 %v2445, %v2794
      %v2917 = vadd.f32 %v2446, %v2799
      %v2918 = vadd.f32 %v2447, %v2802
      %v2919 = vadd.f32 %v2448, %v2807
      %v2920 = vadd.f32 %v2449, %v2810
      %v2921 = vadd.f32 %v2450, %v2815
      %v2922 = vadd.f32 %v2451, %v2818
      %v2923 = vadd.f32 %v2452, %v2823
      %v2924 = vadd.f32 %v2453, %v2826
      %v2925 = vadd.f32 %v2454, %v2831
      %v2926 = vadd.f32 %v2455, %v2834
      %v2927 = vadd.f32 %v2456, %v2839
      %v2928 = vadd.f32 %v2457, %v2842
      %v2929 = vadd.f32 %v2458, %v2847
      %v2930 = vadd.f32 %v2459, %v2850
      %v2931 = vadd.f32 %v2460, %v2855
      %v2932 = vadd.f32 %v2461, %v2858
      %v2933 = vadd.f32 %v2462, %v2863
      %v2934 = vadd.f32 %v2463, %v2866
      %v2935 = vadd.f32 %v2464, %v2871
      %v2936 = vadd.f32 %v2465, %v2874
      %v2937 = vadd.f32 %v2466, %v2879
      %v2938 = vadd.f32 %v2467, %v2882
      %v2939 = vadd.f32 %v2468, %v2887
      %v2940 = vadd.f32 %v2469, %v2890
      %v2941 = vadd.f32 %v2470, %v2895
      %v2942 = vadd.f32 %v2471, %v2898
      %v2943 = vadd.f32 %v2472, %v2903
      %v2944 = vadd.f32 %v2473, %v2906
      %v2945 = vld [vmem:[%s219 + $0x8] sm:$0xc]
      %s2946 = scalar_lea.vmem %s1, 320
      %v2947 = vld [vmem:[%s2946] sm:$0xf]
      %v2948 = vld [vmem:[%s2946 + $0x4] sm:$0xf]
      %v2949 = vld [vmem:[%s2946 + $0x8] sm:$0xf]
      %v2950 = vld [vmem:[%s2946 + $0xc] sm:$0xf]
      %v2951 = vld [vmem:[%s2946 + $0x10] sm:$0xf]
      %v2952 = vld [vmem:[%s2946 + $0x14] sm:$0xf]
      %v2953 = vld [vmem:[%s2946 + $0x18] sm:$0xf]
      %v2954 = vld [vmem:[%s2946 + $0x1c] sm:$0xf]
      %v2955 = vld [vmem:[%s2946 + $0x20] sm:$0xf]
      %v2956 = vld [vmem:[%s2946 + $0x24] sm:$0xf]
      %v2957 = vld [vmem:[%s2946 + $0x28] sm:$0xf]
      %v2958 = vld [vmem:[%s2946 + $0x2c] sm:$0xf]
      %v2959 = vld [vmem:[%s2946 + $0x30] sm:$0xf]
      %v2960 = vld [vmem:[%s2946 + $0x34] sm:$0xf]
      %v2961 = vld [vmem:[%s2946 + $0x38] sm:$0xf]
      %v2962 = vld [vmem:[%s2946 + $0x3c] sm:$0xf]
      %v2964 = vunpack.c.l.b16 %v2945
      %v2965 = vpack.c.b16 %v2103, %v2964
      %vm2966 = vcmask 1045504
      %v2967 = vrot.slane %v2965, 2
      %v2968 = vrot.slane %v2140, 2
      %v2969 = vsel %vm2966, %v2967, %v2968
      %v2970 = vrot.slane %v2141, 2
      %v2971 = vsel %vm2966, %v2968, %v2970
      %v2972 = vrot.slane %v2142, 2
      %v2973 = vsel %vm2966, %v2970, %v2972
      %v2974 = vrot.slane %v2143, 2
      %v2975 = vsel %vm2966, %v2972, %v2974
      %v2976 = vrot.slane %v2144, 2
      %v2977 = vsel %vm2966, %v2974, %v2976
      %v2978 = vrot.slane %v2145, 2
      %v2979 = vsel %vm2966, %v2976, %v2978
      %v2980 = vrot.slane %v2146, 2
      %v2981 = vsel %vm2966, %v2978, %v2980
      %v2982 = vrot.slane %v2147, 2
      %v2983 = vsel %vm2966, %v2980, %v2982
      %v2984 = vrot.slane %v2148, 2
      %v2985 = vsel %vm2966, %v2982, %v2984
      %v2986 = vrot.slane %v2149, 2
      %v2987 = vsel %vm2966, %v2984, %v2986
      %v2988 = vrot.slane %v2150, 2
      %v2989 = vsel %vm2966, %v2986, %v2988
      %v2990 = vrot.slane %v2151, 2
      %v2991 = vsel %vm2966, %v2988, %v2990
      %v2992 = vrot.slane %v2152, 2
      %v2993 = vsel %vm2966, %v2990, %v2992
      %v2994 = vrot.slane %v2153, 2
      %v2995 = vsel %vm2966, %v2992, %v2994
      %v2996 = vrot.slane %v2154, 2
      %v2997 = vsel %vm2966, %v2994, %v2996
      %v2998 = vrot.slane %v2155, 2
      %v2999 = vsel %vm2966, %v2996, %v2998
      %v3000 = vrot.slane %v2156, 2
      %v3001 = vsel %vm2966, %v2998, %v3000
      %v3002 = vrot.slane %v2494, 2
      %v3003 = vsel %vm2966, %v3000, %v3002
      %v3038 = vunpack.c.l.b16 %v2947
      %v3039 = vunpack.c.l.b16 %v2948
      %v3040 = vunpack.c.l.b16 %v2949
      %v3041 = vunpack.c.l.b16 %v2950
      %v3042 = vunpack.c.l.b16 %v2951
      %v3043 = vunpack.c.l.b16 %v2952
      %v3044 = vunpack.c.l.b16 %v2953
      %v3045 = vunpack.c.l.b16 %v2954
      %v3046 = vunpack.c.l.b16 %v2955
      %v3047 = vunpack.c.l.b16 %v2956
      %v3048 = vunpack.c.l.b16 %v2957
      %v3049 = vunpack.c.l.b16 %v2958
      %v3050 = vunpack.c.l.b16 %v2959
      %v3051 = vunpack.c.l.b16 %v2960
      %v3052 = vunpack.c.l.b16 %v2961
      %v3053 = vunpack.c.l.b16 %v2962
      %v3054 = vpack.c.b16 %v3039, %v3038
      %v3055 = vpack.c.b16 %v3041, %v3040
      %v3056 = vpack.c.b16 %v3043, %v3042
      %v3057 = vpack.c.b16 %v3045, %v3044
      %v3058 = vpack.c.b16 %v3047, %v3046
      %v3059 = vpack.c.b16 %v3049, %v3048
      %v3060 = vpack.c.b16 %v3051, %v3050
      %v3061 = vpack.c.b16 %v3053, %v3052
      %3070 = vmatprep.subr.bf16.mxu0 0
      %3071 = vmatpush1.bf16.msra.mxu0 %v3054
      %3072 = vmatprep.subr.bf16.mxu0 0
      %3073 = vmatpush1.bf16.msra.mxu0 %v3055
      %3074 = vmatprep.subr.bf16.mxu0 0
      %3075 = vmatpush1.bf16.msra.mxu0 %v3056
      %3076 = vmatprep.subr.bf16.mxu0 0
      %3077 = vmatpush1.bf16.msra.mxu0 %v3057
      %3078 = vmatprep.subr.bf16.mxu0 0
      %3079 = vmatpush1.bf16.msra.mxu0 %v3058
      %3080 = vmatprep.subr.bf16.mxu0 0
      %3081 = vmatpush1.bf16.msra.mxu0 %v3059
      %3082 = vmatprep.subr.bf16.mxu0 0
      %3083 = vmatpush1.bf16.msra.mxu0 %v3060
      %3084 = vmatprep.subr.bf16.mxu0 0
      %3085 = vmatpush1.bf16.msra.mxu0 %v3061
      %3086 = vmatprep.subr.bf16.mxu0 0
      %3087 = vmatpush1.bf16.msra.mxu0 0
      %3088 = vmatprep.subr.bf16.mxu0 0
      %3089 = vmatpush1.bf16.msra.mxu0 0
      %3090 = vmatprep.subr.bf16.mxu0 0
      %3091 = vmatpush1.bf16.msra.mxu0 0
      %3092 = vmatprep.subr.bf16.mxu0 0
      %3093 = vmatpush1.bf16.msra.mxu0 0
      %3094 = vmatprep.subr.bf16.mxu0 0
      %3095 = vmatpush1.bf16.msra.mxu0 0
      %3096 = vmatprep.subr.bf16.mxu0 0
      %3097 = vmatpush1.bf16.msra.mxu0 0
      %3098 = vmatprep.subr.bf16.mxu0 0
      %3099 = vmatpush1.bf16.msra.mxu0 0
      %3100 = vmatprep.subr.bf16.mxu0 0
      %3101 = vmatpush1.bf16.msra.mxu0 0
      %3102 = vmatprep.mubr.bf16.mxu0 0
      %3103 = vmatmul.mubr.bf16.gmra.mrb[0].mxu0 %v2969
      %v3104 = vpop.f32.mrb[0].mxu0
      %v3105 = vadd.f32 0.0, %v3104
      %v3106 = vpop.f32.mrb[0].mxu0
      %v3107 = vpop.f32.mrb[0].mxu0
      %v3108 = vadd.f32 0.0, %v3107
      %v3109 = vpop.f32.mrb[0].mxu0
      %3110 = vmatprep.mubr.bf16.mxu0 0
      %3111 = vmatmul.mubr.bf16.gmra.mrb[0].mxu0 %v2971
      %v3112 = vpop.f32.mrb[0].mxu0
      %v3113 = vadd.f32 0.0, %v3112
      %v3114 = vpop.f32.mrb[0].mxu0
      %v3115 = vpop.f32.mrb[0].mxu0
      %v3116 = vadd.f32 0.0, %v3115
      %v3117 = vpop.f32.mrb[0].mxu0
      %3118 = vmatprep.mubr.bf16.mxu0 0
      %3119 = vmatmul.mubr.bf16.gmra.mrb[0].mxu0 %v2973
      %v3120 = vpop.f32.mrb[0].mxu0
      %v3121 = vadd.f32 0.0, %v3120
      %v3122 = vpop.f32.mrb[0].mxu0
      %v3123 = vpop.f32.mrb[0].mxu0
      %v3124 = vadd.f32 0.0, %v3123
      %v3125 = vpop.f32.mrb[0].mxu0
      %3126 = vmatprep.mubr.bf16.mxu0 0
      %3127 = vmatmul.mubr.bf16.gmra.mrb[0].mxu0 %v2975
      %v3128 = vpop.f32.mrb[0].mxu0
      %v3129 = vadd.f32 0.0, %v3128
      %v3130 = vpop.f32.mrb[0].mxu0
      %v3131 = vpop.f32.mrb[0].mxu0
      %v3132 = vadd.f32 0.0, %v3131
      %v3133 = vpop.f32.mrb[0].mxu0
      %3134 = vmatprep.mubr.bf16.mxu0 0
      %3135 = vmatmul.mubr.bf16.gmra.mrb[0].mxu0 %v2977
      %v3136 = vpop.f32.mrb[0].mxu0
      %v3137 = vadd.f32 0.0, %v3136
      %v3138 = vpop.f32.mrb[0].mxu0
      %v3139 = vpop.f32.mrb[0].mxu0
      %v3140 = vadd.f32 0.0, %v3139
      %v3141 = vpop.f32.mrb[0].mxu0
      %3142 = vmatprep.mubr.bf16.mxu0 0
      %3143 = vmatmul.mubr.bf16.gmra.mrb[0].mxu0 %v2979
      %v3144 = vpop.f32.mrb[0].mxu0
      %v3145 = vadd.f32 0.0, %v3144
      %v3146 = vpop.f32.mrb[0].mxu0
      %v3147 = vpop.f32.mrb[0].mxu0
      %v3148 = vadd.f32 0.0, %v3147
      %v3149 = vpop.f32.mrb[0].mxu0
      %3150 = vmatprep.mubr.bf16.mxu0 0
      %3151 = vmatmul.mubr.bf16.gmra.mrb[0].mxu0 %v2981
      %v3152 = vpop.f32.mrb[0].mxu0
      %v3153 = vadd.f32 0.0, %v3152
      %v3154 = vpop.f32.mrb[0].mxu0
      %v3155 = vpop.f32.mrb[0].mxu0
      %v3156 = vadd.f32 0.0, %v3155
      %v3157 = vpop.f32.mrb[0].mxu0
      %3158 = vmatprep.mubr.bf16.mxu0 0
      %3159 = vmatmul.mubr.bf16.gmra.mrb[0].mxu0 %v2983
      %v3160 = vpop.f32.mrb[0].mxu0
      %v3161 = vadd.f32 0.0, %v3160
      %v3162 = vpop.f32.mrb[0].mxu0
      %v3163 = vpop.f32.mrb[0].mxu0
      %v3164 = vadd.f32 0.0, %v3163
      %v3165 = vpop.f32.mrb[0].mxu0
      %3166 = vmatprep.mubr.bf16.mxu0 0
      %3167 = vmatmul.mubr.bf16.gmra.mrb[0].mxu0 %v2985
      %v3168 = vpop.f32.mrb[0].mxu0
      %v3169 = vadd.f32 0.0, %v3168
      %v3170 = vpop.f32.mrb[0].mxu0
      %v3171 = vpop.f32.mrb[0].mxu0
      %v3172 = vadd.f32 0.0, %v3171
      %v3173 = vpop.f32.mrb[0].mxu0
      %3174 = vmatprep.mubr.bf16.mxu0 0
      %3175 = vmatmul.mubr.bf16.gmra.mrb[0].mxu0 %v2987
      %v3176 = vpop.f32.mrb[0].mxu0
      %v3177 = vadd.f32 0.0, %v3176
      %v3178 = vpop.f32.mrb[0].mxu0
      %v3179 = vpop.f32.mrb[0].mxu0
      %v3180 = vadd.f32 0.0, %v3179
      %v3181 = vpop.f32.mrb[0].mxu0
      %3182 = vmatprep.mubr.bf16.mxu0 0
      %3183 = vmatmul.mubr.bf16.gmra.mrb[0].mxu0 %v2989
      %v3184 = vpop.f32.mrb[0].mxu0
      %v3185 = vadd.f32 0.0, %v3184
      %v3186 = vpop.f32.mrb[0].mxu0
      %v3187 = vpop.f32.mrb[0].mxu0
      %v3188 = vadd.f32 0.0, %v3187
      %v3189 = vpop.f32.mrb[0].mxu0
      %3190 = vmatprep.mubr.bf16.mxu0 0
      %3191 = vmatmul.mubr.bf16.gmra.mrb[0].mxu0 %v2991
      %v3192 = vpop.f32.mrb[0].mxu0
      %v3193 = vadd.f32 0.0, %v3192
      %v3194 = vpop.f32.mrb[0].mxu0
      %v3195 = vpop.f32.mrb[0].mxu0
      %v3196 = vadd.f32 0.0, %v3195
      %v3197 = vpop.f32.mrb[0].mxu0
      %3198 = vmatprep.mubr.bf16.mxu0 0
      %3199 = vmatmul.mubr.bf16.gmra.mrb[0].mxu0 %v2993
      %v3200 = vpop.f32.mrb[0].mxu0
      %v3201 = vadd.f32 0.0, %v3200
      %v3202 = vpop.f32.mrb[0].mxu0
      %v3203 = vpop.f32.mrb[0].mxu0
      %v3204 = vadd.f32 0.0, %v3203
      %v3205 = vpop.f32.mrb[0].mxu0
      %3206 = vmatprep.mubr.bf16.mxu0 0
      %3207 = vmatmul.mubr.bf16.gmra.mrb[0].mxu0 %v2995
      %v3208 = vpop.f32.mrb[0].mxu0
      %v3209 = vadd.f32 0.0, %v3208
      %v3210 = vpop.f32.mrb[0].mxu0
      %v3211 = vpop.f32.mrb[0].mxu0
      %v3212 = vadd.f32 0.0, %v3211
      %v3213 = vpop.f32.mrb[0].mxu0
      %3214 = vmatprep.mubr.bf16.mxu0 0
      %3215 = vmatmul.mubr.bf16.gmra.mrb[0].mxu0 %v2997
      %v3216 = vpop.f32.mrb[0].mxu0
      %v3217 = vadd.f32 0.0, %v3216
      %v3218 = vpop.f32.mrb[0].mxu0
      %v3219 = vpop.f32.mrb[0].mxu0
      %v3220 = vadd.f32 0.0, %v3219
      %v3221 = vpop.f32.mrb[0].mxu0
      %3222 = vmatprep.mubr.bf16.mxu0 0
      %3223 = vmatmul.mubr.bf16.gmra.mrb[0].mxu0 %v2999
      %v3224 = vpop.f32.mrb[0].mxu0
      %v3225 = vadd.f32 0.0, %v3224
      %v3226 = vpop.f32.mrb[0].mxu0
      %v3227 = vpop.f32.mrb[0].mxu0
      %v3228 = vadd.f32 0.0, %v3227
      %v3229 = vpop.f32.mrb[0].mxu0
      %3230 = vmatprep.mubr.bf16.mxu0 0
      %3231 = vmatmul.mubr.bf16.gmra.mrb[0].mxu0 %v3001
      %v3232 = vpop.f32.mrb[0].mxu0
      %v3233 = vadd.f32 0.0, %v3232
      %v3234 = vpop.f32.mrb[0].mxu0
      %v3235 = vpop.f32.mrb[0].mxu0
      %v3236 = vadd.f32 0.0, %v3235
      %v3237 = vpop.f32.mrb[0].mxu0
      %3238 = vmatprep.mubr.bf16.mxu0 0
      %3239 = vmatmul.mubr.bf16.gmra.mrb[0].mxu0 %v3003
      %v3240 = vpop.f32.mrb[0].mxu0
      %v3241 = vadd.f32 0.0, %v3240
      %v3242 = vpop.f32.mrb[0].mxu0
      %v3243 = vpop.f32.mrb[0].mxu0
      %v3244 = vadd.f32 0.0, %v3243
      %v3245 = vpop.f32.mrb[0].mxu0
      %3246 = vdwg.mxu0
      %v3247 = vadd.f32 %v2909, %v3105
      %v3248 = vadd.f32 %v2910, %v3108
      %v3249 = vadd.f32 %v2911, %v3113
      %v3250 = vadd.f32 %v2912, %v3116
      %v3251 = vadd.f32 %v2913, %v3121
      %v3252 = vadd.f32 %v2914, %v3124
      %v3253 = vadd.f32 %v2915, %v3129
      %v3254 = vadd.f32 %v2916, %v3132
      %v3255 = vadd.f32 %v2917, %v3137
      %v3256 = vadd.f32 %v2918, %v3140
      %v3257 = vadd.f32 %v2919, %v3145
      %v3258 = vadd.f32 %v2920, %v3148
      %v3259 = vadd.f32 %v2921, %v3153
      %v3260 = vadd.f32 %v2922, %v3156
      %v3261 = vadd.f32 %v2923, %v3161
      %v3262 = vadd.f32 %v2924, %v3164
      %v3263 = vadd.f32 %v2925, %v3169
      %v3264 = vadd.f32 %v2926, %v3172
      %v3265 = vadd.f32 %v2927, %v3177
      %v3266 = vadd.f32 %v2928, %v3180
      %v3267 = vadd.f32 %v2929, %v3185
      %v3268 = vadd.f32 %v2930, %v3188
      %v3269 = vadd.f32 %v2931, %v3193
      %v3270 = vadd.f32 %v2932, %v3196
      %v3271 = vadd.f32 %v2933, %v3201
      %v3272 = vadd.f32 %v2934, %v3204
      %v3273 = vadd.f32 %v2935, %v3209
      %v3274 = vadd.f32 %v2936, %v3212
      %v3275 = vadd.f32 %v2937, %v3217
      %v3276 = vadd.f32 %v2938, %v3220
      %v3277 = vadd.f32 %v2939, %v3225
      %v3278 = vadd.f32 %v2940, %v3228
      %v3279 = vadd.f32 %v2941, %v3233
      %v3280 = vadd.f32 %v2942, %v3236
      %v3281 = vadd.f32 %v2943, %v3241
      %v3282 = vadd.f32 %v2944, %v3244
      %v3283 = vld [vmem:[%s219 + $0x10] sm:$0xc]
      %v3284 = vld [vmem:[%s219 + $0x14] sm:$0xf]
      %v3285 = vld [vmem:[%s219 + $0x18] sm:$0xf]
      %v3286 = vld [vmem:[%s219 + $0x1c] sm:$0xf]
      %v3287 = vld [vmem:[%s219 + $0x20] sm:$0xf]
      %v3288 = vld [vmem:[%s219 + $0x24] sm:$0xf]
      %v3289 = vld [vmem:[%s219 + $0x28] sm:$0xf]
      %v3290 = vld [vmem:[%s219 + $0x2c] sm:$0xf]
      %v3291 = vld [vmem:[%s219 + $0x30] sm:$0xf]
      %v3292 = vld [vmem:[%s219 + $0x34] sm:$0xf]
      %v3293 = vld [vmem:[%s219 + $0x38] sm:$0xf]
      %v3294 = vld [vmem:[%s219 + $0x3c] sm:$0xf]
      %v3295 = vld [vmem:[%s219 + $0x40] sm:$0xf]
      %v3296 = vld [vmem:[%s219 + $0x44] sm:$0xf]
      %v3297 = vld [vmem:[%s219 + $0x48] sm:$0xf]
      %v3298 = vld [vmem:[%s219 + $0x4c] sm:$0xf]
      %v3299 = vld [vmem:[%s219 + $0x50] sm:$0xf]
      %v3300 = vld [vmem:[%s219 + $0x54] sm:$0xf]
      %v3301 = vld [vmem:[%s219 + $0x58] sm:$0xf]
      %v3302 = vld [vmem:[%s219 + $0x5c] sm:$0xf]
      %v3303 = vld [vmem:[%s219 + $0x60] sm:$0xf]
      %v3304 = vld [vmem:[%s219 + $0x64] sm:$0xf]
      %v3305 = vld [vmem:[%s219 + $0x68] sm:$0xf]
      %v3306 = vld [vmem:[%s219 + $0x6c] sm:$0xf]
      %v3307 = vld [vmem:[%s219 + $0x70] sm:$0xf]
      %v3308 = vld [vmem:[%s219 + $0x74] sm:$0xf]
      %v3309 = vld [vmem:[%s219 + $0x78] sm:$0xf]
      %v3310 = vld [vmem:[%s219 + $0x7c] sm:$0xf]
      %v3311 = vld [vmem:[%s219 + $0x80] sm:$0xf]
      %v3312 = vld [vmem:[%s219 + $0x84] sm:$0xf]
      %v3313 = vld [vmem:[%s219 + $0x88] sm:$0xf]
      %v3314 = vld [vmem:[%s219 + $0x8c] sm:$0xf]
      %v3315 = vld [vmem:[%s219 + $0x90] sm:$0xf]
      %v3316 = vld [vmem:[%s219 + $0x94] sm:$0xf]
      %v3317 = vld [vmem:[%s219 + $0x98] sm:$0xf]
      %v3318 = vld [vmem:[%s219 + $0x9c] sm:$0xf]
      %v3319 = vld [vmem:[%s219 + $0xa0] sm:$0x3]
      %s3320 = scalar_lea.vmem %s1, 384
      %v3321 = vld [vmem:[%s3320] sm:$0xf]
      %v3322 = vld [vmem:[%s3320 + $0x4] sm:$0xf]
      %v3323 = vld [vmem:[%s3320 + $0x8] sm:$0xf]
      %v3324 = vld [vmem:[%s3320 + $0xc] sm:$0xf]
      %v3325 = vld [vmem:[%s3320 + $0x10] sm:$0xf]
      %v3326 = vld [vmem:[%s3320 + $0x14] sm:$0xf]
      %v3327 = vld [vmem:[%s3320 + $0x18] sm:$0xf]
      %v3328 = vld [vmem:[%s3320 + $0x1c] sm:$0xf]
      %v3329 = vld [vmem:[%s3320 + $0x20] sm:$0xf]
      %v3330 = vld [vmem:[%s3320 + $0x24] sm:$0xf]
      %v3331 = vld [vmem:[%s3320 + $0x28] sm:$0xf]
      %v3332 = vld [vmem:[%s3320 + $0x2c] sm:$0xf]
      %v3333 = vld [vmem:[%s3320 + $0x30] sm:$0xf]
      %v3334 = vld [vmem:[%s3320 + $0x34] sm:$0xf]
      %v3335 = vld [vmem:[%s3320 + $0x38] sm:$0xf]
      %v3336 = vld [vmem:[%s3320 + $0x3c] sm:$0xf]
      %v3374 = vunpack.c.l.b16 %v3283
      %v3375 = vunpack.c.l.b16 %v3284
      %v3376 = vunpack.c.l.b16 %v3285
      %v3377 = vunpack.c.l.b16 %v3286
      %v3378 = vunpack.c.l.b16 %v3287
      %v3379 = vunpack.c.l.b16 %v3288
      %v3380 = vunpack.c.l.b16 %v3289
      %v3381 = vunpack.c.l.b16 %v3290
      %v3382 = vunpack.c.l.b16 %v3291
      %v3383 = vunpack.c.l.b16 %v3292
      %v3384 = vunpack.c.l.b16 %v3293
      %v3385 = vunpack.c.l.b16 %v3294
      %v3386 = vunpack.c.l.b16 %v3295
      %v3387 = vunpack.c.l.b16 %v3296
      %v3388 = vunpack.c.l.b16 %v3297
      %v3389 = vunpack.c.l.b16 %v3298
      %v3390 = vunpack.c.l.b16 %v3299
      %v3391 = vunpack.c.l.b16 %v3300
      %v3392 = vunpack.c.l.b16 %v3301
      %v3393 = vunpack.c.l.b16 %v3302
      %v3394 = vunpack.c.l.b16 %v3303
      %v3395 = vunpack.c.l.b16 %v3304
      %v3396 = vunpack.c.l.b16 %v3305
      %v3397 = vunpack.c.l.b16 %v3306
      %v3398 = vunpack.c.l.b16 %v3307
      %v3399 = vunpack.c.l.b16 %v3308
      %v3400 = vunpack.c.l.b16 %v3309
      %v3401 = vunpack.c.l.b16 %v3310
      %v3402 = vunpack.c.l.b16 %v3311
      %v3403 = vunpack.c.l.b16 %v3312
      %v3404 = vunpack.c.l.b16 %v3313
      %v3405 = vunpack.c.l.b16 %v3314
      %v3406 = vunpack.c.l.b16 %v3315
      %v3407 = vunpack.c.l.b16 %v3316
      %v3408 = vunpack.c.l.b16 %v3317
      %v3409 = vunpack.c.l.b16 %v3318
      %v3410 = vunpack.c.l.b16 %v3319
      %v3411 = vpack.c.b16 %v3375, %v3374
      %v3412 = vpack.c.b16 %v3377, %v3376
      %v3413 = vpack.c.b16 %v3379, %v3378
      %v3414 = vpack.c.b16 %v3381, %v3380
      %v3415 = vpack.c.b16 %v3383, %v3382
      %v3416 = vpack.c.b16 %v3385, %v3384
      %v3417 = vpack.c.b16 %v3387, %v3386
      %v3418 = vpack.c.b16 %v3389, %v3388
      %v3419 = vpack.c.b16 %v3391, %v3390
      %v3420 = vpack.c.b16 %v3393, %v3392
      %v3421 = vpack.c.b16 %v3395, %v3394
      %v3422 = vpack.c.b16 %v3397, %v3396
      %v3423 = vpack.c.b16 %v3399, %v3398
      %v3424 = vpack.c.b16 %v3401, %v3400
      %v3425 = vpack.c.b16 %v3403, %v3402
      %v3426 = vpack.c.b16 %v3405, %v3404
      %v3427 = vpack.c.b16 %v3407, %v3406
      %v3428 = vpack.c.b16 %v3409, %v3408
      %v3429 = vpack.c.b16 %v3410, %v3410
      %v3430 = vrot.slane %v3411, 2
      %v3431 = vrot.slane %v3412, 2
      %v3432 = vsel %vm2966, %v3430, %v3431
      %v3433 = vrot.slane %v3413, 2
      %v3434 = vsel %vm2966, %v3431, %v3433
      %v3435 = vrot.slane %v3414, 2
      %v3436 = vsel %vm2966, %v3433, %v3435
      %v3437 = vrot.slane %v3415, 2
      %v3438 = vsel %vm2966, %v3435, %v3437
      %v3439 = vrot.slane %v3416, 2
      %v3440 = vsel %vm2966, %v3437, %v3439
      %v3441 = vrot.slane %v3417, 2
      %v3442 = vsel %vm2966, %v3439, %v3441
      %v3443 = vrot.slane %v3418, 2
      %v3444 = vsel %vm2966, %v3441, %v3443
      %v3445 = vrot.slane %v3419, 2
      %v3446 = vsel %vm2966, %v3443, %v3445
      %v3447 = vrot.slane %v3420, 2
      %v3448 = vsel %vm2966, %v3445, %v3447
      %v3449 = vrot.slane %v3421, 2
      %v3450 = vsel %vm2966, %v3447, %v3449
      %v3451 = vrot.slane %v3422, 2
      %v3452 = vsel %vm2966, %v3449, %v3451
      %v3453 = vrot.slane %v3423, 2
      %v3454 = vsel %vm2966, %v3451, %v3453
      %v3455 = vrot.slane %v3424, 2
      %v3456 = vsel %vm2966, %v3453, %v3455
      %v3457 = vrot.slane %v3425, 2
      %v3458 = vsel %vm2966, %v3455, %v3457
      %v3459 = vrot.slane %v3426, 2
      %v3460 = vsel %vm2966, %v3457, %v3459
      %v3461 = vrot.slane %v3427, 2
      %v3462 = vsel %vm2966, %v3459, %v3461
      %v3463 = vrot.slane %v3428, 2
      %v3464 = vsel %vm2966, %v3461, %v3463
      %v3465 = vrot.slane %v3429, 2
      %v3466 = vsel %vm2966, %v3463, %v3465
      %v3501 = vunpack.c.l.b16 %v3321
      %v3502 = vunpack.c.l.b16 %v3322
      %v3503 = vunpack.c.l.b16 %v3323
      %v3504 = vunpack.c.l.b16 %v3324
      %v3505 = vunpack.c.l.b16 %v3325
      %v3506 = vunpack.c.l.b16 %v3326
      %v3507 = vunpack.c.l.b16 %v3327
      %v3508 = vunpack.c.l.b16 %v3328
      %v3509 = vunpack.c.l.b16 %v3329
      %v3510 = vunpack.c.l.b16 %v3330
      %v3511 = vunpack.c.l.b16 %v3331
      %v3512 = vunpack.c.l.b16 %v3332
      %v3513 = vunpack.c.l.b16 %v3333
      %v3514 = vunpack.c.l.b16 %v3334
      %v3515 = vunpack.c.l.b16 %v3335
      %v3516 = vunpack.c.l.b16 %v3336
      %v3517 = vpack.c.b16 %v3502, %v3501
      %v3518 = vpack.c.b16 %v3504, %v3503
      %v3519 = vpack.c.b16 %v3506, %v3505
      %v3520 = vpack.c.b16 %v3508, %v3507
      %v3521 = vpack.c.b16 %v3510, %v3509
      %v3522 = vpack.c.b16 %v3512, %v3511
      %v3523 = vpack.c.b16 %v3514, %v3513
      %v3524 = vpack.c.b16 %v3516, %v3515
      %3533 = vmatprep.subr.bf16.mxu0 0
      %3534 = vmatpush1.bf16.msra.mxu0 %v3517
      %3535 = vmatprep.subr.bf16.mxu0 0
      %3536 = vmatpush1.bf16.msra.mxu0 %v3518
      %3537 = vmatprep.subr.bf16.mxu0 0
      %3538 = vmatpush1.bf16.msra.mxu0 %v3519
      %3539 = vmatprep.subr.bf16.mxu0 0
      %3540 = vmatpush1.bf16.msra.mxu0 %v3520
      %3541 = vmatprep.subr.bf16.mxu0 0
      %3542 = vmatpush1.bf16.msra.mxu0 %v3521
      %3543 = vmatprep.subr.bf16.mxu0 0
      %3544 = vmatpush1.bf16.msra.mxu0 %v3522
      %3545 = vmatprep.subr.bf16.mxu0 0
      %3546 = vmatpush1.bf16.msra.mxu0 %v3523
      %3547 = vmatprep.subr.bf16.mxu0 0
      %3548 = vmatpush1.bf16.msra.mxu0 %v3524
      %3549 = vmatprep.subr.bf16.mxu0 0
      %3550 = vmatpush1.bf16.msra.mxu0 0
      %3551 = vmatprep.subr.bf16.mxu0 0
      %3552 = vmatpush1.bf16.msra.mxu0 0
      %3553 = vmatprep.subr.bf16.mxu0 0
      %3554 = vmatpush1.bf16.msra.mxu0 0
      %3555 = vmatprep.subr.bf16.mxu0 0
      %3556 = vmatpush1.bf16.msra.mxu0 0
      %3557 = vmatprep.subr.bf16.mxu0 0
      %3558 = vmatpush1.bf16.msra.mxu0 0
      %3559 = vmatprep.subr.bf16.mxu0 0
      %3560 = vmatpush1.bf16.msra.mxu0 0
      %3561 = vmatprep.subr.bf16.mxu0 0
      %3562 = vmatpush1.bf16.msra.mxu0 0
      %3563 = vmatprep.subr.bf16.mxu0 0
      %3564 = vmatpush1.bf16.msra.mxu0 0
      %3565 = vmatprep.mubr.bf16.mxu0 0
      %3566 = vmatmul.mubr.bf16.gmra.mrb[0].mxu0 %v3432
      %v3567 = vpop.f32.mrb[0].mxu0
      %v3568 = vadd.f32 0.0, %v3567
      %v3569 = vpop.f32.mrb[0].mxu0
      %v3570 = vpop.f32.mrb[0].mxu0
      %v3571 = vadd.f32 0.0, %v3570
      %v3572 = vpop.f32.mrb[0].mxu0
      %3573 = vmatprep.mubr.bf16.mxu0 0
      %3574 = vmatmul.mubr.bf16.gmra.mrb[0].mxu0 %v3434
      %v3575 = vpop.f32.mrb[0].mxu0
      %v3576 = vadd.f32 0.0, %v3575
      %v3577 = vpop.f32.mrb[0].mxu0
      %v3578 = vpop.f32.mrb[0].mxu0
      %v3579 = vadd.f32 0.0, %v3578
      %v3580 = vpop.f32.mrb[0].mxu0
      %3581 = vmatprep.mubr.bf16.mxu0 0
      %3582 = vmatmul.mubr.bf16.gmra.mrb[0].mxu0 %v3436
      %v3583 = vpop.f32.mrb[0].mxu0
      %v3584 = vadd.f32 0.0, %v3583
      %v3585 = vpop.f32.mrb[0].mxu0
      %v3586 = vpop.f32.mrb[0].mxu0
      %v3587 = vadd.f32 0.0, %v3586
      %v3588 = vpop.f32.mrb[0].mxu0
      %3589 = vmatprep.mubr.bf16.mxu0 0
      %3590 = vmatmul.mubr.bf16.gmra.mrb[0].mxu0 %v3438
      %v3591 = vpop.f32.mrb[0].mxu0
      %v3592 = vadd.f32 0.0, %v3591
      %v3593 = vpop.f32.mrb[0].mxu0
      %v3594 = vpop.f32.mrb[0].mxu0
      %v3595 = vadd.f32 0.0, %v3594
      %v3596 = vpop.f32.mrb[0].mxu0
      %3597 = vmatprep.mubr.bf16.mxu0 0
      %3598 = vmatmul.mubr.bf16.gmra.mrb[0].mxu0 %v3440
      %v3599 = vpop.f32.mrb[0].mxu0
      %v3600 = vadd.f32 0.0, %v3599
      %v3601 = vpop.f32.mrb[0].mxu0
      %v3602 = vpop.f32.mrb[0].mxu0
      %v3603 = vadd.f32 0.0, %v3602
      %v3604 = vpop.f32.mrb[0].mxu0
      %3605 = vmatprep.mubr.bf16.mxu0 0
      %3606 = vmatmul.mubr.bf16.gmra.mrb[0].mxu0 %v3442
      %v3607 = vpop.f32.mrb[0].mxu0
      %v3608 = vadd.f32 0.0, %v3607
      %v3609 = vpop.f32.mrb[0].mxu0
      %v3610 = vpop.f32.mrb[0].mxu0
      %v3611 = vadd.f32 0.0, %v3610
      %v3612 = vpop.f32.mrb[0].mxu0
      %3613 = vmatprep.mubr.bf16.mxu0 0
      %3614 = vmatmul.mubr.bf16.gmra.mrb[0].mxu0 %v3444
      %v3615 = vpop.f32.mrb[0].mxu0
      %v3616 = vadd.f32 0.0, %v3615
      %v3617 = vpop.f32.mrb[0].mxu0
      %v3618 = vpop.f32.mrb[0].mxu0
      %v3619 = vadd.f32 0.0, %v3618
      %v3620 = vpop.f32.mrb[0].mxu0
      %3621 = vmatprep.mubr.bf16.mxu0 0
      %3622 = vmatmul.mubr.bf16.gmra.mrb[0].mxu0 %v3446
      %v3623 = vpop.f32.mrb[0].mxu0
      %v3624 = vadd.f32 0.0, %v3623
      %v3625 = vpop.f32.mrb[0].mxu0
      %v3626 = vpop.f32.mrb[0].mxu0
      %v3627 = vadd.f32 0.0, %v3626
      %v3628 = vpop.f32.mrb[0].mxu0
      %3629 = vmatprep.mubr.bf16.mxu0 0
      %3630 = vmatmul.mubr.bf16.gmra.mrb[0].mxu0 %v3448
      %v3631 = vpop.f32.mrb[0].mxu0
      %v3632 = vadd.f32 0.0, %v3631
      %v3633 = vpop.f32.mrb[0].mxu0
      %v3634 = vpop.f32.mrb[0].mxu0
      %v3635 = vadd.f32 0.0, %v3634
      %v3636 = vpop.f32.mrb[0].mxu0
      %3637 = vmatprep.mubr.bf16.mxu0 0
      %3638 = vmatmul.mubr.bf16.gmra.mrb[0].mxu0 %v3450
      %v3639 = vpop.f32.mrb[0].mxu0
      %v3640 = vadd.f32 0.0, %v3639
      %v3641 = vpop.f32.mrb[0].mxu0
      %v3642 = vpop.f32.mrb[0].mxu0
      %v3643 = vadd.f32 0.0, %v3642
      %v3644 = vpop.f32.mrb[0].mxu0
      %3645 = vmatprep.mubr.bf16.mxu0 0
      %3646 = vmatmul.mubr.bf16.gmra.mrb[0].mxu0 %v3452
      %v3647 = vpop.f32.mrb[0].mxu0
      %v3648 = vadd.f32 0.0, %v3647
      %v3649 = vpop.f32.mrb[0].mxu0
      %v3650 = vpop.f32.mrb[0].mxu0
      %v3651 = vadd.f32 0.0, %v3650
      %v3652 = vpop.f32.mrb[0].mxu0
      %3653 = vmatprep.mubr.bf16.mxu0 0
      %3654 = vmatmul.mubr.bf16.gmra.mrb[0].mxu0 %v3454
      %v3655 = vpop.f32.mrb[0].mxu0
      %v3656 = vadd.f32 0.0, %v3655
      %v3657 = vpop.f32.mrb[0].mxu0
      %v3658 = vpop.f32.mrb[0].mxu0
      %v3659 = vadd.f32 0.0, %v3658
      %v3660 = vpop.f32.mrb[0].mxu0
      %3661 = vmatprep.mubr.bf16.mxu0 0
      %3662 = vmatmul.mubr.bf16.gmra.mrb[0].mxu0 %v3456
      %v3663 = vpop.f32.mrb[0].mxu0
      %v3664 = vadd.f32 0.0, %v3663
      %v3665 = vpop.f32.mrb[0].mxu0
      %v3666 = vpop.f32.mrb[0].mxu0
      %v3667 = vadd.f32 0.0, %v3666
      %v3668 = vpop.f32.mrb[0].mxu0
      %3669 = vmatprep.mubr.bf16.mxu0 0
      %3670 = vmatmul.mubr.bf16.gmra.mrb[0].mxu0 %v3458
      %v3671 = vpop.f32.mrb[0].mxu0
      %v3672 = vadd.f32 0.0, %v3671
      %v3673 = vpop.f32.mrb[0].mxu0
      %v3674 = vpop.f32.mrb[0].mxu0
      %v3675 = vadd.f32 0.0, %v3674
      %v3676 = vpop.f32.mrb[0].mxu0
      %3677 = vmatprep.mubr.bf16.mxu0 0
      %3678 = vmatmul.mubr.bf16.gmra.mrb[0].mxu0 %v3460
      %v3679 = vpop.f32.mrb[0].mxu0
      %v3680 = vadd.f32 0.0, %v3679
      %v3681 = vpop.f32.mrb[0].mxu0
      %v3682 = vpop.f32.mrb[0].mxu0
      %v3683 = vadd.f32 0.0, %v3682
      %v3684 = vpop.f32.mrb[0].mxu0
      %3685 = vmatprep.mubr.bf16.mxu0 0
      %3686 = vmatmul.mubr.bf16.gmra.mrb[0].mxu0 %v3462
      %v3687 = vpop.f32.mrb[0].mxu0
      %v3688 = vadd.f32 0.0, %v3687
      %v3689 = vpop.f32.mrb[0].mxu0
      %v3690 = vpop.f32.mrb[0].mxu0
      %v3691 = vadd.f32 0.0, %v3690
      %v3692 = vpop.f32.mrb[0].mxu0
      %3693 = vmatprep.mubr.bf16.mxu0 0
      %3694 = vmatmul.mubr.bf16.gmra.mrb[0].mxu0 %v3464
      %v3695 = vpop.f32.mrb[0].mxu0
      %v3696 = vadd.f32 0.0, %v3695
      %v3697 = vpop.f32.mrb[0].mxu0
      %v3698 = vpop.f32.mrb[0].mxu0
      %v3699 = vadd.f32 0.0, %v3698
      %v3700 = vpop.f32.mrb[0].mxu0
      %3701 = vmatprep.mubr.bf16.mxu0 0
      %3702 = vmatmul.mubr.bf16.gmra.mrb[0].mxu0 %v3466
      %v3703 = vpop.f32.mrb[0].mxu0
      %v3704 = vadd.f32 0.0, %v3703
      %v3705 = vpop.f32.mrb[0].mxu0
      %v3706 = vpop.f32.mrb[0].mxu0
      %v3707 = vadd.f32 0.0, %v3706
      %v3708 = vpop.f32.mrb[0].mxu0
      %3709 = vdwg.mxu0
      %v3710 = vadd.f32 %v3247, %v3568
      %v3711 = vadd.f32 %v3248, %v3571
      %v3712 = vadd.f32 %v3249, %v3576
      %v3713 = vadd.f32 %v3250, %v3579
      %v3714 = vadd.f32 %v3251, %v3584
      %v3715 = vadd.f32 %v3252, %v3587
      %v3716 = vadd.f32 %v3253, %v3592
      %v3717 = vadd.f32 %v3254, %v3595
      %v3718 = vadd.f32 %v3255, %v3600
      %v3719 = vadd.f32 %v3256, %v3603
      %v3720 = vadd.f32 %v3257, %v3608
      %v3721 = vadd.f32 %v3258, %v3611
      %v3722 = vadd.f32 %v3259, %v3616
      %v3723 = vadd.f32 %v3260, %v3619
      %v3724 = vadd.f32 %v3261, %v3624
      %v3725 = vadd.f32 %v3262, %v3627
      %v3726 = vadd.f32 %v3263, %v3632
      %v3727 = vadd.f32 %v3264, %v3635
      %v3728 = vadd.f32 %v3265, %v3640
      %v3729 = vadd.f32 %v3266, %v3643
      %v3730 = vadd.f32 %v3267, %v3648
      %v3731 = vadd.f32 %v3268, %v3651
      %v3732 = vadd.f32 %v3269, %v3656
      %v3733 = vadd.f32 %v3270, %v3659
      %v3734 = vadd.f32 %v3271, %v3664
      %v3735 = vadd.f32 %v3272, %v3667
      %v3736 = vadd.f32 %v3273, %v3672
      %v3737 = vadd.f32 %v3274, %v3675
      %v3738 = vadd.f32 %v3275, %v3680
      %v3739 = vadd.f32 %v3276, %v3683
      %v3740 = vadd.f32 %v3277, %v3688
      %v3741 = vadd.f32 %v3278, %v3691
      %v3742 = vadd.f32 %v3279, %v3696
      %v3743 = vadd.f32 %v3280, %v3699
      %v3744 = vadd.f32 %v3281, %v3704
      %v3745 = vadd.f32 %v3282, %v3707
      %v3746 = vld [vmem:[%s219 + $0xa0] sm:$0x7]
      %s3747 = scalar_lea.vmem %s1, 448
      %v3748 = vld [vmem:[%s3747] sm:$0xf]
      %v3749 = vld [vmem:[%s3747 + $0x4] sm:$0xf]
      %v3750 = vld [vmem:[%s3747 + $0x8] sm:$0xf]
      %v3751 = vld [vmem:[%s3747 + $0xc] sm:$0xf]
      %v3752 = vld [vmem:[%s3747 + $0x10] sm:$0xf]
      %v3753 = vld [vmem:[%s3747 + $0x14] sm:$0xf]
      %v3754 = vld [vmem:[%s3747 + $0x18] sm:$0xf]
      %v3755 = vld [vmem:[%s3747 + $0x1c] sm:$0xf]
      %v3756 = vld [vmem:[%s3747 + $0x20] sm:$0xf]
      %v3757 = vld [vmem:[%s3747 + $0x24] sm:$0xf]
      %v3758 = vld [vmem:[%s3747 + $0x28] sm:$0xf]
      %v3759 = vld [vmem:[%s3747 + $0x2c] sm:$0xf]
      %v3760 = vld [vmem:[%s3747 + $0x30] sm:$0xf]
      %v3761 = vld [vmem:[%s3747 + $0x34] sm:$0xf]
      %v3762 = vld [vmem:[%s3747 + $0x38] sm:$0xf]
      %v3763 = vld [vmem:[%s3747 + $0x3c] sm:$0xf]
      %v3765 = vunpack.c.l.b16 %v3746
      %v3766 = vpack.c.b16 %v3765, %v3765
      %vm3767 = vsmask.f32 5376
      %v3769 = vshrl.u32 %v3411, 16
      %v3771 = vrot.slane %v3769, 2
      %v3772 = vshll.u32 %v3411, 16
      %v3774 = vrot.slane %v3772, 3
      %v3775 = vor.u32 %v3771, %v3774
      %v3777 = vshrl.u32 %v3412, 16
      %v3779 = vrot.slane %v3777, 2
      %v3780 = vshll.u32 %v3412, 16
      %v3782 = vrot.slane %v3780, 3
      %v3783 = vor.u32 %v3779, %v3782
      %v3784 = vsel %vm3767, %v3775, %v3783
      %v3786 = vshrl.u32 %v3413, 16
      %v3788 = vrot.slane %v3786, 2
      %v3789 = vshll.u32 %v3413, 16
      %v3791 = vrot.slane %v3789, 3
      %v3792 = vor.u32 %v3788, %v3791
      %v3793 = vsel %vm3767, %v3783, %v3792
      %v3795 = vshrl.u32 %v3414, 16
      %v3797 = vrot.slane %v3795, 2
      %v3798 = vshll.u32 %v3414, 16
      %v3800 = vrot.slane %v3798, 3
      %v3801 = vor.u32 %v3797, %v3800
      %v3802 = vsel %vm3767, %v3792, %v3801
      %v3804 = vshrl.u32 %v3415, 16
      %v3806 = vrot.slane %v3804, 2
      %v3807 = vshll.u32 %v3415, 16
      %v3809 = vrot.slane %v3807, 3
      %v3810 = vor.u32 %v3806, %v3809
      %v3811 = vsel %vm3767, %v3801, %v3810
      %v3813 = vshrl.u32 %v3416, 16
      %v3815 = vrot.slane %v3813, 2
      %v3816 = vshll.u32 %v3416, 16
      %v3818 = vrot.slane %v3816, 3
      %v3819 = vor.u32 %v3815, %v3818
      %v3820 = vsel %vm3767, %v3810, %v3819
      %v3822 = vshrl.u32 %v3417, 16
      %v3824 = vrot.slane %v3822, 2
      %v3825 = vshll.u32 %v3417, 16
      %v3827 = vrot.slane %v3825, 3
      %v3828 = vor.u32 %v3824, %v3827
      %v3829 = vsel %vm3767, %v3819, %v3828
      %v3831 = vshrl.u32 %v3418, 16
      %v3833 = vrot.slane %v3831, 2
      %v3834 = vshll.u32 %v3418, 16
      %v3836 = vrot.slane %v3834, 3
      %v3837 = vor.u32 %v3833, %v3836
      %v3838 = vsel %vm3767, %v3828, %v3837
      %v3840 = vshrl.u32 %v3419, 16
      %v3842 = vrot.slane %v3840, 2
      %v3843 = vshll.u32 %v3419, 16
      %v3845 = vrot.slane %v3843, 3
      %v3846 = vor.u32 %v3842, %v3845
      %v3847 = vsel %vm3767, %v3837, %v3846
      %v3849 = vshrl.u32 %v3420, 16
      %v3851 = vrot.slane %v3849, 2
      %v3852 = vshll.u32 %v3420, 16
      %v3854 = vrot.slane %v3852, 3
      %v3855 = vor.u32 %v3851, %v3854
      %v3856 = vsel %vm3767, %v3846, %v3855
      %v3858 = vshrl.u32 %v3421, 16
      %v3860 = vrot.slane %v3858, 2
      %v3861 = vshll.u32 %v3421, 16
      %v3863 = vrot.slane %v3861, 3
      %v3864 = vor.u32 %v3860, %v3863
      %v3865 = vsel %vm3767, %v3855, %v3864
      %v3867 = vshrl.u32 %v3422, 16
      %v3869 = vrot.slane %v3867, 2
      %v3870 = vshll.u32 %v3422, 16
      %v3872 = vrot.slane %v3870, 3
      %v3873 = vor.u32 %v3869, %v3872
      %v3874 = vsel %vm3767, %v3864, %v3873
      %v3876 = vshrl.u32 %v3423, 16
      %v3878 = vrot.slane %v3876, 2
      %v3879 = vshll.u32 %v3423, 16
      %v3881 = vrot.slane %v3879, 3
      %v3882 = vor.u32 %v3878, %v3881
      %v3883 = vsel %vm3767, %v3873, %v3882
      %v3885 = vshrl.u32 %v3424, 16
      %v3887 = vrot.slane %v3885, 2
      %v3888 = vshll.u32 %v3424, 16
      %v3890 = vrot.slane %v3888, 3
      %v3891 = vor.u32 %v3887, %v3890
      %v3892 = vsel %vm3767, %v3882, %v3891
      %v3894 = vshrl.u32 %v3425, 16
      %v3896 = vrot.slane %v3894, 2
      %v3897 = vshll.u32 %v3425, 16
      %v3899 = vrot.slane %v3897, 3
      %v3900 = vor.u32 %v3896, %v3899
      %v3901 = vsel %vm3767, %v3891, %v3900
      %v3903 = vshrl.u32 %v3426, 16
      %v3905 = vrot.slane %v3903, 2
      %v3906 = vshll.u32 %v3426, 16
      %v3908 = vrot.slane %v3906, 3
      %v3909 = vor.u32 %v3905, %v3908
      %v3910 = vsel %vm3767, %v3900, %v3909
      %v3912 = vshrl.u32 %v3427, 16
      %v3914 = vrot.slane %v3912, 2
      %v3915 = vshll.u32 %v3427, 16
      %v3917 = vrot.slane %v3915, 3
      %v3918 = vor.u32 %v3914, %v3917
      %v3919 = vsel %vm3767, %v3909, %v3918
      %v3921 = vshrl.u32 %v3428, 16
      %v3923 = vrot.slane %v3921, 2
      %v3924 = vshll.u32 %v3428, 16
      %v3926 = vrot.slane %v3924, 3
      %v3927 = vor.u32 %v3923, %v3926
      %v3928 = vsel %vm3767, %v3918, %v3927
      %v3930 = vshrl.u32 %v3766, 16
      %v3932 = vrot.slane %v3930, 2
      %v3933 = vshll.u32 %v3766, 16
      %v3935 = vrot.slane %v3933, 3
      %v3936 = vor.u32 %v3932, %v3935
      %v3937 = vsel %vm3767, %v3927, %v3936
      %v3972 = vunpack.c.l.b16 %v3748
      %v3973 = vunpack.c.l.b16 %v3749
      %v3974 = vunpack.c.l.b16 %v3750
      %v3975 = vunpack.c.l.b16 %v3751
      %v3976 = vunpack.c.l.b16 %v3752
      %v3977 = vunpack.c.l.b16 %v3753
      %v3978 = vunpack.c.l.b16 %v3754
      %v3979 = vunpack.c.l.b16 %v3755
      %v3980 = vunpack.c.l.b16 %v3756
      %v3981 = vunpack.c.l.b16 %v3757
      %v3982 = vunpack.c.l.b16 %v3758
      %v3983 = vunpack.c.l.b16 %v3759
      %v3984 = vunpack.c.l.b16 %v3760
      %v3985 = vunpack.c.l.b16 %v3761
      %v3986 = vunpack.c.l.b16 %v3762
      %v3987 = vunpack.c.l.b16 %v3763
      %v3988 = vpack.c.b16 %v3973, %v3972
      %v3989 = vpack.c.b16 %v3975, %v3974
      %v3990 = vpack.c.b16 %v3977, %v3976
      %v3991 = vpack.c.b16 %v3979, %v3978
      %v3992 = vpack.c.b16 %v3981, %v3980
      %v3993 = vpack.c.b16 %v3983, %v3982
      %v3994 = vpack.c.b16 %v3985, %v3984
      %v3995 = vpack.c.b16 %v3987, %v3986
      %4004 = vmatprep.subr.bf16.mxu0 0
      %4005 = vmatpush1.bf16.msra.mxu0 %v3988
      %4006 = vmatprep.subr.bf16.mxu0 0
      %4007 = vmatpush1.bf16.msra.mxu0 %v3989
      %4008 = vmatprep.subr.bf16.mxu0 0
      %4009 = vmatpush1.bf16.msra.mxu0 %v3990
      %4010 = vmatprep.subr.bf16.mxu0 0
      %4011 = vmatpush1.bf16.msra.mxu0 %v3991
      %4012 = vmatprep.subr.bf16.mxu0 0
      %4013 = vmatpush1.bf16.msra.mxu0 %v3992
      %4014 = vmatprep.subr.bf16.mxu0 0
      %4015 = vmatpush1.bf16.msra.mxu0 %v3993
      %4016 = vmatprep.subr.bf16.mxu0 0
      %4017 = vmatpush1.bf16.msra.mxu0 %v3994
      %4018 = vmatprep.subr.bf16.mxu0 0
      %4019 = vmatpush1.bf16.msra.mxu0 %v3995
      %4020 = vmatprep.subr.bf16.mxu0 0
      %4021 = vmatpush1.bf16.msra.mxu0 0
      %4022 = vmatprep.subr.bf16.mxu0 0
      %4023 = vmatpush1.bf16.msra.mxu0 0
      %4024 = vmatprep.subr.bf16.mxu0 0
      %4025 = vmatpush1.bf16.msra.mxu0 0
      %4026 = vmatprep.subr.bf16.mxu0 0
      %4027 = vmatpush1.bf16.msra.mxu0 0
      %4028 = vmatprep.subr.bf16.mxu0 0
      %4029 = vmatpush1.bf16.msra.mxu0 0
      %4030 = vmatprep.subr.bf16.mxu0 0
      %4031 = vmatpush1.bf16.msra.mxu0 0
      %4032 = vmatprep.subr.bf16.mxu0 0
      %4033 = vmatpush1.bf16.msra.mxu0 0
      %4034 = vmatprep.subr.bf16.mxu0 0
      %4035 = vmatpush1.bf16.msra.mxu0 0
      %4036 = vmatprep.mubr.bf16.mxu0 0
      %4037 = vmatmul.mubr.bf16.gmra.mrb[0].mxu0 %v3784
      %v4038 = vpop.f32.mrb[0].mxu0
      %v4039 = vadd.f32 0.0, %v4038
      %v4040 = vpop.f32.mrb[0].mxu0
      %v4041 = vpop.f32.mrb[0].mxu0
      %v4042 = vadd.f32 0.0, %v4041
      %v4043 = vpop.f32.mrb[0].mxu0
      %4044 = vmatprep.mubr.bf16.mxu0 0
      %4045 = vmatmul.mubr.bf16.gmra.mrb[0].mxu0 %v3793
      %v4046 = vpop.f32.mrb[0].mxu0
      %v4047 = vadd.f32 0.0, %v4046
      %v4048 = vpop.f32.mrb[0].mxu0
      %v4049 = vpop.f32.mrb[0].mxu0
      %v4050 = vadd.f32 0.0, %v4049
      %v4051 = vpop.f32.mrb[0].mxu0
      %4052 = vmatprep.mubr.bf16.mxu0 0
      %4053 = vmatmul.mubr.bf16.gmra.mrb[0].mxu0 %v3802
      %v4054 = vpop.f32.mrb[0].mxu0
      %v4055 = vadd.f32 0.0, %v4054
      %v4056 = vpop.f32.mrb[0].mxu0
      %v4057 = vpop.f32.mrb[0].mxu0
      %v4058 = vadd.f32 0.0, %v4057
      %v4059 = vpop.f32.mrb[0].mxu0
      %4060 = vmatprep.mubr.bf16.mxu0 0
      %4061 = vmatmul.mubr.bf16.gmra.mrb[0].mxu0 %v3811
      %v4062 = vpop.f32.mrb[0].mxu0
      %v4063 = vadd.f32 0.0, %v4062
      %v4064 = vpop.f32.mrb[0].mxu0
      %v4065 = vpop.f32.mrb[0].mxu0
      %v4066 = vadd.f32 0.0, %v4065
      %v4067 = vpop.f32.mrb[0].mxu0
      %4068 = vmatprep.mubr.bf16.mxu0 0
      %4069 = vmatmul.mubr.bf16.gmra.mrb[0].mxu0 %v3820
      %v4070 = vpop.f32.mrb[0].mxu0
      %v4071 = vadd.f32 0.0, %v4070
      %v4072 = vpop.f32.mrb[0].mxu0
      %v4073 = vpop.f32.mrb[0].mxu0
      %v4074 = vadd.f32 0.0, %v4073
      %v4075 = vpop.f32.mrb[0].mxu0
      %4076 = vmatprep.mubr.bf16.mxu0 0
      %4077 = vmatmul.mubr.bf16.gmra.mrb[0].mxu0 %v3829
      %v4078 = vpop.f32.mrb[0].mxu0
      %v4079 = vadd.f32 0.0, %v4078
      %v4080 = vpop.f32.mrb[0].mxu0
      %v4081 = vpop.f32.mrb[0].mxu0
      %v4082 = vadd.f32 0.0, %v4081
      %v4083 = vpop.f32.mrb[0].mxu0
      %4084 = vmatprep.mubr.bf16.mxu0 0
      %4085 = vmatmul.mubr.bf16.gmra.mrb[0].mxu0 %v3838
      %v4086 = vpop.f32.mrb[0].mxu0
      %v4087 = vadd.f32 0.0, %v4086
      %v4088 = vpop.f32.mrb[0].mxu0
      %v4089 = vpop.f32.mrb[0].mxu0
      %v4090 = vadd.f32 0.0, %v4089
      %v4091 = vpop.f32.mrb[0].mxu0
      %4092 = vmatprep.mubr.bf16.mxu0 0
      %4093 = vmatmul.mubr.bf16.gmra.mrb[0].mxu0 %v3847
      %v4094 = vpop.f32.mrb[0].mxu0
      %v4095 = vadd.f32 0.0, %v4094
      %v4096 = vpop.f32.mrb[0].mxu0
      %v4097 = vpop.f32.mrb[0].mxu0
      %v4098 = vadd.f32 0.0, %v4097
      %v4099 = vpop.f32.mrb[0].mxu0
      %4100 = vmatprep.mubr.bf16.mxu0 0
      %4101 = vmatmul.mubr.bf16.gmra.mrb[0].mxu0 %v3856
      %v4102 = vpop.f32.mrb[0].mxu0
      %v4103 = vadd.f32 0.0, %v4102
      %v4104 = vpop.f32.mrb[0].mxu0
      %v4105 = vpop.f32.mrb[0].mxu0
      %v4106 = vadd.f32 0.0, %v4105
      %v4107 = vpop.f32.mrb[0].mxu0
      %4108 = vmatprep.mubr.bf16.mxu0 0
      %4109 = vmatmul.mubr.bf16.gmra.mrb[0].mxu0 %v3865
      %v4110 = vpop.f32.mrb[0].mxu0
      %v4111 = vadd.f32 0.0, %v4110
      %v4112 = vpop.f32.mrb[0].mxu0
      %v4113 = vpop.f32.mrb[0].mxu0
      %v4114 = vadd.f32 0.0, %v4113
      %v4115 = vpop.f32.mrb[0].mxu0
      %4116 = vmatprep.mubr.bf16.mxu0 0
      %4117 = vmatmul.mubr.bf16.gmra.mrb[0].mxu0 %v3874
      %v4118 = vpop.f32.mrb[0].mxu0
      %v4119 = vadd.f32 0.0, %v4118
      %v4120 = vpop.f32.mrb[0].mxu0
      %v4121 = vpop.f32.mrb[0].mxu0
      %v4122 = vadd.f32 0.0, %v4121
      %v4123 = vpop.f32.mrb[0].mxu0
      %4124 = vmatprep.mubr.bf16.mxu0 0
      %4125 = vmatmul.mubr.bf16.gmra.mrb[0].mxu0 %v3883
      %v4126 = vpop.f32.mrb[0].mxu0
      %v4127 = vadd.f32 0.0, %v4126
      %v4128 = vpop.f32.mrb[0].mxu0
      %v4129 = vpop.f32.mrb[0].mxu0
      %v4130 = vadd.f32 0.0, %v4129
      %v4131 = vpop.f32.mrb[0].mxu0
      %4132 = vmatprep.mubr.bf16.mxu0 0
      %4133 = vmatmul.mubr.bf16.gmra.mrb[0].mxu0 %v3892
      %v4134 = vpop.f32.mrb[0].mxu0
      %v4135 = vadd.f32 0.0, %v4134
      %v4136 = vpop.f32.mrb[0].mxu0
      %v4137 = vpop.f32.mrb[0].mxu0
      %v4138 = vadd.f32 0.0, %v4137
      %v4139 = vpop.f32.mrb[0].mxu0
      %4140 = vmatprep.mubr.bf16.mxu0 0
      %4141 = vmatmul.mubr.bf16.gmra.mrb[0].mxu0 %v3901
      %v4142 = vpop.f32.mrb[0].mxu0
      %v4143 = vadd.f32 0.0, %v4142
      %v4144 = vpop.f32.mrb[0].mxu0
      %v4145 = vpop.f32.mrb[0].mxu0
      %v4146 = vadd.f32 0.0, %v4145
      %v4147 = vpop.f32.mrb[0].mxu0
      %4148 = vmatprep.mubr.bf16.mxu0 0
      %4149 = vmatmul.mubr.bf16.gmra.mrb[0].mxu0 %v3910
      %v4150 = vpop.f32.mrb[0].mxu0
      %v4151 = vadd.f32 0.0, %v4150
      %v4152 = vpop.f32.mrb[0].mxu0
      %v4153 = vpop.f32.mrb[0].mxu0
      %v4154 = vadd.f32 0.0, %v4153
      %v4155 = vpop.f32.mrb[0].mxu0
      %4156 = vmatprep.mubr.bf16.mxu0 0
      %4157 = vmatmul.mubr.bf16.gmra.mrb[0].mxu0 %v3919
      %v4158 = vpop.f32.mrb[0].mxu0
      %v4159 = vadd.f32 0.0, %v4158
      %v4160 = vpop.f32.mrb[0].mxu0
      %v4161 = vpop.f32.mrb[0].mxu0
      %v4162 = vadd.f32 0.0, %v4161
      %v4163 = vpop.f32.mrb[0].mxu0
      %4164 = vmatprep.mubr.bf16.mxu0 0
      %4165 = vmatmul.mubr.bf16.gmra.mrb[0].mxu0 %v3928
      %v4166 = vpop.f32.mrb[0].mxu0
      %v4167 = vadd.f32 0.0, %v4166
      %v4168 = vpop.f32.mrb[0].mxu0
      %v4169 = vpop.f32.mrb[0].mxu0
      %v4170 = vadd.f32 0.0, %v4169
      %v4171 = vpop.f32.mrb[0].mxu0
      %4172 = vmatprep.mubr.bf16.mxu0 0
      %4173 = vmatmul.mubr.bf16.gmra.mrb[0].mxu0 %v3937
      %v4174 = vpop.f32.mrb[0].mxu0
      %v4175 = vadd.f32 0.0, %v4174
      %v4176 = vpop.f32.mrb[0].mxu0
      %v4177 = vpop.f32.mrb[0].mxu0
      %v4178 = vadd.f32 0.0, %v4177
      %v4179 = vpop.f32.mrb[0].mxu0
      %4180 = vdwg.mxu0
      %v4181 = vadd.f32 %v3710, %v4039
      %v4182 = vadd.f32 %v3711, %v4042
      %v4183 = vadd.f32 %v3712, %v4047
      %v4184 = vadd.f32 %v3713, %v4050
      %v4185 = vadd.f32 %v3714, %v4055
      %v4186 = vadd.f32 %v3715, %v4058
      %v4187 = vadd.f32 %v3716, %v4063
      %v4188 = vadd.f32 %v3717, %v4066
      %v4189 = vadd.f32 %v3718, %v4071
      %v4190 = vadd.f32 %v3719, %v4074
      %v4191 = vadd.f32 %v3720, %v4079
      %v4192 = vadd.f32 %v3721, %v4082
      %v4193 = vadd.f32 %v3722, %v4087
      %v4194 = vadd.f32 %v3723, %v4090
      %v4195 = vadd.f32 %v3724, %v4095
      %v4196 = vadd.f32 %v3725, %v4098
      %v4197 = vadd.f32 %v3726, %v4103
      %v4198 = vadd.f32 %v3727, %v4106
      %v4199 = vadd.f32 %v3728, %v4111
      %v4200 = vadd.f32 %v3729, %v4114
      %v4201 = vadd.f32 %v3730, %v4119
      %v4202 = vadd.f32 %v3731, %v4122
      %v4203 = vadd.f32 %v3732, %v4127
      %v4204 = vadd.f32 %v3733, %v4130
      %v4205 = vadd.f32 %v3734, %v4135
      %v4206 = vadd.f32 %v3735, %v4138
      %v4207 = vadd.f32 %v3736, %v4143
      %v4208 = vadd.f32 %v3737, %v4146
      %v4209 = vadd.f32 %v3738, %v4151
      %v4210 = vadd.f32 %v3739, %v4154
      %v4211 = vadd.f32 %v3740, %v4159
      %v4212 = vadd.f32 %v3741, %v4162
      %v4213 = vadd.f32 %v3742, %v4167
      %v4214 = vadd.f32 %v3743, %v4170
      %v4215 = vadd.f32 %v3744, %v4175
      %v4216 = vadd.f32 %v3745, %v4178
      %v4217 = vld [vmem:[%s219 + $0x10] sm:$0x8]
      %s4218 = scalar_lea.vmem %s1, 512
      %v4219 = vld [vmem:[%s4218] sm:$0xf]
      %v4220 = vld [vmem:[%s4218 + $0x4] sm:$0xf]
      %v4221 = vld [vmem:[%s4218 + $0x8] sm:$0xf]
      %v4222 = vld [vmem:[%s4218 + $0xc] sm:$0xf]
      %v4223 = vld [vmem:[%s4218 + $0x10] sm:$0xf]
      %v4224 = vld [vmem:[%s4218 + $0x14] sm:$0xf]
      %v4225 = vld [vmem:[%s4218 + $0x18] sm:$0xf]
      %v4226 = vld [vmem:[%s4218 + $0x1c] sm:$0xf]
      %v4227 = vld [vmem:[%s4218 + $0x20] sm:$0xf]
      %v4228 = vld [vmem:[%s4218 + $0x24] sm:$0xf]
      %v4229 = vld [vmem:[%s4218 + $0x28] sm:$0xf]
      %v4230 = vld [vmem:[%s4218 + $0x2c] sm:$0xf]
      %v4231 = vld [vmem:[%s4218 + $0x30] sm:$0xf]
      %v4232 = vld [vmem:[%s4218 + $0x34] sm:$0xf]
      %v4233 = vld [vmem:[%s4218 + $0x38] sm:$0xf]
      %v4234 = vld [vmem:[%s4218 + $0x3c] sm:$0xf]
      %v4236 = vunpack.c.l.b16 %v4217
      %v4237 = vpack.c.b16 %v3375, %v4236
      %vm4238 = vcmask 1044480
      %v4239 = vrot.slane %v4237, 3
      %v4240 = vrot.slane %v3412, 3
      %v4241 = vsel %vm4238, %v4239, %v4240
      %v4242 = vrot.slane %v3413, 3
      %v4243 = vsel %vm4238, %v4240, %v4242
      %v4244 = vrot.slane %v3414, 3
      %v4245 = vsel %vm4238, %v4242, %v4244
      %v4246 = vrot.slane %v3415, 3
      %v4247 = vsel %vm4238, %v4244, %v4246
      %v4248 = vrot.slane %v3416, 3
      %v4249 = vsel %vm4238, %v4246, %v4248
      %v4250 = vrot.slane %v3417, 3
      %v4251 = vsel %vm4238, %v4248, %v4250
      %v4252 = vrot.slane %v3418, 3
      %v4253 = vsel %vm4238, %v4250, %v4252
      %v4254 = vrot.slane %v3419, 3
      %v4255 = vsel %vm4238, %v4252, %v4254
      %v4256 = vrot.slane %v3420, 3
      %v4257 = vsel %vm4238, %v4254, %v4256
      %v4258 = vrot.slane %v3421, 3
      %v4259 = vsel %vm4238, %v4256, %v4258
      %v4260 = vrot.slane %v3422, 3
      %v4261 = vsel %vm4238, %v4258, %v4260
      %v4262 = vrot.slane %v3423, 3
      %v4263 = vsel %vm4238, %v4260, %v4262
      %v4264 = vrot.slane %v3424, 3
      %v4265 = vsel %vm4238, %v4262, %v4264
      %v4266 = vrot.slane %v3425, 3
      %v4267 = vsel %vm4238, %v4264, %v4266
      %v4268 = vrot.slane %v3426, 3
      %v4269 = vsel %vm4238, %v4266, %v4268
      %v4270 = vrot.slane %v3427, 3
      %v4271 = vsel %vm4238, %v4268, %v4270
      %v4272 = vrot.slane %v3428, 3
      %v4273 = vsel %vm4238, %v4270, %v4272
      %v4274 = vrot.slane %v3766, 3
      %v4275 = vsel %vm4238, %v4272, %v4274
      %v4310 = vunpack.c.l.b16 %v4219
      %v4311 = vunpack.c.l.b16 %v4220
      %v4312 = vunpack.c.l.b16 %v4221
      %v4313 = vunpack.c.l.b16 %v4222
      %v4314 = vunpack.c.l.b16 %v4223
      %v4315 = vunpack.c.l.b16 %v4224
      %v4316 = vunpack.c.l.b16 %v4225
      %v4317 = vunpack.c.l.b16 %v4226
      %v4318 = vunpack.c.l.b16 %v4227
      %v4319 = vunpack.c.l.b16 %v4228
      %v4320 = vunpack.c.l.b16 %v4229
      %v4321 = vunpack.c.l.b16 %v4230
      %v4322 = vunpack.c.l.b16 %v4231
      %v4323 = vunpack.c.l.b16 %v4232
      %v4324 = vunpack.c.l.b16 %v4233
      %v4325 = vunpack.c.l.b16 %v4234
      %v4326 = vpack.c.b16 %v4311, %v4310
      %v4327 = vpack.c.b16 %v4313, %v4312
      %v4328 = vpack.c.b16 %v4315, %v4314
      %v4329 = vpack.c.b16 %v4317, %v4316
      %v4330 = vpack.c.b16 %v4319, %v4318
      %v4331 = vpack.c.b16 %v4321, %v4320
      %v4332 = vpack.c.b16 %v4323, %v4322
      %v4333 = vpack.c.b16 %v4325, %v4324
      %4342 = vmatprep.subr.bf16.mxu0 0
      %4343 = vmatpush1.bf16.msra.mxu0 %v4326
      %4344 = vmatprep.subr.bf16.mxu0 0
      %4345 = vmatpush1.bf16.msra.mxu0 %v4327
      %4346 = vmatprep.subr.bf16.mxu0 0
      %4347 = vmatpush1.bf16.msra.mxu0 %v4328
      %4348 = vmatprep.subr.bf16.mxu0 0
      %4349 = vmatpush1.bf16.msra.mxu0 %v4329
      %4350 = vmatprep.subr.bf16.mxu0 0
      %4351 = vmatpush1.bf16.msra.mxu0 %v4330
      %4352 = vmatprep.subr.bf16.mxu0 0
      %4353 = vmatpush1.bf16.msra.mxu0 %v4331
      %4354 = vmatprep.subr.bf16.mxu0 0
      %4355 = vmatpush1.bf16.msra.mxu0 %v4332
      %4356 = vmatprep.subr.bf16.mxu0 0
      %4357 = vmatpush1.bf16.msra.mxu0 %v4333
      %4358 = vmatprep.subr.bf16.mxu0 0
      %4359 = vmatpush1.bf16.msra.mxu0 0
      %4360 = vmatprep.subr.bf16.mxu0 0
      %4361 = vmatpush1.bf16.msra.mxu0 0
      %4362 = vmatprep.subr.bf16.mxu0 0
      %4363 = vmatpush1.bf16.msra.mxu0 0
      %4364 = vmatprep.subr.bf16.mxu0 0
      %4365 = vmatpush1.bf16.msra.mxu0 0
      %4366 = vmatprep.subr.bf16.mxu0 0
      %4367 = vmatpush1.bf16.msra.mxu0 0
      %4368 = vmatprep.subr.bf16.mxu0 0
      %4369 = vmatpush1.bf16.msra.mxu0 0
      %4370 = vmatprep.subr.bf16.mxu0 0
      %4371 = vmatpush1.bf16.msra.mxu0 0
      %4372 = vmatprep.subr.bf16.mxu0 0
      %4373 = vmatpush1.bf16.msra.mxu0 0
      %4374 = vmatprep.mubr.bf16.mxu0 0
      %4375 = vmatmul.mubr.bf16.gmra.mrb[0].mxu0 %v4241
      %v4376 = vpop.f32.mrb[0].mxu0
      %v4377 = vadd.f32 0.0, %v4376
      %v4378 = vpop.f32.mrb[0].mxu0
      %v4379 = vpop.f32.mrb[0].mxu0
      %v4380 = vadd.f32 0.0, %v4379
      %v4381 = vpop.f32.mrb[0].mxu0
      %4382 = vmatprep.mubr.bf16.mxu0 0
      %4383 = vmatmul.mubr.bf16.gmra.mrb[0].mxu0 %v4243
      %v4384 = vpop.f32.mrb[0].mxu0
      %v4385 = vadd.f32 0.0, %v4384
      %v4386 = vpop.f32.mrb[0].mxu0
      %v4387 = vpop.f32.mrb[0].mxu0
      %v4388 = vadd.f32 0.0, %v4387
      %v4389 = vpop.f32.mrb[0].mxu0
      %4390 = vmatprep.mubr.bf16.mxu0 0
      %4391 = vmatmul.mubr.bf16.gmra.mrb[0].mxu0 %v4245
      %v4392 = vpop.f32.mrb[0].mxu0
      %v4393 = vadd.f32 0.0, %v4392
      %v4394 = vpop.f32.mrb[0].mxu0
      %v4395 = vpop.f32.mrb[0].mxu0
      %v4396 = vadd.f32 0.0, %v4395
      %v4397 = vpop.f32.mrb[0].mxu0
      %4398 = vmatprep.mubr.bf16.mxu0 0
      %4399 = vmatmul.mubr.bf16.gmra.mrb[0].mxu0 %v4247
      %v4400 = vpop.f32.mrb[0].mxu0
      %v4401 = vadd.f32 0.0, %v4400
      %v4402 = vpop.f32.mrb[0].mxu0
      %v4403 = vpop.f32.mrb[0].mxu0
      %v4404 = vadd.f32 0.0, %v4403
      %v4405 = vpop.f32.mrb[0].mxu0
      %4406 = vmatprep.mubr.bf16.mxu0 0
      %4407 = vmatmul.mubr.bf16.gmra.mrb[0].mxu0 %v4249
      %v4408 = vpop.f32.mrb[0].mxu0
      %v4409 = vadd.f32 0.0, %v4408
      %v4410 = vpop.f32.mrb[0].mxu0
      %v4411 = vpop.f32.mrb[0].mxu0
      %v4412 = vadd.f32 0.0, %v4411
      %v4413 = vpop.f32.mrb[0].mxu0
      %4414 = vmatprep.mubr.bf16.mxu0 0
      %4415 = vmatmul.mubr.bf16.gmra.mrb[0].mxu0 %v4251
      %v4416 = vpop.f32.mrb[0].mxu0
      %v4417 = vadd.f32 0.0, %v4416
      %v4418 = vpop.f32.mrb[0].mxu0
      %v4419 = vpop.f32.mrb[0].mxu0
      %v4420 = vadd.f32 0.0, %v4419
      %v4421 = vpop.f32.mrb[0].mxu0
      %4422 = vmatprep.mubr.bf16.mxu0 0
      %4423 = vmatmul.mubr.bf16.gmra.mrb[0].mxu0 %v4253
      %v4424 = vpop.f32.mrb[0].mxu0
      %v4425 = vadd.f32 0.0, %v4424
      %v4426 = vpop.f32.mrb[0].mxu0
      %v4427 = vpop.f32.mrb[0].mxu0
      %v4428 = vadd.f32 0.0, %v4427
      %v4429 = vpop.f32.mrb[0].mxu0
      %4430 = vmatprep.mubr.bf16.mxu0 0
      %4431 = vmatmul.mubr.bf16.gmra.mrb[0].mxu0 %v4255
      %v4432 = vpop.f32.mrb[0].mxu0
      %v4433 = vadd.f32 0.0, %v4432
      %v4434 = vpop.f32.mrb[0].mxu0
      %v4435 = vpop.f32.mrb[0].mxu0
      %v4436 = vadd.f32 0.0, %v4435
      %v4437 = vpop.f32.mrb[0].mxu0
      %4438 = vmatprep.mubr.bf16.mxu0 0
      %4439 = vmatmul.mubr.bf16.gmra.mrb[0].mxu0 %v4257
      %v4440 = vpop.f32.mrb[0].mxu0
      %v4441 = vadd.f32 0.0, %v4440
      %v4442 = vpop.f32.mrb[0].mxu0
      %v4443 = vpop.f32.mrb[0].mxu0
      %v4444 = vadd.f32 0.0, %v4443
      %v4445 = vpop.f32.mrb[0].mxu0
      %4446 = vmatprep.mubr.bf16.mxu0 0
      %4447 = vmatmul.mubr.bf16.gmra.mrb[0].mxu0 %v4259
      %v4448 = vpop.f32.mrb[0].mxu0
      %v4449 = vadd.f32 0.0, %v4448
      %v4450 = vpop.f32.mrb[0].mxu0
      %v4451 = vpop.f32.mrb[0].mxu0
      %v4452 = vadd.f32 0.0, %v4451
      %v4453 = vpop.f32.mrb[0].mxu0
      %4454 = vmatprep.mubr.bf16.mxu0 0
      %4455 = vmatmul.mubr.bf16.gmra.mrb[0].mxu0 %v4261
      %v4456 = vpop.f32.mrb[0].mxu0
      %v4457 = vadd.f32 0.0, %v4456
      %v4458 = vpop.f32.mrb[0].mxu0
      %v4459 = vpop.f32.mrb[0].mxu0
      %v4460 = vadd.f32 0.0, %v4459
      %v4461 = vpop.f32.mrb[0].mxu0
      %4462 = vmatprep.mubr.bf16.mxu0 0
      %4463 = vmatmul.mubr.bf16.gmra.mrb[0].mxu0 %v4263
      %v4464 = vpop.f32.mrb[0].mxu0
      %v4465 = vadd.f32 0.0, %v4464
      %v4466 = vpop.f32.mrb[0].mxu0
      %v4467 = vpop.f32.mrb[0].mxu0
      %v4468 = vadd.f32 0.0, %v4467
      %v4469 = vpop.f32.mrb[0].mxu0
      %4470 = vmatprep.mubr.bf16.mxu0 0
      %4471 = vmatmul.mubr.bf16.gmra.mrb[0].mxu0 %v4265
      %v4472 = vpop.f32.mrb[0].mxu0
      %v4473 = vadd.f32 0.0, %v4472
      %v4474 = vpop.f32.mrb[0].mxu0
      %v4475 = vpop.f32.mrb[0].mxu0
      %v4476 = vadd.f32 0.0, %v4475
      %v4477 = vpop.f32.mrb[0].mxu0
      %4478 = vmatprep.mubr.bf16.mxu0 0
      %4479 = vmatmul.mubr.bf16.gmra.mrb[0].mxu0 %v4267
      %v4480 = vpop.f32.mrb[0].mxu0
      %v4481 = vadd.f32 0.0, %v4480
      %v4482 = vpop.f32.mrb[0].mxu0
      %v4483 = vpop.f32.mrb[0].mxu0
      %v4484 = vadd.f32 0.0, %v4483
      %v4485 = vpop.f32.mrb[0].mxu0
      %4486 = vmatprep.mubr.bf16.mxu0 0
      %4487 = vmatmul.mubr.bf16.gmra.mrb[0].mxu0 %v4269
      %v4488 = vpop.f32.mrb[0].mxu0
      %v4489 = vadd.f32 0.0, %v4488
      %v4490 = vpop.f32.mrb[0].mxu0
      %v4491 = vpop.f32.mrb[0].mxu0
      %v4492 = vadd.f32 0.0, %v4491
      %v4493 = vpop.f32.mrb[0].mxu0
      %4494 = vmatprep.mubr.bf16.mxu0 0
      %4495 = vmatmul.mubr.bf16.gmra.mrb[0].mxu0 %v4271
      %v4496 = vpop.f32.mrb[0].mxu0
      %v4497 = vadd.f32 0.0, %v4496
      %v4498 = vpop.f32.mrb[0].mxu0
      %v4499 = vpop.f32.mrb[0].mxu0
      %v4500 = vadd.f32 0.0, %v4499
      %v4501 = vpop.f32.mrb[0].mxu0
      %4502 = vmatprep.mubr.bf16.mxu0 0
      %4503 = vmatmul.mubr.bf16.gmra.mrb[0].mxu0 %v4273
      %v4504 = vpop.f32.mrb[0].mxu0
      %v4505 = vadd.f32 0.0, %v4504
      %v4506 = vpop.f32.mrb[0].mxu0
      %v4507 = vpop.f32.mrb[0].mxu0
      %v4508 = vadd.f32 0.0, %v4507
      %v4509 = vpop.f32.mrb[0].mxu0
      %4510 = vmatprep.mubr.bf16.mxu0 0
      %4511 = vmatmul.mubr.bf16.gmra.mrb[0].mxu0 %v4275
      %v4512 = vpop.f32.mrb[0].mxu0
      %v4513 = vadd.f32 0.0, %v4512
      %v4514 = vpop.f32.mrb[0].mxu0
      %v4515 = vpop.f32.mrb[0].mxu0
      %v4516 = vadd.f32 0.0, %v4515
      %v4517 = vpop.f32.mrb[0].mxu0
      %4518 = vdwg.mxu0
      %v4519 = vadd.f32 %v4181, %v4377
      %v4520 = vadd.f32 %v4182, %v4380
      %v4521 = vadd.f32 %v4183, %v4385
      %v4522 = vadd.f32 %v4184, %v4388
      %v4523 = vadd.f32 %v4185, %v4393
      %v4524 = vadd.f32 %v4186, %v4396
      %v4525 = vadd.f32 %v4187, %v4401
      %v4526 = vadd.f32 %v4188, %v4404
      %v4527 = vadd.f32 %v4189, %v4409
      %v4528 = vadd.f32 %v4190, %v4412
      %v4529 = vadd.f32 %v4191, %v4417
      %v4530 = vadd.f32 %v4192, %v4420
      %v4531 = vadd.f32 %v4193, %v4425
      %v4532 = vadd.f32 %v4194, %v4428
      %v4533 = vadd.f32 %v4195, %v4433
      %v4534 = vadd.f32 %v4196, %v4436
      %v4535 = vadd.f32 %v4197, %v4441
      %v4536 = vadd.f32 %v4198, %v4444
      %v4537 = vadd.f32 %v4199, %v4449
      %v4538 = vadd.f32 %v4200, %v4452
      %v4539 = vadd.f32 %v4201, %v4457
      %v4540 = vadd.f32 %v4202, %v4460
      %v4541 = vadd.f32 %v4203, %v4465
      %v4542 = vadd.f32 %v4204, %v4468
      %v4543 = vadd.f32 %v4205, %v4473
      %v4544 = vadd.f32 %v4206, %v4476
      %v4545 = vadd.f32 %v4207, %v4481
      %v4546 = vadd.f32 %v4208, %v4484
      %v4547 = vadd.f32 %v4209, %v4489
      %v4548 = vadd.f32 %v4210, %v4492
      %v4549 = vadd.f32 %v4211, %v4497
      %v4550 = vadd.f32 %v4212, %v4500
      %v4551 = vadd.f32 %v4213, %v4505
      %v4552 = vadd.f32 %v4214, %v4508
      %v4553 = vadd.f32 %v4215, %v4513
      %v4554 = vadd.f32 %v4216, %v4516
      %v4555 = vld [vmem:[%s2] sm:$0x1]
      %v4557 = vlaneseq
      %v4558 = vshrl.u32 %v4557, 7
      %v4559 = vsub.s32 0, %v4558
      %v4560 = vrot.slane %v4555, %v4559
      %v4562 = vadd.f32 %v4519, %v4560
      %v4563 = vadd.f32 %v4520, %v4560
      %v4564 = vadd.f32 %v4521, %v4560
      %v4565 = vadd.f32 %v4522, %v4560
      %v4566 = vadd.f32 %v4523, %v4560
      %v4567 = vadd.f32 %v4524, %v4560
      %v4568 = vadd.f32 %v4525, %v4560
      %v4569 = vadd.f32 %v4526, %v4560
      %v4570 = vadd.f32 %v4527, %v4560
      %v4571 = vadd.f32 %v4528, %v4560
      %v4572 = vadd.f32 %v4529, %v4560
      %v4573 = vadd.f32 %v4530, %v4560
      %v4574 = vadd.f32 %v4531, %v4560
      %v4575 = vadd.f32 %v4532, %v4560
      %v4576 = vadd.f32 %v4533, %v4560
      %v4577 = vadd.f32 %v4534, %v4560
      %v4578 = vadd.f32 %v4535, %v4560
      %v4579 = vadd.f32 %v4536, %v4560
      %v4580 = vadd.f32 %v4537, %v4560
      %v4581 = vadd.f32 %v4538, %v4560
      %v4582 = vadd.f32 %v4539, %v4560
      %v4583 = vadd.f32 %v4540, %v4560
      %v4584 = vadd.f32 %v4541, %v4560
      %v4585 = vadd.f32 %v4542, %v4560
      %v4586 = vadd.f32 %v4543, %v4560
      %v4587 = vadd.f32 %v4544, %v4560
      %v4588 = vadd.f32 %v4545, %v4560
      %v4589 = vadd.f32 %v4546, %v4560
      %v4590 = vadd.f32 %v4547, %v4560
      %v4591 = vadd.f32 %v4548, %v4560
      %v4592 = vadd.f32 %v4549, %v4560
      %v4593 = vadd.f32 %v4550, %v4560
      %v4594 = vadd.f32 %v4551, %v4560
      %v4595 = vadd.f32 %v4552, %v4560
      %v4596 = vadd.f32 %v4553, %v4560
      %v4597 = vadd.f32 %v4554, %v4560
      %v4598 = vmax.f32 %v4562, 0.0
      %v4599 = vmax.f32 %v4563, 0.0
      %v4600 = vmax.f32 %v4564, 0.0
      %v4601 = vmax.f32 %v4565, 0.0
      %v4602 = vmax.f32 %v4566, 0.0
      %v4603 = vmax.f32 %v4567, 0.0
      %v4604 = vmax.f32 %v4568, 0.0
      %v4605 = vmax.f32 %v4569, 0.0
      %v4606 = vmax.f32 %v4570, 0.0
      %v4607 = vmax.f32 %v4571, 0.0
      %v4608 = vmax.f32 %v4572, 0.0
      %v4609 = vmax.f32 %v4573, 0.0
      %v4610 = vmax.f32 %v4574, 0.0
      %v4611 = vmax.f32 %v4575, 0.0
      %v4612 = vmax.f32 %v4576, 0.0
      %v4613 = vmax.f32 %v4577, 0.0
      %v4614 = vmax.f32 %v4578, 0.0
      %v4615 = vmax.f32 %v4579, 0.0
      %v4616 = vmax.f32 %v4580, 0.0
      %v4617 = vmax.f32 %v4581, 0.0
      %v4618 = vmax.f32 %v4582, 0.0
      %v4619 = vmax.f32 %v4583, 0.0
      %v4620 = vmax.f32 %v4584, 0.0
      %v4621 = vmax.f32 %v4585, 0.0
      %v4622 = vmax.f32 %v4586, 0.0
      %v4623 = vmax.f32 %v4587, 0.0
      %v4624 = vmax.f32 %v4588, 0.0
      %v4625 = vmax.f32 %v4589, 0.0
      %v4626 = vmax.f32 %v4590, 0.0
      %v4627 = vmax.f32 %v4591, 0.0
      %v4628 = vmax.f32 %v4592, 0.0
      %v4629 = vmax.f32 %v4593, 0.0
      %v4630 = vmax.f32 %v4594, 0.0
      %v4631 = vmax.f32 %v4595, 0.0
      %v4632 = vmax.f32 %v4596, 0.0
      %v4633 = vmax.f32 %v4597, 0.0
      %v4634 = vsel %vm839, 1, 0
      %v4635 = vsel %vm840, 1, 0
      %v4636 = vsel %vm841, 1, 0
      %v4637 = vsel %vm842, 1, 0
      %v4638 = vsel %vm843, 1, 0
      %v4639 = vsel %vm844, 1, 0
      %v4640 = vsel %vm845, 1, 0
      %v4641 = vsel %vm846, 1, 0
      %v4642 = vsel %vm847, 1, 0
      %v4643 = vsel %vm848, 1, 0
      %v4644 = vsel %vm849, 1, 0
      %v4645 = vsel %vm850, 1, 0
      %v4646 = vsel %vm851, 1, 0
      %v4647 = vsel %vm852, 1, 0
      %v4648 = vsel %vm853, 1, 0
      %v4649 = vsel %vm854, 1, 0
      %v4650 = vsel %vm855, 1, 0
      %v4651 = vsel %vm856, 1, 0
      %v4652 = vsel %vm857, 1, 0
      %v4653 = vsel %vm858, 1, 0
      %v4654 = vsel %vm859, 1, 0
      %v4655 = vsel %vm860, 1, 0
      %v4656 = vsel %vm861, 1, 0
      %v4657 = vsel %vm862, 1, 0
      %v4658 = vsel %vm863, 1, 0
      %v4659 = vsel %vm864, 1, 0
      %v4660 = vsel %vm865, 1, 0
      %v4661 = vsel %vm866, 1, 0
      %v4662 = vsel %vm867, 1, 0
      %v4663 = vsel %vm868, 1, 0
      %v4664 = vsel %vm869, 1, 0
      %v4665 = vsel %vm870, 1, 0
      %v4666 = vsel %vm871, 1, 0
      %v4667 = vsel %vm872, 1, 0
      %v4668 = vsel %vm873, 1, 0
      %v4669 = vsel %vm874, 1, 0
      %vm4670 = vcmp.eq.s32.totalorder %v4634, 1
      %vm4671 = vcmp.eq.s32.totalorder %v4635, 1
      %vm4672 = vcmp.eq.s32.totalorder %v4636, 1
      %vm4673 = vcmp.eq.s32.totalorder %v4637, 1
      %vm4674 = vcmp.eq.s32.totalorder %v4638, 1
      %vm4675 = vcmp.eq.s32.totalorder %v4639, 1
      %vm4676 = vcmp.eq.s32.totalorder %v4640, 1
      %vm4677 = vcmp.eq.s32.totalorder %v4641, 1
      %vm4678 = vcmp.eq.s32.totalorder %v4642, 1
      %vm4679 = vcmp.eq.s32.totalorder %v4643, 1
      %vm4680 = vcmp.eq.s32.totalorder %v4644, 1
      %vm4681 = vcmp.eq.s32.totalorder %v4645, 1
      %vm4682 = vcmp.eq.s32.totalorder %v4646, 1
      %vm4683 = vcmp.eq.s32.totalorder %v4647, 1
      %vm4684 = vcmp.eq.s32.totalorder %v4648, 1
      %vm4685 = vcmp.eq.s32.totalorder %v4649, 1
      %vm4686 = vcmp.eq.s32.totalorder %v4650, 1
      %vm4687 = vcmp.eq.s32.totalorder %v4651, 1
      %vm4688 = vcmp.eq.s32.totalorder %v4652, 1
      %vm4689 = vcmp.eq.s32.totalorder %v4653, 1
      %vm4690 = vcmp.eq.s32.totalorder %v4654, 1
      %vm4691 = vcmp.eq.s32.totalorder %v4655, 1
      %vm4692 = vcmp.eq.s32.totalorder %v4656, 1
      %vm4693 = vcmp.eq.s32.totalorder %v4657, 1
      %vm4694 = vcmp.eq.s32.totalorder %v4658, 1
      %vm4695 = vcmp.eq.s32.totalorder %v4659, 1
      %vm4696 = vcmp.eq.s32.totalorder %v4660, 1
      %vm4697 = vcmp.eq.s32.totalorder %v4661, 1
      %vm4698 = vcmp.eq.s32.totalorder %v4662, 1
      %vm4699 = vcmp.eq.s32.totalorder %v4663, 1
      %vm4700 = vcmp.eq.s32.totalorder %v4664, 1
      %vm4701 = vcmp.eq.s32.totalorder %v4665, 1
      %vm4702 = vcmp.eq.s32.totalorder %v4666, 1
      %vm4703 = vcmp.eq.s32.totalorder %v4667, 1
      %vm4704 = vcmp.eq.s32.totalorder %v4668, 1
      %vm4705 = vcmp.eq.s32.totalorder %v4669, 1
      %v4706 = vsel %vm4670, %v4598, 0.0
      %v4707 = vsel %vm4671, %v4599, 0.0
      %v4708 = vsel %vm4672, %v4600, 0.0
      %v4709 = vsel %vm4673, %v4601, 0.0
      %v4710 = vsel %vm4674, %v4602, 0.0
      %v4711 = vsel %vm4675, %v4603, 0.0
      %v4712 = vsel %vm4676, %v4604, 0.0
      %v4713 = vsel %vm4677, %v4605, 0.0
      %v4714 = vsel %vm4678, %v4606, 0.0
      %v4715 = vsel %vm4679, %v4607, 0.0
      %v4716 = vsel %vm4680, %v4608, 0.0
      %v4717 = vsel %vm4681, %v4609, 0.0
      %v4718 = vsel %vm4682, %v4610, 0.0
      %v4719 = vsel %vm4683, %v4611, 0.0
      %v4720 = vsel %vm4684, %v4612, 0.0
      %v4721 = vsel %vm4685, %v4613, 0.0
      %v4722 = vsel %vm4686, %v4614, 0.0
      %v4723 = vsel %vm4687, %v4615, 0.0
      %v4724 = vsel %vm4688, %v4616, 0.0
      %v4725 = vsel %vm4689, %v4617, 0.0
      %v4726 = vsel %vm4690, %v4618, 0.0
      %v4727 = vsel %vm4691, %v4619, 0.0
      %v4728 = vsel %vm4692, %v4620, 0.0
      %v4729 = vsel %vm4693, %v4621, 0.0
      %v4730 = vsel %vm4694, %v4622, 0.0
      %v4731 = vsel %vm4695, %v4623, 0.0
      %v4732 = vsel %vm4696, %v4624, 0.0
      %v4733 = vsel %vm4697, %v4625, 0.0
      %v4734 = vsel %vm4698, %v4626, 0.0
      %v4735 = vsel %vm4699, %v4627, 0.0
      %v4736 = vsel %vm4700, %v4628, 0.0
      %v4737 = vsel %vm4701, %v4629, 0.0
      %v4738 = vsel %vm4702, %v4630, 0.0
      %v4739 = vsel %vm4703, %v4631, 0.0
      %v4740 = vsel %vm4704, %v4632, 0.0
      %v4741 = vsel %vm4705, %v4633, 0.0
      %v4742 = vpack.c.bf16 %v4707, %v4706
      %v4743 = vpack.c.bf16 %v4709, %v4708
      %v4744 = vpack.c.bf16 %v4711, %v4710
      %v4745 = vpack.c.bf16 %v4713, %v4712
      %v4746 = vpack.c.bf16 %v4715, %v4714
      %v4747 = vpack.c.bf16 %v4717, %v4716
      %v4748 = vpack.c.bf16 %v4719, %v4718
      %v4749 = vpack.c.bf16 %v4721, %v4720
      %v4750 = vpack.c.bf16 %v4723, %v4722
      %v4751 = vpack.c.bf16 %v4725, %v4724
      %v4752 = vpack.c.bf16 %v4727, %v4726
      %v4753 = vpack.c.bf16 %v4729, %v4728
      %v4754 = vpack.c.bf16 %v4731, %v4730
      %v4755 = vpack.c.bf16 %v4733, %v4732
      %v4756 = vpack.c.bf16 %v4735, %v4734
      %v4757 = vpack.c.bf16 %v4737, %v4736
      %v4758 = vpack.c.bf16 %v4739, %v4738
      %v4759 = vpack.c.bf16 %v4741, %v4740
      %4760 = vst [vmem:[#allocation2] sm:$0xf] 0
      %4761 = vst [vmem:[#allocation2 + $0x4] sm:$0xf] 0
      %4762 = vst [vmem:[#allocation2 + $0x8] sm:$0xf] 0
      %4763 = vst [vmem:[#allocation2 + $0xc] sm:$0xf] 0
      %4764 = vst [vmem:[#allocation2 + $0x10] sm:$0xf] 0
      %4765 = vst [vmem:[#allocation2 + $0x14] sm:$0xf] 0
      %4766 = vst [vmem:[#allocation2 + $0x18] sm:$0xf] 0
      %4767 = vst [vmem:[#allocation2 + $0x1c] sm:$0xf] 0
      %4768 = vst [vmem:[#allocation2 + $0x20] sm:$0xf] 0
      %4769 = vst [vmem:[#allocation2 + $0x24] sm:$0xf] 0
      %4770 = vst [vmem:[#allocation2 + $0x28] sm:$0xf] 0
      %4771 = vst [vmem:[#allocation2 + $0x2c] sm:$0xf] 0
      %4772 = vst [vmem:[#allocation2 + $0x30] sm:$0xf] 0
      %4773 = vst [vmem:[#allocation2 + $0x34] sm:$0xf] 0
      %4774 = vst [vmem:[#allocation2 + $0x38] sm:$0xf] 0
      %4775 = vst [vmem:[#allocation2 + $0x3c] sm:$0xf] 0
      %4776 = vst [vmem:[#allocation2 + $0x40] sm:$0xf] 0
      %4777 = vst [vmem:[#allocation2 + $0x44] sm:$0xf] 0
      %4778 = vst [vmem:[#allocation2 + $0x48] sm:$0xf] 0
      %4779 = vst [vmem:[#allocation2 + $0x4c] sm:$0xf] 0
      %4780 = vst [vmem:[#allocation2 + $0x50] sm:$0xf] 0
      %4781 = vst [vmem:[#allocation2 + $0x54] sm:$0xf] 0
      %4782 = vst [vmem:[#allocation2 + $0x58] sm:$0xf] 0
      %4783 = vst [vmem:[#allocation2 + $0x5c] sm:$0xf] 0
      %4784 = vst [vmem:[#allocation2 + $0x60] sm:$0xf] 0
      %4785 = vst [vmem:[#allocation2 + $0x64] sm:$0xf] 0
      %4786 = vst [vmem:[#allocation2 + $0x68] sm:$0xf] 0
      %4787 = vst [vmem:[#allocation2 + $0x6c] sm:$0xf] 0
      %4788 = vst [vmem:[#allocation2 + $0x70] sm:$0xf] 0
      %4789 = vst [vmem:[#allocation2 + $0x74] sm:$0xf] 0
      %4790 = vst [vmem:[#allocation2 + $0x78] sm:$0xf] 0
      %4791 = vst [vmem:[#allocation2 + $0x7c] sm:$0xf] 0
      %4792 = vst [vmem:[#allocation2 + $0x80] sm:$0xf] 0
      %4793 = vst [vmem:[#allocation2 + $0x84] sm:$0xf] 0
      %4794 = vst [vmem:[#allocation2 + $0x88] sm:$0xf] 0
      %4795 = vst [vmem:[#allocation2 + $0x8c] sm:$0xf] 0
      %4796 = vst [vmem:[#allocation2 + $0x90] sm:$0xf] 0
      %4797 = vst [vmem:[#allocation2 + $0x94] sm:$0xf] 0
      %4798 = vst [vmem:[#allocation2 + $0x98] sm:$0xf] 0
      %4799 = vst [vmem:[#allocation2 + $0x9c] sm:$0xf] 0
      %4800 = vst [vmem:[#allocation2 + $0xa0] sm:$0xf] 0
      %4801 = vst [vmem:[#allocation2 + $0xa4] sm:$0xf] 0
      %4802 = vst [vmem:[#allocation2 + $0xa8] sm:$0x7] 0
      %v4821 = vunpack.c.l.b16 %v4742
      %v4822 = vunpack.c.h.b16 %v4742
      %v4823 = vunpack.c.l.b16 %v4743
      %v4824 = vunpack.c.h.b16 %v4743
      %v4825 = vunpack.c.l.b16 %v4744
      %v4826 = vunpack.c.h.b16 %v4744
      %v4827 = vunpack.c.l.b16 %v4745
      %v4828 = vunpack.c.h.b16 %v4745
      %v4829 = vunpack.c.l.b16 %v4746
      %v4830 = vunpack.c.h.b16 %v4746
      %v4831 = vunpack.c.l.b16 %v4747
      %v4832 = vunpack.c.h.b16 %v4747
      %v4833 = vunpack.c.l.b16 %v4748
      %v4834 = vunpack.c.h.b16 %v4748
      %v4835 = vunpack.c.l.b16 %v4749
      %v4836 = vunpack.c.h.b16 %v4749
      %v4837 = vunpack.c.l.b16 %v4750
      %v4838 = vunpack.c.h.b16 %v4750
      %v4839 = vunpack.c.l.b16 %v4751
      %v4840 = vunpack.c.h.b16 %v4751
      %v4841 = vunpack.c.l.b16 %v4752
      %v4842 = vunpack.c.h.b16 %v4752
      %v4843 = vunpack.c.l.b16 %v4753
      %v4844 = vunpack.c.h.b16 %v4753
      %v4845 = vunpack.c.l.b16 %v4754
      %v4846 = vunpack.c.h.b16 %v4754
      %v4847 = vunpack.c.l.b16 %v4755
      %v4848 = vunpack.c.h.b16 %v4755
      %v4849 = vunpack.c.l.b16 %v4756
      %v4850 = vunpack.c.h.b16 %v4756
      %v4851 = vunpack.c.l.b16 %v4757
      %v4852 = vunpack.c.h.b16 %v4757
      %v4853 = vunpack.c.l.b16 %v4758
      %v4854 = vunpack.c.h.b16 %v4758
      %v4855 = vunpack.c.l.b16 %v4759
      %v4856 = vunpack.c.h.b16 %v4759
      %v4857 = vpack.c.b16 %v4821, %v4821
      %v4858 = vpack.c.b16 %v4822, %v4822
      %v4859 = vpack.c.b16 %v4823, %v4823
      %v4860 = vpack.c.b16 %v4824, %v4824
      %v4861 = vpack.c.b16 %v4825, %v4825
      %v4862 = vpack.c.b16 %v4826, %v4826
      %v4863 = vpack.c.b16 %v4827, %v4827
      %v4864 = vpack.c.b16 %v4828, %v4828
      %v4865 = vpack.c.b16 %v4829, %v4829
      %v4866 = vpack.c.b16 %v4830, %v4830
      %v4867 = vpack.c.b16 %v4831, %v4831
      %v4868 = vpack.c.b16 %v4832, %v4832
      %v4869 = vpack.c.b16 %v4833, %v4833
      %v4870 = vpack.c.b16 %v4834, %v4834
      %v4871 = vpack.c.b16 %v4835, %v4835
      %v4872 = vpack.c.b16 %v4836, %v4836
      %v4873 = vpack.c.b16 %v4837, %v4837
      %v4874 = vpack.c.b16 %v4838, %v4838
      %v4875 = vpack.c.b16 %v4839, %v4839
      %v4876 = vpack.c.b16 %v4840, %v4840
      %v4877 = vpack.c.b16 %v4841, %v4841
      %v4878 = vpack.c.b16 %v4842, %v4842
      %v4879 = vpack.c.b16 %v4843, %v4843
      %v4880 = vpack.c.b16 %v4844, %v4844
      %v4881 = vpack.c.b16 %v4845, %v4845
      %v4882 = vpack.c.b16 %v4846, %v4846
      %v4883 = vpack.c.b16 %v4847, %v4847
      %v4884 = vpack.c.b16 %v4848, %v4848
      %v4885 = vpack.c.b16 %v4849, %v4849
      %v4886 = vpack.c.b16 %v4850, %v4850
      %v4887 = vpack.c.b16 %v4851, %v4851
      %v4888 = vpack.c.b16 %v4852, %v4852
      %v4889 = vpack.c.b16 %v4853, %v4853
      %v4890 = vpack.c.b16 %v4854, %v4854
      %v4891 = vpack.c.b16 %v4855, %v4855
      %v4892 = vpack.c.b16 %v4856, %v4856
      %vm4893 = vsmask.f32 1280
      %vm4894 = vsmask.f32 5392
      %vm4895 = vmor %vm4893, %vm4894
      %v4897 = vshrl.u32 %v4857, 16
      %v4899 = vrot.slane %v4897, 6
      %v4900 = vshll.u32 %v4857, 16
      %v4902 = vrot.slane %v4900, 7
      %v4903 = vor.u32 %v4899, %v4902
      %v4904 = vrot.slane %v4903, 4
      %v4906 = vshrl.u32 %v4858, 16
      %v4908 = vrot.slane %v4906, 6
      %v4909 = vshll.u32 %v4858, 16
      %v4911 = vrot.slane %v4909, 7
      %v4912 = vor.u32 %v4908, %v4911
      %v4913 = vsel %vm4895, %v4904, %v4912
      %v4914 = vrot.slane %v4912, 4
      %v4916 = vshrl.u32 %v4859, 16
      %v4918 = vrot.slane %v4916, 6
      %v4919 = vshll.u32 %v4859, 16
      %v4921 = vrot.slane %v4919, 7
      %v4922 = vor.u32 %v4918, %v4921
      %v4923 = vsel %vm4895, %v4914, %v4922
      %v4924 = vrot.slane %v4922, 4
      %v4926 = vshrl.u32 %v4860, 16
      %v4928 = vrot.slane %v4926, 6
      %v4929 = vshll.u32 %v4860, 16
      %v4931 = vrot.slane %v4929, 7
      %v4932 = vor.u32 %v4928, %v4931
      %v4933 = vsel %vm4895, %v4924, %v4932
      %v4934 = vrot.slane %v4932, 4
      %v4936 = vshrl.u32 %v4861, 16
      %v4938 = vrot.slane %v4936, 6
      %v4939 = vshll.u32 %v4861, 16
      %v4941 = vrot.slane %v4939, 7
      %v4942 = vor.u32 %v4938, %v4941
      %v4943 = vsel %vm4895, %v4934, %v4942
      %v4944 = vrot.slane %v4942, 4
      %v4946 = vshrl.u32 %v4862, 16
      %v4948 = vrot.slane %v4946, 6
      %v4949 = vshll.u32 %v4862, 16
      %v4951 = vrot.slane %v4949, 7
      %v4952 = vor.u32 %v4948, %v4951
      %v4953 = vsel %vm4895, %v4944, %v4952
      %v4954 = vrot.slane %v4952, 4
      %v4956 = vshrl.u32 %v4863, 16
      %v4958 = vrot.slane %v4956, 6
      %v4959 = vshll.u32 %v4863, 16
      %v4961 = vrot.slane %v4959, 7
      %v4962 = vor.u32 %v4958, %v4961
      %v4963 = vsel %vm4895, %v4954, %v4962
      %v4964 = vrot.slane %v4962, 4
      %v4966 = vshrl.u32 %v4864, 16
      %v4968 = vrot.slane %v4966, 6
      %v4969 = vshll.u32 %v4864, 16
      %v4971 = vrot.slane %v4969, 7
      %v4972 = vor.u32 %v4968, %v4971
      %v4973 = vsel %vm4895, %v4964, %v4972
      %v4974 = vrot.slane %v4972, 4
      %v4976 = vshrl.u32 %v4865, 16
      %v4978 = vrot.slane %v4976, 6
      %v4979 = vshll.u32 %v4865, 16
      %v4981 = vrot.slane %v4979, 7
      %v4982 = vor.u32 %v4978, %v4981
      %v4983 = vsel %vm4895, %v4974, %v4982
      %v4984 = vrot.slane %v4982, 4
      %v4986 = vshrl.u32 %v4866, 16
      %v4988 = vrot.slane %v4986, 6
      %v4989 = vshll.u32 %v4866, 16
      %v4991 = vrot.slane %v4989, 7
      %v4992 = vor.u32 %v4988, %v4991
      %v4993 = vsel %vm4895, %v4984, %v4992
      %v4994 = vrot.slane %v4992, 4
      %v4996 = vshrl.u32 %v4867, 16
      %v4998 = vrot.slane %v4996, 6
      %v4999 = vshll.u32 %v4867, 16
      %v5001 = vrot.slane %v4999, 7
      %v5002 = vor.u32 %v4998, %v5001
      %v5003 = vsel %vm4895, %v4994, %v5002
      %v5004 = vrot.slane %v5002, 4
      %v5006 = vshrl.u32 %v4868, 16
      %v5008 = vrot.slane %v5006, 6
      %v5009 = vshll.u32 %v4868, 16
      %v5011 = vrot.slane %v5009, 7
      %v5012 = vor.u32 %v5008, %v5011
      %v5013 = vsel %vm4895, %v5004, %v5012
      %v5014 = vrot.slane %v5012, 4
      %v5016 = vshrl.u32 %v4869, 16
      %v5018 = vrot.slane %v5016, 6
      %v5019 = vshll.u32 %v4869, 16
      %v5021 = vrot.slane %v5019, 7
      %v5022 = vor.u32 %v5018, %v5021
      %v5023 = vsel %vm4895, %v5014, %v5022
      %v5024 = vrot.slane %v5022, 4
      %v5026 = vshrl.u32 %v4870, 16
      %v5028 = vrot.slane %v5026, 6
      %v5029 = vshll.u32 %v4870, 16
      %v5031 = vrot.slane %v5029, 7
      %v5032 = vor.u32 %v5028, %v5031
      %v5033 = vsel %vm4895, %v5024, %v5032
      %v5034 = vrot.slane %v5032, 4
      %v5036 = vshrl.u32 %v4871, 16
      %v5038 = vrot.slane %v5036, 6
      %v5039 = vshll.u32 %v4871, 16
      %v5041 = vrot.slane %v5039, 7
      %v5042 = vor.u32 %v5038, %v5041
      %v5043 = vsel %vm4895, %v5034, %v5042
      %v5044 = vrot.slane %v5042, 4
      %v5046 = vshrl.u32 %v4872, 16
      %v5048 = vrot.slane %v5046, 6
      %v5049 = vshll.u32 %v4872, 16
      %v5051 = vrot.slane %v5049, 7
      %v5052 = vor.u32 %v5048, %v5051
      %v5053 = vsel %vm4895, %v5044, %v5052
      %v5054 = vrot.slane %v5052, 4
      %v5056 = vshrl.u32 %v4873, 16
      %v5058 = vrot.slane %v5056, 6
      %v5059 = vshll.u32 %v4873, 16
      %v5061 = vrot.slane %v5059, 7
      %v5062 = vor.u32 %v5058, %v5061
      %v5063 = vsel %vm4895, %v5054, %v5062
      %v5064 = vrot.slane %v5062, 4
      %v5066 = vshrl.u32 %v4874, 16
      %v5068 = vrot.slane %v5066, 6
      %v5069 = vshll.u32 %v4874, 16
      %v5071 = vrot.slane %v5069, 7
      %v5072 = vor.u32 %v5068, %v5071
      %v5073 = vsel %vm4895, %v5064, %v5072
      %v5074 = vrot.slane %v5072, 4
      %v5076 = vshrl.u32 %v4875, 16
      %v5078 = vrot.slane %v5076, 6
      %v5079 = vshll.u32 %v4875, 16
      %v5081 = vrot.slane %v5079, 7
      %v5082 = vor.u32 %v5078, %v5081
      %v5083 = vsel %vm4895, %v5074, %v5082
      %v5084 = vrot.slane %v5082, 4
      %v5086 = vshrl.u32 %v4876, 16
      %v5088 = vrot.slane %v5086, 6
      %v5089 = vshll.u32 %v4876, 16
      %v5091 = vrot.slane %v5089, 7
      %v5092 = vor.u32 %v5088, %v5091
      %v5093 = vsel %vm4895, %v5084, %v5092
      %v5094 = vrot.slane %v5092, 4
      %v5096 = vshrl.u32 %v4877, 16
      %v5098 = vrot.slane %v5096, 6
      %v5099 = vshll.u32 %v4877, 16
      %v5101 = vrot.slane %v5099, 7
      %v5102 = vor.u32 %v5098, %v5101
      %v5103 = vsel %vm4895, %v5094, %v5102
      %v5104 = vrot.slane %v5102, 4
      %v5106 = vshrl.u32 %v4878, 16
      %v5108 = vrot.slane %v5106, 6
      %v5109 = vshll.u32 %v4878, 16
      %v5111 = vrot.slane %v5109, 7
      %v5112 = vor.u32 %v5108, %v5111
      %v5113 = vsel %vm4895, %v5104, %v5112
      %v5114 = vrot.slane %v5112, 4
      %v5116 = vshrl.u32 %v4879, 16
      %v5118 = vrot.slane %v5116, 6
      %v5119 = vshll.u32 %v4879, 16
      %v5121 = vrot.slane %v5119, 7
      %v5122 = vor.u32 %v5118, %v5121
      %v5123 = vsel %vm4895, %v5114, %v5122
      %v5124 = vrot.slane %v5122, 4
      %v5126 = vshrl.u32 %v4880, 16
      %v5128 = vrot.slane %v5126, 6
      %v5129 = vshll.u32 %v4880, 16
      %v5131 = vrot.slane %v5129, 7
      %v5132 = vor.u32 %v5128, %v5131
      %v5133 = vsel %vm4895, %v5124, %v5132
      %v5134 = vrot.slane %v5132, 4
      %v5136 = vshrl.u32 %v4881, 16
      %v5138 = vrot.slane %v5136, 6
      %v5139 = vshll.u32 %v4881, 16
      %v5141 = vrot.slane %v5139, 7
      %v5142 = vor.u32 %v5138, %v5141
      %v5143 = vsel %vm4895, %v5134, %v5142
      %v5144 = vrot.slane %v5142, 4
      %v5146 = vshrl.u32 %v4882, 16
      %v5148 = vrot.slane %v5146, 6
      %v5149 = vshll.u32 %v4882, 16
      %v5151 = vrot.slane %v5149, 7
      %v5152 = vor.u32 %v5148, %v5151
      %v5153 = vsel %vm4895, %v5144, %v5152
      %v5154 = vrot.slane %v5152, 4
      %v5156 = vshrl.u32 %v4883, 16
      %v5158 = vrot.slane %v5156, 6
      %v5159 = vshll.u32 %v4883, 16
      %v5161 = vrot.slane %v5159, 7
      %v5162 = vor.u32 %v5158, %v5161
      %v5163 = vsel %vm4895, %v5154, %v5162
      %v5164 = vrot.slane %v5162, 4
      %v5166 = vshrl.u32 %v4884, 16
      %v5168 = vrot.slane %v5166, 6
      %v5169 = vshll.u32 %v4884, 16
      %v5171 = vrot.slane %v5169, 7
      %v5172 = vor.u32 %v5168, %v5171
      %v5173 = vsel %vm4895, %v5164, %v5172
      %v5174 = vrot.slane %v5172, 4
      %v5176 = vshrl.u32 %v4885, 16
      %v5178 = vrot.slane %v5176, 6
      %v5179 = vshll.u32 %v4885, 16
      %v5181 = vrot.slane %v5179, 7
      %v5182 = vor.u32 %v5178, %v5181
      %v5183 = vsel %vm4895, %v5174, %v5182
      %v5184 = vrot.slane %v5182, 4
      %v5186 = vshrl.u32 %v4886, 16
      %v5188 = vrot.slane %v5186, 6
      %v5189 = vshll.u32 %v4886, 16
      %v5191 = vrot.slane %v5189, 7
      %v5192 = vor.u32 %v5188, %v5191
      %v5193 = vsel %vm4895, %v5184, %v5192
      %v5194 = vrot.slane %v5192, 4
      %v5196 = vshrl.u32 %v4887, 16
      %v5198 = vrot.slane %v5196, 6
      %v5199 = vshll.u32 %v4887, 16
      %v5201 = vrot.slane %v5199, 7
      %v5202 = vor.u32 %v5198, %v5201
      %v5203 = vsel %vm4895, %v5194, %v5202
      %v5204 = vrot.slane %v5202, 4
      %v5206 = vshrl.u32 %v4888, 16
      %v5208 = vrot.slane %v5206, 6
      %v5209 = vshll.u32 %v4888, 16
      %v5211 = vrot.slane %v5209, 7
      %v5212 = vor.u32 %v5208, %v5211
      %v5213 = vsel %vm4895, %v5204, %v5212
      %v5214 = vrot.slane %v5212, 4
      %v5216 = vshrl.u32 %v4889, 16
      %v5218 = vrot.slane %v5216, 6
      %v5219 = vshll.u32 %v4889, 16
      %v5221 = vrot.slane %v5219, 7
      %v5222 = vor.u32 %v5218, %v5221
      %v5223 = vsel %vm4895, %v5214, %v5222
      %v5224 = vrot.slane %v5222, 4
      %v5226 = vshrl.u32 %v4890, 16
      %v5228 = vrot.slane %v5226, 6
      %v5229 = vshll.u32 %v4890, 16
      %v5231 = vrot.slane %v5229, 7
      %v5232 = vor.u32 %v5228, %v5231
      %v5233 = vsel %vm4895, %v5224, %v5232
      %v5234 = vrot.slane %v5232, 4
      %v5236 = vshrl.u32 %v4891, 16
      %v5238 = vrot.slane %v5236, 6
      %v5239 = vshll.u32 %v4891, 16
      %v5241 = vrot.slane %v5239, 7
      %v5242 = vor.u32 %v5238, %v5241
      %v5243 = vsel %vm4895, %v5234, %v5242
      %v5244 = vrot.slane %v5242, 4
      %v5246 = vshrl.u32 %v4892, 16
      %v5248 = vrot.slane %v5246, 6
      %v5249 = vshll.u32 %v4892, 16
      %v5251 = vrot.slane %v5249, 7
      %v5252 = vor.u32 %v5248, %v5251
      %v5253 = vsel %vm4895, %v5244, %v5252
      %v5254 = vrot.slane %v5252, 4
      %vm5292 = vcmask 1043457
      %vm5293 = vsmask.f32 7942
      %vm5294 = vmand %vm5292, %vm5293
      %v5295 = vld [vmem:[#allocation2 + $0x8] sm:$0xe]
      %v5296 = vsel %vm5294, %v4903, %v5295
      %5297 = vst [vmem:[#allocation2 + $0x8] sm:$0xe] %v5296
      %5298 = vst [vmem:[#allocation2 + $0xc] sm:$0xf] %v4913
      %5299 = vst [vmem:[#allocation2 + $0x10] sm:$0xf] %v4923
      %5300 = vst [vmem:[#allocation2 + $0x14] sm:$0xf] %v4933
      %5301 = vst [vmem:[#allocation2 + $0x18] sm:$0xf] %v4943
      %5302 = vst [vmem:[#allocation2 + $0x1c] sm:$0xf] %v4953
      %5303 = vst [vmem:[#allocation2 + $0x20] sm:$0xf] %v4963
      %5304 = vst [vmem:[#allocation2 + $0x24] sm:$0xf] %v4973
      %5305 = vst [vmem:[#allocation2 + $0x28] sm:$0xf] %v4983
      %5306 = vst [vmem:[#allocation2 + $0x2c] sm:$0xf] %v4993
      %5307 = vst [vmem:[#allocation2 + $0x30] sm:$0xf] %v5003
      %5308 = vst [vmem:[#allocation2 + $0x34] sm:$0xf] %v5013
      %5309 = vst [vmem:[#allocation2 + $0x38] sm:$0xf] %v5023
      %5310 = vst [vmem:[#allocation2 + $0x3c] sm:$0xf] %v5033
      %5311 = vst [vmem:[#allocation2 + $0x40] sm:$0xf] %v5043
      %5312 = vst [vmem:[#allocation2 + $0x44] sm:$0xf] %v5053
      %5313 = vst [vmem:[#allocation2 + $0x48] sm:$0xf] %v5063
      %5314 = vst [vmem:[#allocation2 + $0x4c] sm:$0xf] %v5073
      %5315 = vst [vmem:[#allocation2 + $0x50] sm:$0xf] %v5083
      %5316 = vst [vmem:[#allocation2 + $0x54] sm:$0xf] %v5093
      %5317 = vst [vmem:[#allocation2 + $0x58] sm:$0xf] %v5103
      %5318 = vst [vmem:[#allocation2 + $0x5c] sm:$0xf] %v5113
      %5319 = vst [vmem:[#allocation2 + $0x60] sm:$0xf] %v5123
      %5320 = vst [vmem:[#allocation2 + $0x64] sm:$0xf] %v5133
      %5321 = vst [vmem:[#allocation2 + $0x68] sm:$0xf] %v5143
      %5322 = vst [vmem:[#allocation2 + $0x6c] sm:$0xf] %v5153
      %5323 = vst [vmem:[#allocation2 + $0x70] sm:$0xf] %v5163
      %5324 = vst [vmem:[#allocation2 + $0x74] sm:$0xf] %v5173
      %5325 = vst [vmem:[#allocation2 + $0x78] sm:$0xf] %v5183
      %5326 = vst [vmem:[#allocation2 + $0x7c] sm:$0xf] %v5193
      %5327 = vst [vmem:[#allocation2 + $0x80] sm:$0xf] %v5203
      %5328 = vst [vmem:[#allocation2 + $0x84] sm:$0xf] %v5213
      %5329 = vst [vmem:[#allocation2 + $0x88] sm:$0xf] %v5223
      %5330 = vst [vmem:[#allocation2 + $0x8c] sm:$0xf] %v5233
      %5331 = vst [vmem:[#allocation2 + $0x90] sm:$0xf] %v5243
      %5332 = vst [vmem:[#allocation2 + $0x94] sm:$0xf] %v5253
      %vm5333 = vcmask 1041408
      %vm5334 = vmand %vm5333, %vm4893
      %v5335 = vld [vmem:[#allocation2 + $0x98] sm:$0x3]
      %v5336 = vsel %vm5334, %v5254, %v5335
      %5337 = vst [vmem:[#allocation2 + $0x98] sm:$0x3] %v5336
      %v5338 = vld [vmem:[#allocation2] sm:$0xf]
      %v5339 = vld [vmem:[#allocation2 + $0x4] sm:$0xf]
      %v5340 = vld [vmem:[#allocation2 + $0x8] sm:$0xf]
      %v5341 = vld [vmem:[#allocation2 + $0xc] sm:$0xf]
      %v5342 = vld [vmem:[#allocation2 + $0x10] sm:$0xf]
      %v5343 = vld [vmem:[#allocation2 + $0x14] sm:$0xf]
      %v5344 = vld [vmem:[#allocation2 + $0x18] sm:$0xf]
      %v5345 = vld [vmem:[#allocation2 + $0x1c] sm:$0xf]
      %v5346 = vld [vmem:[#allocation2 + $0x20] sm:$0xf]
      %v5347 = vld [vmem:[#allocation2 + $0x24] sm:$0xf]
      %v5348 = vld [vmem:[#allocation2 + $0x28] sm:$0xf]
      %v5349 = vld [vmem:[#allocation2 + $0x2c] sm:$0xf]
      %v5350 = vld [vmem:[#allocation2 + $0x30] sm:$0xf]
      %v5351 = vld [vmem:[#allocation2 + $0x34] sm:$0xf]
      %v5352 = vld [vmem:[#allocation2 + $0x38] sm:$0xf]
      %v5353 = vld [vmem:[#allocation2 + $0x3c] sm:$0xf]
      %v5354 = vld [vmem:[#allocation2 + $0x40] sm:$0xf]
      %v5355 = vld [vmem:[#allocation2 + $0x44] sm:$0xf]
      %v5356 = vld [vmem:[#allocation2 + $0x48] sm:$0xf]
      %v5357 = vld [vmem:[#allocation2 + $0x4c] sm:$0xf]
      %v5358 = vld [vmem:[#allocation2 + $0x50] sm:$0xf]
      %v5359 = vld [vmem:[#allocation2 + $0x54] sm:$0xf]
      %v5360 = vld [vmem:[#allocation2 + $0x58] sm:$0xf]
      %v5361 = vld [vmem:[#allocation2 + $0x5c] sm:$0xf]
      %v5362 = vld [vmem:[#allocation2 + $0x60] sm:$0xf]
      %v5363 = vld [vmem:[#allocation2 + $0x64] sm:$0xf]
      %v5364 = vld [vmem:[#allocation2 + $0x68] sm:$0xf]
      %v5365 = vld [vmem:[#allocation2 + $0x6c] sm:$0xf]
      %v5366 = vld [vmem:[#allocation2 + $0x70] sm:$0xf]
      %v5367 = vld [vmem:[#allocation2 + $0x74] sm:$0xf]
      %v5368 = vld [vmem:[#allocation2 + $0x78] sm:$0xf]
      %v5369 = vld [vmem:[#allocation2 + $0x7c] sm:$0xf]
      %v5370 = vld [vmem:[#allocation2 + $0x80] sm:$0xf]
      %v5371 = vld [vmem:[#allocation2 + $0x84] sm:$0xf]
      %v5372 = vld [vmem:[#allocation2 + $0x88] sm:$0xf]
      %v5373 = vld [vmem:[#allocation2 + $0x8c] sm:$0xf]
      %v5374 = vld [vmem:[%s3] sm:$0xf]
      %v5375 = vld [vmem:[%s3 + $0x4] sm:$0xf]
      %v5376 = vld [vmem:[%s3 + $0x8] sm:$0xf]
      %v5377 = vld [vmem:[%s3 + $0xc] sm:$0xf]
      %v5378 = vld [vmem:[%s3 + $0x10] sm:$0xf]
      %v5379 = vld [vmem:[%s3 + $0x14] sm:$0xf]
      %v5380 = vld [vmem:[%s3 + $0x18] sm:$0xf]
      %v5381 = vld [vmem:[%s3 + $0x1c] sm:$0xf]
      %v5382 = vld [vmem:[%s3 + $0x20] sm:$0xf]
      %v5383 = vld [vmem:[%s3 + $0x24] sm:$0xf]
      %v5384 = vld [vmem:[%s3 + $0x28] sm:$0xf]
      %v5385 = vld [vmem:[%s3 + $0x2c] sm:$0xf]
      %v5386 = vld [vmem:[%s3 + $0x30] sm:$0xf]
      %v5387 = vld [vmem:[%s3 + $0x34] sm:$0xf]
      %v5388 = vld [vmem:[%s3 + $0x38] sm:$0xf]
      %v5389 = vld [vmem:[%s3 + $0x3c] sm:$0xf]
      %v5390 = vld [vmem:[#allocation2 + $0x90] sm:$0x1]
      %s5391 = scalar_lea.vmem %s3, 64
      %v5392 = vld [vmem:[%s5391] sm:$0xf]
      %v5393 = vld [vmem:[%s5391 + $0x4] sm:$0xf]
      %v5394 = vld [vmem:[%s5391 + $0x8] sm:$0xf]
      %v5395 = vld [vmem:[%s5391 + $0xc] sm:$0xf]
      %v5396 = vld [vmem:[%s5391 + $0x10] sm:$0xf]
      %v5397 = vld [vmem:[%s5391 + $0x14] sm:$0xf]
      %v5398 = vld [vmem:[%s5391 + $0x18] sm:$0xf]
      %v5399 = vld [vmem:[%s5391 + $0x1c] sm:$0xf]
      %v5400 = vld [vmem:[%s5391 + $0x20] sm:$0xf]
      %v5401 = vld [vmem:[%s5391 + $0x24] sm:$0xf]
      %v5402 = vld [vmem:[%s5391 + $0x28] sm:$0xf]
      %v5403 = vld [vmem:[%s5391 + $0x2c] sm:$0xf]
      %v5404 = vld [vmem:[%s5391 + $0x30] sm:$0xf]
      %v5405 = vld [vmem:[%s5391 + $0x34] sm:$0xf]
      %v5406 = vld [vmem:[%s5391 + $0x38] sm:$0xf]
      %v5407 = vld [vmem:[%s5391 + $0x3c] sm:$0xf]
      %v5445 = vunpack.c.l.b16 %v5338
      %v5446 = vunpack.c.l.b16 %v5339
      %v5447 = vunpack.c.l.b16 %v5340
      %v5448 = vunpack.c.l.b16 %v5341
      %v5449 = vunpack.c.l.b16 %v5342
      %v5450 = vunpack.c.l.b16 %v5343
      %v5451 = vunpack.c.l.b16 %v5344
      %v5452 = vunpack.c.l.b16 %v5345
      %v5453 = vunpack.c.l.b16 %v5346
      %v5454 = vunpack.c.l.b16 %v5347
      %v5455 = vunpack.c.l.b16 %v5348
      %v5456 = vunpack.c.l.b16 %v5349
      %v5457 = vunpack.c.l.b16 %v5350
      %v5458 = vunpack.c.l.b16 %v5351
      %v5459 = vunpack.c.l.b16 %v5352
      %v5460 = vunpack.c.l.b16 %v5353
      %v5461 = vunpack.c.l.b16 %v5354
      %v5462 = vunpack.c.l.b16 %v5355
      %v5463 = vunpack.c.l.b16 %v5356
      %v5464 = vunpack.c.l.b16 %v5357
      %v5465 = vunpack.c.l.b16 %v5358
      %v5466 = vunpack.c.l.b16 %v5359
      %v5467 = vunpack.c.l.b16 %v5360
      %v5468 = vunpack.c.l.b16 %v5361
      %v5469 = vunpack.c.l.b16 %v5362
      %v5470 = vunpack.c.l.b16 %v5363
      %v5471 = vunpack.c.l.b16 %v5364
      %v5472 = vunpack.c.l.b16 %v5365
      %v5473 = vunpack.c.l.b16 %v5366
      %v5474 = vunpack.c.l.b16 %v5367
      %v5475 = vunpack.c.l.b16 %v5368
      %v5476 = vunpack.c.l.b16 %v5369
      %v5477 = vunpack.c.l.b16 %v5370
      %v5478 = vunpack.c.l.b16 %v5371
      %v5479 = vunpack.c.l.b16 %v5372
      %v5480 = vunpack.c.l.b16 %v5373
      %v5481 = vunpack.c.l.b16 %v5390
      %v5482 = vpack.c.b16 %v5446, %v5445
      %v5483 = vpack.c.b16 %v5448, %v5447
      %v5484 = vpack.c.b16 %v5450, %v5449
      %v5485 = vpack.c.b16 %v5452, %v5451
      %v5486 = vpack.c.b16 %v5454, %v5453
      %v5487 = vpack.c.b16 %v5456, %v5455
      %v5488 = vpack.c.b16 %v5458, %v5457
      %v5489 = vpack.c.b16 %v5460, %v5459
      %v5490 = vpack.c.b16 %v5462, %v5461
      %v5491 = vpack.c.b16 %v5464, %v5463
      %v5492 = vpack.c.b16 %v5466, %v5465
      %v5493 = vpack.c.b16 %v5468, %v5467
      %v5494 = vpack.c.b16 %v5470, %v5469
      %v5495 = vpack.c.b16 %v5472, %v5471
      %v5496 = vpack.c.b16 %v5474, %v5473
      %v5497 = vpack.c.b16 %v5476, %v5475
      %v5498 = vpack.c.b16 %v5478, %v5477
      %v5499 = vpack.c.b16 %v5480, %v5479
      %v5500 = vpack.c.b16 %v5481, %v5481
      %v5502 = vshrl.u32 %v5482, 16
      %v5504 = vshll.u32 %v5482, 16
      %v5506 = vrot.slane %v5504, 1
      %v5507 = vor.u32 %v5502, %v5506
      %v5509 = vshll.u32 %v5483, 16
      %v5511 = vrot.slane %v5509, 1
      %v5512 = vsel %vm1038, %v5507, %v5511
      %v5513 = vshrl.u32 %v5483, 16
      %v5515 = vor.u32 %v5513, %v5511
      %v5517 = vshll.u32 %v5484, 16
      %v5519 = vrot.slane %v5517, 1
      %v5520 = vsel %vm1038, %v5515, %v5519
      %v5521 = vshrl.u32 %v5484, 16
      %v5523 = vor.u32 %v5521, %v5519
      %v5525 = vshll.u32 %v5485, 16
      %v5527 = vrot.slane %v5525, 1
      %v5528 = vsel %vm1038, %v5523, %v5527
      %v5529 = vshrl.u32 %v5485, 16
      %v5531 = vor.u32 %v5529, %v5527
      %v5533 = vshll.u32 %v5486, 16
      %v5535 = vrot.slane %v5533, 1
      %v5536 = vsel %vm1038, %v5531, %v5535
      %v5537 = vshrl.u32 %v5486, 16
      %v5539 = vor.u32 %v5537, %v5535
      %v5541 = vshll.u32 %v5487, 16
      %v5543 = vrot.slane %v5541, 1
      %v5544 = vsel %vm1038, %v5539, %v5543
      %v5545 = vshrl.u32 %v5487, 16
      %v5547 = vor.u32 %v5545, %v5543
      %v5549 = vshll.u32 %v5488, 16
      %v5551 = vrot.slane %v5549, 1
      %v5552 = vsel %vm1038, %v5547, %v5551
      %v5553 = vshrl.u32 %v5488, 16
      %v5555 = vor.u32 %v5553, %v5551
      %v5557 = vshll.u32 %v5489, 16
      %v5559 = vrot.slane %v5557, 1
      %v5560 = vsel %vm1038, %v5555, %v5559
      %v5561 = vshrl.u32 %v5489, 16
      %v5563 = vor.u32 %v5561, %v5559
      %v5565 = vshll.u32 %v5490, 16
      %v5567 = vrot.slane %v5565, 1
      %v5568 = vsel %vm1038, %v5563, %v5567
      %v5569 = vshrl.u32 %v5490, 16
      %v5571 = vor.u32 %v5569, %v5567
      %v5573 = vshll.u32 %v5491, 16
      %v5575 = vrot.slane %v5573, 1
      %v5576 = vsel %vm1038, %v5571, %v5575
      %v5577 = vshrl.u32 %v5491, 16
      %v5579 = vor.u32 %v5577, %v5575
      %v5581 = vshll.u32 %v5492, 16
      %v5583 = vrot.slane %v5581, 1
      %v5584 = vsel %vm1038, %v5579, %v5583
      %v5585 = vshrl.u32 %v5492, 16
      %v5587 = vor.u32 %v5585, %v5583
      %v5589 = vshll.u32 %v5493, 16
      %v5591 = vrot.slane %v5589, 1
      %v5592 = vsel %vm1038, %v5587, %v5591
      %v5593 = vshrl.u32 %v5493, 16
      %v5595 = vor.u32 %v5593, %v5591
      %v5597 = vshll.u32 %v5494, 16
      %v5599 = vrot.slane %v5597, 1
      %v5600 = vsel %vm1038, %v5595, %v5599
      %v5601 = vshrl.u32 %v5494, 16
      %v5603 = vor.u32 %v5601, %v5599
      %v5605 = vshll.u32 %v5495, 16
      %v5607 = vrot.slane %v5605, 1
      %v5608 = vsel %vm1038, %v5603, %v5607
      %v5609 = vshrl.u32 %v5495, 16
      %v5611 = vor.u32 %v5609, %v5607
      %v5613 = vshll.u32 %v5496, 16
      %v5615 = vrot.slane %v5613, 1
      %v5616 = vsel %vm1038, %v5611, %v5615
      %v5617 = vshrl.u32 %v5496, 16
      %v5619 = vor.u32 %v5617, %v5615
      %v5621 = vshll.u32 %v5497, 16
      %v5623 = vrot.slane %v5621, 1
      %v5624 = vsel %vm1038, %v5619, %v5623
      %v5625 = vshrl.u32 %v5497, 16
      %v5627 = vor.u32 %v5625, %v5623
      %v5629 = vshll.u32 %v5498, 16
      %v5631 = vrot.slane %v5629, 1
      %v5632 = vsel %vm1038, %v5627, %v5631
      %v5633 = vshrl.u32 %v5498, 16
      %v5635 = vor.u32 %v5633, %v5631
      %v5637 = vshll.u32 %v5499, 16
      %v5639 = vrot.slane %v5637, 1
      %v5640 = vsel %vm1038, %v5635, %v5639
      %v5641 = vshrl.u32 %v5499, 16
      %v5643 = vor.u32 %v5641, %v5639
      %v5645 = vshll.u32 %v5500, 16
      %v5647 = vrot.slane %v5645, 1
      %v5648 = vsel %vm1038, %v5643, %v5647
      %v5683 = vunpack.c.l.b16 %v5392
      %v5684 = vunpack.c.l.b16 %v5393
      %v5685 = vunpack.c.l.b16 %v5394
      %v5686 = vunpack.c.l.b16 %v5395
      %v5687 = vunpack.c.l.b16 %v5396
      %v5688 = vunpack.c.l.b16 %v5397
      %v5689 = vunpack.c.l.b16 %v5398
      %v5690 = vunpack.c.l.b16 %v5399
      %v5691 = vunpack.c.l.b16 %v5400
      %v5692 = vunpack.c.l.b16 %v5401
      %v5693 = vunpack.c.l.b16 %v5402
      %v5694 = vunpack.c.l.b16 %v5403
      %v5695 = vunpack.c.l.b16 %v5404
      %v5696 = vunpack.c.l.b16 %v5405
      %v5697 = vunpack.c.l.b16 %v5406
      %v5698 = vunpack.c.l.b16 %v5407
      %v5699 = vpack.c.b16 %v5684, %v5683
      %v5700 = vpack.c.b16 %v5686, %v5685
      %v5701 = vpack.c.b16 %v5688, %v5687
      %v5702 = vpack.c.b16 %v5690, %v5689
      %v5703 = vpack.c.b16 %v5692, %v5691
      %v5704 = vpack.c.b16 %v5694, %v5693
      %v5705 = vpack.c.b16 %v5696, %v5695
      %v5706 = vpack.c.b16 %v5698, %v5697
      %5715 = vmatprep.subr.bf16.mxu0 0
      %5716 = vmatpush1.bf16.msra.mxu0 %v5699
      %5717 = vmatprep.subr.bf16.mxu0 0
      %5718 = vmatpush1.bf16.msra.mxu0 %v5700
      %5719 = vmatprep.subr.bf16.mxu0 0
      %5720 = vmatpush1.bf16.msra.mxu0 %v5701
      %5721 = vmatprep.subr.bf16.mxu0 0
      %5722 = vmatpush1.bf16.msra.mxu0 %v5702
      %5723 = vmatprep.subr.bf16.mxu0 0
      %5724 = vmatpush1.bf16.msra.mxu0 %v5703
      %5725 = vmatprep.subr.bf16.mxu0 0
      %5726 = vmatpush1.bf16.msra.mxu0 %v5704
      %5727 = vmatprep.subr.bf16.mxu0 0
      %5728 = vmatpush1.bf16.msra.mxu0 %v5705
      %5729 = vmatprep.subr.bf16.mxu0 0
      %5730 = vmatpush1.bf16.msra.mxu0 %v5706
      %5731 = vmatprep.subr.bf16.mxu0 0
      %5732 = vmatpush1.bf16.msra.mxu0 0
      %5733 = vmatprep.subr.bf16.mxu0 0
      %5734 = vmatpush1.bf16.msra.mxu0 0
      %5735 = vmatprep.subr.bf16.mxu0 0
      %5736 = vmatpush1.bf16.msra.mxu0 0
      %5737 = vmatprep.subr.bf16.mxu0 0
      %5738 = vmatpush1.bf16.msra.mxu0 0
      %5739 = vmatprep.subr.bf16.mxu0 0
      %5740 = vmatpush1.bf16.msra.mxu0 0
      %5741 = vmatprep.subr.bf16.mxu0 0
      %5742 = vmatpush1.bf16.msra.mxu0 0
      %5743 = vmatprep.subr.bf16.mxu0 0
      %5744 = vmatpush1.bf16.msra.mxu0 0
      %5745 = vmatprep.subr.bf16.mxu0 0
      %5746 = vmatpush1.bf16.msra.mxu0 0
      %5747 = vmatprep.mubr.bf16.mxu0 0
      %5748 = vmatmul.mubr.bf16.gmra.mrb[0].mxu0 %v5512
      %v5749 = vpop.f32.mrb[0].mxu0
      %v5750 = vadd.f32 0.0, %v5749
      %v5751 = vpop.f32.mrb[0].mxu0
      %v5752 = vpop.f32.mrb[0].mxu0
      %v5753 = vadd.f32 0.0, %v5752
      %v5754 = vpop.f32.mrb[0].mxu0
      %5755 = vmatprep.mubr.bf16.mxu0 0
      %5756 = vmatmul.mubr.bf16.gmra.mrb[0].mxu0 %v5520
      %v5757 = vpop.f32.mrb[0].mxu0
      %v5758 = vadd.f32 0.0, %v5757
      %v5759 = vpop.f32.mrb[0].mxu0
      %v5760 = vpop.f32.mrb[0].mxu0
      %v5761 = vadd.f32 0.0, %v5760
      %v5762 = vpop.f32.mrb[0].mxu0
      %5763 = vmatprep.mubr.bf16.mxu0 0
      %5764 = vmatmul.mubr.bf16.gmra.mrb[0].mxu0 %v5528
      %v5765 = vpop.f32.mrb[0].mxu0
      %v5766 = vadd.f32 0.0, %v5765
      %v5767 = vpop.f32.mrb[0].mxu0
      %v5768 = vpop.f32.mrb[0].mxu0
      %v5769 = vadd.f32 0.0, %v5768
      %v5770 = vpop.f32.mrb[0].mxu0
      %5771 = vmatprep.mubr.bf16.mxu0 0
      %5772 = vmatmul.mubr.bf16.gmra.mrb[0].mxu0 %v5536
      %v5773 = vpop.f32.mrb[0].mxu0
      %v5774 = vadd.f32 0.0, %v5773
      %v5775 = vpop.f32.mrb[0].mxu0
      %v5776 = vpop.f32.mrb[0].mxu0
      %v5777 = vadd.f32 0.0, %v5776
      %v5778 = vpop.f32.mrb[0].mxu0
      %5779 = vmatprep.mubr.bf16.mxu0 0
      %5780 = vmatmul.mubr.bf16.gmra.mrb[0].mxu0 %v5544
      %v5781 = vpop.f32.mrb[0].mxu0
      %v5782 = vadd.f32 0.0, %v5781
      %v5783 = vpop.f32.mrb[0].mxu0
      %v5784 = vpop.f32.mrb[0].mxu0
      %v5785 = vadd.f32 0.0, %v5784
      %v5786 = vpop.f32.mrb[0].mxu0
      %5787 = vmatprep.mubr.bf16.mxu0 0
      %5788 = vmatmul.mubr.bf16.gmra.mrb[0].mxu0 %v5552
      %v5789 = vpop.f32.mrb[0].mxu0
      %v5790 = vadd.f32 0.0, %v5789
      %v5791 = vpop.f32.mrb[0].mxu0
      %v5792 = vpop.f32.mrb[0].mxu0
      %v5793 = vadd.f32 0.0, %v5792
      %v5794 = vpop.f32.mrb[0].mxu0
      %5795 = vmatprep.mubr.bf16.mxu0 0
      %5796 = vmatmul.mubr.bf16.gmra.mrb[0].mxu0 %v5560
      %v5797 = vpop.f32.mrb[0].mxu0
      %v5798 = vadd.f32 0.0, %v5797
      %v5799 = vpop.f32.mrb[0].mxu0
      %v5800 = vpop.f32.mrb[0].mxu0
      %v5801 = vadd.f32 0.0, %v5800
      %v5802 = vpop.f32.mrb[0].mxu0
      %5803 = vmatprep.mubr.bf16.mxu0 0
      %5804 = vmatmul.mubr.bf16.gmra.mrb[0].mxu0 %v5568
      %v5805 = vpop.f32.mrb[0].mxu0
      %v5806 = vadd.f32 0.0, %v5805
      %v5807 = vpop.f32.mrb[0].mxu0
      %v5808 = vpop.f32.mrb[0].mxu0
      %v5809 = vadd.f32 0.0, %v5808
      %v5810 = vpop.f32.mrb[0].mxu0
      %5811 = vmatprep.mubr.bf16.mxu0 0
      %5812 = vmatmul.mubr.bf16.gmra.mrb[0].mxu0 %v5576
      %v5813 = vpop.f32.mrb[0].mxu0
      %v5814 = vadd.f32 0.0, %v5813
      %v5815 = vpop.f32.mrb[0].mxu0
      %v5816 = vpop.f32.mrb[0].mxu0
      %v5817 = vadd.f32 0.0, %v5816
      %v5818 = vpop.f32.mrb[0].mxu0
      %5819 = vmatprep.mubr.bf16.mxu0 0
      %5820 = vmatmul.mubr.bf16.gmra.mrb[0].mxu0 %v5584
      %v5821 = vpop.f32.mrb[0].mxu0
      %v5822 = vadd.f32 0.0, %v5821
      %v5823 = vpop.f32.mrb[0].mxu0
      %v5824 = vpop.f32.mrb[0].mxu0
      %v5825 = vadd.f32 0.0, %v5824
      %v5826 = vpop.f32.mrb[0].mxu0
      %5827 = vmatprep.mubr.bf16.mxu0 0
      %5828 = vmatmul.mubr.bf16.gmra.mrb[0].mxu0 %v5592
      %v5829 = vpop.f32.mrb[0].mxu0
      %v5830 = vadd.f32 0.0, %v5829
      %v5831 = vpop.f32.mrb[0].mxu0
      %v5832 = vpop.f32.mrb[0].mxu0
      %v5833 = vadd.f32 0.0, %v5832
      %v5834 = vpop.f32.mrb[0].mxu0
      %5835 = vmatprep.mubr.bf16.mxu0 0
      %5836 = vmatmul.mubr.bf16.gmra.mrb[0].mxu0 %v5600
      %v5837 = vpop.f32.mrb[0].mxu0
      %v5838 = vadd.f32 0.0, %v5837
      %v5839 = vpop.f32.mrb[0].mxu0
      %v5840 = vpop.f32.mrb[0].mxu0
      %v5841 = vadd.f32 0.0, %v5840
      %v5842 = vpop.f32.mrb[0].mxu0
      %5843 = vmatprep.mubr.bf16.mxu0 0
      %5844 = vmatmul.mubr.bf16.gmra.mrb[0].mxu0 %v5608
      %v5845 = vpop.f32.mrb[0].mxu0
      %v5846 = vadd.f32 0.0, %v5845
      %v5847 = vpop.f32.mrb[0].mxu0
      %v5848 = vpop.f32.mrb[0].mxu0
      %v5849 = vadd.f32 0.0, %v5848
      %v5850 = vpop.f32.mrb[0].mxu0
      %5851 = vmatprep.mubr.bf16.mxu0 0
      %5852 = vmatmul.mubr.bf16.gmra.mrb[0].mxu0 %v5616
      %v5853 = vpop.f32.mrb[0].mxu0
      %v5854 = vadd.f32 0.0, %v5853
      %v5855 = vpop.f32.mrb[0].mxu0
      %v5856 = vpop.f32.mrb[0].mxu0
      %v5857 = vadd.f32 0.0, %v5856
      %v5858 = vpop.f32.mrb[0].mxu0
      %5859 = vmatprep.mubr.bf16.mxu0 0
      %5860 = vmatmul.mubr.bf16.gmra.mrb[0].mxu0 %v5624
      %v5861 = vpop.f32.mrb[0].mxu0
      %v5862 = vadd.f32 0.0, %v5861
      %v5863 = vpop.f32.mrb[0].mxu0
      %v5864 = vpop.f32.mrb[0].mxu0
      %v5865 = vadd.f32 0.0, %v5864
      %v5866 = vpop.f32.mrb[0].mxu0
      %5867 = vmatprep.mubr.bf16.mxu0 0
      %5868 = vmatmul.mubr.bf16.gmra.mrb[0].mxu0 %v5632
      %v5869 = vpop.f32.mrb[0].mxu0
      %v5870 = vadd.f32 0.0, %v5869
      %v5871 = vpop.f32.mrb[0].mxu0
      %v5872 = vpop.f32.mrb[0].mxu0
      %v5873 = vadd.f32 0.0, %v5872
      %v5874 = vpop.f32.mrb[0].mxu0
      %5875 = vmatprep.mubr.bf16.mxu0 0
      %5876 = vmatmul.mubr.bf16.gmra.mrb[0].mxu0 %v5640
      %v5877 = vpop.f32.mrb[0].mxu0
      %v5878 = vadd.f32 0.0, %v5877
      %v5879 = vpop.f32.mrb[0].mxu0
      %v5880 = vpop.f32.mrb[0].mxu0
      %v5881 = vadd.f32 0.0, %v5880
      %v5882 = vpop.f32.mrb[0].mxu0
      %5883 = vmatprep.mubr.bf16.mxu0 0
      %5884 = vmatmul.mubr.bf16.gmra.mrb[0].mxu0 %v5648
      %v5885 = vpop.f32.mrb[0].mxu0
      %v5886 = vadd.f32 0.0, %v5885
      %v5887 = vpop.f32.mrb[0].mxu0
      %v5888 = vpop.f32.mrb[0].mxu0
      %v5889 = vadd.f32 0.0, %v5888
      %v5890 = vpop.f32.mrb[0].mxu0
      %5891 = vdwg.mxu0
      %v5926 = vunpack.c.l.b16 %v5374
      %v5927 = vunpack.c.l.b16 %v5375
      %v5928 = vunpack.c.l.b16 %v5376
      %v5929 = vunpack.c.l.b16 %v5377
      %v5930 = vunpack.c.l.b16 %v5378
      %v5931 = vunpack.c.l.b16 %v5379
      %v5932 = vunpack.c.l.b16 %v5380
      %v5933 = vunpack.c.l.b16 %v5381
      %v5934 = vunpack.c.l.b16 %v5382
      %v5935 = vunpack.c.l.b16 %v5383
      %v5936 = vunpack.c.l.b16 %v5384
      %v5937 = vunpack.c.l.b16 %v5385
      %v5938 = vunpack.c.l.b16 %v5386
      %v5939 = vunpack.c.l.b16 %v5387
      %v5940 = vunpack.c.l.b16 %v5388
      %v5941 = vunpack.c.l.b16 %v5389
      %v5942 = vpack.c.b16 %v5927, %v5926
      %v5943 = vpack.c.b16 %v5929, %v5928
      %v5944 = vpack.c.b16 %v5931, %v5930
      %v5945 = vpack.c.b16 %v5933, %v5932
      %v5946 = vpack.c.b16 %v5935, %v5934
      %v5947 = vpack.c.b16 %v5937, %v5936
      %v5948 = vpack.c.b16 %v5939, %v5938
      %v5949 = vpack.c.b16 %v5941, %v5940
      %5958 = vmatprep.subr.bf16.mxu0 0
      %5959 = vmatpush1.bf16.msra.mxu0 %v5942
      %5960 = vmatprep.subr.bf16.mxu0 0
      %5961 = vmatpush1.bf16.msra.mxu0 %v5943
      %5962 = vmatprep.subr.bf16.mxu0 0
      %5963 = vmatpush1.bf16.msra.mxu0 %v5944
      %5964 = vmatprep.subr.bf16.mxu0 0
      %5965 = vmatpush1.bf16.msra.mxu0 %v5945
      %5966 = vmatprep.subr.bf16.mxu0 0
      %5967 = vmatpush1.bf16.msra.mxu0 %v5946
      %5968 = vmatprep.subr.bf16.mxu0 0
      %5969 = vmatpush1.bf16.msra.mxu0 %v5947
      %5970 = vmatprep.subr.bf16.mxu0 0
      %5971 = vmatpush1.bf16.msra.mxu0 %v5948
      %5972 = vmatprep.subr.bf16.mxu0 0
      %5973 = vmatpush1.bf16.msra.mxu0 %v5949
      %5974 = vmatprep.subr.bf16.mxu0 0
      %5975 = vmatpush1.bf16.msra.mxu0 0
      %5976 = vmatprep.subr.bf16.mxu0 0
      %5977 = vmatpush1.bf16.msra.mxu0 0
      %5978 = vmatprep.subr.bf16.mxu0 0
      %5979 = vmatpush1.bf16.msra.mxu0 0
      %5980 = vmatprep.subr.bf16.mxu0 0
      %5981 = vmatpush1.bf16.msra.mxu0 0
      %5982 = vmatprep.subr.bf16.mxu0 0
      %5983 = vmatpush1.bf16.msra.mxu0 0
      %5984 = vmatprep.subr.bf16.mxu0 0
      %5985 = vmatpush1.bf16.msra.mxu0 0
      %5986 = vmatprep.subr.bf16.mxu0 0
      %5987 = vmatpush1.bf16.msra.mxu0 0
      %5988 = vmatprep.subr.bf16.mxu0 0
      %5989 = vmatpush1.bf16.msra.mxu0 0
      %5990 = vmatprep.mubr.bf16.mxu0 0
      %5991 = vmatmul.mubr.bf16.gmra.mrb[0].mxu0 %v5482
      %v5992 = vpop.f32.mrb[0].mxu0
      %v5993 = vadd.f32 %v5750, %v5992
      %v5994 = vpop.f32.mrb[0].mxu0
      %v5995 = vpop.f32.mrb[0].mxu0
      %v5996 = vadd.f32 %v5753, %v5995
      %v5997 = vpop.f32.mrb[0].mxu0
      %5998 = vmatprep.mubr.bf16.mxu0 0
      %5999 = vmatmul.mubr.bf16.gmra.mrb[0].mxu0 %v5483
      %v6000 = vpop.f32.mrb[0].mxu0
      %v6001 = vadd.f32 %v5758, %v6000
      %v6002 = vpop.f32.mrb[0].mxu0
      %v6003 = vpop.f32.mrb[0].mxu0
      %v6004 = vadd.f32 %v5761, %v6003
      %v6005 = vpop.f32.mrb[0].mxu0
      %6006 = vmatprep.mubr.bf16.mxu0 0
      %6007 = vmatmul.mubr.bf16.gmra.mrb[0].mxu0 %v5484
      %v6008 = vpop.f32.mrb[0].mxu0
      %v6009 = vadd.f32 %v5766, %v6008
      %v6010 = vpop.f32.mrb[0].mxu0
      %v6011 = vpop.f32.mrb[0].mxu0
      %v6012 = vadd.f32 %v5769, %v6011
      %v6013 = vpop.f32.mrb[0].mxu0
      %6014 = vmatprep.mubr.bf16.mxu0 0
      %6015 = vmatmul.mubr.bf16.gmra.mrb[0].mxu0 %v5485
      %v6016 = vpop.f32.mrb[0].mxu0
      %v6017 = vadd.f32 %v5774, %v6016
      %v6018 = vpop.f32.mrb[0].mxu0
      %v6019 = vpop.f32.mrb[0].mxu0
      %v6020 = vadd.f32 %v5777, %v6019
      %v6021 = vpop.f32.mrb[0].mxu0
      %6022 = vmatprep.mubr.bf16.mxu0 0
      %6023 = vmatmul.mubr.bf16.gmra.mrb[0].mxu0 %v5486
      %v6024 = vpop.f32.mrb[0].mxu0
      %v6025 = vadd.f32 %v5782, %v6024
      %v6026 = vpop.f32.mrb[0].mxu0
      %v6027 = vpop.f32.mrb[0].mxu0
      %v6028 = vadd.f32 %v5785, %v6027
      %v6029 = vpop.f32.mrb[0].mxu0
      %6030 = vmatprep.mubr.bf16.mxu0 0
      %6031 = vmatmul.mubr.bf16.gmra.mrb[0].mxu0 %v5487
      %v6032 = vpop.f32.mrb[0].mxu0
      %v6033 = vadd.f32 %v5790, %v6032
      %v6034 = vpop.f32.mrb[0].mxu0
      %v6035 = vpop.f32.mrb[0].mxu0
      %v6036 = vadd.f32 %v5793, %v6035
      %v6037 = vpop.f32.mrb[0].mxu0
      %6038 = vmatprep.mubr.bf16.mxu0 0
      %6039 = vmatmul.mubr.bf16.gmra.mrb[0].mxu0 %v5488
      %v6040 = vpop.f32.mrb[0].mxu0
      %v6041 = vadd.f32 %v5798, %v6040
      %v6042 = vpop.f32.mrb[0].mxu0
      %v6043 = vpop.f32.mrb[0].mxu0
      %v6044 = vadd.f32 %v5801, %v6043
      %v6045 = vpop.f32.mrb[0].mxu0
      %6046 = vmatprep.mubr.bf16.mxu0 0
      %6047 = vmatmul.mubr.bf16.gmra.mrb[0].mxu0 %v5489
      %v6048 = vpop.f32.mrb[0].mxu0
      %v6049 = vadd.f32 %v5806, %v6048
      %v6050 = vpop.f32.mrb[0].mxu0
      %v6051 = vpop.f32.mrb[0].mxu0
      %v6052 = vadd.f32 %v5809, %v6051
      %v6053 = vpop.f32.mrb[0].mxu0
      %6054 = vmatprep.mubr.bf16.mxu0 0
      %6055 = vmatmul.mubr.bf16.gmra.mrb[0].mxu0 %v5490
      %v6056 = vpop.f32.mrb[0].mxu0
      %v6057 = vadd.f32 %v5814, %v6056
      %v6058 = vpop.f32.mrb[0].mxu0
      %v6059 = vpop.f32.mrb[0].mxu0
      %v6060 = vadd.f32 %v5817, %v6059
      %v6061 = vpop.f32.mrb[0].mxu0
      %6062 = vmatprep.mubr.bf16.mxu0 0
      %6063 = vmatmul.mubr.bf16.gmra.mrb[0].mxu0 %v5491
      %v6064 = vpop.f32.mrb[0].mxu0
      %v6065 = vadd.f32 %v5822, %v6064
      %v6066 = vpop.f32.mrb[0].mxu0
      %v6067 = vpop.f32.mrb[0].mxu0
      %v6068 = vadd.f32 %v5825, %v6067
      %v6069 = vpop.f32.mrb[0].mxu0
      %6070 = vmatprep.mubr.bf16.mxu0 0
      %6071 = vmatmul.mubr.bf16.gmra.mrb[0].mxu0 %v5492
      %v6072 = vpop.f32.mrb[0].mxu0
      %v6073 = vadd.f32 %v5830, %v6072
      %v6074 = vpop.f32.mrb[0].mxu0
      %v6075 = vpop.f32.mrb[0].mxu0
      %v6076 = vadd.f32 %v5833, %v6075
      %v6077 = vpop.f32.mrb[0].mxu0
      %6078 = vmatprep.mubr.bf16.mxu0 0
      %6079 = vmatmul.mubr.bf16.gmra.mrb[0].mxu0 %v5493
      %v6080 = vpop.f32.mrb[0].mxu0
      %v6081 = vadd.f32 %v5838, %v6080
      %v6082 = vpop.f32.mrb[0].mxu0
      %v6083 = vpop.f32.mrb[0].mxu0
      %v6084 = vadd.f32 %v5841, %v6083
      %v6085 = vpop.f32.mrb[0].mxu0
      %6086 = vmatprep.mubr.bf16.mxu0 0
      %6087 = vmatmul.mubr.bf16.gmra.mrb[0].mxu0 %v5494
      %v6088 = vpop.f32.mrb[0].mxu0
      %v6089 = vadd.f32 %v5846, %v6088
      %v6090 = vpop.f32.mrb[0].mxu0
      %v6091 = vpop.f32.mrb[0].mxu0
      %v6092 = vadd.f32 %v5849, %v6091
      %v6093 = vpop.f32.mrb[0].mxu0
      %6094 = vmatprep.mubr.bf16.mxu0 0
      %6095 = vmatmul.mubr.bf16.gmra.mrb[0].mxu0 %v5495
      %v6096 = vpop.f32.mrb[0].mxu0
      %v6097 = vadd.f32 %v5854, %v6096
      %v6098 = vpop.f32.mrb[0].mxu0
      %v6099 = vpop.f32.mrb[0].mxu0
      %v6100 = vadd.f32 %v5857, %v6099
      %v6101 = vpop.f32.mrb[0].mxu0
      %6102 = vmatprep.mubr.bf16.mxu0 0
      %6103 = vmatmul.mubr.bf16.gmra.mrb[0].mxu0 %v5496
      %v6104 = vpop.f32.mrb[0].mxu0
      %v6105 = vadd.f32 %v5862, %v6104
      %v6106 = vpop.f32.mrb[0].mxu0
      %v6107 = vpop.f32.mrb[0].mxu0
      %v6108 = vadd.f32 %v5865, %v6107
      %v6109 = vpop.f32.mrb[0].mxu0
      %6110 = vmatprep.mubr.bf16.mxu0 0
      %6111 = vmatmul.mubr.bf16.gmra.mrb[0].mxu0 %v5497
      %v6112 = vpop.f32.mrb[0].mxu0
      %v6113 = vadd.f32 %v5870, %v6112
      %v6114 = vpop.f32.mrb[0].mxu0
      %v6115 = vpop.f32.mrb[0].mxu0
      %v6116 = vadd.f32 %v5873, %v6115
      %v6117 = vpop.f32.mrb[0].mxu0
      %6118 = vmatprep.mubr.bf16.mxu0 0
      %6119 = vmatmul.mubr.bf16.gmra.mrb[0].mxu0 %v5498
      %v6120 = vpop.f32.mrb[0].mxu0
      %v6121 = vadd.f32 %v5878, %v6120
      %v6122 = vpop.f32.mrb[0].mxu0
      %v6123 = vpop.f32.mrb[0].mxu0
      %v6124 = vadd.f32 %v5881, %v6123
      %v6125 = vpop.f32.mrb[0].mxu0
      %6126 = vmatprep.mubr.bf16.mxu0 0
      %6127 = vmatmul.mubr.bf16.gmra.mrb[0].mxu0 %v5499
      %v6128 = vpop.f32.mrb[0].mxu0
      %v6129 = vadd.f32 %v5886, %v6128
      %v6130 = vpop.f32.mrb[0].mxu0
      %v6131 = vpop.f32.mrb[0].mxu0
      %v6132 = vadd.f32 %v5889, %v6131
      %v6133 = vpop.f32.mrb[0].mxu0
      %6134 = vdwg.mxu0
      %v6135 = vld [vmem:[#allocation2] sm:$0xe]
      %s6136 = scalar_lea.vmem %s3, 128
      %v6137 = vld [vmem:[%s6136] sm:$0xf]
      %v6138 = vld [vmem:[%s6136 + $0x4] sm:$0xf]
      %v6139 = vld [vmem:[%s6136 + $0x8] sm:$0xf]
      %v6140 = vld [vmem:[%s6136 + $0xc] sm:$0xf]
      %v6141 = vld [vmem:[%s6136 + $0x10] sm:$0xf]
      %v6142 = vld [vmem:[%s6136 + $0x14] sm:$0xf]
      %v6143 = vld [vmem:[%s6136 + $0x18] sm:$0xf]
      %v6144 = vld [vmem:[%s6136 + $0x1c] sm:$0xf]
      %v6145 = vld [vmem:[%s6136 + $0x20] sm:$0xf]
      %v6146 = vld [vmem:[%s6136 + $0x24] sm:$0xf]
      %v6147 = vld [vmem:[%s6136 + $0x28] sm:$0xf]
      %v6148 = vld [vmem:[%s6136 + $0x2c] sm:$0xf]
      %v6149 = vld [vmem:[%s6136 + $0x30] sm:$0xf]
      %v6150 = vld [vmem:[%s6136 + $0x34] sm:$0xf]
      %v6151 = vld [vmem:[%s6136 + $0x38] sm:$0xf]
      %v6152 = vld [vmem:[%s6136 + $0x3c] sm:$0xf]
      %v6154 = vunpack.c.l.b16 %v6135
      %v6155 = vpack.c.b16 %v5446, %v6154
      %v6156 = vrot.slane %v6155, 1
      %v6157 = vrot.slane %v5483, 1
      %v6158 = vsel %vm1694, %v6156, %v6157
      %v6159 = vrot.slane %v5484, 1
      %v6160 = vsel %vm1694, %v6157, %v6159
      %v6161 = vrot.slane %v5485, 1
      %v6162 = vsel %vm1694, %v6159, %v6161
      %v6163 = vrot.slane %v5486, 1
      %v6164 = vsel %vm1694, %v6161, %v6163
      %v6165 = vrot.slane %v5487, 1
      %v6166 = vsel %vm1694, %v6163, %v6165
      %v6167 = vrot.slane %v5488, 1
      %v6168 = vsel %vm1694, %v6165, %v6167
      %v6169 = vrot.slane %v5489, 1
      %v6170 = vsel %vm1694, %v6167, %v6169
      %v6171 = vrot.slane %v5490, 1
      %v6172 = vsel %vm1694, %v6169, %v6171
      %v6173 = vrot.slane %v5491, 1
      %v6174 = vsel %vm1694, %v6171, %v6173
      %v6175 = vrot.slane %v5492, 1
      %v6176 = vsel %vm1694, %v6173, %v6175
      %v6177 = vrot.slane %v5493, 1
      %v6178 = vsel %vm1694, %v6175, %v6177
      %v6179 = vrot.slane %v5494, 1
      %v6180 = vsel %vm1694, %v6177, %v6179
      %v6181 = vrot.slane %v5495, 1
      %v6182 = vsel %vm1694, %v6179, %v6181
      %v6183 = vrot.slane %v5496, 1
      %v6184 = vsel %vm1694, %v6181, %v6183
      %v6185 = vrot.slane %v5497, 1
      %v6186 = vsel %vm1694, %v6183, %v6185
      %v6187 = vrot.slane %v5498, 1
      %v6188 = vsel %vm1694, %v6185, %v6187
      %v6189 = vrot.slane %v5499, 1
      %v6190 = vsel %vm1694, %v6187, %v6189
      %v6191 = vrot.slane %v5500, 1
      %v6192 = vsel %vm1694, %v6189, %v6191
      %v6227 = vunpack.c.l.b16 %v6137
      %v6228 = vunpack.c.l.b16 %v6138
      %v6229 = vunpack.c.l.b16 %v6139
      %v6230 = vunpack.c.l.b16 %v6140
      %v6231 = vunpack.c.l.b16 %v6141
      %v6232 = vunpack.c.l.b16 %v6142
      %v6233 = vunpack.c.l.b16 %v6143
      %v6234 = vunpack.c.l.b16 %v6144
      %v6235 = vunpack.c.l.b16 %v6145
      %v6236 = vunpack.c.l.b16 %v6146
      %v6237 = vunpack.c.l.b16 %v6147
      %v6238 = vunpack.c.l.b16 %v6148
      %v6239 = vunpack.c.l.b16 %v6149
      %v6240 = vunpack.c.l.b16 %v6150
      %v6241 = vunpack.c.l.b16 %v6151
      %v6242 = vunpack.c.l.b16 %v6152
      %v6243 = vpack.c.b16 %v6228, %v6227
      %v6244 = vpack.c.b16 %v6230, %v6229
      %v6245 = vpack.c.b16 %v6232, %v6231
      %v6246 = vpack.c.b16 %v6234, %v6233
      %v6247 = vpack.c.b16 %v6236, %v6235
      %v6248 = vpack.c.b16 %v6238, %v6237
      %v6249 = vpack.c.b16 %v6240, %v6239
      %v6250 = vpack.c.b16 %v6242, %v6241
      %6259 = vmatprep.subr.bf16.mxu0 0
      %6260 = vmatpush1.bf16.msra.mxu0 %v6243
      %6261 = vmatprep.subr.bf16.mxu0 0
      %6262 = vmatpush1.bf16.msra.mxu0 %v6244
      %6263 = vmatprep.subr.bf16.mxu0 0
      %6264 = vmatpush1.bf16.msra.mxu0 %v6245
      %6265 = vmatprep.subr.bf16.mxu0 0
      %6266 = vmatpush1.bf16.msra.mxu0 %v6246
      %6267 = vmatprep.subr.bf16.mxu0 0
      %6268 = vmatpush1.bf16.msra.mxu0 %v6247
      %6269 = vmatprep.subr.bf16.mxu0 0
      %6270 = vmatpush1.bf16.msra.mxu0 %v6248
      %6271 = vmatprep.subr.bf16.mxu0 0
      %6272 = vmatpush1.bf16.msra.mxu0 %v6249
      %6273 = vmatprep.subr.bf16.mxu0 0
      %6274 = vmatpush1.bf16.msra.mxu0 %v6250
      %6275 = vmatprep.subr.bf16.mxu0 0
      %6276 = vmatpush1.bf16.msra.mxu0 0
      %6277 = vmatprep.subr.bf16.mxu0 0
      %6278 = vmatpush1.bf16.msra.mxu0 0
      %6279 = vmatprep.subr.bf16.mxu0 0
      %6280 = vmatpush1.bf16.msra.mxu0 0
      %6281 = vmatprep.subr.bf16.mxu0 0
      %6282 = vmatpush1.bf16.msra.mxu0 0
      %6283 = vmatprep.subr.bf16.mxu0 0
      %6284 = vmatpush1.bf16.msra.mxu0 0
      %6285 = vmatprep.subr.bf16.mxu0 0
      %6286 = vmatpush1.bf16.msra.mxu0 0
      %6287 = vmatprep.subr.bf16.mxu0 0
      %6288 = vmatpush1.bf16.msra.mxu0 0
      %6289 = vmatprep.subr.bf16.mxu0 0
      %6290 = vmatpush1.bf16.msra.mxu0 0
      %6291 = vmatprep.mubr.bf16.mxu0 0
      %6292 = vmatmul.mubr.bf16.gmra.mrb[0].mxu0 %v6158
      %v6293 = vpop.f32.mrb[0].mxu0
      %v6294 = vadd.f32 0.0, %v6293
      %v6295 = vpop.f32.mrb[0].mxu0
      %v6296 = vpop.f32.mrb[0].mxu0
      %v6297 = vadd.f32 0.0, %v6296
      %v6298 = vpop.f32.mrb[0].mxu0
      %6299 = vmatprep.mubr.bf16.mxu0 0
      %6300 = vmatmul.mubr.bf16.gmra.mrb[0].mxu0 %v6160
      %v6301 = vpop.f32.mrb[0].mxu0
      %v6302 = vadd.f32 0.0, %v6301
      %v6303 = vpop.f32.mrb[0].mxu0
      %v6304 = vpop.f32.mrb[0].mxu0
      %v6305 = vadd.f32 0.0, %v6304
      %v6306 = vpop.f32.mrb[0].mxu0
      %6307 = vmatprep.mubr.bf16.mxu0 0
      %6308 = vmatmul.mubr.bf16.gmra.mrb[0].mxu0 %v6162
      %v6309 = vpop.f32.mrb[0].mxu0
      %v6310 = vadd.f32 0.0, %v6309
      %v6311 = vpop.f32.mrb[0].mxu0
      %v6312 = vpop.f32.mrb[0].mxu0
      %v6313 = vadd.f32 0.0, %v6312
      %v6314 = vpop.f32.mrb[0].mxu0
      %6315 = vmatprep.mubr.bf16.mxu0 0
      %6316 = vmatmul.mubr.bf16.gmra.mrb[0].mxu0 %v6164
      %v6317 = vpop.f32.mrb[0].mxu0
      %v6318 = vadd.f32 0.0, %v6317
      %v6319 = vpop.f32.mrb[0].mxu0
      %v6320 = vpop.f32.mrb[0].mxu0
      %v6321 = vadd.f32 0.0, %v6320
      %v6322 = vpop.f32.mrb[0].mxu0
      %6323 = vmatprep.mubr.bf16.mxu0 0
      %6324 = vmatmul.mubr.bf16.gmra.mrb[0].mxu0 %v6166
      %v6325 = vpop.f32.mrb[0].mxu0
      %v6326 = vadd.f32 0.0, %v6325
      %v6327 = vpop.f32.mrb[0].mxu0
      %v6328 = vpop.f32.mrb[0].mxu0
      %v6329 = vadd.f32 0.0, %v6328
      %v6330 = vpop.f32.mrb[0].mxu0
      %6331 = vmatprep.mubr.bf16.mxu0 0
      %6332 = vmatmul.mubr.bf16.gmra.mrb[0].mxu0 %v6168
      %v6333 = vpop.f32.mrb[0].mxu0
      %v6334 = vadd.f32 0.0, %v6333
      %v6335 = vpop.f32.mrb[0].mxu0
      %v6336 = vpop.f32.mrb[0].mxu0
      %v6337 = vadd.f32 0.0, %v6336
      %v6338 = vpop.f32.mrb[0].mxu0
      %6339 = vmatprep.mubr.bf16.mxu0 0
      %6340 = vmatmul.mubr.bf16.gmra.mrb[0].mxu0 %v6170
      %v6341 = vpop.f32.mrb[0].mxu0
      %v6342 = vadd.f32 0.0, %v6341
      %v6343 = vpop.f32.mrb[0].mxu0
      %v6344 = vpop.f32.mrb[0].mxu0
      %v6345 = vadd.f32 0.0, %v6344
      %v6346 = vpop.f32.mrb[0].mxu0
      %6347 = vmatprep.mubr.bf16.mxu0 0
      %6348 = vmatmul.mubr.bf16.gmra.mrb[0].mxu0 %v6172
      %v6349 = vpop.f32.mrb[0].mxu0
      %v6350 = vadd.f32 0.0, %v6349
      %v6351 = vpop.f32.mrb[0].mxu0
      %v6352 = vpop.f32.mrb[0].mxu0
      %v6353 = vadd.f32 0.0, %v6352
      %v6354 = vpop.f32.mrb[0].mxu0
      %6355 = vmatprep.mubr.bf16.mxu0 0
      %6356 = vmatmul.mubr.bf16.gmra.mrb[0].mxu0 %v6174
      %v6357 = vpop.f32.mrb[0].mxu0
      %v6358 = vadd.f32 0.0, %v6357
      %v6359 = vpop.f32.mrb[0].mxu0
      %v6360 = vpop.f32.mrb[0].mxu0
      %v6361 = vadd.f32 0.0, %v6360
      %v6362 = vpop.f32.mrb[0].mxu0
      %6363 = vmatprep.mubr.bf16.mxu0 0
      %6364 = vmatmul.mubr.bf16.gmra.mrb[0].mxu0 %v6176
      %v6365 = vpop.f32.mrb[0].mxu0
      %v6366 = vadd.f32 0.0, %v6365
      %v6367 = vpop.f32.mrb[0].mxu0
      %v6368 = vpop.f32.mrb[0].mxu0
      %v6369 = vadd.f32 0.0, %v6368
      %v6370 = vpop.f32.mrb[0].mxu0
      %6371 = vmatprep.mubr.bf16.mxu0 0
      %6372 = vmatmul.mubr.bf16.gmra.mrb[0].mxu0 %v6178
      %v6373 = vpop.f32.mrb[0].mxu0
      %v6374 = vadd.f32 0.0, %v6373
      %v6375 = vpop.f32.mrb[0].mxu0
      %v6376 = vpop.f32.mrb[0].mxu0
      %v6377 = vadd.f32 0.0, %v6376
      %v6378 = vpop.f32.mrb[0].mxu0
      %6379 = vmatprep.mubr.bf16.mxu0 0
      %6380 = vmatmul.mubr.bf16.gmra.mrb[0].mxu0 %v6180
      %v6381 = vpop.f32.mrb[0].mxu0
      %v6382 = vadd.f32 0.0, %v6381
      %v6383 = vpop.f32.mrb[0].mxu0
      %v6384 = vpop.f32.mrb[0].mxu0
      %v6385 = vadd.f32 0.0, %v6384
      %v6386 = vpop.f32.mrb[0].mxu0
      %6387 = vmatprep.mubr.bf16.mxu0 0
      %6388 = vmatmul.mubr.bf16.gmra.mrb[0].mxu0 %v6182
      %v6389 = vpop.f32.mrb[0].mxu0
      %v6390 = vadd.f32 0.0, %v6389
      %v6391 = vpop.f32.mrb[0].mxu0
      %v6392 = vpop.f32.mrb[0].mxu0
      %v6393 = vadd.f32 0.0, %v6392
      %v6394 = vpop.f32.mrb[0].mxu0
      %6395 = vmatprep.mubr.bf16.mxu0 0
      %6396 = vmatmul.mubr.bf16.gmra.mrb[0].mxu0 %v6184
      %v6397 = vpop.f32.mrb[0].mxu0
      %v6398 = vadd.f32 0.0, %v6397
      %v6399 = vpop.f32.mrb[0].mxu0
      %v6400 = vpop.f32.mrb[0].mxu0
      %v6401 = vadd.f32 0.0, %v6400
      %v6402 = vpop.f32.mrb[0].mxu0
      %6403 = vmatprep.mubr.bf16.mxu0 0
      %6404 = vmatmul.mubr.bf16.gmra.mrb[0].mxu0 %v6186
      %v6405 = vpop.f32.mrb[0].mxu0
      %v6406 = vadd.f32 0.0, %v6405
      %v6407 = vpop.f32.mrb[0].mxu0
      %v6408 = vpop.f32.mrb[0].mxu0
      %v6409 = vadd.f32 0.0, %v6408
      %v6410 = vpop.f32.mrb[0].mxu0
      %6411 = vmatprep.mubr.bf16.mxu0 0
      %6412 = vmatmul.mubr.bf16.gmra.mrb[0].mxu0 %v6188
      %v6413 = vpop.f32.mrb[0].mxu0
      %v6414 = vadd.f32 0.0, %v6413
      %v6415 = vpop.f32.mrb[0].mxu0
      %v6416 = vpop.f32.mrb[0].mxu0
      %v6417 = vadd.f32 0.0, %v6416
      %v6418 = vpop.f32.mrb[0].mxu0
      %6419 = vmatprep.mubr.bf16.mxu0 0
      %6420 = vmatmul.mubr.bf16.gmra.mrb[0].mxu0 %v6190
      %v6421 = vpop.f32.mrb[0].mxu0
      %v6422 = vadd.f32 0.0, %v6421
      %v6423 = vpop.f32.mrb[0].mxu0
      %v6424 = vpop.f32.mrb[0].mxu0
      %v6425 = vadd.f32 0.0, %v6424
      %v6426 = vpop.f32.mrb[0].mxu0
      %6427 = vmatprep.mubr.bf16.mxu0 0
      %6428 = vmatmul.mubr.bf16.gmra.mrb[0].mxu0 %v6192
      %v6429 = vpop.f32.mrb[0].mxu0
      %v6430 = vadd.f32 0.0, %v6429
      %v6431 = vpop.f32.mrb[0].mxu0
      %v6432 = vpop.f32.mrb[0].mxu0
      %v6433 = vadd.f32 0.0, %v6432
      %v6434 = vpop.f32.mrb[0].mxu0
      %6435 = vdwg.mxu0
      %v6436 = vadd.f32 %v5993, %v6294
      %v6437 = vadd.f32 %v5996, %v6297
      %v6438 = vadd.f32 %v6001, %v6302
      %v6439 = vadd.f32 %v6004, %v6305
      %v6440 = vadd.f32 %v6009, %v6310
      %v6441 = vadd.f32 %v6012, %v6313
      %v6442 = vadd.f32 %v6017, %v6318
      %v6443 = vadd.f32 %v6020, %v6321
      %v6444 = vadd.f32 %v6025, %v6326
      %v6445 = vadd.f32 %v6028, %v6329
      %v6446 = vadd.f32 %v6033, %v6334
      %v6447 = vadd.f32 %v6036, %v6337
      %v6448 = vadd.f32 %v6041, %v6342
      %v6449 = vadd.f32 %v6044, %v6345
      %v6450 = vadd.f32 %v6049, %v6350
      %v6451 = vadd.f32 %v6052, %v6353
      %v6452 = vadd.f32 %v6057, %v6358
      %v6453 = vadd.f32 %v6060, %v6361
      %v6454 = vadd.f32 %v6065, %v6366
      %v6455 = vadd.f32 %v6068, %v6369
      %v6456 = vadd.f32 %v6073, %v6374
      %v6457 = vadd.f32 %v6076, %v6377
      %v6458 = vadd.f32 %v6081, %v6382
      %v6459 = vadd.f32 %v6084, %v6385
      %v6460 = vadd.f32 %v6089, %v6390
      %v6461 = vadd.f32 %v6092, %v6393
      %v6462 = vadd.f32 %v6097, %v6398
      %v6463 = vadd.f32 %v6100, %v6401
      %v6464 = vadd.f32 %v6105, %v6406
      %v6465 = vadd.f32 %v6108, %v6409
      %v6466 = vadd.f32 %v6113, %v6414
      %v6467 = vadd.f32 %v6116, %v6417
      %v6468 = vadd.f32 %v6121, %v6422
      %v6469 = vadd.f32 %v6124, %v6425
      %v6470 = vadd.f32 %v6129, %v6430
      %v6471 = vadd.f32 %v6132, %v6433
      %v6472 = vld [vmem:[#allocation2 + $0x8] sm:$0xe]
      %v6473 = vld [vmem:[#allocation2 + $0xc] sm:$0xf]
      %v6474 = vld [vmem:[#allocation2 + $0x10] sm:$0xf]
      %v6475 = vld [vmem:[#allocation2 + $0x14] sm:$0xf]
      %v6476 = vld [vmem:[#allocation2 + $0x18] sm:$0xf]
      %v6477 = vld [vmem:[#allocation2 + $0x1c] sm:$0xf]
      %v6478 = vld [vmem:[#allocation2 + $0x20] sm:$0xf]
      %v6479 = vld [vmem:[#allocation2 + $0x24] sm:$0xf]
      %v6480 = vld [vmem:[#allocation2 + $0x28] sm:$0xf]
      %v6481 = vld [vmem:[#allocation2 + $0x2c] sm:$0xf]
      %v6482 = vld [vmem:[#allocation2 + $0x30] sm:$0xf]
      %v6483 = vld [vmem:[#allocation2 + $0x34] sm:$0xf]
      %v6484 = vld [vmem:[#allocation2 + $0x38] sm:$0xf]
      %v6485 = vld [vmem:[#allocation2 + $0x3c] sm:$0xf]
      %v6486 = vld [vmem:[#allocation2 + $0x40] sm:$0xf]
      %v6487 = vld [vmem:[#allocation2 + $0x44] sm:$0xf]
      %v6488 = vld [vmem:[#allocation2 + $0x48] sm:$0xf]
      %v6489 = vld [vmem:[#allocation2 + $0x4c] sm:$0xf]
      %v6490 = vld [vmem:[#allocation2 + $0x50] sm:$0xf]
      %v6491 = vld [vmem:[#allocation2 + $0x54] sm:$0xf]
      %v6492 = vld [vmem:[#allocation2 + $0x58] sm:$0xf]
      %v6493 = vld [vmem:[#allocation2 + $0x5c] sm:$0xf]
      %v6494 = vld [vmem:[#allocation2 + $0x60] sm:$0xf]
      %v6495 = vld [vmem:[#allocation2 + $0x64] sm:$0xf]
      %v6496 = vld [vmem:[#allocation2 + $0x68] sm:$0xf]
      %v6497 = vld [vmem:[#allocation2 + $0x6c] sm:$0xf]
      %v6498 = vld [vmem:[#allocation2 + $0x70] sm:$0xf]
      %v6499 = vld [vmem:[#allocation2 + $0x74] sm:$0xf]
      %v6500 = vld [vmem:[#allocation2 + $0x78] sm:$0xf]
      %v6501 = vld [vmem:[#allocation2 + $0x7c] sm:$0xf]
      %v6502 = vld [vmem:[#allocation2 + $0x80] sm:$0xf]
      %v6503 = vld [vmem:[#allocation2 + $0x84] sm:$0xf]
      %v6504 = vld [vmem:[#allocation2 + $0x88] sm:$0xf]
      %v6505 = vld [vmem:[#allocation2 + $0x8c] sm:$0xf]
      %v6506 = vld [vmem:[#allocation2 + $0x90] sm:$0xf]
      %v6507 = vld [vmem:[#allocation2 + $0x94] sm:$0xf]
      %v6508 = vld [vmem:[#allocation2 + $0x98] sm:$0x1]
      %s6509 = scalar_lea.vmem %s3, 192
      %v6510 = vld [vmem:[%s6509] sm:$0xf]
      %v6511 = vld [vmem:[%s6509 + $0x4] sm:$0xf]
      %v6512 = vld [vmem:[%s6509 + $0x8] sm:$0xf]
      %v6513 = vld [vmem:[%s6509 + $0xc] sm:$0xf]
      %v6514 = vld [vmem:[%s6509 + $0x10] sm:$0xf]
      %v6515 = vld [vmem:[%s6509 + $0x14] sm:$0xf]
      %v6516 = vld [vmem:[%s6509 + $0x18] sm:$0xf]
      %v6517 = vld [vmem:[%s6509 + $0x1c] sm:$0xf]
      %v6518 = vld [vmem:[%s6509 + $0x20] sm:$0xf]
      %v6519 = vld [vmem:[%s6509 + $0x24] sm:$0xf]
      %v6520 = vld [vmem:[%s6509 + $0x28] sm:$0xf]
      %v6521 = vld [vmem:[%s6509 + $0x2c] sm:$0xf]
      %v6522 = vld [vmem:[%s6509 + $0x30] sm:$0xf]
      %v6523 = vld [vmem:[%s6509 + $0x34] sm:$0xf]
      %v6524 = vld [vmem:[%s6509 + $0x38] sm:$0xf]
      %v6525 = vld [vmem:[%s6509 + $0x3c] sm:$0xf]
      %v6563 = vunpack.c.l.b16 %v6472
      %v6564 = vunpack.c.l.b16 %v6473
      %v6565 = vunpack.c.l.b16 %v6474
      %v6566 = vunpack.c.l.b16 %v6475
      %v6567 = vunpack.c.l.b16 %v6476
      %v6568 = vunpack.c.l.b16 %v6477
      %v6569 = vunpack.c.l.b16 %v6478
      %v6570 = vunpack.c.l.b16 %v6479
      %v6571 = vunpack.c.l.b16 %v6480
      %v6572 = vunpack.c.l.b16 %v6481
      %v6573 = vunpack.c.l.b16 %v6482
      %v6574 = vunpack.c.l.b16 %v6483
      %v6575 = vunpack.c.l.b16 %v6484
      %v6576 = vunpack.c.l.b16 %v6485
      %v6577 = vunpack.c.l.b16 %v6486
      %v6578 = vunpack.c.l.b16 %v6487
      %v6579 = vunpack.c.l.b16 %v6488
      %v6580 = vunpack.c.l.b16 %v6489
      %v6581 = vunpack.c.l.b16 %v6490
      %v6582 = vunpack.c.l.b16 %v6491
      %v6583 = vunpack.c.l.b16 %v6492
      %v6584 = vunpack.c.l.b16 %v6493
      %v6585 = vunpack.c.l.b16 %v6494
      %v6586 = vunpack.c.l.b16 %v6495
      %v6587 = vunpack.c.l.b16 %v6496
      %v6588 = vunpack.c.l.b16 %v6497
      %v6589 = vunpack.c.l.b16 %v6498
      %v6590 = vunpack.c.l.b16 %v6499
      %v6591 = vunpack.c.l.b16 %v6500
      %v6592 = vunpack.c.l.b16 %v6501
      %v6593 = vunpack.c.l.b16 %v6502
      %v6594 = vunpack.c.l.b16 %v6503
      %v6595 = vunpack.c.l.b16 %v6504
      %v6596 = vunpack.c.l.b16 %v6505
      %v6597 = vunpack.c.l.b16 %v6506
      %v6598 = vunpack.c.l.b16 %v6507
      %v6599 = vunpack.c.l.b16 %v6508
      %v6600 = vpack.c.b16 %v6564, %v6563
      %v6601 = vpack.c.b16 %v6566, %v6565
      %v6602 = vpack.c.b16 %v6568, %v6567
      %v6603 = vpack.c.b16 %v6570, %v6569
      %v6604 = vpack.c.b16 %v6572, %v6571
      %v6605 = vpack.c.b16 %v6574, %v6573
      %v6606 = vpack.c.b16 %v6576, %v6575
      %v6607 = vpack.c.b16 %v6578, %v6577
      %v6608 = vpack.c.b16 %v6580, %v6579
      %v6609 = vpack.c.b16 %v6582, %v6581
      %v6610 = vpack.c.b16 %v6584, %v6583
      %v6611 = vpack.c.b16 %v6586, %v6585
      %v6612 = vpack.c.b16 %v6588, %v6587
      %v6613 = vpack.c.b16 %v6590, %v6589
      %v6614 = vpack.c.b16 %v6592, %v6591
      %v6615 = vpack.c.b16 %v6594, %v6593
      %v6616 = vpack.c.b16 %v6596, %v6595
      %v6617 = vpack.c.b16 %v6598, %v6597
      %v6618 = vpack.c.b16 %v6599, %v6599
      %v6619 = vrot.slane %v6600, 1
      %v6620 = vrot.slane %v6601, 1
      %v6621 = vsel %vm1694, %v6619, %v6620
      %v6622 = vrot.slane %v6602, 1
      %v6623 = vsel %vm1694, %v6620, %v6622
      %v6624 = vrot.slane %v6603, 1
      %v6625 = vsel %vm1694, %v6622, %v6624
      %v6626 = vrot.slane %v6604, 1
      %v6627 = vsel %vm1694, %v6624, %v6626
      %v6628 = vrot.slane %v6605, 1
      %v6629 = vsel %vm1694, %v6626, %v6628
      %v6630 = vrot.slane %v6606, 1
      %v6631 = vsel %vm1694, %v6628, %v6630
      %v6632 = vrot.slane %v6607, 1
      %v6633 = vsel %vm1694, %v6630, %v6632
      %v6634 = vrot.slane %v6608, 1
      %v6635 = vsel %vm1694, %v6632, %v6634
      %v6636 = vrot.slane %v6609, 1
      %v6637 = vsel %vm1694, %v6634, %v6636
      %v6638 = vrot.slane %v6610, 1
      %v6639 = vsel %vm1694, %v6636, %v6638
      %v6640 = vrot.slane %v6611, 1
      %v6641 = vsel %vm1694, %v6638, %v6640
      %v6642 = vrot.slane %v6612, 1
      %v6643 = vsel %vm1694, %v6640, %v6642
      %v6644 = vrot.slane %v6613, 1
      %v6645 = vsel %vm1694, %v6642, %v6644
      %v6646 = vrot.slane %v6614, 1
      %v6647 = vsel %vm1694, %v6644, %v6646
      %v6648 = vrot.slane %v6615, 1
      %v6649 = vsel %vm1694, %v6646, %v6648
      %v6650 = vrot.slane %v6616, 1
      %v6651 = vsel %vm1694, %v6648, %v6650
      %v6652 = vrot.slane %v6617, 1
      %v6653 = vsel %vm1694, %v6650, %v6652
      %v6654 = vrot.slane %v6618, 1
      %v6655 = vsel %vm1694, %v6652, %v6654
      %v6690 = vunpack.c.l.b16 %v6510
      %v6691 = vunpack.c.l.b16 %v6511
      %v6692 = vunpack.c.l.b16 %v6512
      %v6693 = vunpack.c.l.b16 %v6513
      %v6694 = vunpack.c.l.b16 %v6514
      %v6695 = vunpack.c.l.b16 %v6515
      %v6696 = vunpack.c.l.b16 %v6516
      %v6697 = vunpack.c.l.b16 %v6517
      %v6698 = vunpack.c.l.b16 %v6518
      %v6699 = vunpack.c.l.b16 %v6519
      %v6700 = vunpack.c.l.b16 %v6520
      %v6701 = vunpack.c.l.b16 %v6521
      %v6702 = vunpack.c.l.b16 %v6522
      %v6703 = vunpack.c.l.b16 %v6523
      %v6704 = vunpack.c.l.b16 %v6524
      %v6705 = vunpack.c.l.b16 %v6525
      %v6706 = vpack.c.b16 %v6691, %v6690
      %v6707 = vpack.c.b16 %v6693, %v6692
      %v6708 = vpack.c.b16 %v6695, %v6694
      %v6709 = vpack.c.b16 %v6697, %v6696
      %v6710 = vpack.c.b16 %v6699, %v6698
      %v6711 = vpack.c.b16 %v6701, %v6700
      %v6712 = vpack.c.b16 %v6703, %v6702
      %v6713 = vpack.c.b16 %v6705, %v6704
      %6722 = vmatprep.subr.bf16.mxu0 0
      %6723 = vmatpush1.bf16.msra.mxu0 %v6706
      %6724 = vmatprep.subr.bf16.mxu0 0
      %6725 = vmatpush1.bf16.msra.mxu0 %v6707
      %6726 = vmatprep.subr.bf16.mxu0 0
      %6727 = vmatpush1.bf16.msra.mxu0 %v6708
      %6728 = vmatprep.subr.bf16.mxu0 0
      %6729 = vmatpush1.bf16.msra.mxu0 %v6709
      %6730 = vmatprep.subr.bf16.mxu0 0
      %6731 = vmatpush1.bf16.msra.mxu0 %v6710
      %6732 = vmatprep.subr.bf16.mxu0 0
      %6733 = vmatpush1.bf16.msra.mxu0 %v6711
      %6734 = vmatprep.subr.bf16.mxu0 0
      %6735 = vmatpush1.bf16.msra.mxu0 %v6712
      %6736 = vmatprep.subr.bf16.mxu0 0
      %6737 = vmatpush1.bf16.msra.mxu0 %v6713
      %6738 = vmatprep.subr.bf16.mxu0 0
      %6739 = vmatpush1.bf16.msra.mxu0 0
      %6740 = vmatprep.subr.bf16.mxu0 0
      %6741 = vmatpush1.bf16.msra.mxu0 0
      %6742 = vmatprep.subr.bf16.mxu0 0
      %6743 = vmatpush1.bf16.msra.mxu0 0
      %6744 = vmatprep.subr.bf16.mxu0 0
      %6745 = vmatpush1.bf16.msra.mxu0 0
      %6746 = vmatprep.subr.bf16.mxu0 0
      %6747 = vmatpush1.bf16.msra.mxu0 0
      %6748 = vmatprep.subr.bf16.mxu0 0
      %6749 = vmatpush1.bf16.msra.mxu0 0
      %6750 = vmatprep.subr.bf16.mxu0 0
      %6751 = vmatpush1.bf16.msra.mxu0 0
      %6752 = vmatprep.subr.bf16.mxu0 0
      %6753 = vmatpush1.bf16.msra.mxu0 0
      %6754 = vmatprep.mubr.bf16.mxu0 0
      %6755 = vmatmul.mubr.bf16.gmra.mrb[0].mxu0 %v6621
      %v6756 = vpop.f32.mrb[0].mxu0
      %v6757 = vadd.f32 0.0, %v6756
      %v6758 = vpop.f32.mrb[0].mxu0
      %v6759 = vpop.f32.mrb[0].mxu0
      %v6760 = vadd.f32 0.0, %v6759
      %v6761 = vpop.f32.mrb[0].mxu0
      %6762 = vmatprep.mubr.bf16.mxu0 0
      %6763 = vmatmul.mubr.bf16.gmra.mrb[0].mxu0 %v6623
      %v6764 = vpop.f32.mrb[0].mxu0
      %v6765 = vadd.f32 0.0, %v6764
      %v6766 = vpop.f32.mrb[0].mxu0
      %v6767 = vpop.f32.mrb[0].mxu0
      %v6768 = vadd.f32 0.0, %v6767
      %v6769 = vpop.f32.mrb[0].mxu0
      %6770 = vmatprep.mubr.bf16.mxu0 0
      %6771 = vmatmul.mubr.bf16.gmra.mrb[0].mxu0 %v6625
      %v6772 = vpop.f32.mrb[0].mxu0
      %v6773 = vadd.f32 0.0, %v6772
      %v6774 = vpop.f32.mrb[0].mxu0
      %v6775 = vpop.f32.mrb[0].mxu0
      %v6776 = vadd.f32 0.0, %v6775
      %v6777 = vpop.f32.mrb[0].mxu0
      %6778 = vmatprep.mubr.bf16.mxu0 0
      %6779 = vmatmul.mubr.bf16.gmra.mrb[0].mxu0 %v6627
      %v6780 = vpop.f32.mrb[0].mxu0
      %v6781 = vadd.f32 0.0, %v6780
      %v6782 = vpop.f32.mrb[0].mxu0
      %v6783 = vpop.f32.mrb[0].mxu0
      %v6784 = vadd.f32 0.0, %v6783
      %v6785 = vpop.f32.mrb[0].mxu0
      %6786 = vmatprep.mubr.bf16.mxu0 0
      %6787 = vmatmul.mubr.bf16.gmra.mrb[0].mxu0 %v6629
      %v6788 = vpop.f32.mrb[0].mxu0
      %v6789 = vadd.f32 0.0, %v6788
      %v6790 = vpop.f32.mrb[0].mxu0
      %v6791 = vpop.f32.mrb[0].mxu0
      %v6792 = vadd.f32 0.0, %v6791
      %v6793 = vpop.f32.mrb[0].mxu0
      %6794 = vmatprep.mubr.bf16.mxu0 0
      %6795 = vmatmul.mubr.bf16.gmra.mrb[0].mxu0 %v6631
      %v6796 = vpop.f32.mrb[0].mxu0
      %v6797 = vadd.f32 0.0, %v6796
      %v6798 = vpop.f32.mrb[0].mxu0
      %v6799 = vpop.f32.mrb[0].mxu0
      %v6800 = vadd.f32 0.0, %v6799
      %v6801 = vpop.f32.mrb[0].mxu0
      %6802 = vmatprep.mubr.bf16.mxu0 0
      %6803 = vmatmul.mubr.bf16.gmra.mrb[0].mxu0 %v6633
      %v6804 = vpop.f32.mrb[0].mxu0
      %v6805 = vadd.f32 0.0, %v6804
      %v6806 = vpop.f32.mrb[0].mxu0
      %v6807 = vpop.f32.mrb[0].mxu0
      %v6808 = vadd.f32 0.0, %v6807
      %v6809 = vpop.f32.mrb[0].mxu0
      %6810 = vmatprep.mubr.bf16.mxu0 0
      %6811 = vmatmul.mubr.bf16.gmra.mrb[0].mxu0 %v6635
      %v6812 = vpop.f32.mrb[0].mxu0
      %v6813 = vadd.f32 0.0, %v6812
      %v6814 = vpop.f32.mrb[0].mxu0
      %v6815 = vpop.f32.mrb[0].mxu0
      %v6816 = vadd.f32 0.0, %v6815
      %v6817 = vpop.f32.mrb[0].mxu0
      %6818 = vmatprep.mubr.bf16.mxu0 0
      %6819 = vmatmul.mubr.bf16.gmra.mrb[0].mxu0 %v6637
      %v6820 = vpop.f32.mrb[0].mxu0
      %v6821 = vadd.f32 0.0, %v6820
      %v6822 = vpop.f32.mrb[0].mxu0
      %v6823 = vpop.f32.mrb[0].mxu0
      %v6824 = vadd.f32 0.0, %v6823
      %v6825 = vpop.f32.mrb[0].mxu0
      %6826 = vmatprep.mubr.bf16.mxu0 0
      %6827 = vmatmul.mubr.bf16.gmra.mrb[0].mxu0 %v6639
      %v6828 = vpop.f32.mrb[0].mxu0
      %v6829 = vadd.f32 0.0, %v6828
      %v6830 = vpop.f32.mrb[0].mxu0
      %v6831 = vpop.f32.mrb[0].mxu0
      %v6832 = vadd.f32 0.0, %v6831
      %v6833 = vpop.f32.mrb[0].mxu0
      %6834 = vmatprep.mubr.bf16.mxu0 0
      %6835 = vmatmul.mubr.bf16.gmra.mrb[0].mxu0 %v6641
      %v6836 = vpop.f32.mrb[0].mxu0
      %v6837 = vadd.f32 0.0, %v6836
      %v6838 = vpop.f32.mrb[0].mxu0
      %v6839 = vpop.f32.mrb[0].mxu0
      %v6840 = vadd.f32 0.0, %v6839
      %v6841 = vpop.f32.mrb[0].mxu0
      %6842 = vmatprep.mubr.bf16.mxu0 0
      %6843 = vmatmul.mubr.bf16.gmra.mrb[0].mxu0 %v6643
      %v6844 = vpop.f32.mrb[0].mxu0
      %v6845 = vadd.f32 0.0, %v6844
      %v6846 = vpop.f32.mrb[0].mxu0
      %v6847 = vpop.f32.mrb[0].mxu0
      %v6848 = vadd.f32 0.0, %v6847
      %v6849 = vpop.f32.mrb[0].mxu0
      %6850 = vmatprep.mubr.bf16.mxu0 0
      %6851 = vmatmul.mubr.bf16.gmra.mrb[0].mxu0 %v6645
      %v6852 = vpop.f32.mrb[0].mxu0
      %v6853 = vadd.f32 0.0, %v6852
      %v6854 = vpop.f32.mrb[0].mxu0
      %v6855 = vpop.f32.mrb[0].mxu0
      %v6856 = vadd.f32 0.0, %v6855
      %v6857 = vpop.f32.mrb[0].mxu0
      %6858 = vmatprep.mubr.bf16.mxu0 0
      %6859 = vmatmul.mubr.bf16.gmra.mrb[0].mxu0 %v6647
      %v6860 = vpop.f32.mrb[0].mxu0
      %v6861 = vadd.f32 0.0, %v6860
      %v6862 = vpop.f32.mrb[0].mxu0
      %v6863 = vpop.f32.mrb[0].mxu0
      %v6864 = vadd.f32 0.0, %v6863
      %v6865 = vpop.f32.mrb[0].mxu0
      %6866 = vmatprep.mubr.bf16.mxu0 0
      %6867 = vmatmul.mubr.bf16.gmra.mrb[0].mxu0 %v6649
      %v6868 = vpop.f32.mrb[0].mxu0
      %v6869 = vadd.f32 0.0, %v6868
      %v6870 = vpop.f32.mrb[0].mxu0
      %v6871 = vpop.f32.mrb[0].mxu0
      %v6872 = vadd.f32 0.0, %v6871
      %v6873 = vpop.f32.mrb[0].mxu0
      %6874 = vmatprep.mubr.bf16.mxu0 0
      %6875 = vmatmul.mubr.bf16.gmra.mrb[0].mxu0 %v6651
      %v6876 = vpop.f32.mrb[0].mxu0
      %v6877 = vadd.f32 0.0, %v6876
      %v6878 = vpop.f32.mrb[0].mxu0
      %v6879 = vpop.f32.mrb[0].mxu0
      %v6880 = vadd.f32 0.0, %v6879
      %v6881 = vpop.f32.mrb[0].mxu0
      %6882 = vmatprep.mubr.bf16.mxu0 0
      %6883 = vmatmul.mubr.bf16.gmra.mrb[0].mxu0 %v6653
      %v6884 = vpop.f32.mrb[0].mxu0
      %v6885 = vadd.f32 0.0, %v6884
      %v6886 = vpop.f32.mrb[0].mxu0
      %v6887 = vpop.f32.mrb[0].mxu0
      %v6888 = vadd.f32 0.0, %v6887
      %v6889 = vpop.f32.mrb[0].mxu0
      %6890 = vmatprep.mubr.bf16.mxu0 0
      %6891 = vmatmul.mubr.bf16.gmra.mrb[0].mxu0 %v6655
      %v6892 = vpop.f32.mrb[0].mxu0
      %v6893 = vadd.f32 0.0, %v6892
      %v6894 = vpop.f32.mrb[0].mxu0
      %v6895 = vpop.f32.mrb[0].mxu0
      %v6896 = vadd.f32 0.0, %v6895
      %v6897 = vpop.f32.mrb[0].mxu0
      %6898 = vdwg.mxu0
      %v6899 = vadd.f32 %v6436, %v6757
      %v6900 = vadd.f32 %v6437, %v6760
      %v6901 = vadd.f32 %v6438, %v6765
      %v6902 = vadd.f32 %v6439, %v6768
      %v6903 = vadd.f32 %v6440, %v6773
      %v6904 = vadd.f32 %v6441, %v6776
      %v6905 = vadd.f32 %v6442, %v6781
      %v6906 = vadd.f32 %v6443, %v6784
      %v6907 = vadd.f32 %v6444, %v6789
      %v6908 = vadd.f32 %v6445, %v6792
      %v6909 = vadd.f32 %v6446, %v6797
      %v6910 = vadd.f32 %v6447, %v6800
      %v6911 = vadd.f32 %v6448, %v6805
      %v6912 = vadd.f32 %v6449, %v6808
      %v6913 = vadd.f32 %v6450, %v6813
      %v6914 = vadd.f32 %v6451, %v6816
      %v6915 = vadd.f32 %v6452, %v6821
      %v6916 = vadd.f32 %v6453, %v6824
      %v6917 = vadd.f32 %v6454, %v6829
      %v6918 = vadd.f32 %v6455, %v6832
      %v6919 = vadd.f32 %v6456, %v6837
      %v6920 = vadd.f32 %v6457, %v6840
      %v6921 = vadd.f32 %v6458, %v6845
      %v6922 = vadd.f32 %v6459, %v6848
      %v6923 = vadd.f32 %v6460, %v6853
      %v6924 = vadd.f32 %v6461, %v6856
      %v6925 = vadd.f32 %v6462, %v6861
      %v6926 = vadd.f32 %v6463, %v6864
      %v6927 = vadd.f32 %v6464, %v6869
      %v6928 = vadd.f32 %v6465, %v6872
      %v6929 = vadd.f32 %v6466, %v6877
      %v6930 = vadd.f32 %v6467, %v6880
      %v6931 = vadd.f32 %v6468, %v6885
      %v6932 = vadd.f32 %v6469, %v6888
      %v6933 = vadd.f32 %v6470, %v6893
      %v6934 = vadd.f32 %v6471, %v6896
      %v6935 = vld [vmem:[#allocation2 + $0x98] sm:$0x3]
      %s6936 = scalar_lea.vmem %s3, 256
      %v6937 = vld [vmem:[%s6936] sm:$0xf]
      %v6938 = vld [vmem:[%s6936 + $0x4] sm:$0xf]
      %v6939 = vld [vmem:[%s6936 + $0x8] sm:$0xf]
      %v6940 = vld [vmem:[%s6936 + $0xc] sm:$0xf]
      %v6941 = vld [vmem:[%s6936 + $0x10] sm:$0xf]
      %v6942 = vld [vmem:[%s6936 + $0x14] sm:$0xf]
      %v6943 = vld [vmem:[%s6936 + $0x18] sm:$0xf]
      %v6944 = vld [vmem:[%s6936 + $0x1c] sm:$0xf]
      %v6945 = vld [vmem:[%s6936 + $0x20] sm:$0xf]
      %v6946 = vld [vmem:[%s6936 + $0x24] sm:$0xf]
      %v6947 = vld [vmem:[%s6936 + $0x28] sm:$0xf]
      %v6948 = vld [vmem:[%s6936 + $0x2c] sm:$0xf]
      %v6949 = vld [vmem:[%s6936 + $0x30] sm:$0xf]
      %v6950 = vld [vmem:[%s6936 + $0x34] sm:$0xf]
      %v6951 = vld [vmem:[%s6936 + $0x38] sm:$0xf]
      %v6952 = vld [vmem:[%s6936 + $0x3c] sm:$0xf]
      %v6954 = vunpack.c.l.b16 %v6935
      %v6955 = vpack.c.b16 %v6954, %v6954
      %v6957 = vshrl.u32 %v6600, 16
      %v6959 = vrot.slane %v6957, 1
      %v6960 = vshll.u32 %v6600, 16
      %v6962 = vrot.slane %v6960, 2
      %v6963 = vor.u32 %v6959, %v6962
      %v6965 = vshrl.u32 %v6601, 16
      %v6967 = vrot.slane %v6965, 1
      %v6968 = vshll.u32 %v6601, 16
      %v6970 = vrot.slane %v6968, 2
      %v6971 = vor.u32 %v6967, %v6970
      %v6972 = vsel %vm2495, %v6963, %v6971
      %v6974 = vshrl.u32 %v6602, 16
      %v6976 = vrot.slane %v6974, 1
      %v6977 = vshll.u32 %v6602, 16
      %v6979 = vrot.slane %v6977, 2
      %v6980 = vor.u32 %v6976, %v6979
      %v6981 = vsel %vm2495, %v6971, %v6980
      %v6983 = vshrl.u32 %v6603, 16
      %v6985 = vrot.slane %v6983, 1
      %v6986 = vshll.u32 %v6603, 16
      %v6988 = vrot.slane %v6986, 2
      %v6989 = vor.u32 %v6985, %v6988
      %v6990 = vsel %vm2495, %v6980, %v6989
      %v6992 = vshrl.u32 %v6604, 16
      %v6994 = vrot.slane %v6992, 1
      %v6995 = vshll.u32 %v6604, 16
      %v6997 = vrot.slane %v6995, 2
      %v6998 = vor.u32 %v6994, %v6997
      %v6999 = vsel %vm2495, %v6989, %v6998
      %v7001 = vshrl.u32 %v6605, 16
      %v7003 = vrot.slane %v7001, 1
      %v7004 = vshll.u32 %v6605, 16
      %v7006 = vrot.slane %v7004, 2
      %v7007 = vor.u32 %v7003, %v7006
      %v7008 = vsel %vm2495, %v6998, %v7007
      %v7010 = vshrl.u32 %v6606, 16
      %v7012 = vrot.slane %v7010, 1
      %v7013 = vshll.u32 %v6606, 16
      %v7015 = vrot.slane %v7013, 2
      %v7016 = vor.u32 %v7012, %v7015
      %v7017 = vsel %vm2495, %v7007, %v7016
      %v7019 = vshrl.u32 %v6607, 16
      %v7021 = vrot.slane %v7019, 1
      %v7022 = vshll.u32 %v6607, 16
      %v7024 = vrot.slane %v7022, 2
      %v7025 = vor.u32 %v7021, %v7024
      %v7026 = vsel %vm2495, %v7016, %v7025
      %v7028 = vshrl.u32 %v6608, 16
      %v7030 = vrot.slane %v7028, 1
      %v7031 = vshll.u32 %v6608, 16
      %v7033 = vrot.slane %v7031, 2
      %v7034 = vor.u32 %v7030, %v7033
      %v7035 = vsel %vm2495, %v7025, %v7034
      %v7037 = vshrl.u32 %v6609, 16
      %v7039 = vrot.slane %v7037, 1
      %v7040 = vshll.u32 %v6609, 16
      %v7042 = vrot.slane %v7040, 2
      %v7043 = vor.u32 %v7039, %v7042
      %v7044 = vsel %vm2495, %v7034, %v7043
      %v7046 = vshrl.u32 %v6610, 16
      %v7048 = vrot.slane %v7046, 1
      %v7049 = vshll.u32 %v6610, 16
      %v7051 = vrot.slane %v7049, 2
      %v7052 = vor.u32 %v7048, %v7051
      %v7053 = vsel %vm2495, %v7043, %v7052
      %v7055 = vshrl.u32 %v6611, 16
      %v7057 = vrot.slane %v7055, 1
      %v7058 = vshll.u32 %v6611, 16
      %v7060 = vrot.slane %v7058, 2
      %v7061 = vor.u32 %v7057, %v7060
      %v7062 = vsel %vm2495, %v7052, %v7061
      %v7064 = vshrl.u32 %v6612, 16
      %v7066 = vrot.slane %v7064, 1
      %v7067 = vshll.u32 %v6612, 16
      %v7069 = vrot.slane %v7067, 2
      %v7070 = vor.u32 %v7066, %v7069
      %v7071 = vsel %vm2495, %v7061, %v7070
      %v7073 = vshrl.u32 %v6613, 16
      %v7075 = vrot.slane %v7073, 1
      %v7076 = vshll.u32 %v6613, 16
      %v7078 = vrot.slane %v7076, 2
      %v7079 = vor.u32 %v7075, %v7078
      %v7080 = vsel %vm2495, %v7070, %v7079
      %v7082 = vshrl.u32 %v6614, 16
      %v7084 = vrot.slane %v7082, 1
      %v7085 = vshll.u32 %v6614, 16
      %v7087 = vrot.slane %v7085, 2
      %v7088 = vor.u32 %v7084, %v7087
      %v7089 = vsel %vm2495, %v7079, %v7088
      %v7091 = vshrl.u32 %v6615, 16
      %v7093 = vrot.slane %v7091, 1
      %v7094 = vshll.u32 %v6615, 16
      %v7096 = vrot.slane %v7094, 2
      %v7097 = vor.u32 %v7093, %v7096
      %v7098 = vsel %vm2495, %v7088, %v7097
      %v7100 = vshrl.u32 %v6616, 16
      %v7102 = vrot.slane %v7100, 1
      %v7103 = vshll.u32 %v6616, 16
      %v7105 = vrot.slane %v7103, 2
      %v7106 = vor.u32 %v7102, %v7105
      %v7107 = vsel %vm2495, %v7097, %v7106
      %v7109 = vshrl.u32 %v6617, 16
      %v7111 = vrot.slane %v7109, 1
      %v7112 = vshll.u32 %v6617, 16
      %v7114 = vrot.slane %v7112, 2
      %v7115 = vor.u32 %v7111, %v7114
      %v7116 = vsel %vm2495, %v7106, %v7115
      %v7118 = vshrl.u32 %v6955, 16
      %v7120 = vrot.slane %v7118, 1
      %v7121 = vshll.u32 %v6955, 16
      %v7123 = vrot.slane %v7121, 2
      %v7124 = vor.u32 %v7120, %v7123
      %v7125 = vsel %vm2495, %v7115, %v7124
      %v7160 = vunpack.c.l.b16 %v6937
      %v7161 = vunpack.c.l.b16 %v6938
      %v7162 = vunpack.c.l.b16 %v6939
      %v7163 = vunpack.c.l.b16 %v6940
      %v7164 = vunpack.c.l.b16 %v6941
      %v7165 = vunpack.c.l.b16 %v6942
      %v7166 = vunpack.c.l.b16 %v6943
      %v7167 = vunpack.c.l.b16 %v6944
      %v7168 = vunpack.c.l.b16 %v6945
      %v7169 = vunpack.c.l.b16 %v6946
      %v7170 = vunpack.c.l.b16 %v6947
      %v7171 = vunpack.c.l.b16 %v6948
      %v7172 = vunpack.c.l.b16 %v6949
      %v7173 = vunpack.c.l.b16 %v6950
      %v7174 = vunpack.c.l.b16 %v6951
      %v7175 = vunpack.c.l.b16 %v6952
      %v7176 = vpack.c.b16 %v7161, %v7160
      %v7177 = vpack.c.b16 %v7163, %v7162
      %v7178 = vpack.c.b16 %v7165, %v7164
      %v7179 = vpack.c.b16 %v7167, %v7166
      %v7180 = vpack.c.b16 %v7169, %v7168
      %v7181 = vpack.c.b16 %v7171, %v7170
      %v7182 = vpack.c.b16 %v7173, %v7172
      %v7183 = vpack.c.b16 %v7175, %v7174
      %7192 = vmatprep.subr.bf16.mxu0 0
      %7193 = vmatpush1.bf16.msra.mxu0 %v7176
      %7194 = vmatprep.subr.bf16.mxu0 0
      %7195 = vmatpush1.bf16.msra.mxu0 %v7177
      %7196 = vmatprep.subr.bf16.mxu0 0
      %7197 = vmatpush1.bf16.msra.mxu0 %v7178
      %7198 = vmatprep.subr.bf16.mxu0 0
      %7199 = vmatpush1.bf16.msra.mxu0 %v7179
      %7200 = vmatprep.subr.bf16.mxu0 0
      %7201 = vmatpush1.bf16.msra.mxu0 %v7180
      %7202 = vmatprep.subr.bf16.mxu0 0
      %7203 = vmatpush1.bf16.msra.mxu0 %v7181
      %7204 = vmatprep.subr.bf16.mxu0 0
      %7205 = vmatpush1.bf16.msra.mxu0 %v7182
      %7206 = vmatprep.subr.bf16.mxu0 0
      %7207 = vmatpush1.bf16.msra.mxu0 %v7183
      %7208 = vmatprep.subr.bf16.mxu0 0
      %7209 = vmatpush1.bf16.msra.mxu0 0
      %7210 = vmatprep.subr.bf16.mxu0 0
      %7211 = vmatpush1.bf16.msra.mxu0 0
      %7212 = vmatprep.subr.bf16.mxu0 0
      %7213 = vmatpush1.bf16.msra.mxu0 0
      %7214 = vmatprep.subr.bf16.mxu0 0
      %7215 = vmatpush1.bf16.msra.mxu0 0
      %7216 = vmatprep.subr.bf16.mxu0 0
      %7217 = vmatpush1.bf16.msra.mxu0 0
      %7218 = vmatprep.subr.bf16.mxu0 0
      %7219 = vmatpush1.bf16.msra.mxu0 0
      %7220 = vmatprep.subr.bf16.mxu0 0
      %7221 = vmatpush1.bf16.msra.mxu0 0
      %7222 = vmatprep.subr.bf16.mxu0 0
      %7223 = vmatpush1.bf16.msra.mxu0 0
      %7224 = vmatprep.mubr.bf16.mxu0 0
      %7225 = vmatmul.mubr.bf16.gmra.mrb[0].mxu0 %v6972
      %v7226 = vpop.f32.mrb[0].mxu0
      %v7227 = vadd.f32 0.0, %v7226
      %v7228 = vpop.f32.mrb[0].mxu0
      %v7229 = vpop.f32.mrb[0].mxu0
      %v7230 = vadd.f32 0.0, %v7229
      %v7231 = vpop.f32.mrb[0].mxu0
      %7232 = vmatprep.mubr.bf16.mxu0 0
      %7233 = vmatmul.mubr.bf16.gmra.mrb[0].mxu0 %v6981
      %v7234 = vpop.f32.mrb[0].mxu0
      %v7235 = vadd.f32 0.0, %v7234
      %v7236 = vpop.f32.mrb[0].mxu0
      %v7237 = vpop.f32.mrb[0].mxu0
      %v7238 = vadd.f32 0.0, %v7237
      %v7239 = vpop.f32.mrb[0].mxu0
      %7240 = vmatprep.mubr.bf16.mxu0 0
      %7241 = vmatmul.mubr.bf16.gmra.mrb[0].mxu0 %v6990
      %v7242 = vpop.f32.mrb[0].mxu0
      %v7243 = vadd.f32 0.0, %v7242
      %v7244 = vpop.f32.mrb[0].mxu0
      %v7245 = vpop.f32.mrb[0].mxu0
      %v7246 = vadd.f32 0.0, %v7245
      %v7247 = vpop.f32.mrb[0].mxu0
      %7248 = vmatprep.mubr.bf16.mxu0 0
      %7249 = vmatmul.mubr.bf16.gmra.mrb[0].mxu0 %v6999
      %v7250 = vpop.f32.mrb[0].mxu0
      %v7251 = vadd.f32 0.0, %v7250
      %v7252 = vpop.f32.mrb[0].mxu0
      %v7253 = vpop.f32.mrb[0].mxu0
      %v7254 = vadd.f32 0.0, %v7253
      %v7255 = vpop.f32.mrb[0].mxu0
      %7256 = vmatprep.mubr.bf16.mxu0 0
      %7257 = vmatmul.mubr.bf16.gmra.mrb[0].mxu0 %v7008
      %v7258 = vpop.f32.mrb[0].mxu0
      %v7259 = vadd.f32 0.0, %v7258
      %v7260 = vpop.f32.mrb[0].mxu0
      %v7261 = vpop.f32.mrb[0].mxu0
      %v7262 = vadd.f32 0.0, %v7261
      %v7263 = vpop.f32.mrb[0].mxu0
      %7264 = vmatprep.mubr.bf16.mxu0 0
      %7265 = vmatmul.mubr.bf16.gmra.mrb[0].mxu0 %v7017
      %v7266 = vpop.f32.mrb[0].mxu0
      %v7267 = vadd.f32 0.0, %v7266
      %v7268 = vpop.f32.mrb[0].mxu0
      %v7269 = vpop.f32.mrb[0].mxu0
      %v7270 = vadd.f32 0.0, %v7269
      %v7271 = vpop.f32.mrb[0].mxu0
      %7272 = vmatprep.mubr.bf16.mxu0 0
      %7273 = vmatmul.mubr.bf16.gmra.mrb[0].mxu0 %v7026
      %v7274 = vpop.f32.mrb[0].mxu0
      %v7275 = vadd.f32 0.0, %v7274
      %v7276 = vpop.f32.mrb[0].mxu0
      %v7277 = vpop.f32.mrb[0].mxu0
      %v7278 = vadd.f32 0.0, %v7277
      %v7279 = vpop.f32.mrb[0].mxu0
      %7280 = vmatprep.mubr.bf16.mxu0 0
      %7281 = vmatmul.mubr.bf16.gmra.mrb[0].mxu0 %v7035
      %v7282 = vpop.f32.mrb[0].mxu0
      %v7283 = vadd.f32 0.0, %v7282
      %v7284 = vpop.f32.mrb[0].mxu0
      %v7285 = vpop.f32.mrb[0].mxu0
      %v7286 = vadd.f32 0.0, %v7285
      %v7287 = vpop.f32.mrb[0].mxu0
      %7288 = vmatprep.mubr.bf16.mxu0 0
      %7289 = vmatmul.mubr.bf16.gmra.mrb[0].mxu0 %v7044
      %v7290 = vpop.f32.mrb[0].mxu0
      %v7291 = vadd.f32 0.0, %v7290
      %v7292 = vpop.f32.mrb[0].mxu0
      %v7293 = vpop.f32.mrb[0].mxu0
      %v7294 = vadd.f32 0.0, %v7293
      %v7295 = vpop.f32.mrb[0].mxu0
      %7296 = vmatprep.mubr.bf16.mxu0 0
      %7297 = vmatmul.mubr.bf16.gmra.mrb[0].mxu0 %v7053
      %v7298 = vpop.f32.mrb[0].mxu0
      %v7299 = vadd.f32 0.0, %v7298
      %v7300 = vpop.f32.mrb[0].mxu0
      %v7301 = vpop.f32.mrb[0].mxu0
      %v7302 = vadd.f32 0.0, %v7301
      %v7303 = vpop.f32.mrb[0].mxu0
      %7304 = vmatprep.mubr.bf16.mxu0 0
      %7305 = vmatmul.mubr.bf16.gmra.mrb[0].mxu0 %v7062
      %v7306 = vpop.f32.mrb[0].mxu0
      %v7307 = vadd.f32 0.0, %v7306
      %v7308 = vpop.f32.mrb[0].mxu0
      %v7309 = vpop.f32.mrb[0].mxu0
      %v7310 = vadd.f32 0.0, %v7309
      %v7311 = vpop.f32.mrb[0].mxu0
      %7312 = vmatprep.mubr.bf16.mxu0 0
      %7313 = vmatmul.mubr.bf16.gmra.mrb[0].mxu0 %v7071
      %v7314 = vpop.f32.mrb[0].mxu0
      %v7315 = vadd.f32 0.0, %v7314
      %v7316 = vpop.f32.mrb[0].mxu0
      %v7317 = vpop.f32.mrb[0].mxu0
      %v7318 = vadd.f32 0.0, %v7317
      %v7319 = vpop.f32.mrb[0].mxu0
      %7320 = vmatprep.mubr.bf16.mxu0 0
      %7321 = vmatmul.mubr.bf16.gmra.mrb[0].mxu0 %v7080
      %v7322 = vpop.f32.mrb[0].mxu0
      %v7323 = vadd.f32 0.0, %v7322
      %v7324 = vpop.f32.mrb[0].mxu0
      %v7325 = vpop.f32.mrb[0].mxu0
      %v7326 = vadd.f32 0.0, %v7325
      %v7327 = vpop.f32.mrb[0].mxu0
      %7328 = vmatprep.mubr.bf16.mxu0 0
      %7329 = vmatmul.mubr.bf16.gmra.mrb[0].mxu0 %v7089
      %v7330 = vpop.f32.mrb[0].mxu0
      %v7331 = vadd.f32 0.0, %v7330
      %v7332 = vpop.f32.mrb[0].mxu0
      %v7333 = vpop.f32.mrb[0].mxu0
      %v7334 = vadd.f32 0.0, %v7333
      %v7335 = vpop.f32.mrb[0].mxu0
      %7336 = vmatprep.mubr.bf16.mxu0 0
      %7337 = vmatmul.mubr.bf16.gmra.mrb[0].mxu0 %v7098
      %v7338 = vpop.f32.mrb[0].mxu0
      %v7339 = vadd.f32 0.0, %v7338
      %v7340 = vpop.f32.mrb[0].mxu0
      %v7341 = vpop.f32.mrb[0].mxu0
      %v7342 = vadd.f32 0.0, %v7341
      %v7343 = vpop.f32.mrb[0].mxu0
      %7344 = vmatprep.mubr.bf16.mxu0 0
      %7345 = vmatmul.mubr.bf16.gmra.mrb[0].mxu0 %v7107
      %v7346 = vpop.f32.mrb[0].mxu0
      %v7347 = vadd.f32 0.0, %v7346
      %v7348 = vpop.f32.mrb[0].mxu0
      %v7349 = vpop.f32.mrb[0].mxu0
      %v7350 = vadd.f32 0.0, %v7349
      %v7351 = vpop.f32.mrb[0].mxu0
      %7352 = vmatprep.mubr.bf16.mxu0 0
      %7353 = vmatmul.mubr.bf16.gmra.mrb[0].mxu0 %v7116
      %v7354 = vpop.f32.mrb[0].mxu0
      %v7355 = vadd.f32 0.0, %v7354
      %v7356 = vpop.f32.mrb[0].mxu0
      %v7357 = vpop.f32.mrb[0].mxu0
      %v7358 = vadd.f32 0.0, %v7357
      %v7359 = vpop.f32.mrb[0].mxu0
      %7360 = vmatprep.mubr.bf16.mxu0 0
      %7361 = vmatmul.mubr.bf16.gmra.mrb[0].mxu0 %v7125
      %v7362 = vpop.f32.mrb[0].mxu0
      %v7363 = vadd.f32 0.0, %v7362
      %v7364 = vpop.f32.mrb[0].mxu0
      %v7365 = vpop.f32.mrb[0].mxu0
      %v7366 = vadd.f32 0.0, %v7365
      %v7367 = vpop.f32.mrb[0].mxu0
      %7368 = vdwg.mxu0
      %v7369 = vadd.f32 %v6899, %v7227
      %v7370 = vadd.f32 %v6900, %v7230
      %v7371 = vadd.f32 %v6901, %v7235
      %v7372 = vadd.f32 %v6902, %v7238
      %v7373 = vadd.f32 %v6903, %v7243
      %v7374 = vadd.f32 %v6904, %v7246
      %v7375 = vadd.f32 %v6905, %v7251
      %v7376 = vadd.f32 %v6906, %v7254
      %v7377 = vadd.f32 %v6907, %v7259
      %v7378 = vadd.f32 %v6908, %v7262
      %v7379 = vadd.f32 %v6909, %v7267
      %v7380 = vadd.f32 %v6910, %v7270
      %v7381 = vadd.f32 %v6911, %v7275
      %v7382 = vadd.f32 %v6912, %v7278
      %v7383 = vadd.f32 %v6913, %v7283
      %v7384 = vadd.f32 %v6914, %v7286
      %v7385 = vadd.f32 %v6915, %v7291
      %v7386 = vadd.f32 %v6916, %v7294
      %v7387 = vadd.f32 %v6917, %v7299
      %v7388 = vadd.f32 %v6918, %v7302
      %v7389 = vadd.f32 %v6919, %v7307
      %v7390 = vadd.f32 %v6920, %v7310
      %v7391 = vadd.f32 %v6921, %v7315
      %v7392 = vadd.f32 %v6922, %v7318
      %v7393 = vadd.f32 %v6923, %v7323
      %v7394 = vadd.f32 %v6924, %v7326
      %v7395 = vadd.f32 %v6925, %v7331
      %v7396 = vadd.f32 %v6926, %v7334
      %v7397 = vadd.f32 %v6927, %v7339
      %v7398 = vadd.f32 %v6928, %v7342
      %v7399 = vadd.f32 %v6929, %v7347
      %v7400 = vadd.f32 %v6930, %v7350
      %v7401 = vadd.f32 %v6931, %v7355
      %v7402 = vadd.f32 %v6932, %v7358
      %v7403 = vadd.f32 %v6933, %v7363
      %v7404 = vadd.f32 %v6934, %v7366
      %v7405 = vld [vmem:[#allocation2 + $0x8] sm:$0xc]
      %s7406 = scalar_lea.vmem %s3, 320
      %v7407 = vld [vmem:[%s7406] sm:$0xf]
      %v7408 = vld [vmem:[%s7406 + $0x4] sm:$0xf]
      %v7409 = vld [vmem:[%s7406 + $0x8] sm:$0xf]
      %v7410 = vld [vmem:[%s7406 + $0xc] sm:$0xf]
      %v7411 = vld [vmem:[%s7406 + $0x10] sm:$0xf]
      %v7412 = vld [vmem:[%s7406 + $0x14] sm:$0xf]
      %v7413 = vld [vmem:[%s7406 + $0x18] sm:$0xf]
      %v7414 = vld [vmem:[%s7406 + $0x1c] sm:$0xf]
      %v7415 = vld [vmem:[%s7406 + $0x20] sm:$0xf]
      %v7416 = vld [vmem:[%s7406 + $0x24] sm:$0xf]
      %v7417 = vld [vmem:[%s7406 + $0x28] sm:$0xf]
      %v7418 = vld [vmem:[%s7406 + $0x2c] sm:$0xf]
      %v7419 = vld [vmem:[%s7406 + $0x30] sm:$0xf]
      %v7420 = vld [vmem:[%s7406 + $0x34] sm:$0xf]
      %v7421 = vld [vmem:[%s7406 + $0x38] sm:$0xf]
      %v7422 = vld [vmem:[%s7406 + $0x3c] sm:$0xf]
      %v7424 = vunpack.c.l.b16 %v7405
      %v7425 = vpack.c.b16 %v6564, %v7424
      %v7426 = vrot.slane %v7425, 2
      %v7427 = vrot.slane %v6601, 2
      %v7428 = vsel %vm2966, %v7426, %v7427
      %v7429 = vrot.slane %v6602, 2
      %v7430 = vsel %vm2966, %v7427, %v7429
      %v7431 = vrot.slane %v6603, 2
      %v7432 = vsel %vm2966, %v7429, %v7431
      %v7433 = vrot.slane %v6604, 2
      %v7434 = vsel %vm2966, %v7431, %v7433
      %v7435 = vrot.slane %v6605, 2
      %v7436 = vsel %vm2966, %v7433, %v7435
      %v7437 = vrot.slane %v6606, 2
      %v7438 = vsel %vm2966, %v7435, %v7437
      %v7439 = vrot.slane %v6607, 2
      %v7440 = vsel %vm2966, %v7437, %v7439
      %v7441 = vrot.slane %v6608, 2
      %v7442 = vsel %vm2966, %v7439, %v7441
      %v7443 = vrot.slane %v6609, 2
      %v7444 = vsel %vm2966, %v7441, %v7443
      %v7445 = vrot.slane %v6610, 2
      %v7446 = vsel %vm2966, %v7443, %v7445
      %v7447 = vrot.slane %v6611, 2
      %v7448 = vsel %vm2966, %v7445, %v7447
      %v7449 = vrot.slane %v6612, 2
      %v7450 = vsel %vm2966, %v7447, %v7449
      %v7451 = vrot.slane %v6613, 2
      %v7452 = vsel %vm2966, %v7449, %v7451
      %v7453 = vrot.slane %v6614, 2
      %v7454 = vsel %vm2966, %v7451, %v7453
      %v7455 = vrot.slane %v6615, 2
      %v7456 = vsel %vm2966, %v7453, %v7455
      %v7457 = vrot.slane %v6616, 2
      %v7458 = vsel %vm2966, %v7455, %v7457
      %v7459 = vrot.slane %v6617, 2
      %v7460 = vsel %vm2966, %v7457, %v7459
      %v7461 = vrot.slane %v6955, 2
      %v7462 = vsel %vm2966, %v7459, %v7461
      %v7497 = vunpack.c.l.b16 %v7407
      %v7498 = vunpack.c.l.b16 %v7408
      %v7499 = vunpack.c.l.b16 %v7409
      %v7500 = vunpack.c.l.b16 %v7410
      %v7501 = vunpack.c.l.b16 %v7411
      %v7502 = vunpack.c.l.b16 %v7412
      %v7503 = vunpack.c.l.b16 %v7413
      %v7504 = vunpack.c.l.b16 %v7414
      %v7505 = vunpack.c.l.b16 %v7415
      %v7506 = vunpack.c.l.b16 %v7416
      %v7507 = vunpack.c.l.b16 %v7417
      %v7508 = vunpack.c.l.b16 %v7418
      %v7509 = vunpack.c.l.b16 %v7419
      %v7510 = vunpack.c.l.b16 %v7420
      %v7511 = vunpack.c.l.b16 %v7421
      %v7512 = vunpack.c.l.b16 %v7422
      %v7513 = vpack.c.b16 %v7498, %v7497
      %v7514 = vpack.c.b16 %v7500, %v7499
      %v7515 = vpack.c.b16 %v7502, %v7501
      %v7516 = vpack.c.b16 %v7504, %v7503
      %v7517 = vpack.c.b16 %v7506, %v7505
      %v7518 = vpack.c.b16 %v7508, %v7507
      %v7519 = vpack.c.b16 %v7510, %v7509
      %v7520 = vpack.c.b16 %v7512, %v7511
      %7529 = vmatprep.subr.bf16.mxu0 0
      %7530 = vmatpush1.bf16.msra.mxu0 %v7513
      %7531 = vmatprep.subr.bf16.mxu0 0
      %7532 = vmatpush1.bf16.msra.mxu0 %v7514
      %7533 = vmatprep.subr.bf16.mxu0 0
      %7534 = vmatpush1.bf16.msra.mxu0 %v7515
      %7535 = vmatprep.subr.bf16.mxu0 0
      %7536 = vmatpush1.bf16.msra.mxu0 %v7516
      %7537 = vmatprep.subr.bf16.mxu0 0
      %7538 = vmatpush1.bf16.msra.mxu0 %v7517
      %7539 = vmatprep.subr.bf16.mxu0 0
      %7540 = vmatpush1.bf16.msra.mxu0 %v7518
      %7541 = vmatprep.subr.bf16.mxu0 0
      %7542 = vmatpush1.bf16.msra.mxu0 %v7519
      %7543 = vmatprep.subr.bf16.mxu0 0
      %7544 = vmatpush1.bf16.msra.mxu0 %v7520
      %7545 = vmatprep.subr.bf16.mxu0 0
      %7546 = vmatpush1.bf16.msra.mxu0 0
      %7547 = vmatprep.subr.bf16.mxu0 0
      %7548 = vmatpush1.bf16.msra.mxu0 0
      %7549 = vmatprep.subr.bf16.mxu0 0
      %7550 = vmatpush1.bf16.msra.mxu0 0
      %7551 = vmatprep.subr.bf16.mxu0 0
      %7552 = vmatpush1.bf16.msra.mxu0 0
      %7553 = vmatprep.subr.bf16.mxu0 0
      %7554 = vmatpush1.bf16.msra.mxu0 0
      %7555 = vmatprep.subr.bf16.mxu0 0
      %7556 = vmatpush1.bf16.msra.mxu0 0
      %7557 = vmatprep.subr.bf16.mxu0 0
      %7558 = vmatpush1.bf16.msra.mxu0 0
      %7559 = vmatprep.subr.bf16.mxu0 0
      %7560 = vmatpush1.bf16.msra.mxu0 0
      %7561 = vmatprep.mubr.bf16.mxu0 0
      %7562 = vmatmul.mubr.bf16.gmra.mrb[0].mxu0 %v7428
      %v7563 = vpop.f32.mrb[0].mxu0
      %v7564 = vadd.f32 0.0, %v7563
      %v7565 = vpop.f32.mrb[0].mxu0
      %v7566 = vpop.f32.mrb[0].mxu0
      %v7567 = vadd.f32 0.0, %v7566
      %v7568 = vpop.f32.mrb[0].mxu0
      %7569 = vmatprep.mubr.bf16.mxu0 0
      %7570 = vmatmul.mubr.bf16.gmra.mrb[0].mxu0 %v7430
      %v7571 = vpop.f32.mrb[0].mxu0
      %v7572 = vadd.f32 0.0, %v7571
      %v7573 = vpop.f32.mrb[0].mxu0
      %v7574 = vpop.f32.mrb[0].mxu0
      %v7575 = vadd.f32 0.0, %v7574
      %v7576 = vpop.f32.mrb[0].mxu0
      %7577 = vmatprep.mubr.bf16.mxu0 0
      %7578 = vmatmul.mubr.bf16.gmra.mrb[0].mxu0 %v7432
      %v7579 = vpop.f32.mrb[0].mxu0
      %v7580 = vadd.f32 0.0, %v7579
      %v7581 = vpop.f32.mrb[0].mxu0
      %v7582 = vpop.f32.mrb[0].mxu0
      %v7583 = vadd.f32 0.0, %v7582
      %v7584 = vpop.f32.mrb[0].mxu0
      %7585 = vmatprep.mubr.bf16.mxu0 0
      %7586 = vmatmul.mubr.bf16.gmra.mrb[0].mxu0 %v7434
      %v7587 = vpop.f32.mrb[0].mxu0
      %v7588 = vadd.f32 0.0, %v7587
      %v7589 = vpop.f32.mrb[0].mxu0
      %v7590 = vpop.f32.mrb[0].mxu0
      %v7591 = vadd.f32 0.0, %v7590
      %v7592 = vpop.f32.mrb[0].mxu0
      %7593 = vmatprep.mubr.bf16.mxu0 0
      %7594 = vmatmul.mubr.bf16.gmra.mrb[0].mxu0 %v7436
      %v7595 = vpop.f32.mrb[0].mxu0
      %v7596 = vadd.f32 0.0, %v7595
      %v7597 = vpop.f32.mrb[0].mxu0
      %v7598 = vpop.f32.mrb[0].mxu0
      %v7599 = vadd.f32 0.0, %v7598
      %v7600 = vpop.f32.mrb[0].mxu0
      %7601 = vmatprep.mubr.bf16.mxu0 0
      %7602 = vmatmul.mubr.bf16.gmra.mrb[0].mxu0 %v7438
      %v7603 = vpop.f32.mrb[0].mxu0
      %v7604 = vadd.f32 0.0, %v7603
      %v7605 = vpop.f32.mrb[0].mxu0
      %v7606 = vpop.f32.mrb[0].mxu0
      %v7607 = vadd.f32 0.0, %v7606
      %v7608 = vpop.f32.mrb[0].mxu0
      %7609 = vmatprep.mubr.bf16.mxu0 0
      %7610 = vmatmul.mubr.bf16.gmra.mrb[0].mxu0 %v7440
      %v7611 = vpop.f32.mrb[0].mxu0
      %v7612 = vadd.f32 0.0, %v7611
      %v7613 = vpop.f32.mrb[0].mxu0
      %v7614 = vpop.f32.mrb[0].mxu0
      %v7615 = vadd.f32 0.0, %v7614
      %v7616 = vpop.f32.mrb[0].mxu0
      %7617 = vmatprep.mubr.bf16.mxu0 0
      %7618 = vmatmul.mubr.bf16.gmra.mrb[0].mxu0 %v7442
      %v7619 = vpop.f32.mrb[0].mxu0
      %v7620 = vadd.f32 0.0, %v7619
      %v7621 = vpop.f32.mrb[0].mxu0
      %v7622 = vpop.f32.mrb[0].mxu0
      %v7623 = vadd.f32 0.0, %v7622
      %v7624 = vpop.f32.mrb[0].mxu0
      %7625 = vmatprep.mubr.bf16.mxu0 0
      %7626 = vmatmul.mubr.bf16.gmra.mrb[0].mxu0 %v7444
      %v7627 = vpop.f32.mrb[0].mxu0
      %v7628 = vadd.f32 0.0, %v7627
      %v7629 = vpop.f32.mrb[0].mxu0
      %v7630 = vpop.f32.mrb[0].mxu0
      %v7631 = vadd.f32 0.0, %v7630
      %v7632 = vpop.f32.mrb[0].mxu0
      %7633 = vmatprep.mubr.bf16.mxu0 0
      %7634 = vmatmul.mubr.bf16.gmra.mrb[0].mxu0 %v7446
      %v7635 = vpop.f32.mrb[0].mxu0
      %v7636 = vadd.f32 0.0, %v7635
      %v7637 = vpop.f32.mrb[0].mxu0
      %v7638 = vpop.f32.mrb[0].mxu0
      %v7639 = vadd.f32 0.0, %v7638
      %v7640 = vpop.f32.mrb[0].mxu0
      %7641 = vmatprep.mubr.bf16.mxu0 0
      %7642 = vmatmul.mubr.bf16.gmra.mrb[0].mxu0 %v7448
      %v7643 = vpop.f32.mrb[0].mxu0
      %v7644 = vadd.f32 0.0, %v7643
      %v7645 = vpop.f32.mrb[0].mxu0
      %v7646 = vpop.f32.mrb[0].mxu0
      %v7647 = vadd.f32 0.0, %v7646
      %v7648 = vpop.f32.mrb[0].mxu0
      %7649 = vmatprep.mubr.bf16.mxu0 0
      %7650 = vmatmul.mubr.bf16.gmra.mrb[0].mxu0 %v7450
      %v7651 = vpop.f32.mrb[0].mxu0
      %v7652 = vadd.f32 0.0, %v7651
      %v7653 = vpop.f32.mrb[0].mxu0
      %v7654 = vpop.f32.mrb[0].mxu0
      %v7655 = vadd.f32 0.0, %v7654
      %v7656 = vpop.f32.mrb[0].mxu0
      %7657 = vmatprep.mubr.bf16.mxu0 0
      %7658 = vmatmul.mubr.bf16.gmra.mrb[0].mxu0 %v7452
      %v7659 = vpop.f32.mrb[0].mxu0
      %v7660 = vadd.f32 0.0, %v7659
      %v7661 = vpop.f32.mrb[0].mxu0
      %v7662 = vpop.f32.mrb[0].mxu0
      %v7663 = vadd.f32 0.0, %v7662
      %v7664 = vpop.f32.mrb[0].mxu0
      %7665 = vmatprep.mubr.bf16.mxu0 0
      %7666 = vmatmul.mubr.bf16.gmra.mrb[0].mxu0 %v7454
      %v7667 = vpop.f32.mrb[0].mxu0
      %v7668 = vadd.f32 0.0, %v7667
      %v7669 = vpop.f32.mrb[0].mxu0
      %v7670 = vpop.f32.mrb[0].mxu0
      %v7671 = vadd.f32 0.0, %v7670
      %v7672 = vpop.f32.mrb[0].mxu0
      %7673 = vmatprep.mubr.bf16.mxu0 0
      %7674 = vmatmul.mubr.bf16.gmra.mrb[0].mxu0 %v7456
      %v7675 = vpop.f32.mrb[0].mxu0
      %v7676 = vadd.f32 0.0, %v7675
      %v7677 = vpop.f32.mrb[0].mxu0
      %v7678 = vpop.f32.mrb[0].mxu0
      %v7679 = vadd.f32 0.0, %v7678
      %v7680 = vpop.f32.mrb[0].mxu0
      %7681 = vmatprep.mubr.bf16.mxu0 0
      %7682 = vmatmul.mubr.bf16.gmra.mrb[0].mxu0 %v7458
      %v7683 = vpop.f32.mrb[0].mxu0
      %v7684 = vadd.f32 0.0, %v7683
      %v7685 = vpop.f32.mrb[0].mxu0
      %v7686 = vpop.f32.mrb[0].mxu0
      %v7687 = vadd.f32 0.0, %v7686
      %v7688 = vpop.f32.mrb[0].mxu0
      %7689 = vmatprep.mubr.bf16.mxu0 0
      %7690 = vmatmul.mubr.bf16.gmra.mrb[0].mxu0 %v7460
      %v7691 = vpop.f32.mrb[0].mxu0
      %v7692 = vadd.f32 0.0, %v7691
      %v7693 = vpop.f32.mrb[0].mxu0
      %v7694 = vpop.f32.mrb[0].mxu0
      %v7695 = vadd.f32 0.0, %v7694
      %v7696 = vpop.f32.mrb[0].mxu0
      %7697 = vmatprep.mubr.bf16.mxu0 0
      %7698 = vmatmul.mubr.bf16.gmra.mrb[0].mxu0 %v7462
      %v7699 = vpop.f32.mrb[0].mxu0
      %v7700 = vadd.f32 0.0, %v7699
      %v7701 = vpop.f32.mrb[0].mxu0
      %v7702 = vpop.f32.mrb[0].mxu0
      %v7703 = vadd.f32 0.0, %v7702
      %v7704 = vpop.f32.mrb[0].mxu0
      %7705 = vdwg.mxu0
      %v7706 = vadd.f32 %v7369, %v7564
      %v7707 = vadd.f32 %v7370, %v7567
      %v7708 = vadd.f32 %v7371, %v7572
      %v7709 = vadd.f32 %v7372, %v7575
      %v7710 = vadd.f32 %v7373, %v7580
      %v7711 = vadd.f32 %v7374, %v7583
      %v7712 = vadd.f32 %v7375, %v7588
      %v7713 = vadd.f32 %v7376, %v7591
      %v7714 = vadd.f32 %v7377, %v7596
      %v7715 = vadd.f32 %v7378, %v7599
      %v7716 = vadd.f32 %v7379, %v7604
      %v7717 = vadd.f32 %v7380, %v7607
      %v7718 = vadd.f32 %v7381, %v7612
      %v7719 = vadd.f32 %v7382, %v7615
      %v7720 = vadd.f32 %v7383, %v7620
      %v7721 = vadd.f32 %v7384, %v7623
      %v7722 = vadd.f32 %v7385, %v7628
      %v7723 = vadd.f32 %v7386, %v7631
      %v7724 = vadd.f32 %v7387, %v7636
      %v7725 = vadd.f32 %v7388, %v7639
      %v7726 = vadd.f32 %v7389, %v7644
      %v7727 = vadd.f32 %v7390, %v7647
      %v7728 = vadd.f32 %v7391, %v7652
      %v7729 = vadd.f32 %v7392, %v7655
      %v7730 = vadd.f32 %v7393, %v7660
      %v7731 = vadd.f32 %v7394, %v7663
      %v7732 = vadd.f32 %v7395, %v7668
      %v7733 = vadd.f32 %v7396, %v7671
      %v7734 = vadd.f32 %v7397, %v7676
      %v7735 = vadd.f32 %v7398, %v7679
      %v7736 = vadd.f32 %v7399, %v7684
      %v7737 = vadd.f32 %v7400, %v7687
      %v7738 = vadd.f32 %v7401, %v7692
      %v7739 = vadd.f32 %v7402, %v7695
      %v7740 = vadd.f32 %v7403, %v7700
      %v7741 = vadd.f32 %v7404, %v7703
      %v7742 = vld [vmem:[#allocation2 + $0x10] sm:$0xc]
      %v7743 = vld [vmem:[#allocation2 + $0x14] sm:$0xf]
      %v7744 = vld [vmem:[#allocation2 + $0x18] sm:$0xf]
      %v7745 = vld [vmem:[#allocation2 + $0x1c] sm:$0xf]
      %v7746 = vld [vmem:[#allocation2 + $0x20] sm:$0xf]
      %v7747 = vld [vmem:[#allocation2 + $0x24] sm:$0xf]
      %v7748 = vld [vmem:[#allocation2 + $0x28] sm:$0xf]
      %v7749 = vld [vmem:[#allocation2 + $0x2c] sm:$0xf]
      %v7750 = vld [vmem:[#allocation2 + $0x30] sm:$0xf]
      %v7751 = vld [vmem:[#allocation2 + $0x34] sm:$0xf]
      %v7752 = vld [vmem:[#allocation2 + $0x38] sm:$0xf]
      %v7753 = vld [vmem:[#allocation2 + $0x3c] sm:$0xf]
      %v7754 = vld [vmem:[#allocation2 + $0x40] sm:$0xf]
      %v7755 = vld [vmem:[#allocation2 + $0x44] sm:$0xf]
      %v7756 = vld [vmem:[#allocation2 + $0x48] sm:$0xf]
      %v7757 = vld [vmem:[#allocation2 + $0x4c] sm:$0xf]
      %v7758 = vld [vmem:[#allocation2 + $0x50] sm:$0xf]
      %v7759 = vld [vmem:[#allocation2 + $0x54] sm:$0xf]
      %v7760 = vld [vmem:[#allocation2 + $0x58] sm:$0xf]
      %v7761 = vld [vmem:[#allocation2 + $0x5c] sm:$0xf]
      %v7762 = vld [vmem:[#allocation2 + $0x60] sm:$0xf]
      %v7763 = vld [vmem:[#allocation2 + $0x64] sm:$0xf]
      %v7764 = vld [vmem:[#allocation2 + $0x68] sm:$0xf]
      %v7765 = vld [vmem:[#allocation2 + $0x6c] sm:$0xf]
      %v7766 = vld [vmem:[#allocation2 + $0x70] sm:$0xf]
      %v7767 = vld [vmem:[#allocation2 + $0x74] sm:$0xf]
      %v7768 = vld [vmem:[#allocation2 + $0x78] sm:$0xf]
      %v7769 = vld [vmem:[#allocation2 + $0x7c] sm:$0xf]
      %v7770 = vld [vmem:[#allocation2 + $0x80] sm:$0xf]
      %v7771 = vld [vmem:[#allocation2 + $0x84] sm:$0xf]
      %v7772 = vld [vmem:[#allocation2 + $0x88] sm:$0xf]
      %v7773 = vld [vmem:[#allocation2 + $0x8c] sm:$0xf]
      %v7774 = vld [vmem:[#allocation2 + $0x90] sm:$0xf]
      %v7775 = vld [vmem:[#allocation2 + $0x94] sm:$0xf]
      %v7776 = vld [vmem:[#allocation2 + $0x98] sm:$0xf]
      %v7777 = vld [vmem:[#allocation2 + $0x9c] sm:$0xf]
      %v7778 = vld [vmem:[#allocation2 + $0xa0] sm:$0x3]
      %s7779 = scalar_lea.vmem %s3, 384
      %v7780 = vld [vmem:[%s7779] sm:$0xf]
      %v7781 = vld [vmem:[%s7779 + $0x4] sm:$0xf]
      %v7782 = vld [vmem:[%s7779 + $0x8] sm:$0xf]
      %v7783 = vld [vmem:[%s7779 + $0xc] sm:$0xf]
      %v7784 = vld [vmem:[%s7779 + $0x10] sm:$0xf]
      %v7785 = vld [vmem:[%s7779 + $0x14] sm:$0xf]
      %v7786 = vld [vmem:[%s7779 + $0x18] sm:$0xf]
      %v7787 = vld [vmem:[%s7779 + $0x1c] sm:$0xf]
      %v7788 = vld [vmem:[%s7779 + $0x20] sm:$0xf]
      %v7789 = vld [vmem:[%s7779 + $0x24] sm:$0xf]
      %v7790 = vld [vmem:[%s7779 + $0x28] sm:$0xf]
      %v7791 = vld [vmem:[%s7779 + $0x2c] sm:$0xf]
      %v7792 = vld [vmem:[%s7779 + $0x30] sm:$0xf]
      %v7793 = vld [vmem:[%s7779 + $0x34] sm:$0xf]
      %v7794 = vld [vmem:[%s7779 + $0x38] sm:$0xf]
      %v7795 = vld [vmem:[%s7779 + $0x3c] sm:$0xf]
      %v7833 = vunpack.c.l.b16 %v7742
      %v7834 = vunpack.c.l.b16 %v7743
      %v7835 = vunpack.c.l.b16 %v7744
      %v7836 = vunpack.c.l.b16 %v7745
      %v7837 = vunpack.c.l.b16 %v7746
      %v7838 = vunpack.c.l.b16 %v7747
      %v7839 = vunpack.c.l.b16 %v7748
      %v7840 = vunpack.c.l.b16 %v7749
      %v7841 = vunpack.c.l.b16 %v7750
      %v7842 = vunpack.c.l.b16 %v7751
      %v7843 = vunpack.c.l.b16 %v7752
      %v7844 = vunpack.c.l.b16 %v7753
      %v7845 = vunpack.c.l.b16 %v7754
      %v7846 = vunpack.c.l.b16 %v7755
      %v7847 = vunpack.c.l.b16 %v7756
      %v7848 = vunpack.c.l.b16 %v7757
      %v7849 = vunpack.c.l.b16 %v7758
      %v7850 = vunpack.c.l.b16 %v7759
      %v7851 = vunpack.c.l.b16 %v7760
      %v7852 = vunpack.c.l.b16 %v7761
      %v7853 = vunpack.c.l.b16 %v7762
      %v7854 = vunpack.c.l.b16 %v7763
      %v7855 = vunpack.c.l.b16 %v7764
      %v7856 = vunpack.c.l.b16 %v7765
      %v7857 = vunpack.c.l.b16 %v7766
      %v7858 = vunpack.c.l.b16 %v7767
      %v7859 = vunpack.c.l.b16 %v7768
      %v7860 = vunpack.c.l.b16 %v7769
      %v7861 = vunpack.c.l.b16 %v7770
      %v7862 = vunpack.c.l.b16 %v7771
      %v7863 = vunpack.c.l.b16 %v7772
      %v7864 = vunpack.c.l.b16 %v7773
      %v7865 = vunpack.c.l.b16 %v7774
      %v7866 = vunpack.c.l.b16 %v7775
      %v7867 = vunpack.c.l.b16 %v7776
      %v7868 = vunpack.c.l.b16 %v7777
      %v7869 = vunpack.c.l.b16 %v7778
      %v7870 = vpack.c.b16 %v7834, %v7833
      %v7871 = vpack.c.b16 %v7836, %v7835
      %v7872 = vpack.c.b16 %v7838, %v7837
      %v7873 = vpack.c.b16 %v7840, %v7839
      %v7874 = vpack.c.b16 %v7842, %v7841
      %v7875 = vpack.c.b16 %v7844, %v7843
      %v7876 = vpack.c.b16 %v7846, %v7845
      %v7877 = vpack.c.b16 %v7848, %v7847
      %v7878 = vpack.c.b16 %v7850, %v7849
      %v7879 = vpack.c.b16 %v7852, %v7851
      %v7880 = vpack.c.b16 %v7854, %v7853
      %v7881 = vpack.c.b16 %v7856, %v7855
      %v7882 = vpack.c.b16 %v7858, %v7857
      %v7883 = vpack.c.b16 %v7860, %v7859
      %v7884 = vpack.c.b16 %v7862, %v7861
      %v7885 = vpack.c.b16 %v7864, %v7863
      %v7886 = vpack.c.b16 %v7866, %v7865
      %v7887 = vpack.c.b16 %v7868, %v7867
      %v7888 = vpack.c.b16 %v7869, %v7869
      %v7889 = vrot.slane %v7870, 2
      %v7890 = vrot.slane %v7871, 2
      %v7891 = vsel %vm2966, %v7889, %v7890
      %v7892 = vrot.slane %v7872, 2
      %v7893 = vsel %vm2966, %v7890, %v7892
      %v7894 = vrot.slane %v7873, 2
      %v7895 = vsel %vm2966, %v7892, %v7894
      %v7896 = vrot.slane %v7874, 2
      %v7897 = vsel %vm2966, %v7894, %v7896
      %v7898 = vrot.slane %v7875, 2
      %v7899 = vsel %vm2966, %v7896, %v7898
      %v7900 = vrot.slane %v7876, 2
      %v7901 = vsel %vm2966, %v7898, %v7900
      %v7902 = vrot.slane %v7877, 2
      %v7903 = vsel %vm2966, %v7900, %v7902
      %v7904 = vrot.slane %v7878, 2
      %v7905 = vsel %vm2966, %v7902, %v7904
      %v7906 = vrot.slane %v7879, 2
      %v7907 = vsel %vm2966, %v7904, %v7906
      %v7908 = vrot.slane %v7880, 2
      %v7909 = vsel %vm2966, %v7906, %v7908
      %v7910 = vrot.slane %v7881, 2
      %v7911 = vsel %vm2966, %v7908, %v7910
      %v7912 = vrot.slane %v7882, 2
      %v7913 = vsel %vm2966, %v7910, %v7912
      %v7914 = vrot.slane %v7883, 2
      %v7915 = vsel %vm2966, %v7912, %v7914
      %v7916 = vrot.slane %v7884, 2
      %v7917 = vsel %vm2966, %v7914, %v7916
      %v7918 = vrot.slane %v7885, 2
      %v7919 = vsel %vm2966, %v7916, %v7918
      %v7920 = vrot.slane %v7886, 2
      %v7921 = vsel %vm2966, %v7918, %v7920
      %v7922 = vrot.slane %v7887, 2
      %v7923 = vsel %vm2966, %v7920, %v7922
      %v7924 = vrot.slane %v7888, 2
      %v7925 = vsel %vm2966, %v7922, %v7924
      %v7960 = vunpack.c.l.b16 %v7780
      %v7961 = vunpack.c.l.b16 %v7781
      %v7962 = vunpack.c.l.b16 %v7782
      %v7963 = vunpack.c.l.b16 %v7783
      %v7964 = vunpack.c.l.b16 %v7784
      %v7965 = vunpack.c.l.b16 %v7785
      %v7966 = vunpack.c.l.b16 %v7786
      %v7967 = vunpack.c.l.b16 %v7787
      %v7968 = vunpack.c.l.b16 %v7788
      %v7969 = vunpack.c.l.b16 %v7789
      %v7970 = vunpack.c.l.b16 %v7790
      %v7971 = vunpack.c.l.b16 %v7791
      %v7972 = vunpack.c.l.b16 %v7792
      %v7973 = vunpack.c.l.b16 %v7793
      %v7974 = vunpack.c.l.b16 %v7794
      %v7975 = vunpack.c.l.b16 %v7795
      %v7976 = vpack.c.b16 %v7961, %v7960
      %v7977 = vpack.c.b16 %v7963, %v7962
      %v7978 = vpack.c.b16 %v7965, %v7964
      %v7979 = vpack.c.b16 %v7967, %v7966
      %v7980 = vpack.c.b16 %v7969, %v7968
      %v7981 = vpack.c.b16 %v7971, %v7970
      %v7982 = vpack.c.b16 %v7973, %v7972
      %v7983 = vpack.c.b16 %v7975, %v7974
      %7992 = vmatprep.subr.bf16.mxu0 0
      %7993 = vmatpush1.bf16.msra.mxu0 %v7976
      %7994 = vmatprep.subr.bf16.mxu0 0
      %7995 = vmatpush1.bf16.msra.mxu0 %v7977
      %7996 = vmatprep.subr.bf16.mxu0 0
      %7997 = vmatpush1.bf16.msra.mxu0 %v7978
      %7998 = vmatprep.subr.bf16.mxu0 0
      %7999 = vmatpush1.bf16.msra.mxu0 %v7979
      %8000 = vmatprep.subr.bf16.mxu0 0
      %8001 = vmatpush1.bf16.msra.mxu0 %v7980
      %8002 = vmatprep.subr.bf16.mxu0 0
      %8003 = vmatpush1.bf16.msra.mxu0 %v7981
      %8004 = vmatprep.subr.bf16.mxu0 0
      %8005 = vmatpush1.bf16.msra.mxu0 %v7982
      %8006 = vmatprep.subr.bf16.mxu0 0
      %8007 = vmatpush1.bf16.msra.mxu0 %v7983
      %8008 = vmatprep.subr.bf16.mxu0 0
      %8009 = vmatpush1.bf16.msra.mxu0 0
      %8010 = vmatprep.subr.bf16.mxu0 0
      %8011 = vmatpush1.bf16.msra.mxu0 0
      %8012 = vmatprep.subr.bf16.mxu0 0
      %8013 = vmatpush1.bf16.msra.mxu0 0
      %8014 = vmatprep.subr.bf16.mxu0 0
      %8015 = vmatpush1.bf16.msra.mxu0 0
      %8016 = vmatprep.subr.bf16.mxu0 0
      %8017 = vmatpush1.bf16.msra.mxu0 0
      %8018 = vmatprep.subr.bf16.mxu0 0
      %8019 = vmatpush1.bf16.msra.mxu0 0
      %8020 = vmatprep.subr.bf16.mxu0 0
      %8021 = vmatpush1.bf16.msra.mxu0 0
      %8022 = vmatprep.subr.bf16.mxu0 0
      %8023 = vmatpush1.bf16.msra.mxu0 0
      %8024 = vmatprep.mubr.bf16.mxu0 0
      %8025 = vmatmul.mubr.bf16.gmra.mrb[0].mxu0 %v7891
      %v8026 = vpop.f32.mrb[0].mxu0
      %v8027 = vadd.f32 0.0, %v8026
      %v8028 = vpop.f32.mrb[0].mxu0
      %v8029 = vpop.f32.mrb[0].mxu0
      %v8030 = vadd.f32 0.0, %v8029
      %v8031 = vpop.f32.mrb[0].mxu0
      %8032 = vmatprep.mubr.bf16.mxu0 0
      %8033 = vmatmul.mubr.bf16.gmra.mrb[0].mxu0 %v7893
      %v8034 = vpop.f32.mrb[0].mxu0
      %v8035 = vadd.f32 0.0, %v8034
      %v8036 = vpop.f32.mrb[0].mxu0
      %v8037 = vpop.f32.mrb[0].mxu0
      %v8038 = vadd.f32 0.0, %v8037
      %v8039 = vpop.f32.mrb[0].mxu0
      %8040 = vmatprep.mubr.bf16.mxu0 0
      %8041 = vmatmul.mubr.bf16.gmra.mrb[0].mxu0 %v7895
      %v8042 = vpop.f32.mrb[0].mxu0
      %v8043 = vadd.f32 0.0, %v8042
      %v8044 = vpop.f32.mrb[0].mxu0
      %v8045 = vpop.f32.mrb[0].mxu0
      %v8046 = vadd.f32 0.0, %v8045
      %v8047 = vpop.f32.mrb[0].mxu0
      %8048 = vmatprep.mubr.bf16.mxu0 0
      %8049 = vmatmul.mubr.bf16.gmra.mrb[0].mxu0 %v7897
      %v8050 = vpop.f32.mrb[0].mxu0
      %v8051 = vadd.f32 0.0, %v8050
      %v8052 = vpop.f32.mrb[0].mxu0
      %v8053 = vpop.f32.mrb[0].mxu0
      %v8054 = vadd.f32 0.0, %v8053
      %v8055 = vpop.f32.mrb[0].mxu0
      %8056 = vmatprep.mubr.bf16.mxu0 0
      %8057 = vmatmul.mubr.bf16.gmra.mrb[0].mxu0 %v7899
      %v8058 = vpop.f32.mrb[0].mxu0
      %v8059 = vadd.f32 0.0, %v8058
      %v8060 = vpop.f32.mrb[0].mxu0
      %v8061 = vpop.f32.mrb[0].mxu0
      %v8062 = vadd.f32 0.0, %v8061
      %v8063 = vpop.f32.mrb[0].mxu0
      %8064 = vmatprep.mubr.bf16.mxu0 0
      %8065 = vmatmul.mubr.bf16.gmra.mrb[0].mxu0 %v7901
      %v8066 = vpop.f32.mrb[0].mxu0
      %v8067 = vadd.f32 0.0, %v8066
      %v8068 = vpop.f32.mrb[0].mxu0
      %v8069 = vpop.f32.mrb[0].mxu0
      %v8070 = vadd.f32 0.0, %v8069
      %v8071 = vpop.f32.mrb[0].mxu0
      %8072 = vmatprep.mubr.bf16.mxu0 0
      %8073 = vmatmul.mubr.bf16.gmra.mrb[0].mxu0 %v7903
      %v8074 = vpop.f32.mrb[0].mxu0
      %v8075 = vadd.f32 0.0, %v8074
      %v8076 = vpop.f32.mrb[0].mxu0
      %v8077 = vpop.f32.mrb[0].mxu0
      %v8078 = vadd.f32 0.0, %v8077
      %v8079 = vpop.f32.mrb[0].mxu0
      %8080 = vmatprep.mubr.bf16.mxu0 0
      %8081 = vmatmul.mubr.bf16.gmra.mrb[0].mxu0 %v7905
      %v8082 = vpop.f32.mrb[0].mxu0
      %v8083 = vadd.f32 0.0, %v8082
      %v8084 = vpop.f32.mrb[0].mxu0
      %v8085 = vpop.f32.mrb[0].mxu0
      %v8086 = vadd.f32 0.0, %v8085
      %v8087 = vpop.f32.mrb[0].mxu0
      %8088 = vmatprep.mubr.bf16.mxu0 0
      %8089 = vmatmul.mubr.bf16.gmra.mrb[0].mxu0 %v7907
      %v8090 = vpop.f32.mrb[0].mxu0
      %v8091 = vadd.f32 0.0, %v8090
      %v8092 = vpop.f32.mrb[0].mxu0
      %v8093 = vpop.f32.mrb[0].mxu0
      %v8094 = vadd.f32 0.0, %v8093
      %v8095 = vpop.f32.mrb[0].mxu0
      %8096 = vmatprep.mubr.bf16.mxu0 0
      %8097 = vmatmul.mubr.bf16.gmra.mrb[0].mxu0 %v7909
      %v8098 = vpop.f32.mrb[0].mxu0
      %v8099 = vadd.f32 0.0, %v8098
      %v8100 = vpop.f32.mrb[0].mxu0
      %v8101 = vpop.f32.mrb[0].mxu0
      %v8102 = vadd.f32 0.0, %v8101
      %v8103 = vpop.f32.mrb[0].mxu0
      %8104 = vmatprep.mubr.bf16.mxu0 0
      %8105 = vmatmul.mubr.bf16.gmra.mrb[0].mxu0 %v7911
      %v8106 = vpop.f32.mrb[0].mxu0
      %v8107 = vadd.f32 0.0, %v8106
      %v8108 = vpop.f32.mrb[0].mxu0
      %v8109 = vpop.f32.mrb[0].mxu0
      %v8110 = vadd.f32 0.0, %v8109
      %v8111 = vpop.f32.mrb[0].mxu0
      %8112 = vmatprep.mubr.bf16.mxu0 0
      %8113 = vmatmul.mubr.bf16.gmra.mrb[0].mxu0 %v7913
      %v8114 = vpop.f32.mrb[0].mxu0
      %v8115 = vadd.f32 0.0, %v8114
      %v8116 = vpop.f32.mrb[0].mxu0
      %v8117 = vpop.f32.mrb[0].mxu0
      %v8118 = vadd.f32 0.0, %v8117
      %v8119 = vpop.f32.mrb[0].mxu0
      %8120 = vmatprep.mubr.bf16.mxu0 0
      %8121 = vmatmul.mubr.bf16.gmra.mrb[0].mxu0 %v7915
      %v8122 = vpop.f32.mrb[0].mxu0
      %v8123 = vadd.f32 0.0, %v8122
      %v8124 = vpop.f32.mrb[0].mxu0
      %v8125 = vpop.f32.mrb[0].mxu0
      %v8126 = vadd.f32 0.0, %v8125
      %v8127 = vpop.f32.mrb[0].mxu0
      %8128 = vmatprep.mubr.bf16.mxu0 0
      %8129 = vmatmul.mubr.bf16.gmra.mrb[0].mxu0 %v7917
      %v8130 = vpop.f32.mrb[0].mxu0
      %v8131 = vadd.f32 0.0, %v8130
      %v8132 = vpop.f32.mrb[0].mxu0
      %v8133 = vpop.f32.mrb[0].mxu0
      %v8134 = vadd.f32 0.0, %v8133
      %v8135 = vpop.f32.mrb[0].mxu0
      %8136 = vmatprep.mubr.bf16.mxu0 0
      %8137 = vmatmul.mubr.bf16.gmra.mrb[0].mxu0 %v7919
      %v8138 = vpop.f32.mrb[0].mxu0
      %v8139 = vadd.f32 0.0, %v8138
      %v8140 = vpop.f32.mrb[0].mxu0
      %v8141 = vpop.f32.mrb[0].mxu0
      %v8142 = vadd.f32 0.0, %v8141
      %v8143 = vpop.f32.mrb[0].mxu0
      %8144 = vmatprep.mubr.bf16.mxu0 0
      %8145 = vmatmul.mubr.bf16.gmra.mrb[0].mxu0 %v7921
      %v8146 = vpop.f32.mrb[0].mxu0
      %v8147 = vadd.f32 0.0, %v8146
      %v8148 = vpop.f32.mrb[0].mxu0
      %v8149 = vpop.f32.mrb[0].mxu0
      %v8150 = vadd.f32 0.0, %v8149
      %v8151 = vpop.f32.mrb[0].mxu0
      %8152 = vmatprep.mubr.bf16.mxu0 0
      %8153 = vmatmul.mubr.bf16.gmra.mrb[0].mxu0 %v7923
      %v8154 = vpop.f32.mrb[0].mxu0
      %v8155 = vadd.f32 0.0, %v8154
      %v8156 = vpop.f32.mrb[0].mxu0
      %v8157 = vpop.f32.mrb[0].mxu0
      %v8158 = vadd.f32 0.0, %v8157
      %v8159 = vpop.f32.mrb[0].mxu0
      %8160 = vmatprep.mubr.bf16.mxu0 0
      %8161 = vmatmul.mubr.bf16.gmra.mrb[0].mxu0 %v7925
      %v8162 = vpop.f32.mrb[0].mxu0
      %v8163 = vadd.f32 0.0, %v8162
      %v8164 = vpop.f32.mrb[0].mxu0
      %v8165 = vpop.f32.mrb[0].mxu0
      %v8166 = vadd.f32 0.0, %v8165
      %v8167 = vpop.f32.mrb[0].mxu0
      %8168 = vdwg.mxu0
      %v8169 = vadd.f32 %v7706, %v8027
      %v8170 = vadd.f32 %v7707, %v8030
      %v8171 = vadd.f32 %v7708, %v8035
      %v8172 = vadd.f32 %v7709, %v8038
      %v8173 = vadd.f32 %v7710, %v8043
      %v8174 = vadd.f32 %v7711, %v8046
      %v8175 = vadd.f32 %v7712, %v8051
      %v8176 = vadd.f32 %v7713, %v8054
      %v8177 = vadd.f32 %v7714, %v8059
      %v8178 = vadd.f32 %v7715, %v8062
      %v8179 = vadd.f32 %v7716, %v8067
      %v8180 = vadd.f32 %v7717, %v8070
      %v8181 = vadd.f32 %v7718, %v8075
      %v8182 = vadd.f32 %v7719, %v8078
      %v8183 = vadd.f32 %v7720, %v8083
      %v8184 = vadd.f32 %v7721, %v8086
      %v8185 = vadd.f32 %v7722, %v8091
      %v8186 = vadd.f32 %v7723, %v8094
      %v8187 = vadd.f32 %v7724, %v8099
      %v8188 = vadd.f32 %v7725, %v8102
      %v8189 = vadd.f32 %v7726, %v8107
      %v8190 = vadd.f32 %v7727, %v8110
      %v8191 = vadd.f32 %v7728, %v8115
      %v8192 = vadd.f32 %v7729, %v8118
      %v8193 = vadd.f32 %v7730, %v8123
      %v8194 = vadd.f32 %v7731, %v8126
      %v8195 = vadd.f32 %v7732, %v8131
      %v8196 = vadd.f32 %v7733, %v8134
      %v8197 = vadd.f32 %v7734, %v8139
      %v8198 = vadd.f32 %v7735, %v8142
      %v8199 = vadd.f32 %v7736, %v8147
      %v8200 = vadd.f32 %v7737, %v8150
      %v8201 = vadd.f32 %v7738, %v8155
      %v8202 = vadd.f32 %v7739, %v8158
      %v8203 = vadd.f32 %v7740, %v8163
      %v8204 = vadd.f32 %v7741, %v8166
      %v8205 = vld [vmem:[#allocation2 + $0xa0] sm:$0x7]
      %s8206 = scalar_lea.vmem %s3, 448
      %v8207 = vld [vmem:[%s8206] sm:$0xf]
      %v8208 = vld [vmem:[%s8206 + $0x4] sm:$0xf]
      %v8209 = vld [vmem:[%s8206 + $0x8] sm:$0xf]
      %v8210 = vld [vmem:[%s8206 + $0xc] sm:$0xf]
      %v8211 = vld [vmem:[%s8206 + $0x10] sm:$0xf]
      %v8212 = vld [vmem:[%s8206 + $0x14] sm:$0xf]
      %v8213 = vld [vmem:[%s8206 + $0x18] sm:$0xf]
      %v8214 = vld [vmem:[%s8206 + $0x1c] sm:$0xf]
      %v8215 = vld [vmem:[%s8206 + $0x20] sm:$0xf]
      %v8216 = vld [vmem:[%s8206 + $0x24] sm:$0xf]
      %v8217 = vld [vmem:[%s8206 + $0x28] sm:$0xf]
      %v8218 = vld [vmem:[%s8206 + $0x2c] sm:$0xf]
      %v8219 = vld [vmem:[%s8206 + $0x30] sm:$0xf]
      %v8220 = vld [vmem:[%s8206 + $0x34] sm:$0xf]
      %v8221 = vld [vmem:[%s8206 + $0x38] sm:$0xf]
      %v8222 = vld [vmem:[%s8206 + $0x3c] sm:$0xf]
      %v8224 = vunpack.c.l.b16 %v8205
      %v8225 = vpack.c.b16 %v8224, %v8224
      %v8227 = vshrl.u32 %v7870, 16
      %v8229 = vrot.slane %v8227, 2
      %v8230 = vshll.u32 %v7870, 16
      %v8232 = vrot.slane %v8230, 3
      %v8233 = vor.u32 %v8229, %v8232
      %v8235 = vshrl.u32 %v7871, 16
      %v8237 = vrot.slane %v8235, 2
      %v8238 = vshll.u32 %v7871, 16
      %v8240 = vrot.slane %v8238, 3
      %v8241 = vor.u32 %v8237, %v8240
      %v8242 = vsel %vm3767, %v8233, %v8241
      %v8244 = vshrl.u32 %v7872, 16
      %v8246 = vrot.slane %v8244, 2
      %v8247 = vshll.u32 %v7872, 16
      %v8249 = vrot.slane %v8247, 3
      %v8250 = vor.u32 %v8246, %v8249
      %v8251 = vsel %vm3767, %v8241, %v8250
      %v8253 = vshrl.u32 %v7873, 16
      %v8255 = vrot.slane %v8253, 2
      %v8256 = vshll.u32 %v7873, 16
      %v8258 = vrot.slane %v8256, 3
      %v8259 = vor.u32 %v8255, %v8258
      %v8260 = vsel %vm3767, %v8250, %v8259
      %v8262 = vshrl.u32 %v7874, 16
      %v8264 = vrot.slane %v8262, 2
      %v8265 = vshll.u32 %v7874, 16
      %v8267 = vrot.slane %v8265, 3
      %v8268 = vor.u32 %v8264, %v8267
      %v8269 = vsel %vm3767, %v8259, %v8268
      %v8271 = vshrl.u32 %v7875, 16
      %v8273 = vrot.slane %v8271, 2
      %v8274 = vshll.u32 %v7875, 16
      %v8276 = vrot.slane %v8274, 3
      %v8277 = vor.u32 %v8273, %v8276
      %v8278 = vsel %vm3767, %v8268, %v8277
      %v8280 = vshrl.u32 %v7876, 16
      %v8282 = vrot.slane %v8280, 2
      %v8283 = vshll.u32 %v7876, 16
      %v8285 = vrot.slane %v8283, 3
      %v8286 = vor.u32 %v8282, %v8285
      %v8287 = vsel %vm3767, %v8277, %v8286
      %v8289 = vshrl.u32 %v7877, 16
      %v8291 = vrot.slane %v8289, 2
      %v8292 = vshll.u32 %v7877, 16
      %v8294 = vrot.slane %v8292, 3
      %v8295 = vor.u32 %v8291, %v8294
      %v8296 = vsel %vm3767, %v8286, %v8295
      %v8298 = vshrl.u32 %v7878, 16
      %v8300 = vrot.slane %v8298, 2
      %v8301 = vshll.u32 %v7878, 16
      %v8303 = vrot.slane %v8301, 3
      %v8304 = vor.u32 %v8300, %v8303
      %v8305 = vsel %vm3767, %v8295, %v8304
      %v8307 = vshrl.u32 %v7879, 16
      %v8309 = vrot.slane %v8307, 2
      %v8310 = vshll.u32 %v7879, 16
      %v8312 = vrot.slane %v8310, 3
      %v8313 = vor.u32 %v8309, %v8312
      %v8314 = vsel %vm3767, %v8304, %v8313
      %v8316 = vshrl.u32 %v7880, 16
      %v8318 = vrot.slane %v8316, 2
      %v8319 = vshll.u32 %v7880, 16
      %v8321 = vrot.slane %v8319, 3
      %v8322 = vor.u32 %v8318, %v8321
      %v8323 = vsel %vm3767, %v8313, %v8322
      %v8325 = vshrl.u32 %v7881, 16
      %v8327 = vrot.slane %v8325, 2
      %v8328 = vshll.u32 %v7881, 16
      %v8330 = vrot.slane %v8328, 3
      %v8331 = vor.u32 %v8327, %v8330
      %v8332 = vsel %vm3767, %v8322, %v8331
      %v8334 = vshrl.u32 %v7882, 16
      %v8336 = vrot.slane %v8334, 2
      %v8337 = vshll.u32 %v7882, 16
      %v8339 = vrot.slane %v8337, 3
      %v8340 = vor.u32 %v8336, %v8339
      %v8341 = vsel %vm3767, %v8331, %v8340
      %v8343 = vshrl.u32 %v7883, 16
      %v8345 = vrot.slane %v8343, 2
      %v8346 = vshll.u32 %v7883, 16
      %v8348 = vrot.slane %v8346, 3
      %v8349 = vor.u32 %v8345, %v8348
      %v8350 = vsel %vm3767, %v8340, %v8349
      %v8352 = vshrl.u32 %v7884, 16
      %v8354 = vrot.slane %v8352, 2
      %v8355 = vshll.u32 %v7884, 16
      %v8357 = vrot.slane %v8355, 3
      %v8358 = vor.u32 %v8354, %v8357
      %v8359 = vsel %vm3767, %v8349, %v8358
      %v8361 = vshrl.u32 %v7885, 16
      %v8363 = vrot.slane %v8361, 2
      %v8364 = vshll.u32 %v7885, 16
      %v8366 = vrot.slane %v8364, 3
      %v8367 = vor.u32 %v8363, %v8366
      %v8368 = vsel %vm3767, %v8358, %v8367
      %v8370 = vshrl.u32 %v7886, 16
      %v8372 = vrot.slane %v8370, 2
      %v8373 = vshll.u32 %v7886, 16
      %v8375 = vrot.slane %v8373, 3
      %v8376 = vor.u32 %v8372, %v8375
      %v8377 = vsel %vm3767, %v8367, %v8376
      %v8379 = vshrl.u32 %v7887, 16
      %v8381 = vrot.slane %v8379, 2
      %v8382 = vshll.u32 %v7887, 16
      %v8384 = vrot.slane %v8382, 3
      %v8385 = vor.u32 %v8381, %v8384
      %v8386 = vsel %vm3767, %v8376, %v8385
      %v8388 = vshrl.u32 %v8225, 16
      %v8390 = vrot.slane %v8388, 2
      %v8391 = vshll.u32 %v8225, 16
      %v8393 = vrot.slane %v8391, 3
      %v8394 = vor.u32 %v8390, %v8393
      %v8395 = vsel %vm3767, %v8385, %v8394
      %v8430 = vunpack.c.l.b16 %v8207
      %v8431 = vunpack.c.l.b16 %v8208
      %v8432 = vunpack.c.l.b16 %v8209
      %v8433 = vunpack.c.l.b16 %v8210
      %v8434 = vunpack.c.l.b16 %v8211
      %v8435 = vunpack.c.l.b16 %v8212
      %v8436 = vunpack.c.l.b16 %v8213
      %v8437 = vunpack.c.l.b16 %v8214
      %v8438 = vunpack.c.l.b16 %v8215
      %v8439 = vunpack.c.l.b16 %v8216
      %v8440 = vunpack.c.l.b16 %v8217
      %v8441 = vunpack.c.l.b16 %v8218
      %v8442 = vunpack.c.l.b16 %v8219
      %v8443 = vunpack.c.l.b16 %v8220
      %v8444 = vunpack.c.l.b16 %v8221
      %v8445 = vunpack.c.l.b16 %v8222
      %v8446 = vpack.c.b16 %v8431, %v8430
      %v8447 = vpack.c.b16 %v8433, %v8432
      %v8448 = vpack.c.b16 %v8435, %v8434
      %v8449 = vpack.c.b16 %v8437, %v8436
      %v8450 = vpack.c.b16 %v8439, %v8438
      %v8451 = vpack.c.b16 %v8441, %v8440
      %v8452 = vpack.c.b16 %v8443, %v8442
      %v8453 = vpack.c.b16 %v8445, %v8444
      %8462 = vmatprep.subr.bf16.mxu0 0
      %8463 = vmatpush1.bf16.msra.mxu0 %v8446
      %8464 = vmatprep.subr.bf16.mxu0 0
      %8465 = vmatpush1.bf16.msra.mxu0 %v8447
      %8466 = vmatprep.subr.bf16.mxu0 0
      %8467 = vmatpush1.bf16.msra.mxu0 %v8448
      %8468 = vmatprep.subr.bf16.mxu0 0
      %8469 = vmatpush1.bf16.msra.mxu0 %v8449
      %8470 = vmatprep.subr.bf16.mxu0 0
      %8471 = vmatpush1.bf16.msra.mxu0 %v8450
      %8472 = vmatprep.subr.bf16.mxu0 0
      %8473 = vmatpush1.bf16.msra.mxu0 %v8451
      %8474 = vmatprep.subr.bf16.mxu0 0
      %8475 = vmatpush1.bf16.msra.mxu0 %v8452
      %8476 = vmatprep.subr.bf16.mxu0 0
      %8477 = vmatpush1.bf16.msra.mxu0 %v8453
      %8478 = vmatprep.subr.bf16.mxu0 0
      %8479 = vmatpush1.bf16.msra.mxu0 0
      %8480 = vmatprep.subr.bf16.mxu0 0
      %8481 = vmatpush1.bf16.msra.mxu0 0
      %8482 = vmatprep.subr.bf16.mxu0 0
      %8483 = vmatpush1.bf16.msra.mxu0 0
      %8484 = vmatprep.subr.bf16.mxu0 0
      %8485 = vmatpush1.bf16.msra.mxu0 0
      %8486 = vmatprep.subr.bf16.mxu0 0
      %8487 = vmatpush1.bf16.msra.mxu0 0
      %8488 = vmatprep.subr.bf16.mxu0 0
      %8489 = vmatpush1.bf16.msra.mxu0 0
      %8490 = vmatprep.subr.bf16.mxu0 0
      %8491 = vmatpush1.bf16.msra.mxu0 0
      %8492 = vmatprep.subr.bf16.mxu0 0
      %8493 = vmatpush1.bf16.msra.mxu0 0
      %8494 = vmatprep.mubr.bf16.mxu0 0
      %8495 = vmatmul.mubr.bf16.gmra.mrb[0].mxu0 %v8242
      %v8496 = vpop.f32.mrb[0].mxu0
      %v8497 = vadd.f32 0.0, %v8496
      %v8498 = vpop.f32.mrb[0].mxu0
      %v8499 = vpop.f32.mrb[0].mxu0
      %v8500 = vadd.f32 0.0, %v8499
      %v8501 = vpop.f32.mrb[0].mxu0
      %8502 = vmatprep.mubr.bf16.mxu0 0
      %8503 = vmatmul.mubr.bf16.gmra.mrb[0].mxu0 %v8251
      %v8504 = vpop.f32.mrb[0].mxu0
      %v8505 = vadd.f32 0.0, %v8504
      %v8506 = vpop.f32.mrb[0].mxu0
      %v8507 = vpop.f32.mrb[0].mxu0
      %v8508 = vadd.f32 0.0, %v8507
      %v8509 = vpop.f32.mrb[0].mxu0
      %8510 = vmatprep.mubr.bf16.mxu0 0
      %8511 = vmatmul.mubr.bf16.gmra.mrb[0].mxu0 %v8260
      %v8512 = vpop.f32.mrb[0].mxu0
      %v8513 = vadd.f32 0.0, %v8512
      %v8514 = vpop.f32.mrb[0].mxu0
      %v8515 = vpop.f32.mrb[0].mxu0
      %v8516 = vadd.f32 0.0, %v8515
      %v8517 = vpop.f32.mrb[0].mxu0
      %8518 = vmatprep.mubr.bf16.mxu0 0
      %8519 = vmatmul.mubr.bf16.gmra.mrb[0].mxu0 %v8269
      %v8520 = vpop.f32.mrb[0].mxu0
      %v8521 = vadd.f32 0.0, %v8520
      %v8522 = vpop.f32.mrb[0].mxu0
      %v8523 = vpop.f32.mrb[0].mxu0
      %v8524 = vadd.f32 0.0, %v8523
      %v8525 = vpop.f32.mrb[0].mxu0
      %8526 = vmatprep.mubr.bf16.mxu0 0
      %8527 = vmatmul.mubr.bf16.gmra.mrb[0].mxu0 %v8278
      %v8528 = vpop.f32.mrb[0].mxu0
      %v8529 = vadd.f32 0.0, %v8528
      %v8530 = vpop.f32.mrb[0].mxu0
      %v8531 = vpop.f32.mrb[0].mxu0
      %v8532 = vadd.f32 0.0, %v8531
      %v8533 = vpop.f32.mrb[0].mxu0
      %8534 = vmatprep.mubr.bf16.mxu0 0
      %8535 = vmatmul.mubr.bf16.gmra.mrb[0].mxu0 %v8287
      %v8536 = vpop.f32.mrb[0].mxu0
      %v8537 = vadd.f32 0.0, %v8536
      %v8538 = vpop.f32.mrb[0].mxu0
      %v8539 = vpop.f32.mrb[0].mxu0
      %v8540 = vadd.f32 0.0, %v8539
      %v8541 = vpop.f32.mrb[0].mxu0
      %8542 = vmatprep.mubr.bf16.mxu0 0
      %8543 = vmatmul.mubr.bf16.gmra.mrb[0].mxu0 %v8296
      %v8544 = vpop.f32.mrb[0].mxu0
      %v8545 = vadd.f32 0.0, %v8544
      %v8546 = vpop.f32.mrb[0].mxu0
      %v8547 = vpop.f32.mrb[0].mxu0
      %v8548 = vadd.f32 0.0, %v8547
      %v8549 = vpop.f32.mrb[0].mxu0
      %8550 = vmatprep.mubr.bf16.mxu0 0
      %8551 = vmatmul.mubr.bf16.gmra.mrb[0].mxu0 %v8305
      %v8552 = vpop.f32.mrb[0].mxu0
      %v8553 = vadd.f32 0.0, %v8552
      %v8554 = vpop.f32.mrb[0].mxu0
      %v8555 = vpop.f32.mrb[0].mxu0
      %v8556 = vadd.f32 0.0, %v8555
      %v8557 = vpop.f32.mrb[0].mxu0
      %8558 = vmatprep.mubr.bf16.mxu0 0
      %8559 = vmatmul.mubr.bf16.gmra.mrb[0].mxu0 %v8314
      %v8560 = vpop.f32.mrb[0].mxu0
      %v8561 = vadd.f32 0.0, %v8560
      %v8562 = vpop.f32.mrb[0].mxu0
      %v8563 = vpop.f32.mrb[0].mxu0
      %v8564 = vadd.f32 0.0, %v8563
      %v8565 = vpop.f32.mrb[0].mxu0
      %8566 = vmatprep.mubr.bf16.mxu0 0
      %8567 = vmatmul.mubr.bf16.gmra.mrb[0].mxu0 %v8323
      %v8568 = vpop.f32.mrb[0].mxu0
      %v8569 = vadd.f32 0.0, %v8568
      %v8570 = vpop.f32.mrb[0].mxu0
      %v8571 = vpop.f32.mrb[0].mxu0
      %v8572 = vadd.f32 0.0, %v8571
      %v8573 = vpop.f32.mrb[0].mxu0
      %8574 = vmatprep.mubr.bf16.mxu0 0
      %8575 = vmatmul.mubr.bf16.gmra.mrb[0].mxu0 %v8332
      %v8576 = vpop.f32.mrb[0].mxu0
      %v8577 = vadd.f32 0.0, %v8576
      %v8578 = vpop.f32.mrb[0].mxu0
      %v8579 = vpop.f32.mrb[0].mxu0
      %v8580 = vadd.f32 0.0, %v8579
      %v8581 = vpop.f32.mrb[0].mxu0
      %8582 = vmatprep.mubr.bf16.mxu0 0
      %8583 = vmatmul.mubr.bf16.gmra.mrb[0].mxu0 %v8341
      %v8584 = vpop.f32.mrb[0].mxu0
      %v8585 = vadd.f32 0.0, %v8584
      %v8586 = vpop.f32.mrb[0].mxu0
      %v8587 = vpop.f32.mrb[0].mxu0
      %v8588 = vadd.f32 0.0, %v8587
      %v8589 = vpop.f32.mrb[0].mxu0
      %8590 = vmatprep.mubr.bf16.mxu0 0
      %8591 = vmatmul.mubr.bf16.gmra.mrb[0].mxu0 %v8350
      %v8592 = vpop.f32.mrb[0].mxu0
      %v8593 = vadd.f32 0.0, %v8592
      %v8594 = vpop.f32.mrb[0].mxu0
      %v8595 = vpop.f32.mrb[0].mxu0
      %v8596 = vadd.f32 0.0, %v8595
      %v8597 = vpop.f32.mrb[0].mxu0
      %8598 = vmatprep.mubr.bf16.mxu0 0
      %8599 = vmatmul.mubr.bf16.gmra.mrb[0].mxu0 %v8359
      %v8600 = vpop.f32.mrb[0].mxu0
      %v8601 = vadd.f32 0.0, %v8600
      %v8602 = vpop.f32.mrb[0].mxu0
      %v8603 = vpop.f32.mrb[0].mxu0
      %v8604 = vadd.f32 0.0, %v8603
      %v8605 = vpop.f32.mrb[0].mxu0
      %8606 = vmatprep.mubr.bf16.mxu0 0
      %8607 = vmatmul.mubr.bf16.gmra.mrb[0].mxu0 %v8368
      %v8608 = vpop.f32.mrb[0].mxu0
      %v8609 = vadd.f32 0.0, %v8608
      %v8610 = vpop.f32.mrb[0].mxu0
      %v8611 = vpop.f32.mrb[0].mxu0
      %v8612 = vadd.f32 0.0, %v8611
      %v8613 = vpop.f32.mrb[0].mxu0
      %8614 = vmatprep.mubr.bf16.mxu0 0
      %8615 = vmatmul.mubr.bf16.gmra.mrb[0].mxu0 %v8377
      %v8616 = vpop.f32.mrb[0].mxu0
      %v8617 = vadd.f32 0.0, %v8616
      %v8618 = vpop.f32.mrb[0].mxu0
      %v8619 = vpop.f32.mrb[0].mxu0
      %v8620 = vadd.f32 0.0, %v8619
      %v8621 = vpop.f32.mrb[0].mxu0
      %8622 = vmatprep.mubr.bf16.mxu0 0
      %8623 = vmatmul.mubr.bf16.gmra.mrb[0].mxu0 %v8386
      %v8624 = vpop.f32.mrb[0].mxu0
      %v8625 = vadd.f32 0.0, %v8624
      %v8626 = vpop.f32.mrb[0].mxu0
      %v8627 = vpop.f32.mrb[0].mxu0
      %v8628 = vadd.f32 0.0, %v8627
      %v8629 = vpop.f32.mrb[0].mxu0
      %8630 = vmatprep.mubr.bf16.mxu0 0
      %8631 = vmatmul.mubr.bf16.gmra.mrb[0].mxu0 %v8395
      %v8632 = vpop.f32.mrb[0].mxu0
      %v8633 = vadd.f32 0.0, %v8632
      %v8634 = vpop.f32.mrb[0].mxu0
      %v8635 = vpop.f32.mrb[0].mxu0
      %v8636 = vadd.f32 0.0, %v8635
      %v8637 = vpop.f32.mrb[0].mxu0
      %8638 = vdwg.mxu0
      %v8639 = vadd.f32 %v8169, %v8497
      %v8640 = vadd.f32 %v8170, %v8500
      %v8641 = vadd.f32 %v8171, %v8505
      %v8642 = vadd.f32 %v8172, %v8508
      %v8643 = vadd.f32 %v8173, %v8513
      %v8644 = vadd.f32 %v8174, %v8516
      %v8645 = vadd.f32 %v8175, %v8521
      %v8646 = vadd.f32 %v8176, %v8524
      %v8647 = vadd.f32 %v8177, %v8529
      %v8648 = vadd.f32 %v8178, %v8532
      %v8649 = vadd.f32 %v8179, %v8537
      %v8650 = vadd.f32 %v8180, %v8540
      %v8651 = vadd.f32 %v8181, %v8545
      %v8652 = vadd.f32 %v8182, %v8548
      %v8653 = vadd.f32 %v8183, %v8553
      %v8654 = vadd.f32 %v8184, %v8556
      %v8655 = vadd.f32 %v8185, %v8561
      %v8656 = vadd.f32 %v8186, %v8564
      %v8657 = vadd.f32 %v8187, %v8569
      %v8658 = vadd.f32 %v8188, %v8572
      %v8659 = vadd.f32 %v8189, %v8577
      %v8660 = vadd.f32 %v8190, %v8580
      %v8661 = vadd.f32 %v8191, %v8585
      %v8662 = vadd.f32 %v8192, %v8588
      %v8663 = vadd.f32 %v8193, %v8593
      %v8664 = vadd.f32 %v8194, %v8596
      %v8665 = vadd.f32 %v8195, %v8601
      %v8666 = vadd.f32 %v8196, %v8604
      %v8667 = vadd.f32 %v8197, %v8609
      %v8668 = vadd.f32 %v8198, %v8612
      %v8669 = vadd.f32 %v8199, %v8617
      %v8670 = vadd.f32 %v8200, %v8620
      %v8671 = vadd.f32 %v8201, %v8625
      %v8672 = vadd.f32 %v8202, %v8628
      %v8673 = vadd.f32 %v8203, %v8633
      %v8674 = vadd.f32 %v8204, %v8636
      %v8675 = vld [vmem:[#allocation2 + $0x10] sm:$0x8]
      %s8676 = scalar_lea.vmem %s3, 512
      %v8677 = vld [vmem:[%s8676] sm:$0xf]
      %v8678 = vld [vmem:[%s8676 + $0x4] sm:$0xf]
      %v8679 = vld [vmem:[%s8676 + $0x8] sm:$0xf]
      %v8680 = vld [vmem:[%s8676 + $0xc] sm:$0xf]
      %v8681 = vld [vmem:[%s8676 + $0x10] sm:$0xf]
      %v8682 = vld [vmem:[%s8676 + $0x14] sm:$0xf]
      %v8683 = vld [vmem:[%s8676 + $0x18] sm:$0xf]
      %v8684 = vld [vmem:[%s8676 + $0x1c] sm:$0xf]
      %v8685 = vld [vmem:[%s8676 + $0x20] sm:$0xf]
      %v8686 = vld [vmem:[%s8676 + $0x24] sm:$0xf]
      %v8687 = vld [vmem:[%s8676 + $0x28] sm:$0xf]
      %v8688 = vld [vmem:[%s8676 + $0x2c] sm:$0xf]
      %v8689 = vld [vmem:[%s8676 + $0x30] sm:$0xf]
      %v8690 = vld [vmem:[%s8676 + $0x34] sm:$0xf]
      %v8691 = vld [vmem:[%s8676 + $0x38] sm:$0xf]
      %v8692 = vld [vmem:[%s8676 + $0x3c] sm:$0xf]
      %v8694 = vunpack.c.l.b16 %v8675
      %v8695 = vpack.c.b16 %v7834, %v8694
      %v8696 = vrot.slane %v8695, 3
      %v8697 = vrot.slane %v7871, 3
      %v8698 = vsel %vm4238, %v8696, %v8697
      %v8699 = vrot.slane %v7872, 3
      %v8700 = vsel %vm4238, %v8697, %v8699
      %v8701 = vrot.slane %v7873, 3
      %v8702 = vsel %vm4238, %v8699, %v8701
      %v8703 = vrot.slane %v7874, 3
      %v8704 = vsel %vm4238, %v8701, %v8703
      %v8705 = vrot.slane %v7875, 3
      %v8706 = vsel %vm4238, %v8703, %v8705
      %v8707 = vrot.slane %v7876, 3
      %v8708 = vsel %vm4238, %v8705, %v8707
      %v8709 = vrot.slane %v7877, 3
      %v8710 = vsel %vm4238, %v8707, %v8709
      %v8711 = vrot.slane %v7878, 3
      %v8712 = vsel %vm4238, %v8709, %v8711
      %v8713 = vrot.slane %v7879, 3
      %v8714 = vsel %vm4238, %v8711, %v8713
      %v8715 = vrot.slane %v7880, 3
      %v8716 = vsel %vm4238, %v8713, %v8715
      %v8717 = vrot.slane %v7881, 3
      %v8718 = vsel %vm4238, %v8715, %v8717
      %v8719 = vrot.slane %v7882, 3
      %v8720 = vsel %vm4238, %v8717, %v8719
      %v8721 = vrot.slane %v7883, 3
      %v8722 = vsel %vm4238, %v8719, %v8721
      %v8723 = vrot.slane %v7884, 3
      %v8724 = vsel %vm4238, %v8721, %v8723
      %v8725 = vrot.slane %v7885, 3
      %v8726 = vsel %vm4238, %v8723, %v8725
      %v8727 = vrot.slane %v7886, 3
      %v8728 = vsel %vm4238, %v8725, %v8727
      %v8729 = vrot.slane %v7887, 3
      %v8730 = vsel %vm4238, %v8727, %v8729
      %v8731 = vrot.slane %v8225, 3
      %v8732 = vsel %vm4238, %v8729, %v8731
      %v8767 = vunpack.c.l.b16 %v8677
      %v8768 = vunpack.c.l.b16 %v8678
      %v8769 = vunpack.c.l.b16 %v8679
      %v8770 = vunpack.c.l.b16 %v8680
      %v8771 = vunpack.c.l.b16 %v8681
      %v8772 = vunpack.c.l.b16 %v8682
      %v8773 = vunpack.c.l.b16 %v8683
      %v8774 = vunpack.c.l.b16 %v8684
      %v8775 = vunpack.c.l.b16 %v8685
      %v8776 = vunpack.c.l.b16 %v8686
      %v8777 = vunpack.c.l.b16 %v8687
      %v8778 = vunpack.c.l.b16 %v8688
      %v8779 = vunpack.c.l.b16 %v8689
      %v8780 = vunpack.c.l.b16 %v8690
      %v8781 = vunpack.c.l.b16 %v8691
      %v8782 = vunpack.c.l.b16 %v8692
      %v8783 = vpack.c.b16 %v8768, %v8767
      %v8784 = vpack.c.b16 %v8770, %v8769
      %v8785 = vpack.c.b16 %v8772, %v8771
      %v8786 = vpack.c.b16 %v8774, %v8773
      %v8787 = vpack.c.b16 %v8776, %v8775
      %v8788 = vpack.c.b16 %v8778, %v8777
      %v8789 = vpack.c.b16 %v8780, %v8779
      %v8790 = vpack.c.b16 %v8782, %v8781
      %8799 = vmatprep.subr.bf16.mxu0 0
      %8800 = vmatpush1.bf16.msra.mxu0 %v8783
      %8801 = vmatprep.subr.bf16.mxu0 0
      %8802 = vmatpush1.bf16.msra.mxu0 %v8784
      %8803 = vmatprep.subr.bf16.mxu0 0
      %8804 = vmatpush1.bf16.msra.mxu0 %v8785
      %8805 = vmatprep.subr.bf16.mxu0 0
      %8806 = vmatpush1.bf16.msra.mxu0 %v8786
      %8807 = vmatprep.subr.bf16.mxu0 0
      %8808 = vmatpush1.bf16.msra.mxu0 %v8787
      %8809 = vmatprep.subr.bf16.mxu0 0
      %8810 = vmatpush1.bf16.msra.mxu0 %v8788
      %8811 = vmatprep.subr.bf16.mxu0 0
      %8812 = vmatpush1.bf16.msra.mxu0 %v8789
      %8813 = vmatprep.subr.bf16.mxu0 0
      %8814 = vmatpush1.bf16.msra.mxu0 %v8790
      %8815 = vmatprep.subr.bf16.mxu0 0
      %8816 = vmatpush1.bf16.msra.mxu0 0
      %8817 = vmatprep.subr.bf16.mxu0 0
      %8818 = vmatpush1.bf16.msra.mxu0 0
      %8819 = vmatprep.subr.bf16.mxu0 0
      %8820 = vmatpush1.bf16.msra.mxu0 0
      %8821 = vmatprep.subr.bf16.mxu0 0
      %8822 = vmatpush1.bf16.msra.mxu0 0
      %8823 = vmatprep.subr.bf16.mxu0 0
      %8824 = vmatpush1.bf16.msra.mxu0 0
      %8825 = vmatprep.subr.bf16.mxu0 0
      %8826 = vmatpush1.bf16.msra.mxu0 0
      %8827 = vmatprep.subr.bf16.mxu0 0
      %8828 = vmatpush1.bf16.msra.mxu0 0
      %8829 = vmatprep.subr.bf16.mxu0 0
      %8830 = vmatpush1.bf16.msra.mxu0 0
      %8831 = vmatprep.mubr.bf16.mxu0 0
      %8832 = vmatmul.mubr.bf16.gmra.mrb[0].mxu0 %v8698
      %v8833 = vpop.f32.mrb[0].mxu0
      %v8834 = vadd.f32 0.0, %v8833
      %v8835 = vpop.f32.mrb[0].mxu0
      %v8836 = vpop.f32.mrb[0].mxu0
      %v8837 = vadd.f32 0.0, %v8836
      %v8838 = vpop.f32.mrb[0].mxu0
      %8839 = vmatprep.mubr.bf16.mxu0 0
      %8840 = vmatmul.mubr.bf16.gmra.mrb[0].mxu0 %v8700
      %v8841 = vpop.f32.mrb[0].mxu0
      %v8842 = vadd.f32 0.0, %v8841
      %v8843 = vpop.f32.mrb[0].mxu0
      %v8844 = vpop.f32.mrb[0].mxu0
      %v8845 = vadd.f32 0.0, %v8844
      %v8846 = vpop.f32.mrb[0].mxu0
      %8847 = vmatprep.mubr.bf16.mxu0 0
      %8848 = vmatmul.mubr.bf16.gmra.mrb[0].mxu0 %v8702
      %v8849 = vpop.f32.mrb[0].mxu0
      %v8850 = vadd.f32 0.0, %v8849
      %v8851 = vpop.f32.mrb[0].mxu0
      %v8852 = vpop.f32.mrb[0].mxu0
      %v8853 = vadd.f32 0.0, %v8852
      %v8854 = vpop.f32.mrb[0].mxu0
      %8855 = vmatprep.mubr.bf16.mxu0 0
      %8856 = vmatmul.mubr.bf16.gmra.mrb[0].mxu0 %v8704
      %v8857 = vpop.f32.mrb[0].mxu0
      %v8858 = vadd.f32 0.0, %v8857
      %v8859 = vpop.f32.mrb[0].mxu0
      %v8860 = vpop.f32.mrb[0].mxu0
      %v8861 = vadd.f32 0.0, %v8860
      %v8862 = vpop.f32.mrb[0].mxu0
      %8863 = vmatprep.mubr.bf16.mxu0 0
      %8864 = vmatmul.mubr.bf16.gmra.mrb[0].mxu0 %v8706
      %v8865 = vpop.f32.mrb[0].mxu0
      %v8866 = vadd.f32 0.0, %v8865
      %v8867 = vpop.f32.mrb[0].mxu0
      %v8868 = vpop.f32.mrb[0].mxu0
      %v8869 = vadd.f32 0.0, %v8868
      %v8870 = vpop.f32.mrb[0].mxu0
      %8871 = vmatprep.mubr.bf16.mxu0 0
      %8872 = vmatmul.mubr.bf16.gmra.mrb[0].mxu0 %v8708
      %v8873 = vpop.f32.mrb[0].mxu0
      %v8874 = vadd.f32 0.0, %v8873
      %v8875 = vpop.f32.mrb[0].mxu0
      %v8876 = vpop.f32.mrb[0].mxu0
      %v8877 = vadd.f32 0.0, %v8876
      %v8878 = vpop.f32.mrb[0].mxu0
      %8879 = vmatprep.mubr.bf16.mxu0 0
      %8880 = vmatmul.mubr.bf16.gmra.mrb[0].mxu0 %v8710
      %v8881 = vpop.f32.mrb[0].mxu0
      %v8882 = vadd.f32 0.0, %v8881
      %v8883 = vpop.f32.mrb[0].mxu0
      %v8884 = vpop.f32.mrb[0].mxu0
      %v8885 = vadd.f32 0.0, %v8884
      %v8886 = vpop.f32.mrb[0].mxu0
      %8887 = vmatprep.mubr.bf16.mxu0 0
      %8888 = vmatmul.mubr.bf16.gmra.mrb[0].mxu0 %v8712
      %v8889 = vpop.f32.mrb[0].mxu0
      %v8890 = vadd.f32 0.0, %v8889
      %v8891 = vpop.f32.mrb[0].mxu0
      %v8892 = vpop.f32.mrb[0].mxu0
      %v8893 = vadd.f32 0.0, %v8892
      %v8894 = vpop.f32.mrb[0].mxu0
      %8895 = vmatprep.mubr.bf16.mxu0 0
      %8896 = vmatmul.mubr.bf16.gmra.mrb[0].mxu0 %v8714
      %v8897 = vpop.f32.mrb[0].mxu0
      %v8898 = vadd.f32 0.0, %v8897
      %v8899 = vpop.f32.mrb[0].mxu0
      %v8900 = vpop.f32.mrb[0].mxu0
      %v8901 = vadd.f32 0.0, %v8900
      %v8902 = vpop.f32.mrb[0].mxu0
      %8903 = vmatprep.mubr.bf16.mxu0 0
      %8904 = vmatmul.mubr.bf16.gmra.mrb[0].mxu0 %v8716
      %v8905 = vpop.f32.mrb[0].mxu0
      %v8906 = vadd.f32 0.0, %v8905
      %v8907 = vpop.f32.mrb[0].mxu0
      %v8908 = vpop.f32.mrb[0].mxu0
      %v8909 = vadd.f32 0.0, %v8908
      %v8910 = vpop.f32.mrb[0].mxu0
      %8911 = vmatprep.mubr.bf16.mxu0 0
      %8912 = vmatmul.mubr.bf16.gmra.mrb[0].mxu0 %v8718
      %v8913 = vpop.f32.mrb[0].mxu0
      %v8914 = vadd.f32 0.0, %v8913
      %v8915 = vpop.f32.mrb[0].mxu0
      %v8916 = vpop.f32.mrb[0].mxu0
      %v8917 = vadd.f32 0.0, %v8916
      %v8918 = vpop.f32.mrb[0].mxu0
      %8919 = vmatprep.mubr.bf16.mxu0 0
      %8920 = vmatmul.mubr.bf16.gmra.mrb[0].mxu0 %v8720
      %v8921 = vpop.f32.mrb[0].mxu0
      %v8922 = vadd.f32 0.0, %v8921
      %v8923 = vpop.f32.mrb[0].mxu0
      %v8924 = vpop.f32.mrb[0].mxu0
      %v8925 = vadd.f32 0.0, %v8924
      %v8926 = vpop.f32.mrb[0].mxu0
      %8927 = vmatprep.mubr.bf16.mxu0 0
      %8928 = vmatmul.mubr.bf16.gmra.mrb[0].mxu0 %v8722
      %v8929 = vpop.f32.mrb[0].mxu0
      %v8930 = vadd.f32 0.0, %v8929
      %v8931 = vpop.f32.mrb[0].mxu0
      %v8932 = vpop.f32.mrb[0].mxu0
      %v8933 = vadd.f32 0.0, %v8932
      %v8934 = vpop.f32.mrb[0].mxu0
      %8935 = vmatprep.mubr.bf16.mxu0 0
      %8936 = vmatmul.mubr.bf16.gmra.mrb[0].mxu0 %v8724
      %v8937 = vpop.f32.mrb[0].mxu0
      %v8938 = vadd.f32 0.0, %v8937
      %v8939 = vpop.f32.mrb[0].mxu0
      %v8940 = vpop.f32.mrb[0].mxu0
      %v8941 = vadd.f32 0.0, %v8940
      %v8942 = vpop.f32.mrb[0].mxu0
      %8943 = vmatprep.mubr.bf16.mxu0 0
      %8944 = vmatmul.mubr.bf16.gmra.mrb[0].mxu0 %v8726
      %v8945 = vpop.f32.mrb[0].mxu0
      %v8946 = vadd.f32 0.0, %v8945
      %v8947 = vpop.f32.mrb[0].mxu0
      %v8948 = vpop.f32.mrb[0].mxu0
      %v8949 = vadd.f32 0.0, %v8948
      %v8950 = vpop.f32.mrb[0].mxu0
      %8951 = vmatprep.mubr.bf16.mxu0 0
      %8952 = vmatmul.mubr.bf16.gmra.mrb[0].mxu0 %v8728
      %v8953 = vpop.f32.mrb[0].mxu0
      %v8954 = vadd.f32 0.0, %v8953
      %v8955 = vpop.f32.mrb[0].mxu0
      %v8956 = vpop.f32.mrb[0].mxu0
      %v8957 = vadd.f32 0.0, %v8956
      %v8958 = vpop.f32.mrb[0].mxu0
      %8959 = vmatprep.mubr.bf16.mxu0 0
      %8960 = vmatmul.mubr.bf16.gmra.mrb[0].mxu0 %v8730
      %v8961 = vpop.f32.mrb[0].mxu0
      %v8962 = vadd.f32 0.0, %v8961
      %v8963 = vpop.f32.mrb[0].mxu0
      %v8964 = vpop.f32.mrb[0].mxu0
      %v8965 = vadd.f32 0.0, %v8964
      %v8966 = vpop.f32.mrb[0].mxu0
      %8967 = vmatprep.mubr.bf16.mxu0 0
      %8968 = vmatmul.mubr.bf16.gmra.mrb[0].mxu0 %v8732
      %v8969 = vpop.f32.mrb[0].mxu0
      %v8970 = vadd.f32 0.0, %v8969
      %v8971 = vpop.f32.mrb[0].mxu0
      %v8972 = vpop.f32.mrb[0].mxu0
      %v8973 = vadd.f32 0.0, %v8972
      %v8974 = vpop.f32.mrb[0].mxu0
      %8975 = vdwg.mxu0
      %v8976 = vadd.f32 %v8639, %v8834
      %v8977 = vadd.f32 %v8640, %v8837
      %v8978 = vadd.f32 %v8641, %v8842
      %v8979 = vadd.f32 %v8642, %v8845
      %v8980 = vadd.f32 %v8643, %v8850
      %v8981 = vadd.f32 %v8644, %v8853
      %v8982 = vadd.f32 %v8645, %v8858
      %v8983 = vadd.f32 %v8646, %v8861
      %v8984 = vadd.f32 %v8647, %v8866
      %v8985 = vadd.f32 %v8648, %v8869
      %v8986 = vadd.f32 %v8649, %v8874
      %v8987 = vadd.f32 %v8650, %v8877
      %v8988 = vadd.f32 %v8651, %v8882
      %v8989 = vadd.f32 %v8652, %v8885
      %v8990 = vadd.f32 %v8653, %v8890
      %v8991 = vadd.f32 %v8654, %v8893
      %v8992 = vadd.f32 %v8655, %v8898
      %v8993 = vadd.f32 %v8656, %v8901
      %v8994 = vadd.f32 %v8657, %v8906
      %v8995 = vadd.f32 %v8658, %v8909
      %v8996 = vadd.f32 %v8659, %v8914
      %v8997 = vadd.f32 %v8660, %v8917
      %v8998 = vadd.f32 %v8661, %v8922
      %v8999 = vadd.f32 %v8662, %v8925
      %v9000 = vadd.f32 %v8663, %v8930
      %v9001 = vadd.f32 %v8664, %v8933
      %v9002 = vadd.f32 %v8665, %v8938
      %v9003 = vadd.f32 %v8666, %v8941
      %v9004 = vadd.f32 %v8667, %v8946
      %v9005 = vadd.f32 %v8668, %v8949
      %v9006 = vadd.f32 %v8669, %v8954
      %v9007 = vadd.f32 %v8670, %v8957
      %v9008 = vadd.f32 %v8671, %v8962
      %v9009 = vadd.f32 %v8672, %v8965
      %v9010 = vadd.f32 %v8673, %v8970
      %v9011 = vadd.f32 %v8674, %v8973
      %v9012 = vld [vmem:[%s219 + $0x8] sm:$0xe]
      %v9013 = vld [vmem:[%s219 + $0xc] sm:$0xf]
      %v9014 = vld [vmem:[%s219 + $0x10] sm:$0xf]
      %v9015 = vld [vmem:[%s219 + $0x14] sm:$0xf]
      %v9016 = vld [vmem:[%s219 + $0x18] sm:$0xf]
      %v9017 = vld [vmem:[%s219 + $0x1c] sm:$0xf]
      %v9018 = vld [vmem:[%s219 + $0x20] sm:$0xf]
      %v9019 = vld [vmem:[%s219 + $0x24] sm:$0xf]
      %v9020 = vld [vmem:[%s219 + $0x28] sm:$0xf]
      %v9021 = vld [vmem:[%s219 + $0x2c] sm:$0xf]
      %v9022 = vld [vmem:[%s219 + $0x30] sm:$0xf]
      %v9023 = vld [vmem:[%s219 + $0x34] sm:$0xf]
      %v9024 = vld [vmem:[%s219 + $0x38] sm:$0xf]
      %v9025 = vld [vmem:[%s219 + $0x3c] sm:$0xf]
      %v9026 = vld [vmem:[%s219 + $0x40] sm:$0xf]
      %v9027 = vld [vmem:[%s219 + $0x44] sm:$0xf]
      %v9028 = vld [vmem:[%s219 + $0x48] sm:$0xf]
      %v9029 = vld [vmem:[%s219 + $0x4c] sm:$0xf]
      %v9030 = vld [vmem:[%s219 + $0x50] sm:$0xf]
      %v9031 = vld [vmem:[%s219 + $0x54] sm:$0xf]
      %v9032 = vld [vmem:[%s219 + $0x58] sm:$0xf]
      %v9033 = vld [vmem:[%s219 + $0x5c] sm:$0xf]
      %v9034 = vld [vmem:[%s219 + $0x60] sm:$0xf]
      %v9035 = vld [vmem:[%s219 + $0x64] sm:$0xf]
      %v9036 = vld [vmem:[%s219 + $0x68] sm:$0xf]
      %v9037 = vld [vmem:[%s219 + $0x6c] sm:$0xf]
      %v9038 = vld [vmem:[%s219 + $0x70] sm:$0xf]
      %v9039 = vld [vmem:[%s219 + $0x74] sm:$0xf]
      %v9040 = vld [vmem:[%s219 + $0x78] sm:$0xf]
      %v9041 = vld [vmem:[%s219 + $0x7c] sm:$0xf]
      %v9042 = vld [vmem:[%s219 + $0x80] sm:$0xf]
      %v9043 = vld [vmem:[%s219 + $0x84] sm:$0xf]
      %v9044 = vld [vmem:[%s219 + $0x88] sm:$0xf]
      %v9045 = vld [vmem:[%s219 + $0x8c] sm:$0xf]
      %v9046 = vld [vmem:[%s219 + $0x90] sm:$0xf]
      %v9047 = vld [vmem:[%s219 + $0x94] sm:$0xf]
      %v9048 = vld [vmem:[%s219 + $0x98] sm:$0x3]
      %v9049 = vunpack.c.l.bf16 %v9012
      %v9050 = vunpack.c.l.bf16 %v9013
      %v9051 = vunpack.c.l.bf16 %v9014
      %v9052 = vunpack.c.l.bf16 %v9015
      %v9053 = vunpack.c.l.bf16 %v9016
      %v9054 = vunpack.c.l.bf16 %v9017
      %v9055 = vunpack.c.l.bf16 %v9018
      %v9056 = vunpack.c.l.bf16 %v9019
      %v9057 = vunpack.c.l.bf16 %v9020
      %v9058 = vunpack.c.l.bf16 %v9021
      %v9059 = vunpack.c.l.bf16 %v9022
      %v9060 = vunpack.c.l.bf16 %v9023
      %v9061 = vunpack.c.l.bf16 %v9024
      %v9062 = vunpack.c.l.bf16 %v9025
      %v9063 = vunpack.c.l.bf16 %v9026
      %v9064 = vunpack.c.l.bf16 %v9027
      %v9065 = vunpack.c.l.bf16 %v9028
      %v9066 = vunpack.c.l.bf16 %v9029
      %v9067 = vunpack.c.l.bf16 %v9030
      %v9068 = vunpack.c.l.bf16 %v9031
      %v9069 = vunpack.c.l.bf16 %v9032
      %v9070 = vunpack.c.l.bf16 %v9033
      %v9071 = vunpack.c.l.bf16 %v9034
      %v9072 = vunpack.c.l.bf16 %v9035
      %v9073 = vunpack.c.l.bf16 %v9036
      %v9074 = vunpack.c.l.bf16 %v9037
      %v9075 = vunpack.c.l.bf16 %v9038
      %v9076 = vunpack.c.l.bf16 %v9039
      %v9077 = vunpack.c.l.bf16 %v9040
      %v9078 = vunpack.c.l.bf16 %v9041
      %v9079 = vunpack.c.l.bf16 %v9042
      %v9080 = vunpack.c.l.bf16 %v9043
      %v9081 = vunpack.c.l.bf16 %v9044
      %v9082 = vunpack.c.l.bf16 %v9045
      %v9083 = vunpack.c.l.bf16 %v9046
      %v9084 = vunpack.c.l.bf16 %v9047
      %v9085 = vunpack.c.l.bf16 %v9048
      %v9086 = vld [vmem:[%s4] sm:$0x1]
      %v9088 = vlaneseq
      %v9089 = vshrl.u32 %v9088, 7
      %v9090 = vsub.s32 0, %v9089
      %v9091 = vrot.slane %v9086, %v9090
      %v9093 = vadd.f32 %v8976, %v9091
      %v9094 = vadd.f32 %v8977, %v9091
      %v9095 = vadd.f32 %v8978, %v9091
      %v9096 = vadd.f32 %v8979, %v9091
      %v9097 = vadd.f32 %v8980, %v9091
      %v9098 = vadd.f32 %v8981, %v9091
      %v9099 = vadd.f32 %v8982, %v9091
      %v9100 = vadd.f32 %v8983, %v9091
      %v9101 = vadd.f32 %v8984, %v9091
      %v9102 = vadd.f32 %v8985, %v9091
      %v9103 = vadd.f32 %v8986, %v9091
      %v9104 = vadd.f32 %v8987, %v9091
      %v9105 = vadd.f32 %v8988, %v9091
      %v9106 = vadd.f32 %v8989, %v9091
      %v9107 = vadd.f32 %v8990, %v9091
      %v9108 = vadd.f32 %v8991, %v9091
      %v9109 = vadd.f32 %v8992, %v9091
      %v9110 = vadd.f32 %v8993, %v9091
      %v9111 = vadd.f32 %v8994, %v9091
      %v9112 = vadd.f32 %v8995, %v9091
      %v9113 = vadd.f32 %v8996, %v9091
      %v9114 = vadd.f32 %v8997, %v9091
      %v9115 = vadd.f32 %v8998, %v9091
      %v9116 = vadd.f32 %v8999, %v9091
      %v9117 = vadd.f32 %v9000, %v9091
      %v9118 = vadd.f32 %v9001, %v9091
      %v9119 = vadd.f32 %v9002, %v9091
      %v9120 = vadd.f32 %v9003, %v9091
      %v9121 = vadd.f32 %v9004, %v9091
      %v9122 = vadd.f32 %v9005, %v9091
      %v9123 = vadd.f32 %v9006, %v9091
      %v9124 = vadd.f32 %v9007, %v9091
      %v9125 = vadd.f32 %v9008, %v9091
      %v9126 = vadd.f32 %v9009, %v9091
      %v9127 = vadd.f32 %v9010, %v9091
      %v9128 = vadd.f32 %v9011, %v9091
      %vm9166 = vcmask 1044480
      %v9167 = vrot.slane %v9049, 3
      %v9168 = vrot.slane %v9050, 3
      %v9169 = vsel %vm9166, %v9167, %v9168
      %v9170 = vrot.slane %v9051, 3
      %v9171 = vsel %vm9166, %v9168, %v9170
      %v9172 = vrot.slane %v9052, 3
      %v9173 = vsel %vm9166, %v9170, %v9172
      %v9174 = vrot.slane %v9053, 3
      %v9175 = vsel %vm9166, %v9172, %v9174
      %v9176 = vrot.slane %v9054, 3
      %v9177 = vsel %vm9166, %v9174, %v9176
      %v9178 = vrot.slane %v9055, 3
      %v9179 = vsel %vm9166, %v9176, %v9178
      %v9180 = vrot.slane %v9056, 3
      %v9181 = vsel %vm9166, %v9178, %v9180
      %v9182 = vrot.slane %v9057, 3
      %v9183 = vsel %vm9166, %v9180, %v9182
      %v9184 = vrot.slane %v9058, 3
      %v9185 = vsel %vm9166, %v9182, %v9184
      %v9186 = vrot.slane %v9059, 3
      %v9187 = vsel %vm9166, %v9184, %v9186
      %v9188 = vrot.slane %v9060, 3
      %v9189 = vsel %vm9166, %v9186, %v9188
      %v9190 = vrot.slane %v9061, 3
      %v9191 = vsel %vm9166, %v9188, %v9190
      %v9192 = vrot.slane %v9062, 3
      %v9193 = vsel %vm9166, %v9190, %v9192
      %v9194 = vrot.slane %v9063, 3
      %v9195 = vsel %vm9166, %v9192, %v9194
      %v9196 = vrot.slane %v9064, 3
      %v9197 = vsel %vm9166, %v9194, %v9196
      %v9198 = vrot.slane %v9065, 3
      %v9199 = vsel %vm9166, %v9196, %v9198
      %v9200 = vrot.slane %v9066, 3
      %v9201 = vsel %vm9166, %v9198, %v9200
      %v9202 = vrot.slane %v9067, 3
      %v9203 = vsel %vm9166, %v9200, %v9202
      %v9204 = vrot.slane %v9068, 3
      %v9205 = vsel %vm9166, %v9202, %v9204
      %v9206 = vrot.slane %v9069, 3
      %v9207 = vsel %vm9166, %v9204, %v9206
      %v9208 = vrot.slane %v9070, 3
      %v9209 = vsel %vm9166, %v9206, %v9208
      %v9210 = vrot.slane %v9071, 3
      %v9211 = vsel %vm9166, %v9208, %v9210
      %v9212 = vrot.slane %v9072, 3
      %v9213 = vsel %vm9166, %v9210, %v9212
      %v9214 = vrot.slane %v9073, 3
      %v9215 = vsel %vm9166, %v9212, %v9214
      %v9216 = vrot.slane %v9074, 3
      %v9217 = vsel %vm9166, %v9214, %v9216
      %v9218 = vrot.slane %v9075, 3
      %v9219 = vsel %vm9166, %v9216, %v9218
      %v9220 = vrot.slane %v9076, 3
      %v9221 = vsel %vm9166, %v9218, %v9220
      %v9222 = vrot.slane %v9077, 3
      %v9223 = vsel %vm9166, %v9220, %v9222
      %v9224 = vrot.slane %v9078, 3
      %v9225 = vsel %vm9166, %v9222, %v9224
      %v9226 = vrot.slane %v9079, 3
      %v9227 = vsel %vm9166, %v9224, %v9226
      %v9228 = vrot.slane %v9080, 3
      %v9229 = vsel %vm9166, %v9226, %v9228
      %v9230 = vrot.slane %v9081, 3
      %v9231 = vsel %vm9166, %v9228, %v9230
      %v9232 = vrot.slane %v9082, 3
      %v9233 = vsel %vm9166, %v9230, %v9232
      %v9234 = vrot.slane %v9083, 3
      %v9235 = vsel %vm9166, %v9232, %v9234
      %v9236 = vrot.slane %v9084, 3
      %v9237 = vsel %vm9166, %v9234, %v9236
      %v9238 = vrot.slane %v9085, 3
      %v9239 = vsel %vm9166, %v9236, %v9238
      %v9276 = vadd.f32 %v9093, %v9169
      %v9277 = vadd.f32 %v9094, %v9171
      %v9278 = vadd.f32 %v9095, %v9173
      %v9279 = vadd.f32 %v9096, %v9175
      %v9280 = vadd.f32 %v9097, %v9177
      %v9281 = vadd.f32 %v9098, %v9179
      %v9282 = vadd.f32 %v9099, %v9181
      %v9283 = vadd.f32 %v9100, %v9183
      %v9284 = vadd.f32 %v9101, %v9185
      %v9285 = vadd.f32 %v9102, %v9187
      %v9286 = vadd.f32 %v9103, %v9189
      %v9287 = vadd.f32 %v9104, %v9191
      %v9288 = vadd.f32 %v9105, %v9193
      %v9289 = vadd.f32 %v9106, %v9195
      %v9290 = vadd.f32 %v9107, %v9197
      %v9291 = vadd.f32 %v9108, %v9199
      %v9292 = vadd.f32 %v9109, %v9201
      %v9293 = vadd.f32 %v9110, %v9203
      %v9294 = vadd.f32 %v9111, %v9205
      %v9295 = vadd.f32 %v9112, %v9207
      %v9296 = vadd.f32 %v9113, %v9209
      %v9297 = vadd.f32 %v9114, %v9211
      %v9298 = vadd.f32 %v9115, %v9213
      %v9299 = vadd.f32 %v9116, %v9215
      %v9300 = vadd.f32 %v9117, %v9217
      %v9301 = vadd.f32 %v9118, %v9219
      %v9302 = vadd.f32 %v9119, %v9221
      %v9303 = vadd.f32 %v9120, %v9223
      %v9304 = vadd.f32 %v9121, %v9225
      %v9305 = vadd.f32 %v9122, %v9227
      %v9306 = vadd.f32 %v9123, %v9229
      %v9307 = vadd.f32 %v9124, %v9231
      %v9308 = vadd.f32 %v9125, %v9233
      %v9309 = vadd.f32 %v9126, %v9235
      %v9310 = vadd.f32 %v9127, %v9237
      %v9311 = vadd.f32 %v9128, %v9239
      %v9312 = vmax.f32 %v9276, 0.0
      %v9313 = vmax.f32 %v9277, 0.0
      %v9314 = vmax.f32 %v9278, 0.0
      %v9315 = vmax.f32 %v9279, 0.0
      %v9316 = vmax.f32 %v9280, 0.0
      %v9317 = vmax.f32 %v9281, 0.0
      %v9318 = vmax.f32 %v9282, 0.0
      %v9319 = vmax.f32 %v9283, 0.0
      %v9320 = vmax.f32 %v9284, 0.0
      %v9321 = vmax.f32 %v9285, 0.0
      %v9322 = vmax.f32 %v9286, 0.0
      %v9323 = vmax.f32 %v9287, 0.0
      %v9324 = vmax.f32 %v9288, 0.0
      %v9325 = vmax.f32 %v9289, 0.0
      %v9326 = vmax.f32 %v9290, 0.0
      %v9327 = vmax.f32 %v9291, 0.0
      %v9328 = vmax.f32 %v9292, 0.0
      %v9329 = vmax.f32 %v9293, 0.0
      %v9330 = vmax.f32 %v9294, 0.0
      %v9331 = vmax.f32 %v9295, 0.0
      %v9332 = vmax.f32 %v9296, 0.0
      %v9333 = vmax.f32 %v9297, 0.0
      %v9334 = vmax.f32 %v9298, 0.0
      %v9335 = vmax.f32 %v9299, 0.0
      %v9336 = vmax.f32 %v9300, 0.0
      %v9337 = vmax.f32 %v9301, 0.0
      %v9338 = vmax.f32 %v9302, 0.0
      %v9339 = vmax.f32 %v9303, 0.0
      %v9340 = vmax.f32 %v9304, 0.0
      %v9341 = vmax.f32 %v9305, 0.0
      %v9342 = vmax.f32 %v9306, 0.0
      %v9343 = vmax.f32 %v9307, 0.0
      %v9344 = vmax.f32 %v9308, 0.0
      %v9345 = vmax.f32 %v9309, 0.0
      %v9346 = vmax.f32 %v9310, 0.0
      %v9347 = vmax.f32 %v9311, 0.0
      %9348 = vst [vmem:[%s224] sm:$0xff] %v9312
      %9349 = vst [vmem:[%s224 + $0x8] sm:$0xff] %v9313
      %9350 = vst [vmem:[%s224 + $0x10] sm:$0xff] %v9314
      %9351 = vst [vmem:[%s224 + $0x18] sm:$0xff] %v9315
      %9352 = vst [vmem:[%s224 + $0x20] sm:$0xff] %v9316
      %9353 = vst [vmem:[%s224 + $0x28] sm:$0xff] %v9317
      %9354 = vst [vmem:[%s224 + $0x30] sm:$0xff] %v9318
      %9355 = vst [vmem:[%s224 + $0x38] sm:$0xff] %v9319
      %9356 = vst [vmem:[%s224 + $0x40] sm:$0xff] %v9320
      %9357 = vst [vmem:[%s224 + $0x48] sm:$0xff] %v9321
      %9358 = vst [vmem:[%s224 + $0x50] sm:$0xff] %v9322
      %9359 = vst [vmem:[%s224 + $0x58] sm:$0xff] %v9323
      %9360 = vst [vmem:[%s224 + $0x60] sm:$0xff] %v9324
      %9361 = vst [vmem:[%s224 + $0x68] sm:$0xff] %v9325
      %9362 = vst [vmem:[%s224 + $0x70] sm:$0xff] %v9326
      %9363 = vst [vmem:[%s224 + $0x78] sm:$0xff] %v9327
      %9364 = vst [vmem:[%s224 + $0x80] sm:$0xff] %v9328
      %9365 = vst [vmem:[%s224 + $0x88] sm:$0xff] %v9329
      %9366 = vst [vmem:[%s224 + $0x90] sm:$0xff] %v9330
      %9367 = vst [vmem:[%s224 + $0x98] sm:$0xff] %v9331
      %9368 = vst [vmem:[%s224 + $0xa0] sm:$0xff] %v9332
      %9369 = vst [vmem:[%s224 + $0xa8] sm:$0xff] %v9333
      %9370 = vst [vmem:[%s224 + $0xb0] sm:$0xff] %v9334
      %9371 = vst [vmem:[%s224 + $0xb8] sm:$0xff] %v9335
      %9372 = vst [vmem:[%s224 + $0xc0] sm:$0xff] %v9336
      %9373 = vst [vmem:[%s224 + $0xc8] sm:$0xff] %v9337
      %9374 = vst [vmem:[%s224 + $0xd0] sm:$0xff] %v9338
      %9375 = vst [vmem:[%s224 + $0xd8] sm:$0xff] %v9339
      %9376 = vst [vmem:[%s224 + $0xe0] sm:$0xff] %v9340
      %9377 = vst [vmem:[%s224 + $0xe8] sm:$0xff] %v9341
      %9378 = vst [vmem:[%s224 + $0xf0] sm:$0xff] %v9342
      %9379 = vst [vmem:[%s224 + $0xf8] sm:$0xff] %v9343
      %9380 = vst [vmem:[%s224 + $0x100] sm:$0xff] %v9344
      %9381 = vst [vmem:[%s224 + $0x108] sm:$0xff] %v9345
      %9382 = vst [vmem:[%s224 + $0x110] sm:$0xff] %v9346
      %9383 = vst [vmem:[%s224 + $0x118] sm:$0xff] %v9347
      %p9384 = scmp.lt.s32.totalorder %s16, 1
      %s9385 = scalar_select %p9384, %s16, 1
      %s9386 = smul.addr %s9385, 36
      %s9387 = smul.addr %s9386, 8
      %s9388 = scalar_lea.vmem %s5, %s9387
      // Predicated region
      $region41: #{basic_block_forward.1} parent=39 // pred_check
        %p9389 = pneg %p144
      $region42: #{basic_block_forward.1} parent=39 // pred_check_branch
        %9391 = sbr.rel (%p9389) target = $region44
      $region43: #{basic_block_forward.1} parent=39 // pred_region
        _
      $region44: #{basic_block_forward.1} parent=39 // pred_fallthru
        _
    $region40: #{basic_block_forward.1} parent=5 // pred_fallthru
      _
    %p9392 = scmp.le.s32.totalorder 2, %s11
    // Predicated region
    $region45: #{basic_block_forward.1} parent=5 // pred_check
      %p9393 = pneg %p9392
    $region46: #{basic_block_forward.1} parent=5 // pred_check_branch
      %9395 = sbr.rel (%p9393) target = $region48
    $region47: #{basic_block_forward.1} parent=5 // pred_region
      %s9396 = ssub.s32 %s11, 2
      // Predicated region
      $region49: #{basic_block_forward.1} parent=47 // pred_check
        %p9397 = pneg %p150
      $region50: #{basic_block_forward.1} parent=47 // pred_check_branch
        %9399 = sbr.rel (%p9397) target = $region52
      $region51: #{basic_block_forward.1} parent=47 // pred_region
        %p9400 = scmp.lt.s32.totalorder %s17, 1
        %s9401 = scalar_select %p9400, %s17, 1
        %s9402 = smul.addr %s9401, 36
        %s9403 = smul.addr %s9402, 8
        %s9404 = scalar_lea.vmem %s5, %s9403
      $region52: #{basic_block_forward.1} parent=47 // pred_fallthru
        _
    $region48: #{basic_block_forward.1} parent=5 // pred_fallthru
      _
  $region6: #{basic_block_forward.1} parent=0 // loop_footer
    %s15 = sadd.s32 1, %s11
  $region7: #{basic_block_forward.1} parent=0 // loop_footer_branch
    %10 = sbr.rel target = $region3
  $region8: #{basic_block_forward.1} parent=0 // loop_exit
    _

</llo_original>
